<compile_context>
chip_gen: v6e
topology: v6e:2x2x1
jax: 0.10.0
libtpu: 0.0.40
codegen_flags: <defaults>
</compile_context>

<pallas_src>
import jax
import jax.numpy as jnp
from jax.experimental import pallas as pl
from jax.experimental.pallas import tpu as pltpu

EPS = 1e-5
_VMEM_LIMIT = 64 * 1024 * 1024   # <= physical VMEM on v5e / v6e / v7x


# ----------------------------- kernel helpers -------------------------------

def _conv3x3_valid(x_bf16, w_ref, b_ref):
    """3x3 valid conv as a single MXU matmul.

    x_bf16: (H, W, C) bf16 tile.  w_ref: (9*C, Cout) bf16.  b_ref: (1, Cout) f32.
    Returns (acc, Ho, Wo) with acc: (Ho*Wo, Cout) f32 (conv + bias, pre-BN).
    """
    H, W, C = x_bf16.shape
    Ho, Wo = H - 2, W - 2
    # Build the im2col operand once (rows, 9*C); tap order (dy, dx) with channel
    # fastest, matching the (9*C, Cout) weight layout.
    taps = []
    for dy in range(3):
        for dx in range(3):
            taps.append(x_bf16[dy:dy + Ho, dx:dx + Wo, :].reshape(Ho * Wo, C))
    patches = jnp.concatenate(taps, axis=1)                      # (rows, 9*C) bf16
    acc = jnp.dot(patches, w_ref[...],
                  preferred_element_type=jnp.float32)            # f32 accumulate
    return acc + b_ref[...], Ho, Wo


def _write_stats(stats_ref, acc):
    """One-pass per-tile BN partials: rows of [sum, sum_of_squares] per channel."""
    stats_ref[0] = jnp.concatenate(
        [jnp.sum(acc, axis=0, keepdims=True),
         jnp.sum(acc * acc, axis=0, keepdims=True)], axis=0)     # (2, Cout)


# ------------------------------- kernels -------------------------------------

def _conv1_kernel(x_ref, w_ref, b_ref, out_ref, stats_ref):
    # x_ref: (1, H, W, Cin) block for one image.
    acc, Ho, Wo = _conv3x3_valid(x_ref[0].astype(jnp.bfloat16), w_ref, b_ref)
    _write_stats(stats_ref, acc)
    out_ref[0] = acc.reshape(Ho, Wo, -1)


def _bn_relu_conv2_kernel(y_ref, sc_ref, sh_ref, w_ref, b_ref, out_ref, stats_ref):
    # y_ref: (1, H1, W1, C) pre-BN conv1 output; sc/sh: folded BN1 scale/shift.
    _, H1, W1, C = y_ref.shape
    sc = sc_ref[...].reshape(1, 1, C)
    sh = sh_ref[...].reshape(1, 1, C)
    y = jnp.maximum(y_ref[0] * sc + sh, 0.0)                     # BN1 + ReLU (f32)
    acc, Ho, Wo = _conv3x3_valid(y.astype(jnp.bfloat16), w_ref, b_ref)
    _write_stats(stats_ref, acc)
    out_ref[0] = acc.reshape(Ho, Wo, -1)


def _bn_relu_kernel(y_ref, sc_ref, sh_ref, out_ref):
    # Final BN2 + ReLU (elementwise).
    _, H2, W2, C = y_ref.shape
    sc = sc_ref[...].reshape(1, 1, C)
    sh = sh_ref[...].reshape(1, 1, C)
    out_ref[0] = jnp.maximum(y_ref[0] * sc + sh, 0.0)


# ------------------------------- wrappers ------------------------------------

def _bn_affine(stats, gamma, beta, count):
    """Reduce per-tile partials and fold BN into scale/shift (exact batch stats)."""
    s = jnp.sum(stats[:, 0, :], axis=0)                          # (Cout,)
    sq = jnp.sum(stats[:, 1, :], axis=0)
    mean = s / count
    var = jnp.maximum(sq / count - mean * mean, 0.0)             # biased var (BN training)
    scale = gamma.reshape(-1) * jax.lax.rsqrt(var + EPS)
    shift = beta.reshape(-1) - mean * scale
    return scale.reshape(1, -1), shift.reshape(1, -1)


def encoder_block_nhwc(x_nhwc, params):
    """x_nhwc: (N, H, W, Cin) f32 -> (N, H-4, W-4, Cout) f32 (preferred entry)."""
    w1, b1, g1, be1, w2, b2, g2, be2 = params
    N, H, W, Cin = x_nhwc.shape
    Cout = w1.shape[-1]
    H1, W1 = H - 2, W - 2
    H2, W2 = H1 - 2, W1 - 2

    # Cast MXU weights to bf16 once (halves weight DMA, removes per-step cast).
    w1b = w1.astype(jnp.bfloat16)
    w2b = w2.astype(jnp.bfloat16)

    cparams = pltpu.CompilerParams(
        dimension_semantics=("parallel",),        # megacore: split batch across TCs
        vmem_limit_bytes=_VMEM_LIMIT)

    # ---- stage 1: conv1 + bias, per-image BN1 partial stats -----------------
    y1pre, st1 = pl.pallas_call(
        _conv1_kernel,
        grid=(N,),
        in_specs=[
            pl.BlockSpec((1, H, W, Cin), lambda i: (i, 0, 0, 0)),
            pl.BlockSpec((9 * Cin, Cout), lambda i: (0, 0)),
            pl.BlockSpec((1, Cout), lambda i: (0, 0)),
        ],
        out_specs=(
            pl.BlockSpec((1, H1, W1, Cout), lambda i: (i, 0, 0, 0)),
            pl.BlockSpec((1, 2, Cout), lambda i: (i, 0, 0)),
        ),
        out_shape=(
            jax.ShapeDtypeStruct((N, H1, W1, Cout), jnp.float32),
            jax.ShapeDtypeStruct((N, 2, Cout), jnp.float32),
        ),
        compiler_params=cparams,
    )(x_nhwc, w1b, b1)

    scale1, shift1 = _bn_affine(st1, g1, be1, N * H1 * W1)

    # ---- stage 2: BN1 + ReLU + conv2 + bias, per-image BN2 partial stats ----
    y2pre, st2 = pl.pallas_call(
        _bn_relu_conv2_kernel,
        grid=(N,),
        in_specs=[
            pl.BlockSpec((1, H1, W1, Cout), lambda i: (i, 0, 0, 0)),
            pl.BlockSpec((1, Cout), lambda i: (0, 0)),
            pl.BlockSpec((1, Cout), lambda i: (0, 0)),
            pl.BlockSpec((9 * Cout, Cout), lambda i: (0, 0)),
            pl.BlockSpec((1, Cout), lambda i: (0, 0)),
        ],
        out_specs=(
            pl.BlockSpec((1, H2, W2, Cout), lambda i: (i, 0, 0, 0)),
            pl.BlockSpec((1, 2, Cout), lambda i: (i, 0, 0)),
        ),
        out_shape=(
            jax.ShapeDtypeStruct((N, H2, W2, Cout), jnp.float32),
            jax.ShapeDtypeStruct((N, 2, Cout), jnp.float32),
        ),
        compiler_params=cparams,
    )(y1pre, scale1, shift1, w2b, b2)

    scale2, shift2 = _bn_affine(st2, g2, be2, N * H2 * W2)

    # ---- stage 3: BN2 + ReLU -------------------------------------------------
    out = pl.pallas_call(
        _bn_relu_kernel,
        grid=(N,),
        in_specs=[
            pl.BlockSpec((1, H2, W2, Cout), lambda i: (i, 0, 0, 0)),
            pl.BlockSpec((1, Cout), lambda i: (0, 0)),
            pl.BlockSpec((1, Cout), lambda i: (0, 0)),
        ],
        out_specs=pl.BlockSpec((1, H2, W2, Cout), lambda i: (i, 0, 0, 0)),
        out_shape=jax.ShapeDtypeStruct((N, H2, W2, Cout), jnp.float32),
        compiler_params=cparams,
    )(y2pre, scale2, shift2)

    return out


def encoder_block(x_nchw, params):
    """PyTorch-layout wrapper: (N, Cin, H, W) -> (N, Cout, H-4, W-4)."""
    x_nhwc = jnp.transpose(x_nchw, (0, 2, 3, 1))
    y = encoder_block_nhwc(x_nhwc, params)
    return jnp.transpose(y, (0, 3, 1, 2))


# ----------------------------- params / reference ----------------------------

def init_params(key, in_channels, out_channels):
    """Conv weights stored MXU-ready as (9*Cin, Cout) (taps (dy,dx), channel fastest);
    bias / BN params stored as (1, C)."""
    k1, k2, k3, k4 = jax.random.split(key, 4)
    w1 = jax.random.normal(k1, (9 * in_channels, out_channels), jnp.float32) * 0.1
    b1 = jax.random.normal(k2, (1, out_channels), jnp.float32) * 0.1
    g1 = jnp.ones((1, out_channels), jnp.float32)
    be1 = jnp.zeros((1, out_channels), jnp.float32)
    w2 = jax.random.normal(k3, (9 * out_channels, out_channels), jnp.float32) * 0.1
    b2 = jax.random.normal(k4, (1, out_channels), jnp.float32) * 0.1
    g2 = jnp.ones((1, out_channels), jnp.float32)
    be2 = jnp.zeros((1, out_channels), jnp.float32)
    return (w1, b1, g1, be1, w2, b2, g2, be2)


def _reference(x_nchw, params):
    """Pure-JAX f32 reference (lax conv + batch-stat BN + ReLU)."""
    w1, b1, g1, be1, w2, b2, g2, be2 = params

    def conv_bn_relu(x, w9, b, g, be):
        cin, cout = w9.shape[0] // 9, w9.shape[1]
        w = jnp.transpose(w9.reshape(3, 3, cin, cout), (3, 2, 0, 1))   # -> OIHW
        y = jax.lax.conv_general_dilated(
            x, w, window_strides=(1, 1), padding="VALID",
            dimension_numbers=("NCHW", "OIHW", "NCHW"))
        y = y + b.reshape(1, cout, 1, 1)
        mean = jnp.mean(y, axis=(0, 2, 3), keepdims=True)
        var = jnp.mean((y - mean) ** 2, axis=(0, 2, 3), keepdims=True)
        y = (y - mean) * jax.lax.rsqrt(var + EPS)
        y = y * g.reshape(1, cout, 1, 1) + be.reshape(1, cout, 1, 1)
        return jnp.maximum(y, 0.0)

    y = conv_bn_relu(x_nchw, w1, b1, g1, be1)
    return conv_bn_relu(y, w2, b2, g2, be2)


if __name__ == "__main__":
    key = jax.random.PRNGKey(0)
    kx, kp = jax.random.split(key)

    N, Cin, Cout, S = 2, 4, 8, 16
    x = jax.random.normal(kx, (N, Cin, S, S), jnp.float32)
    params = init_params(kp, Cin, Cout)

    out = jax.jit(encoder_block)(x, params)
    out = jax.block_until_ready(out)

    ref = _reference(x, params)
    assert out.shape == (N, Cout, S - 4, S - 4), out.shape
    max_err = float(jnp.max(jnp.abs(out - ref)))
    # bf16 MXU operands -> slightly loosened tolerance vs. the f32 reference.
    assert jnp.allclose(out, ref, atol=5e-2, rtol=5e-2), max_err

    print("KERNEL_OK")
</pallas_src>

<mosaic_0001>
module attributes {stable_mosaic.version = 11 : i64} {
  func.func @_conv1_kernel(%arg0: i32, %arg1: memref<1x16x16x4xf32, #tpu.memory_space<vmem>>, %arg2: memref<36x8xbf16, #tpu.memory_space<vmem>>, %arg3: memref<1x8xf32, #tpu.memory_space<vmem>>, %arg4: memref<1x14x14x8xf32, #tpu.memory_space<vmem>>, %arg5: memref<1x2x8xf32, #tpu.memory_space<vmem>>) attributes {dimension_semantics = [#tpu.dimension_semantics<parallel>], iteration_bounds = array<i64: 2>, scalar_prefetch = 0 : i64, scratch_operands = 0 : i64, tpu.core_type = #tpu.core_type<tc>, window_params = [{transform_indices = @transform_0, window_bounds = array<i64: 1, 16, 16, 4>}, {pipeline_mode = #tpu.pipeline_mode<synchronous>, transform_indices = @transform_1, window_bounds = array<i64: 36, 8>}, {pipeline_mode = #tpu.pipeline_mode<synchronous>, transform_indices = @transform_2, window_bounds = array<i64: 1, 8>}, {transform_indices = @transform_3, window_bounds = array<i64: 1, 14, 14, 8>}, {transform_indices = @transform_4, window_bounds = array<i64: 1, 2, 8>}]} {
    %c0 = arith.constant 0 : index
    %c0_0 = arith.constant 0 : index
    %c0_1 = arith.constant 0 : index
    %c0_2 = arith.constant 0 : index
    %0 = vector.load %arg1[%c0, %c0_0, %c0_1, %c0_2] : memref<1x16x16x4xf32, #tpu.memory_space<vmem>>, vector<1x16x16x4xf32>
    %1 = vector.shape_cast %0 : vector<1x16x16x4xf32> to vector<16x16x4xf32>
    %2 = arith.truncf %1 : vector<16x16x4xf32> to vector<16x16x4xbf16>
    %3 = vector.extract_strided_slice %2 {offsets = [0, 0, 0], sizes = [14, 14, 4], strides = [1, 1, 1]} : vector<16x16x4xbf16> to vector<14x14x4xbf16>
    %4 = vector.shape_cast %3 : vector<14x14x4xbf16> to vector<196x4xbf16>
    %5 = vector.extract_strided_slice %2 {offsets = [0, 1, 0], sizes = [14, 14, 4], strides = [1, 1, 1]} : vector<16x16x4xbf16> to vector<14x14x4xbf16>
    %6 = vector.shape_cast %5 : vector<14x14x4xbf16> to vector<196x4xbf16>
    %7 = vector.extract_strided_slice %2 {offsets = [0, 2, 0], sizes = [14, 14, 4], strides = [1, 1, 1]} : vector<16x16x4xbf16> to vector<14x14x4xbf16>
    %8 = vector.shape_cast %7 : vector<14x14x4xbf16> to vector<196x4xbf16>
    %9 = vector.extract_strided_slice %2 {offsets = [1, 0, 0], sizes = [14, 14, 4], strides = [1, 1, 1]} : vector<16x16x4xbf16> to vector<14x14x4xbf16>
    %10 = vector.shape_cast %9 : vector<14x14x4xbf16> to vector<196x4xbf16>
    %11 = vector.extract_strided_slice %2 {offsets = [1, 1, 0], sizes = [14, 14, 4], strides = [1, 1, 1]} : vector<16x16x4xbf16> to vector<14x14x4xbf16>
    %12 = vector.shape_cast %11 : vector<14x14x4xbf16> to vector<196x4xbf16>
    %13 = vector.extract_strided_slice %2 {offsets = [1, 2, 0], sizes = [14, 14, 4], strides = [1, 1, 1]} : vector<16x16x4xbf16> to vector<14x14x4xbf16>
    %14 = vector.shape_cast %13 : vector<14x14x4xbf16> to vector<196x4xbf16>
    %15 = vector.extract_strided_slice %2 {offsets = [2, 0, 0], sizes = [14, 14, 4], strides = [1, 1, 1]} : vector<16x16x4xbf16> to vector<14x14x4xbf16>
    %16 = vector.shape_cast %15 : vector<14x14x4xbf16> to vector<196x4xbf16>
    %17 = vector.extract_strided_slice %2 {offsets = [2, 1, 0], sizes = [14, 14, 4], strides = [1, 1, 1]} : vector<16x16x4xbf16> to vector<14x14x4xbf16>
    %18 = vector.shape_cast %17 : vector<14x14x4xbf16> to vector<196x4xbf16>
    %19 = vector.extract_strided_slice %2 {offsets = [2, 2, 0], sizes = [14, 14, 4], strides = [1, 1, 1]} : vector<16x16x4xbf16> to vector<14x14x4xbf16>
    %20 = vector.shape_cast %19 : vector<14x14x4xbf16> to vector<196x4xbf16>
    %21 = tpu.concatenate %4, %6, %8, %10, %12, %14, %16, %18, %20 in 1 : vector<196x4xbf16>, vector<196x4xbf16>, vector<196x4xbf16>, vector<196x4xbf16>, vector<196x4xbf16>, vector<196x4xbf16>, vector<196x4xbf16>, vector<196x4xbf16>, vector<196x4xbf16> -> vector<196x36xbf16>
    %c0_3 = arith.constant 0 : index
    %c0_4 = arith.constant 0 : index
    %22 = vector.load %arg2[%c0_3, %c0_4] : memref<36x8xbf16, #tpu.memory_space<vmem>>, vector<36x8xbf16>
    %cst = arith.constant dense<0.000000e+00> : vector<196x8xf32>
    %23 = tpu.matmul %21, %22, %cst {dimension_numbers = #tpu.dot_dimension_numbers<[1], [0], [0], [1], [0, 0, 1, 1], [], []>} : vector<196x36xbf16>, vector<36x8xbf16>, vector<196x8xf32> -> vector<196x8xf32>
    %c0_5 = arith.constant 0 : index
    %c0_6 = arith.constant 0 : index
    %24 = vector.load %arg3[%c0_5, %c0_6] : memref<1x8xf32, #tpu.memory_space<vmem>>, vector<1x8xf32>
    %25 = vector.broadcast %24 : vector<1x8xf32> to vector<196x8xf32>
    %26 = arith.addf %23, %25 : vector<196x8xf32>
    %cst_7 = arith.constant dense<0.000000e+00> : vector<8xf32>
    %27 = vector.multi_reduction <add>, %26, %cst_7 [0] : vector<196x8xf32> to vector<8xf32>
    %28 = vector.shape_cast %27 : vector<8xf32> to vector<1x8xf32>
    %29 = arith.mulf %26, %26 : vector<196x8xf32>
    %cst_8 = arith.constant dense<0.000000e+00> : vector<8xf32>
    %30 = vector.multi_reduction <add>, %29, %cst_8 [0] : vector<196x8xf32> to vector<8xf32>
    %31 = vector.shape_cast %30 : vector<8xf32> to vector<1x8xf32>
    %32 = tpu.concatenate %28, %31 in 0 : vector<1x8xf32>, vector<1x8xf32> -> vector<2x8xf32>
    %c0_9 = arith.constant 0 : index
    %c0_10 = arith.constant 0 : index
    %c0_11 = arith.constant 0 : index
    %33 = vector.load %arg5[%c0_9, %c0_10, %c0_11] : memref<1x2x8xf32, #tpu.memory_space<vmem>>, vector<1x2x8xf32>
    %34 = vector.shape_cast %33 : vector<1x2x8xf32> to vector<2x8xf32>
    %35 = vector.shape_cast %32 : vector<2x8xf32> to vector<1x2x8xf32>
    tpu.vector_store %arg5[%c0_9, %c0_10, %c0_11], %35 {strides = array<i32>} : memref<1x2x8xf32, #tpu.memory_space<vmem>>, vector<1x2x8xf32>,
    %36 = vector.shape_cast %26 : vector<196x8xf32> to vector<14x14x8xf32>
    %c0_12 = arith.constant 0 : index
    %c0_13 = arith.constant 0 : index
    %c0_14 = arith.constant 0 : index
    %c0_15 = arith.constant 0 : index
    %37 = vector.load %arg4[%c0_12, %c0_13, %c0_14, %c0_15] : memref<1x14x14x8xf32, #tpu.memory_space<vmem>>, vector<1x14x14x8xf32>
    %38 = vector.shape_cast %37 : vector<1x14x14x8xf32> to vector<14x14x8xf32>
    %39 = vector.shape_cast %36 : vector<14x14x8xf32> to vector<1x14x14x8xf32>
    tpu.vector_store %arg4[%c0_12, %c0_13, %c0_14, %c0_15], %39 {strides = array<i32>} : memref<1x14x14x8xf32, #tpu.memory_space<vmem>>, vector<1x14x14x8xf32>,
    return
  }
  func.func @transform_0(%arg0: i32) -> (i32, i32, i32, i32) {
    %c0_i32 = arith.constant 0 : i32
    %c0_i32_0 = arith.constant 0 : i32
    %c0_i32_1 = arith.constant 0 : i32
    %c0_i32_2 = arith.constant 0 : i32
    return %arg0, %c0_i32, %c0_i32_0, %c0_i32_1 : i32, i32, i32, i32
  }
  func.func @transform_1(%arg0: i32) -> (i32, i32) {
    %c0_i32 = arith.constant 0 : i32
    %c0_i32_0 = arith.constant 0 : i32
    %c0_i32_1 = arith.constant 0 : i32
    return %c0_i32, %c0_i32_0 : i32, i32
  }
  func.func @transform_2(%arg0: i32) -> (i32, i32) {
    %c0_i32 = arith.constant 0 : i32
    %c0_i32_0 = arith.constant 0 : i32
    %c0_i32_1 = arith.constant 0 : i32
    return %c0_i32, %c0_i32_0 : i32, i32
  }
  func.func @transform_3(%arg0: i32) -> (i32, i32, i32, i32) {
    %c0_i32 = arith.constant 0 : i32
    %c0_i32_0 = arith.constant 0 : i32
    %c0_i32_1 = arith.constant 0 : i32
    %c0_i32_2 = arith.constant 0 : i32
    return %arg0, %c0_i32, %c0_i32_0, %c0_i32_1 : i32, i32, i32, i32
  }
  func.func @transform_4(%arg0: i32) -> (i32, i32, i32) {
    %c0_i32 = arith.constant 0 : i32
    %c0_i32_0 = arith.constant 0 : i32
    %c0_i32_1 = arith.constant 0 : i32
    return %arg0, %c0_i32, %c0_i32_0 : i32, i32, i32
  }
}

module attributes {stable_mosaic.version = 11 : i64} {
  func.func @_bn_relu_conv2_kernel(%arg0: i32, %arg1: memref<1x14x14x8xf32, #tpu.memory_space<vmem>>, %arg2: memref<1x8xf32, #tpu.memory_space<vmem>>, %arg3: memref<1x8xf32, #tpu.memory_space<vmem>>, %arg4: memref<72x8xbf16, #tpu.memory_space<vmem>>, %arg5: memref<1x8xf32, #tpu.memory_space<vmem>>, %arg6: memref<1x12x12x8xf32, #tpu.memory_space<vmem>>, %arg7: memref<1x2x8xf32, #tpu.memory_space<vmem>>) attributes {dimension_semantics = [#tpu.dimension_semantics<parallel>], iteration_bounds = array<i64: 2>, scalar_prefetch = 0 : i64, scratch_operands = 0 : i64, tpu.core_type = #tpu.core_type<tc>, window_params = [{transform_indices = @transform_0, window_bounds = array<i64: 1, 14, 14, 8>}, {pipeline_mode = #tpu.pipeline_mode<synchronous>, transform_indices = @transform_1, window_bounds = array<i64: 1, 8>}, {pipeline_mode = #tpu.pipeline_mode<synchronous>, transform_indices = @transform_2, window_bounds = array<i64: 1, 8>}, {pipeline_mode = #tpu.pipeline_mode<synchronous>, transform_indices = @transform_3, window_bounds = array<i64: 72, 8>}, {pipeline_mode = #tpu.pipeline_mode<synchronous>, transform_indices = @transform_4, window_bounds = array<i64: 1, 8>}, {transform_indices = @transform_5, window_bounds = array<i64: 1, 12, 12, 8>}, {transform_indices = @transform_6, window_bounds = array<i64: 1, 2, 8>}]} {
    %c0 = arith.constant 0 : index
    %c0_0 = arith.constant 0 : index
    %0 = vector.load %arg2[%c0, %c0_0] : memref<1x8xf32, #tpu.memory_space<vmem>>, vector<1x8xf32>
    %1 = vector.shape_cast %0 : vector<1x8xf32> to vector<1x1x8xf32>
    %c0_1 = arith.constant 0 : index
    %c0_2 = arith.constant 0 : index
    %2 = vector.load %arg3[%c0_1, %c0_2] : memref<1x8xf32, #tpu.memory_space<vmem>>, vector<1x8xf32>
    %3 = vector.shape_cast %2 : vector<1x8xf32> to vector<1x1x8xf32>
    %c0_3 = arith.constant 0 : index
    %c0_4 = arith.constant 0 : index
    %c0_5 = arith.constant 0 : index
    %c0_6 = arith.constant 0 : index
    %4 = vector.load %arg1[%c0_3, %c0_4, %c0_5, %c0_6] : memref<1x14x14x8xf32, #tpu.memory_space<vmem>>, vector<1x14x14x8xf32>
    %5 = vector.shape_cast %4 : vector<1x14x14x8xf32> to vector<14x14x8xf32>
    %6 = vector.broadcast %1 : vector<1x1x8xf32> to vector<14x14x8xf32>
    %7 = arith.mulf %5, %6 : vector<14x14x8xf32>
    %8 = vector.broadcast %3 : vector<1x1x8xf32> to vector<14x14x8xf32>
    %9 = arith.addf %7, %8 : vector<14x14x8xf32>
    %cst = arith.constant 0.000000e+00 : f32
    %10 = vector.broadcast %cst : f32 to vector<14x14x8xf32>
    %11 = arith.maximumf %9, %10 : vector<14x14x8xf32>
    %12 = arith.truncf %11 : vector<14x14x8xf32> to vector<14x14x8xbf16>
    %13 = vector.extract_strided_slice %12 {offsets = [0, 0, 0], sizes = [12, 12, 8], strides = [1, 1, 1]} : vector<14x14x8xbf16> to vector<12x12x8xbf16>
    %14 = vector.shape_cast %13 : vector<12x12x8xbf16> to vector<144x8xbf16>
    %15 = vector.extract_strided_slice %12 {offsets = [0, 1, 0], sizes = [12, 12, 8], strides = [1, 1, 1]} : vector<14x14x8xbf16> to vector<12x12x8xbf16>
    %16 = vector.shape_cast %15 : vector<12x12x8xbf16> to vector<144x8xbf16>
    %17 = vector.extract_strided_slice %12 {offsets = [0, 2, 0], sizes = [12, 12, 8], strides = [1, 1, 1]} : vector<14x14x8xbf16> to vector<12x12x8xbf16>
    %18 = vector.shape_cast %17 : vector<12x12x8xbf16> to vector<144x8xbf16>
    %19 = vector.extract_strided_slice %12 {offsets = [1, 0, 0], sizes = [12, 12, 8], strides = [1, 1, 1]} : vector<14x14x8xbf16> to vector<12x12x8xbf16>
    %20 = vector.shape_cast %19 : vector<12x12x8xbf16> to vector<144x8xbf16>
    %21 = vector.extract_strided_slice %12 {offsets = [1, 1, 0], sizes = [12, 12, 8], strides = [1, 1, 1]} : vector<14x14x8xbf16> to vector<12x12x8xbf16>
    %22 = vector.shape_cast %21 : vector<12x12x8xbf16> to vector<144x8xbf16>
    %23 = vector.extract_strided_slice %12 {offsets = [1, 2, 0], sizes = [12, 12, 8], strides = [1, 1, 1]} : vector<14x14x8xbf16> to vector<12x12x8xbf16>
    %24 = vector.shape_cast %23 : vector<12x12x8xbf16> to vector<144x8xbf16>
    %25 = vector.extract_strided_slice %12 {offsets = [2, 0, 0], sizes = [12, 12, 8], strides = [1, 1, 1]} : vector<14x14x8xbf16> to vector<12x12x8xbf16>
    %26 = vector.shape_cast %25 : vector<12x12x8xbf16> to vector<144x8xbf16>
    %27 = vector.extract_strided_slice %12 {offsets = [2, 1, 0], sizes = [12, 12, 8], strides = [1, 1, 1]} : vector<14x14x8xbf16> to vector<12x12x8xbf16>
    %28 = vector.shape_cast %27 : vector<12x12x8xbf16> to vector<144x8xbf16>
    %29 = vector.extract_strided_slice %12 {offsets = [2, 2, 0], sizes = [12, 12, 8], strides = [1, 1, 1]} : vector<14x14x8xbf16> to vector<12x12x8xbf16>
    %30 = vector.shape_cast %29 : vector<12x12x8xbf16> to vector<144x8xbf16>
    %31 = tpu.concatenate %14, %16, %18, %20, %22, %24, %26, %28, %30 in 1 : vector<144x8xbf16>, vector<144x8xbf16>, vector<144x8xbf16>, vector<144x8xbf16>, vector<144x8xbf16>, vector<144x8xbf16>, vector<144x8xbf16>, vector<144x8xbf16>, vector<144x8xbf16> -> vector<144x72xbf16>
    %c0_7 = arith.constant 0 : index
    %c0_8 = arith.constant 0 : index
    %32 = vector.load %arg4[%c0_7, %c0_8] : memref<72x8xbf16, #tpu.memory_space<vmem>>, vector<72x8xbf16>
    %cst_9 = arith.constant dense<0.000000e+00> : vector<144x8xf32>
    %33 = tpu.matmul %31, %32, %cst_9 {dimension_numbers = #tpu.dot_dimension_numbers<[1], [0], [0], [1], [0, 0, 1, 1], [], []>} : vector<144x72xbf16>, vector<72x8xbf16>, vector<144x8xf32> -> vector<144x8xf32>
    %c0_10 = arith.constant 0 : index
    %c0_11 = arith.constant 0 : index
    %34 = vector.load %arg5[%c0_10, %c0_11] : memref<1x8xf32, #tpu.memory_space<vmem>>, vector<1x8xf32>
    %35 = vector.broadcast %34 : vector<1x8xf32> to vector<144x8xf32>
    %36 = arith.addf %33, %35 : vector<144x8xf32>
    %cst_12 = arith.constant dense<0.000000e+00> : vector<8xf32>
    %37 = vector.multi_reduction <add>, %36, %cst_12 [0] : vector<144x8xf32> to vector<8xf32>
    %38 = vector.shape_cast %37 : vector<8xf32> to vector<1x8xf32>
    %39 = arith.mulf %36, %36 : vector<144x8xf32>
    %cst_13 = arith.constant dense<0.000000e+00> : vector<8xf32>
    %40 = vector.multi_reduction <add>, %39, %cst_13 [0] : vector<144x8xf32> to vector<8xf32>
    %41 = vector.shape_cast %40 : vector<8xf32> to vector<1x8xf32>
    %42 = tpu.concatenate %38, %41 in 0 : vector<1x8xf32>, vector<1x8xf32> -> vector<2x8xf32>
    %c0_14 = arith.constant 0 : index
    %c0_15 = arith.constant 0 : index
    %c0_16 = arith.constant 0 : index
    %43 = vector.load %arg7[%c0_14, %c0_15, %c0_16] : memref<1x2x8xf32, #tpu.memory_space<vmem>>, vector<1x2x8xf32>
    %44 = vector.shape_cast %43 : vector<1x2x8xf32> to vector<2x8xf32>
    %45 = vector.shape_cast %42 : vector<2x8xf32> to vector<1x2x8xf32>
    tpu.vector_store %arg7[%c0_14, %c0_15, %c0_16], %45 {strides = array<i32>} : memref<1x2x8xf32, #tpu.memory_space<vmem>>, vector<1x2x8xf32>,
    %46 = vector.shape_cast %36 : vector<144x8xf32> to vector<12x12x8xf32>
    %c0_17 = arith.constant 0 : index
    %c0_18 = arith.constant 0 : index
    %c0_19 = arith.constant 0 : index
    %c0_20 = arith.constant 0 : index
    %47 = vector.load %arg6[%c0_17, %c0_18, %c0_19, %c0_20] : memref<1x12x12x8xf32, #tpu.memory_space<vmem>>, vector<1x12x12x8xf32>
    %48 = vector.shape_cast %47 : vector<1x12x12x8xf32> to vector<12x12x8xf32>
    %49 = vector.shape_cast %46 : vector<12x12x8xf32> to vector<1x12x12x8xf32>
    tpu.vector_store %arg6[%c0_17, %c0_18, %c0_19, %c0_20], %49 {strides = array<i32>} : memref<1x12x12x8xf32, #tpu.memory_space<vmem>>, vector<1x12x12x8xf32>,
    return
  }
  func.func @transform_0(%arg0: i32) -> (i32, i32, i32, i32) {
    %c0_i32 = arith.constant 0 : i32
    %c0_i32_0 = arith.constant 0 : i32
    %c0_i32_1 = arith.constant 0 : i32
    %c0_i32_2 = arith.constant 0 : i32
    return %arg0, %c0_i32, %c0_i32_0, %c0_i32_1 : i32, i32, i32, i32
  }
  func.func @transform_1(%arg0: i32) -> (i32, i32) {
    %c0_i32 = arith.constant 0 : i32
    %c0_i32_0 = arith.constant 0 : i32
    %c0_i32_1 = arith.constant 0 : i32
    return %c0_i32, %c0_i32_0 : i32, i32
  }
  func.func @transform_2(%arg0: i32) -> (i32, i32) {
    %c0_i32 = arith.constant 0 : i32
    %c0_i32_0 = arith.constant 0 : i32
    %c0_i32_1 = arith.constant 0 : i32
    return %c0_i32, %c0_i32_0 : i32, i32
  }
  func.func @transform_3(%arg0: i32) -> (i32, i32) {
    %c0_i32 = arith.constant 0 : i32
    %c0_i32_0 = arith.constant 0 : i32
    %c0_i32_1 = arith.constant 0 : i32
    return %c0_i32, %c0_i32_0 : i32, i32
  }
  func.func @transform_4(%arg0: i32) -> (i32, i32) {
    %c0_i32 = arith.constant 0 : i32
    %c0_i32_0 = arith.constant 0 : i32
    %c0_i32_1 = arith.constant 0 : i32
    return %c0_i32, %c0_i32_0 : i32, i32
  }
  func.func @transform_5(%arg0: i32) -> (i32, i32, i32, i32) {
    %c0_i32 = arith.constant 0 : i32
    %c0_i32_0 = arith.constant 0 : i32
    %c0_i32_1 = arith.constant 0 : i32
    %c0_i32_2 = arith.constant 0 : i32
    return %arg0, %c0_i32, %c0_i32_0, %c0_i32_1 : i32, i32, i32, i32
  }
  func.func @transform_6(%arg0: i32) -> (i32, i32, i32) {
    %c0_i32 = arith.constant 0 : i32
    %c0_i32_0 = arith.constant 0 : i32
    %c0_i32_1 = arith.constant 0 : i32
    return %arg0, %c0_i32, %c0_i32_0 : i32, i32, i32
  }
}

module attributes {stable_mosaic.version = 11 : i64} {
  func.func @_bn_relu_kernel(%arg0: i32, %arg1: memref<1x12x12x8xf32, #tpu.memory_space<vmem>>, %arg2: memref<1x8xf32, #tpu.memory_space<vmem>>, %arg3: memref<1x8xf32, #tpu.memory_space<vmem>>, %arg4: memref<1x12x12x8xf32, #tpu.memory_space<vmem>>) attributes {dimension_semantics = [#tpu.dimension_semantics<parallel>], iteration_bounds = array<i64: 2>, scalar_prefetch = 0 : i64, scratch_operands = 0 : i64, tpu.core_type = #tpu.core_type<tc>, window_params = [{transform_indices = @transform_0, window_bounds = array<i64: 1, 12, 12, 8>}, {pipeline_mode = #tpu.pipeline_mode<synchronous>, transform_indices = @transform_1, window_bounds = array<i64: 1, 8>}, {pipeline_mode = #tpu.pipeline_mode<synchronous>, transform_indices = @transform_2, window_bounds = array<i64: 1, 8>}, {transform_indices = @transform_3, window_bounds = array<i64: 1, 12, 12, 8>}]} {
    %c0 = arith.constant 0 : index
    %c0_0 = arith.constant 0 : index
    %0 = vector.load %arg2[%c0, %c0_0] : memref<1x8xf32, #tpu.memory_space<vmem>>, vector<1x8xf32>
    %1 = vector.shape_cast %0 : vector<1x8xf32> to vector<1x1x8xf32>
    %c0_1 = arith.constant 0 : index
    %c0_2 = arith.constant 0 : index
    %2 = vector.load %arg3[%c0_1, %c0_2] : memref<1x8xf32, #tpu.memory_space<vmem>>, vector<1x8xf32>
    %3 = vector.shape_cast %2 : vector<1x8xf32> to vector<1x1x8xf32>
    %c0_3 = arith.constant 0 : index
    %c0_4 = arith.constant 0 : index
    %c0_5 = arith.constant 0 : index
    %c0_6 = arith.constant 0 : index
    %4 = vector.load %arg1[%c0_3, %c0_4, %c0_5, %c0_6] : memref<1x12x12x8xf32, #tpu.memory_space<vmem>>, vector<1x12x12x8xf32>
    %5 = vector.shape_cast %4 : vector<1x12x12x8xf32> to vector<12x12x8xf32>
    %6 = vector.broadcast %1 : vector<1x1x8xf32> to vector<12x12x8xf32>
    %7 = arith.mulf %5, %6 : vector<12x12x8xf32>
    %8 = vector.broadcast %3 : vector<1x1x8xf32> to vector<12x12x8xf32>
    %9 = arith.addf %7, %8 : vector<12x12x8xf32>
    %cst = arith.constant 0.000000e+00 : f32
    %10 = vector.broadcast %cst : f32 to vector<12x12x8xf32>
    %11 = arith.maximumf %9, %10 : vector<12x12x8xf32>
    %c0_7 = arith.constant 0 : index
    %c0_8 = arith.constant 0 : index
    %c0_9 = arith.constant 0 : index
    %c0_10 = arith.constant 0 : index
    %12 = vector.load %arg4[%c0_7, %c0_8, %c0_9, %c0_10] : memref<1x12x12x8xf32, #tpu.memory_space<vmem>>, vector<1x12x12x8xf32>
    %13 = vector.shape_cast %12 : vector<1x12x12x8xf32> to vector<12x12x8xf32>
    %14 = vector.shape_cast %11 : vector<12x12x8xf32> to vector<1x12x12x8xf32>
    tpu.vector_store %arg4[%c0_7, %c0_8, %c0_9, %c0_10], %14 {strides = array<i32>} : memref<1x12x12x8xf32, #tpu.memory_space<vmem>>, vector<1x12x12x8xf32>,
    return
  }
  func.func @transform_0(%arg0: i32) -> (i32, i32, i32, i32) {
    %c0_i32 = arith.constant 0 : i32
    %c0_i32_0 = arith.constant 0 : i32
    %c0_i32_1 = arith.constant 0 : i32
    %c0_i32_2 = arith.constant 0 : i32
    return %arg0, %c0_i32, %c0_i32_0, %c0_i32_1 : i32, i32, i32, i32
  }
  func.func @transform_1(%arg0: i32) -> (i32, i32) {
    %c0_i32 = arith.constant 0 : i32
    %c0_i32_0 = arith.constant 0 : i32
    %c0_i32_1 = arith.constant 0 : i32
    return %c0_i32, %c0_i32_0 : i32, i32
  }
  func.func @transform_2(%arg0: i32) -> (i32, i32) {
    %c0_i32 = arith.constant 0 : i32
    %c0_i32_0 = arith.constant 0 : i32
    %c0_i32_1 = arith.constant 0 : i32
    return %c0_i32, %c0_i32_0 : i32, i32
  }
  func.func @transform_3(%arg0: i32) -> (i32, i32, i32, i32) {
    %c0_i32 = arith.constant 0 : i32
    %c0_i32_0 = arith.constant 0 : i32
    %c0_i32_1 = arith.constant 0 : i32
    %c0_i32_2 = arith.constant 0 : i32
    return %arg0, %c0_i32, %c0_i32_0, %c0_i32_1 : i32, i32, i32, i32
  }
}

</mosaic_0001>

<llo_original>
// kernel: encoder_block.5
$region0: #{encoder_block.5}
  #allocation0 [shape = 'u32[]', space=smem, size = 0x4, offset = 0x4, fixed_abs, tag = 'smem constant byte address 0x4 - core index']
  #allocation1 [shape = 'u32[144,128]{1,0:T(1,128)}', space=vmem, size = 0x12000, scoped, tag = 'internal scratch']
  %s0 = inlined_call_operand.vmem [shape: f32[2,12,12,8], index: 0, kind: input, shape index: {}]
  %s1 = inlined_call_operand.vmem [shape: f32[1,8], index: 1, kind: input, shape index: {}]
  %s2 = inlined_call_operand.vmem [shape: f32[1,8], index: 2, kind: input, shape index: {}]
  %s3 = inlined_call_operand.vmem [shape: f32[2,12,12,8], index: 3, kind: output, shape index: {}]
  %s4 = sld [smem:[#allocation0]]
  $region45: #{encoder_block.5} parent=0
    _
  %s6 = ssub.s32 1, %s4
  %s7 = scalar_select 0, %s6, %s4
  loop: start=0, step=1, limit=4
  $region2: #{encoder_block.5} parent=0 // loop_pre_header
    _
  $region3: #{encoder_block.5} parent=0 // loop_header
    %s9 = sphi 0, %s13
    %p10 = scmp.ge.s32.totalorder %s9, 4
    %s19 = sphi 0, %s21
    %s22 = sphi 0, %s19
    %s23 = sphi 0, %s22
    %s39 = sphi 0, %s23
    %s43 = sphi 0, %s43
    %s45 = sphi 0, %s43
    %s46 = sphi 0, %s45
    %s60 = sphi 0, %s46
    %s64 = sphi 0, %s64
    %s66 = sphi 0, %s64
    %s67 = sphi 0, %s66
    %s81 = sphi 0, %s67
    %s87 = sphi 0, %s89
    %s90 = sphi 0, %s87
    %s91 = sphi 0, %s90
    %s107 = sphi 0, %s91
  $region4: #{encoder_block.5} parent=0 // loop_header_branch
    %12 = sbr.rel (%p10) target = $region8
  $region5: #{encoder_block.5} parent=0 // loop_body
    %s14 = ssub.s32 %s9, 1
    %s15 = ssub.s32 %s9, 2
    %s16 = sadd.s32 %s9, 1
    %s17 = ssub.s32 %s9, %s16
    %p18 = scmp.eq.s32.totalorder %s17, 0
    %s20 = sadd.s32 %s19, 1
    %s21 = scalar_select %p18, %s19, %s20
    %p24 = pneg %p18
    %p25 = scmp.eq.s32.totalorder %s9, 1
    %p26 = por %p24, %p25
    %p27 = scmp.ne.s32.totalorder %s19, %s22
    %p28 = scmp.eq.s32.totalorder %s9, 0
    %p29 = por %p27, %p28
    %p30 = scmp.ne.s32.totalorder %s19, %s22
    %p31 = scmp.eq.s32.totalorder %s14, 1
    %p32 = por %p30, %p31
    %p33 = scmp.ne.s32.totalorder %s22, %s23
    %p34 = scmp.eq.s32.totalorder %s14, 0
    %p35 = por %p33, %p34
    %p36 = scmp.ne.s32.totalorder %s22, %s23
    %p37 = scmp.eq.s32.totalorder %s15, 1
    %p38 = por %p36, %p37
    %p40 = scmp.ne.s32.totalorder %s23, %s39
    %p41 = scmp.eq.s32.totalorder %s15, 0
    %p42 = por %p40, %p41
    %s44 = sadd.s32 %s43, 1
    %p47 = scmp.eq.s32.totalorder %s9, 1
    %p48 = scmp.ne.s32.totalorder %s43, %s45
    %p49 = scmp.eq.s32.totalorder %s9, 0
    %p50 = por %p48, %p49
    %p51 = scmp.ne.s32.totalorder %s43, %s45
    %p52 = scmp.eq.s32.totalorder %s14, 1
    %p53 = por %p51, %p52
    %p54 = scmp.ne.s32.totalorder %s45, %s46
    %p55 = scmp.eq.s32.totalorder %s14, 0
    %p56 = por %p54, %p55
    %p57 = scmp.ne.s32.totalorder %s45, %s46
    %p58 = scmp.eq.s32.totalorder %s15, 1
    %p59 = por %p57, %p58
    %p61 = scmp.ne.s32.totalorder %s46, %s60
    %p62 = scmp.eq.s32.totalorder %s15, 0
    %p63 = por %p61, %p62
    %s65 = sadd.s32 %s64, 1
    %p68 = scmp.eq.s32.totalorder %s9, 1
    %p69 = scmp.ne.s32.totalorder %s64, %s66
    %p70 = scmp.eq.s32.totalorder %s9, 0
    %p71 = por %p69, %p70
    %p72 = scmp.ne.s32.totalorder %s64, %s66
    %p73 = scmp.eq.s32.totalorder %s14, 1
    %p74 = por %p72, %p73
    %p75 = scmp.ne.s32.totalorder %s66, %s67
    %p76 = scmp.eq.s32.totalorder %s14, 0
    %p77 = por %p75, %p76
    %p78 = scmp.ne.s32.totalorder %s66, %s67
    %p79 = scmp.eq.s32.totalorder %s15, 1
    %p80 = por %p78, %p79
    %p82 = scmp.ne.s32.totalorder %s67, %s81
    %p83 = scmp.eq.s32.totalorder %s15, 0
    %p84 = por %p82, %p83
    %s85 = ssub.s32 %s9, %s16
    %p86 = scmp.eq.s32.totalorder %s85, 0
    %s88 = sadd.s32 %s87, 1
    %s89 = scalar_select %p86, %s87, %s88
    %p92 = pneg %p86
    %p93 = scmp.eq.s32.totalorder %s9, 1
    %p94 = por %p92, %p93
    %p95 = scmp.ne.s32.totalorder %s87, %s90
    %p96 = scmp.eq.s32.totalorder %s9, 0
    %p97 = por %p95, %p96
    %p98 = scmp.ne.s32.totalorder %s87, %s90
    %p99 = scmp.eq.s32.totalorder %s14, 1
    %p100 = por %p98, %p99
    %p101 = scmp.ne.s32.totalorder %s90, %s91
    %p102 = scmp.eq.s32.totalorder %s14, 0
    %p103 = por %p101, %p102
    %p104 = scmp.ne.s32.totalorder %s90, %s91
    %p105 = scmp.eq.s32.totalorder %s15, 1
    %p106 = por %p104, %p105
    %p108 = scmp.ne.s32.totalorder %s91, %s107
    %p109 = scmp.eq.s32.totalorder %s15, 0
    %p110 = por %p108, %p109
    %p111 = scmp.le.s32.totalorder 1, %s9
    %p112 = scmp.lt.s32.totalorder %s9, 3
    %p113 = pnand %p111, %p112
    %p114 = pneg %p113
    // Predicated region
    $region9: #{encoder_block.5} parent=5 // pred_check
      _
    $region10: #{encoder_block.5} parent=5 // pred_check_branch
      %116 = sbr.rel (%p113) target = $region12
    $region11: #{encoder_block.5} parent=5 // pred_region
      %s117 = ssub.s32 %s9, 1
      // Predicated region
      $region13: #{encoder_block.5} parent=11 // pred_check
        %p118 = pneg %p56
      $region14: #{encoder_block.5} parent=11 // pred_check_branch
        %120 = sbr.rel (%p118) target = $region16
      $region15: #{encoder_block.5} parent=11 // pred_region
        _
      $region16: #{encoder_block.5} parent=11 // pred_fallthru
        _
      // Predicated region
      $region17: #{encoder_block.5} parent=11 // pred_check
        %p121 = pneg %p77
      $region18: #{encoder_block.5} parent=11 // pred_check_branch
        %123 = sbr.rel (%p121) target = $region20
      $region19: #{encoder_block.5} parent=11 // pred_region
        _
      $region20: #{encoder_block.5} parent=11 // pred_fallthru
        _
    $region12: #{encoder_block.5} parent=5 // pred_fallthru
      _
    %p124 = scmp.lt.s32.totalorder %s9, 2
    // Predicated region
    $region21: #{encoder_block.5} parent=5 // pred_check
      %p125 = pneg %p124
    $region22: #{encoder_block.5} parent=5 // pred_check_branch
      %127 = sbr.rel (%p125) target = $region24
    $region23: #{encoder_block.5} parent=5 // pred_region
      // Predicated region
      $region25: #{encoder_block.5} parent=23 // pred_check
        %p128 = pneg %p29
      $region26: #{encoder_block.5} parent=23 // pred_check_branch
        %130 = sbr.rel (%p128) target = $region28
      $region27: #{encoder_block.5} parent=23 // pred_region
        %p131 = scmp.lt.s32.totalorder %s9, 1
        %s132 = scalar_select %p131, %s9, 1
        %s133 = smul.addr %s132, 24
        %s134 = smul.addr %s133, 8
        %s135 = scalar_lea.vmem %s0, %s134
      $region28: #{encoder_block.5} parent=23 // pred_fallthru
        _
    $region24: #{encoder_block.5} parent=5 // pred_fallthru
      _
    %p136 = scmp.le.s32.totalorder 1, %s9
    %p137 = scmp.lt.s32.totalorder %s9, 3
    %p138 = pnand %p136, %p137
    %p139 = pneg %p138
    // Predicated region
    $region29: #{encoder_block.5} parent=5 // pred_check
      _
    $region30: #{encoder_block.5} parent=5 // pred_check_branch
      %141 = sbr.rel (%p138) target = $region32
    $region31: #{encoder_block.5} parent=5 // pred_region
      %s142 = ssub.s32 %s9, 1
      %p143 = scmp.lt.s32.totalorder %s14, 1
      %s144 = scalar_select %p143, %s14, 1
      %s145 = smul.addr %s144, 24
      %s146 = smul.addr %s145, 8
      %s147 = scalar_lea.vmem %s0, %s146
      %p148 = pneg %p35
      %p149 = pneg %p32
      %p150 = pneg %p56
      %p151 = pneg %p53
      %p152 = pneg %p77
      %p153 = pneg %p74
      %p154 = pneg %p103
      %p155 = pneg %p100
      %p156 = scmp.lt.s32.totalorder %s14, 1
      %s157 = scalar_select %p156, %s14, 1
      %s158 = smul.addr %s157, 24
      %s159 = smul.addr %s158, 8
      %s160 = scalar_lea.vmem %s3, %s159
      %p161 = scmp.lt.s32.totalorder %s14, 1
      %s162 = scalar_select %p161, %s14, 1
      %s163 = smul.addr %s162, 24
      %s164 = smul.addr %s163, 8
      %s165 = scalar_lea.vmem %s0, %s164
      %p166 = scmp.lt.s32.totalorder %s14, 1
      %s167 = scalar_select %p166, %s14, 1
      %s168 = smul.addr %s167, 24
      %s169 = smul.addr %s168, 8
      %s170 = scalar_lea.vmem %s3, %s169
      %v171 = vld [vmem:[%s1] sm:$0x1]
      %v172 = vld [vmem:[%s2] sm:$0x1]
      %v173 = vld [vmem:[%s165] sm:$0xff]
      %v174 = vld [vmem:[%s165 + $0x8] sm:$0xf]
      %v175 = vld [vmem:[%s165 + $0x10] sm:$0xff]
      %v176 = vld [vmem:[%s165 + $0x18] sm:$0xf]
      %v177 = vld [vmem:[%s165 + $0x20] sm:$0xff]
      %v178 = vld [vmem:[%s165 + $0x28] sm:$0xf]
      %v179 = vld [vmem:[%s165 + $0x30] sm:$0xff]
      %v180 = vld [vmem:[%s165 + $0x38] sm:$0xf]
      %v181 = vld [vmem:[%s165 + $0x40] sm:$0xff]
      %v182 = vld [vmem:[%s165 + $0x48] sm:$0xf]
      %v183 = vld [vmem:[%s165 + $0x50] sm:$0xff]
      %v184 = vld [vmem:[%s165 + $0x58] sm:$0xf]
      %v185 = vld [vmem:[%s165 + $0x60] sm:$0xff]
      %v186 = vld [vmem:[%s165 + $0x68] sm:$0xf]
      %v187 = vld [vmem:[%s165 + $0x70] sm:$0xff]
      %v188 = vld [vmem:[%s165 + $0x78] sm:$0xf]
      %v189 = vld [vmem:[%s165 + $0x80] sm:$0xff]
      %v190 = vld [vmem:[%s165 + $0x88] sm:$0xf]
      %v191 = vld [vmem:[%s165 + $0x90] sm:$0xff]
      %v192 = vld [vmem:[%s165 + $0x98] sm:$0xf]
      %v193 = vld [vmem:[%s165 + $0xa0] sm:$0xff]
      %v194 = vld [vmem:[%s165 + $0xa8] sm:$0xf]
      %v195 = vld [vmem:[%s165 + $0xb0] sm:$0xff]
      %v196 = vld [vmem:[%s165 + $0xb8] sm:$0xf]
      %v198 = vlaneseq
      %v199 = vshrl.u32 %v198, 7
      %v200 = vsub.s32 0, %v199
      %v201 = vrot.slane %v171, %v200
      %v203 = vmul.f32 %v173, %v201
      %v204 = vmul.f32 %v174, %v201
      %v205 = vmul.f32 %v175, %v201
      %v206 = vmul.f32 %v176, %v201
      %v207 = vmul.f32 %v177, %v201
      %v208 = vmul.f32 %v178, %v201
      %v209 = vmul.f32 %v179, %v201
      %v210 = vmul.f32 %v180, %v201
      %v211 = vmul.f32 %v181, %v201
      %v212 = vmul.f32 %v182, %v201
      %v213 = vmul.f32 %v183, %v201
      %v214 = vmul.f32 %v184, %v201
      %v215 = vmul.f32 %v185, %v201
      %v216 = vmul.f32 %v186, %v201
      %v217 = vmul.f32 %v187, %v201
      %v218 = vmul.f32 %v188, %v201
      %v219 = vmul.f32 %v189, %v201
      %v220 = vmul.f32 %v190, %v201
      %v221 = vmul.f32 %v191, %v201
      %v222 = vmul.f32 %v192, %v201
      %v223 = vmul.f32 %v193, %v201
      %v224 = vmul.f32 %v194, %v201
      %v225 = vmul.f32 %v195, %v201
      %v226 = vmul.f32 %v196, %v201
      %v228 = vlaneseq
      %v229 = vshrl.u32 %v228, 7
      %v230 = vsub.s32 0, %v229
      %v231 = vrot.slane %v172, %v230
      %v233 = vadd.f32 %v203, %v231
      %v234 = vadd.f32 %v204, %v231
      %v235 = vadd.f32 %v205, %v231
      %v236 = vadd.f32 %v206, %v231
      %v237 = vadd.f32 %v207, %v231
      %v238 = vadd.f32 %v208, %v231
      %v239 = vadd.f32 %v209, %v231
      %v240 = vadd.f32 %v210, %v231
      %v241 = vadd.f32 %v211, %v231
      %v242 = vadd.f32 %v212, %v231
      %v243 = vadd.f32 %v213, %v231
      %v244 = vadd.f32 %v214, %v231
      %v245 = vadd.f32 %v215, %v231
      %v246 = vadd.f32 %v216, %v231
      %v247 = vadd.f32 %v217, %v231
      %v248 = vadd.f32 %v218, %v231
      %v249 = vadd.f32 %v219, %v231
      %v250 = vadd.f32 %v220, %v231
      %v251 = vadd.f32 %v221, %v231
      %v252 = vadd.f32 %v222, %v231
      %v253 = vadd.f32 %v223, %v231
      %v254 = vadd.f32 %v224, %v231
      %v255 = vadd.f32 %v225, %v231
      %v256 = vadd.f32 %v226, %v231
      %v257 = vmax.f32 %v233, 0.0
      %v258 = vmax.f32 %v234, 0.0
      %v259 = vmax.f32 %v235, 0.0
      %v260 = vmax.f32 %v236, 0.0
      %v261 = vmax.f32 %v237, 0.0
      %v262 = vmax.f32 %v238, 0.0
      %v263 = vmax.f32 %v239, 0.0
      %v264 = vmax.f32 %v240, 0.0
      %v265 = vmax.f32 %v241, 0.0
      %v266 = vmax.f32 %v242, 0.0
      %v267 = vmax.f32 %v243, 0.0
      %v268 = vmax.f32 %v244, 0.0
      %v269 = vmax.f32 %v245, 0.0
      %v270 = vmax.f32 %v246, 0.0
      %v271 = vmax.f32 %v247, 0.0
      %v272 = vmax.f32 %v248, 0.0
      %v273 = vmax.f32 %v249, 0.0
      %v274 = vmax.f32 %v250, 0.0
      %v275 = vmax.f32 %v251, 0.0
      %v276 = vmax.f32 %v252, 0.0
      %v277 = vmax.f32 %v253, 0.0
      %v278 = vmax.f32 %v254, 0.0
      %v279 = vmax.f32 %v255, 0.0
      %v280 = vmax.f32 %v256, 0.0
      %vm281 = vcmask 64512
      %282 = vst.msk [vmem:[%s170] sm:$0xff] %vm281, %v257
      %vm283 = vcmask 60416
      %284 = vst.msk [vmem:[%s170 + $0x8] sm:$0xf] %vm283, %v258
      %285 = vst.msk [vmem:[%s170 + $0x10] sm:$0xff] %vm281, %v259
      %286 = vst.msk [vmem:[%s170 + $0x18] sm:$0xf] %vm283, %v260
      %287 = vst.msk [vmem:[%s170 + $0x20] sm:$0xff] %vm281, %v261
      %288 = vst.msk [vmem:[%s170 + $0x28] sm:$0xf] %vm283, %v262
      %289 = vst.msk [vmem:[%s170 + $0x30] sm:$0xff] %vm281, %v263
      %290 = vst.msk [vmem:[%s170 + $0x38] sm:$0xf] %vm283, %v264
      %291 = vst.msk [vmem:[%s170 + $0x40] sm:$0xff] %vm281, %v265
      %292 = vst.msk [vmem:[%s170 + $0x48] sm:$0xf] %vm283, %v266
      %293 = vst.msk [vmem:[%s170 + $0x50] sm:$0xff] %vm281, %v267
      %294 = vst.msk [vmem:[%s170 + $0x58] sm:$0xf] %vm283, %v268
      %295 = vst.msk [vmem:[%s170 + $0x60] sm:$0xff] %vm281, %v269
      %296 = vst.msk [vmem:[%s170 + $0x68] sm:$0xf] %vm283, %v270
      %297 = vst.msk [vmem:[%s170 + $0x70] sm:$0xff] %vm281, %v271
      %298 = vst.msk [vmem:[%s170 + $0x78] sm:$0xf] %vm283, %v272
      %299 = vst.msk [vmem:[%s170 + $0x80] sm:$0xff] %vm281, %v273
      %300 = vst.msk [vmem:[%s170 + $0x88] sm:$0xf] %vm283, %v274
      %301 = vst.msk [vmem:[%s170 + $0x90] sm:$0xff] %vm281, %v275
      %302 = vst.msk [vmem:[%s170 + $0x98] sm:$0xf] %vm283, %v276
      %303 = vst.msk [vmem:[%s170 + $0xa0] sm:$0xff] %vm281, %v277
      %304 = vst.msk [vmem:[%s170 + $0xa8] sm:$0xf] %vm283, %v278
      %305 = vst.msk [vmem:[%s170 + $0xb0] sm:$0xff] %vm281, %v279
      %306 = vst.msk [vmem:[%s170 + $0xb8] sm:$0xf] %vm283, %v280
      %p307 = scmp.lt.s32.totalorder %s14, 1
      %s308 = scalar_select %p307, %s14, 1
      %s309 = smul.addr %s308, 24
      %s310 = smul.addr %s309, 8
      %s311 = scalar_lea.vmem %s3, %s310
      // Predicated region
      $region33: #{encoder_block.5} parent=31 // pred_check
        %p312 = pneg %p100
      $region34: #{encoder_block.5} parent=31 // pred_check_branch
        %314 = sbr.rel (%p312) target = $region36
      $region35: #{encoder_block.5} parent=31 // pred_region
        _
      $region36: #{encoder_block.5} parent=31 // pred_fallthru
        _
    $region32: #{encoder_block.5} parent=5 // pred_fallthru
      _
    %p315 = scmp.le.s32.totalorder 2, %s9
    // Predicated region
    $region37: #{encoder_block.5} parent=5 // pred_check
      %p316 = pneg %p315
    $region38: #{encoder_block.5} parent=5 // pred_check_branch
      %318 = sbr.rel (%p316) target = $region40
    $region39: #{encoder_block.5} parent=5 // pred_region
      %s319 = ssub.s32 %s9, 2
      // Predicated region
      $region41: #{encoder_block.5} parent=39 // pred_check
        %p320 = pneg %p106
      $region42: #{encoder_block.5} parent=39 // pred_check_branch
        %322 = sbr.rel (%p320) target = $region44
      $region43: #{encoder_block.5} parent=39 // pred_region
        %p323 = scmp.lt.s32.totalorder %s15, 1
        %s324 = scalar_select %p323, %s15, 1
        %s325 = smul.addr %s324, 24
        %s326 = smul.addr %s325, 8
        %s327 = scalar_lea.vmem %s3, %s326
      $region44: #{encoder_block.5} parent=39 // pred_fallthru
        _
    $region40: #{encoder_block.5} parent=5 // pred_fallthru
      _
  $region6: #{encoder_block.5} parent=0 // loop_footer
    %s13 = sadd.s32 1, %s9
  $region7: #{encoder_block.5} parent=0 // loop_footer_branch
    %8 = sbr.rel target = $region3
  $region8: #{encoder_block.5} parent=0 // loop_exit
    _

// kernel: encoder_block.4
$region0: #{encoder_block.4}
  #allocation0 [shape = 'u32[]', space=smem, size = 0x4, offset = 0x4, fixed_abs, tag = 'smem constant byte address 0x4 - core index']
  #allocation1 [shape = 'u32[144,128]{1,0:T(1,128)}', space=vmem, size = 0x12000, scoped, tag = 'internal scratch']
  %s0 = inlined_call_operand.vmem [shape: f32[2,14,14,8], index: 0, kind: input, shape index: {}]
  %s1 = inlined_call_operand.vmem [shape: f32[1,8], index: 1, kind: input, shape index: {}]
  %s2 = inlined_call_operand.vmem [shape: f32[1,8], index: 2, kind: input, shape index: {}]
  %s3 = inlined_call_operand.vmem [shape: bf16[72,8], index: 3, kind: input, shape index: {}]
  %s4 = inlined_call_operand.vmem [shape: f32[1,8], index: 4, kind: input, shape index: {}]
  %s5 = inlined_call_operand.vmem [shape: f32[2,12,12,8], index: 5, kind: output, shape index: {0}]
  %s6 = inlined_call_operand.vmem [shape: f32[2,2,8], index: 6, kind: output, shape index: {1}]
  %7 = xla_tuple %s5, %s6
  %s8 = sld [smem:[#allocation0]]
  $region61: #{encoder_block.4} parent=0
    _
  %s10 = ssub.s32 1, %s8
  %s11 = scalar_select 0, %s10, %s8
  loop: start=0, step=1, limit=4
  $region2: #{encoder_block.4} parent=0 // loop_pre_header
    _
  $region3: #{encoder_block.4} parent=0 // loop_header
    %s13 = sphi 0, %s17
    %p14 = scmp.ge.s32.totalorder %s13, 4
    %s23 = sphi 0, %s25
    %s26 = sphi 0, %s23
    %s27 = sphi 0, %s26
    %s43 = sphi 0, %s27
    %s47 = sphi 0, %s47
    %s49 = sphi 0, %s47
    %s50 = sphi 0, %s49
    %s64 = sphi 0, %s50
    %s68 = sphi 0, %s68
    %s70 = sphi 0, %s68
    %s71 = sphi 0, %s70
    %s85 = sphi 0, %s71
    %s89 = sphi 0, %s89
    %s91 = sphi 0, %s89
    %s92 = sphi 0, %s91
    %s106 = sphi 0, %s92
    %s110 = sphi 0, %s110
    %s112 = sphi 0, %s110
    %s113 = sphi 0, %s112
    %s127 = sphi 0, %s113
    %s133 = sphi 0, %s135
    %s136 = sphi 0, %s133
    %s137 = sphi 0, %s136
    %s153 = sphi 0, %s137
    %s159 = sphi 0, %s161
    %s162 = sphi 0, %s159
    %s163 = sphi 0, %s162
    %s179 = sphi 0, %s163
  $region4: #{encoder_block.4} parent=0 // loop_header_branch
    %16 = sbr.rel (%p14) target = $region8
  $region5: #{encoder_block.4} parent=0 // loop_body
    %s18 = ssub.s32 %s13, 1
    %s19 = ssub.s32 %s13, 2
    %s20 = sadd.s32 %s13, 1
    %s21 = ssub.s32 %s13, %s20
    %p22 = scmp.eq.s32.totalorder %s21, 0
    %s24 = sadd.s32 %s23, 1
    %s25 = scalar_select %p22, %s23, %s24
    %p28 = pneg %p22
    %p29 = scmp.eq.s32.totalorder %s13, 1
    %p30 = por %p28, %p29
    %p31 = scmp.ne.s32.totalorder %s23, %s26
    %p32 = scmp.eq.s32.totalorder %s13, 0
    %p33 = por %p31, %p32
    %p34 = scmp.ne.s32.totalorder %s23, %s26
    %p35 = scmp.eq.s32.totalorder %s18, 1
    %p36 = por %p34, %p35
    %p37 = scmp.ne.s32.totalorder %s26, %s27
    %p38 = scmp.eq.s32.totalorder %s18, 0
    %p39 = por %p37, %p38
    %p40 = scmp.ne.s32.totalorder %s26, %s27
    %p41 = scmp.eq.s32.totalorder %s19, 1
    %p42 = por %p40, %p41
    %p44 = scmp.ne.s32.totalorder %s27, %s43
    %p45 = scmp.eq.s32.totalorder %s19, 0
    %p46 = por %p44, %p45
    %s48 = sadd.s32 %s47, 1
    %p51 = scmp.eq.s32.totalorder %s13, 1
    %p52 = scmp.ne.s32.totalorder %s47, %s49
    %p53 = scmp.eq.s32.totalorder %s13, 0
    %p54 = por %p52, %p53
    %p55 = scmp.ne.s32.totalorder %s47, %s49
    %p56 = scmp.eq.s32.totalorder %s18, 1
    %p57 = por %p55, %p56
    %p58 = scmp.ne.s32.totalorder %s49, %s50
    %p59 = scmp.eq.s32.totalorder %s18, 0
    %p60 = por %p58, %p59
    %p61 = scmp.ne.s32.totalorder %s49, %s50
    %p62 = scmp.eq.s32.totalorder %s19, 1
    %p63 = por %p61, %p62
    %p65 = scmp.ne.s32.totalorder %s50, %s64
    %p66 = scmp.eq.s32.totalorder %s19, 0
    %p67 = por %p65, %p66
    %s69 = sadd.s32 %s68, 1
    %p72 = scmp.eq.s32.totalorder %s13, 1
    %p73 = scmp.ne.s32.totalorder %s68, %s70
    %p74 = scmp.eq.s32.totalorder %s13, 0
    %p75 = por %p73, %p74
    %p76 = scmp.ne.s32.totalorder %s68, %s70
    %p77 = scmp.eq.s32.totalorder %s18, 1
    %p78 = por %p76, %p77
    %p79 = scmp.ne.s32.totalorder %s70, %s71
    %p80 = scmp.eq.s32.totalorder %s18, 0
    %p81 = por %p79, %p80
    %p82 = scmp.ne.s32.totalorder %s70, %s71
    %p83 = scmp.eq.s32.totalorder %s19, 1
    %p84 = por %p82, %p83
    %p86 = scmp.ne.s32.totalorder %s71, %s85
    %p87 = scmp.eq.s32.totalorder %s19, 0
    %p88 = por %p86, %p87
    %s90 = sadd.s32 %s89, 1
    %p93 = scmp.eq.s32.totalorder %s13, 1
    %p94 = scmp.ne.s32.totalorder %s89, %s91
    %p95 = scmp.eq.s32.totalorder %s13, 0
    %p96 = por %p94, %p95
    %p97 = scmp.ne.s32.totalorder %s89, %s91
    %p98 = scmp.eq.s32.totalorder %s18, 1
    %p99 = por %p97, %p98
    %p100 = scmp.ne.s32.totalorder %s91, %s92
    %p101 = scmp.eq.s32.totalorder %s18, 0
    %p102 = por %p100, %p101
    %p103 = scmp.ne.s32.totalorder %s91, %s92
    %p104 = scmp.eq.s32.totalorder %s19, 1
    %p105 = por %p103, %p104
    %p107 = scmp.ne.s32.totalorder %s92, %s106
    %p108 = scmp.eq.s32.totalorder %s19, 0
    %p109 = por %p107, %p108
    %s111 = sadd.s32 %s110, 1
    %p114 = scmp.eq.s32.totalorder %s13, 1
    %p115 = scmp.ne.s32.totalorder %s110, %s112
    %p116 = scmp.eq.s32.totalorder %s13, 0
    %p117 = por %p115, %p116
    %p118 = scmp.ne.s32.totalorder %s110, %s112
    %p119 = scmp.eq.s32.totalorder %s18, 1
    %p120 = por %p118, %p119
    %p121 = scmp.ne.s32.totalorder %s112, %s113
    %p122 = scmp.eq.s32.totalorder %s18, 0
    %p123 = por %p121, %p122
    %p124 = scmp.ne.s32.totalorder %s112, %s113
    %p125 = scmp.eq.s32.totalorder %s19, 1
    %p126 = por %p124, %p125
    %p128 = scmp.ne.s32.totalorder %s113, %s127
    %p129 = scmp.eq.s32.totalorder %s19, 0
    %p130 = por %p128, %p129
    %s131 = ssub.s32 %s13, %s20
    %p132 = scmp.eq.s32.totalorder %s131, 0
    %s134 = sadd.s32 %s133, 1
    %s135 = scalar_select %p132, %s133, %s134
    %p138 = pneg %p132
    %p139 = scmp.eq.s32.totalorder %s13, 1
    %p140 = por %p138, %p139
    %p141 = scmp.ne.s32.totalorder %s133, %s136
    %p142 = scmp.eq.s32.totalorder %s13, 0
    %p143 = por %p141, %p142
    %p144 = scmp.ne.s32.totalorder %s133, %s136
    %p145 = scmp.eq.s32.totalorder %s18, 1
    %p146 = por %p144, %p145
    %p147 = scmp.ne.s32.totalorder %s136, %s137
    %p148 = scmp.eq.s32.totalorder %s18, 0
    %p149 = por %p147, %p148
    %p150 = scmp.ne.s32.totalorder %s136, %s137
    %p151 = scmp.eq.s32.totalorder %s19, 1
    %p152 = por %p150, %p151
    %p154 = scmp.ne.s32.totalorder %s137, %s153
    %p155 = scmp.eq.s32.totalorder %s19, 0
    %p156 = por %p154, %p155
    %s157 = ssub.s32 %s13, %s20
    %p158 = scmp.eq.s32.totalorder %s157, 0
    %s160 = sadd.s32 %s159, 1
    %s161 = scalar_select %p158, %s159, %s160
    %p164 = pneg %p158
    %p165 = scmp.eq.s32.totalorder %s13, 1
    %p166 = por %p164, %p165
    %p167 = scmp.ne.s32.totalorder %s159, %s162
    %p168 = scmp.eq.s32.totalorder %s13, 0
    %p169 = por %p167, %p168
    %p170 = scmp.ne.s32.totalorder %s159, %s162
    %p171 = scmp.eq.s32.totalorder %s18, 1
    %p172 = por %p170, %p171
    %p173 = scmp.ne.s32.totalorder %s162, %s163
    %p174 = scmp.eq.s32.totalorder %s18, 0
    %p175 = por %p173, %p174
    %p176 = scmp.ne.s32.totalorder %s162, %s163
    %p177 = scmp.eq.s32.totalorder %s19, 1
    %p178 = por %p176, %p177
    %p180 = scmp.ne.s32.totalorder %s163, %s179
    %p181 = scmp.eq.s32.totalorder %s19, 0
    %p182 = por %p180, %p181
    %p183 = scmp.le.s32.totalorder 1, %s13
    %p184 = scmp.lt.s32.totalorder %s13, 3
    %p185 = pnand %p183, %p184
    %p186 = pneg %p185
    // Predicated region
    $region9: #{encoder_block.4} parent=5 // pred_check
      _
    $region10: #{encoder_block.4} parent=5 // pred_check_branch
      %188 = sbr.rel (%p185) target = $region12
    $region11: #{encoder_block.4} parent=5 // pred_region
      %s189 = ssub.s32 %s13, 1
      // Predicated region
      $region13: #{encoder_block.4} parent=11 // pred_check
        %p190 = pneg %p60
      $region14: #{encoder_block.4} parent=11 // pred_check_branch
        %192 = sbr.rel (%p190) target = $region16
      $region15: #{encoder_block.4} parent=11 // pred_region
        _
      $region16: #{encoder_block.4} parent=11 // pred_fallthru
        _
      // Predicated region
      $region17: #{encoder_block.4} parent=11 // pred_check
        %p193 = pneg %p81
      $region18: #{encoder_block.4} parent=11 // pred_check_branch
        %195 = sbr.rel (%p193) target = $region20
      $region19: #{encoder_block.4} parent=11 // pred_region
        _
      $region20: #{encoder_block.4} parent=11 // pred_fallthru
        _
      // Predicated region
      $region21: #{encoder_block.4} parent=11 // pred_check
        %p196 = pneg %p102
      $region22: #{encoder_block.4} parent=11 // pred_check_branch
        %198 = sbr.rel (%p196) target = $region24
      $region23: #{encoder_block.4} parent=11 // pred_region
        _
      $region24: #{encoder_block.4} parent=11 // pred_fallthru
        _
      // Predicated region
      $region25: #{encoder_block.4} parent=11 // pred_check
        %p199 = pneg %p123
      $region26: #{encoder_block.4} parent=11 // pred_check_branch
        %201 = sbr.rel (%p199) target = $region28
      $region27: #{encoder_block.4} parent=11 // pred_region
        _
      $region28: #{encoder_block.4} parent=11 // pred_fallthru
        _
    $region12: #{encoder_block.4} parent=5 // pred_fallthru
      _
    %p202 = scmp.lt.s32.totalorder %s13, 2
    // Predicated region
    $region29: #{encoder_block.4} parent=5 // pred_check
      %p203 = pneg %p202
    $region30: #{encoder_block.4} parent=5 // pred_check_branch
      %205 = sbr.rel (%p203) target = $region32
    $region31: #{encoder_block.4} parent=5 // pred_region
      // Predicated region
      $region33: #{encoder_block.4} parent=31 // pred_check
        %p206 = pneg %p33
      $region34: #{encoder_block.4} parent=31 // pred_check_branch
        %208 = sbr.rel (%p206) target = $region36
      $region35: #{encoder_block.4} parent=31 // pred_region
        %p209 = scmp.lt.s32.totalorder %s13, 1
        %s210 = scalar_select %p209, %s13, 1
        %s211 = smul.addr %s210, 28
        %s212 = smul.addr %s211, 8
        %s213 = scalar_lea.vmem %s0, %s212
      $region36: #{encoder_block.4} parent=31 // pred_fallthru
        _
    $region32: #{encoder_block.4} parent=5 // pred_fallthru
      _
    %p214 = scmp.le.s32.totalorder 1, %s13
    %p215 = scmp.lt.s32.totalorder %s13, 3
    %p216 = pnand %p214, %p215
    %p217 = pneg %p216
    // Predicated region
    $region37: #{encoder_block.4} parent=5 // pred_check
      _
    $region38: #{encoder_block.4} parent=5 // pred_check_branch
      %219 = sbr.rel (%p216) target = $region40
    $region39: #{encoder_block.4} parent=5 // pred_region
      %s220 = ssub.s32 %s13, 1
      %p221 = scmp.lt.s32.totalorder %s18, 1
      %s222 = scalar_select %p221, %s18, 1
      %s223 = smul.addr %s222, 28
      %s224 = smul.addr %s223, 8
      %s225 = scalar_lea.vmem %s0, %s224
      %p226 = pneg %p39
      %p227 = pneg %p36
      %p228 = pneg %p60
      %p229 = pneg %p57
      %p230 = pneg %p81
      %p231 = pneg %p78
      %p232 = pneg %p102
      %p233 = pneg %p99
      %p234 = pneg %p123
      %p235 = pneg %p120
      %p236 = pneg %p149
      %p237 = pneg %p146
      %p238 = scmp.lt.s32.totalorder %s18, 1
      %s239 = scalar_select %p238, %s18, 1
      %s240 = smul.addr %s239, 24
      %s241 = smul.addr %s240, 8
      %s242 = scalar_lea.vmem %s5, %s241
      %p243 = pneg %p175
      %p244 = pneg %p172
      %p245 = scmp.lt.s32.totalorder %s18, 1
      %s246 = scalar_select %p245, %s18, 1
      %s247 = smul.addr %s246, 2
      %s248 = scalar_lea.vmem %s6, %s247
      %p249 = scmp.lt.s32.totalorder %s18, 1
      %s250 = scalar_select %p249, %s18, 1
      %s251 = smul.addr %s250, 28
      %s252 = smul.addr %s251, 8
      %s253 = scalar_lea.vmem %s0, %s252
      %p254 = scmp.lt.s32.totalorder %s18, 1
      %s255 = scalar_select %p254, %s18, 1
      %s256 = smul.addr %s255, 24
      %s257 = smul.addr %s256, 8
      %s258 = scalar_lea.vmem %s5, %s257
      %p259 = scmp.lt.s32.totalorder %s18, 1
      %s260 = scalar_select %p259, %s18, 1
      %s261 = smul.addr %s260, 2
      %s262 = scalar_lea.vmem %s6, %s261
      %v264 = vld [vmem:[%s1] sm:$0x1]
      %v265 = vld [vmem:[%s2] sm:$0x1]
      %v266 = vld [vmem:[%s253] sm:$0xff]
      %v267 = vld [vmem:[%s253 + $0x8] sm:$0x3f]
      %v268 = vld [vmem:[%s253 + $0x10] sm:$0xff]
      %v269 = vld [vmem:[%s253 + $0x18] sm:$0x3f]
      %v270 = vld [vmem:[%s253 + $0x20] sm:$0xff]
      %v271 = vld [vmem:[%s253 + $0x28] sm:$0x3f]
      %v272 = vld [vmem:[%s253 + $0x30] sm:$0xff]
      %v273 = vld [vmem:[%s253 + $0x38] sm:$0x3f]
      %v274 = vld [vmem:[%s253 + $0x40] sm:$0xff]
      %v275 = vld [vmem:[%s253 + $0x48] sm:$0x3f]
      %v276 = vld [vmem:[%s253 + $0x50] sm:$0xff]
      %v277 = vld [vmem:[%s253 + $0x58] sm:$0x3f]
      %v278 = vld [vmem:[%s253 + $0x60] sm:$0xff]
      %v279 = vld [vmem:[%s253 + $0x68] sm:$0x3f]
      %v280 = vld [vmem:[%s253 + $0x70] sm:$0xff]
      %v281 = vld [vmem:[%s253 + $0x78] sm:$0x3f]
      %v282 = vld [vmem:[%s253 + $0x80] sm:$0xff]
      %v283 = vld [vmem:[%s253 + $0x88] sm:$0x3f]
      %v284 = vld [vmem:[%s253 + $0x90] sm:$0xff]
      %v285 = vld [vmem:[%s253 + $0x98] sm:$0x3f]
      %v286 = vld [vmem:[%s253 + $0xa0] sm:$0xff]
      %v287 = vld [vmem:[%s253 + $0xa8] sm:$0x3f]
      %v288 = vld [vmem:[%s253 + $0xb0] sm:$0xff]
      %v289 = vld [vmem:[%s253 + $0xb8] sm:$0x3f]
      %v290 = vld [vmem:[%s253 + $0xc0] sm:$0xff]
      %v291 = vld [vmem:[%s253 + $0xc8] sm:$0x3f]
      %v292 = vld [vmem:[%s253 + $0xd0] sm:$0xff]
      %v293 = vld [vmem:[%s253 + $0xd8] sm:$0x3f]
      %v295 = vlaneseq
      %v296 = vshrl.u32 %v295, 7
      %v297 = vsub.s32 0, %v296
      %v298 = vrot.slane %v264, %v297
      %v300 = vmul.f32 %v266, %v298
      %v301 = vmul.f32 %v267, %v298
      %v302 = vmul.f32 %v268, %v298
      %v303 = vmul.f32 %v269, %v298
      %v304 = vmul.f32 %v270, %v298
      %v305 = vmul.f32 %v271, %v298
      %v306 = vmul.f32 %v272, %v298
      %v307 = vmul.f32 %v273, %v298
      %v308 = vmul.f32 %v274, %v298
      %v309 = vmul.f32 %v275, %v298
      %v310 = vmul.f32 %v276, %v298
      %v311 = vmul.f32 %v277, %v298
      %v312 = vmul.f32 %v278, %v298
      %v313 = vmul.f32 %v279, %v298
      %v314 = vmul.f32 %v280, %v298
      %v315 = vmul.f32 %v281, %v298
      %v316 = vmul.f32 %v282, %v298
      %v317 = vmul.f32 %v283, %v298
      %v318 = vmul.f32 %v284, %v298
      %v319 = vmul.f32 %v285, %v298
      %v320 = vmul.f32 %v286, %v298
      %v321 = vmul.f32 %v287, %v298
      %v322 = vmul.f32 %v288, %v298
      %v323 = vmul.f32 %v289, %v298
      %v324 = vmul.f32 %v290, %v298
      %v325 = vmul.f32 %v291, %v298
      %v326 = vmul.f32 %v292, %v298
      %v327 = vmul.f32 %v293, %v298
      %v329 = vlaneseq
      %v330 = vshrl.u32 %v329, 7
      %v331 = vsub.s32 0, %v330
      %v332 = vrot.slane %v265, %v331
      %v334 = vadd.f32 %v300, %v332
      %v335 = vadd.f32 %v301, %v332
      %v336 = vadd.f32 %v302, %v332
      %v337 = vadd.f32 %v303, %v332
      %v338 = vadd.f32 %v304, %v332
      %v339 = vadd.f32 %v305, %v332
      %v340 = vadd.f32 %v306, %v332
      %v341 = vadd.f32 %v307, %v332
      %v342 = vadd.f32 %v308, %v332
      %v343 = vadd.f32 %v309, %v332
      %v344 = vadd.f32 %v310, %v332
      %v345 = vadd.f32 %v311, %v332
      %v346 = vadd.f32 %v312, %v332
      %v347 = vadd.f32 %v313, %v332
      %v348 = vadd.f32 %v314, %v332
      %v349 = vadd.f32 %v315, %v332
      %v350 = vadd.f32 %v316, %v332
      %v351 = vadd.f32 %v317, %v332
      %v352 = vadd.f32 %v318, %v332
      %v353 = vadd.f32 %v319, %v332
      %v354 = vadd.f32 %v320, %v332
      %v355 = vadd.f32 %v321, %v332
      %v356 = vadd.f32 %v322, %v332
      %v357 = vadd.f32 %v323, %v332
      %v358 = vadd.f32 %v324, %v332
      %v359 = vadd.f32 %v325, %v332
      %v360 = vadd.f32 %v326, %v332
      %v361 = vadd.f32 %v327, %v332
      %v362 = vmax.f32 %v334, 0.0
      %v363 = vmax.f32 %v335, 0.0
      %v364 = vmax.f32 %v336, 0.0
      %v365 = vmax.f32 %v337, 0.0
      %v366 = vmax.f32 %v338, 0.0
      %v367 = vmax.f32 %v339, 0.0
      %v368 = vmax.f32 %v340, 0.0
      %v369 = vmax.f32 %v341, 0.0
      %v370 = vmax.f32 %v342, 0.0
      %v371 = vmax.f32 %v343, 0.0
      %v372 = vmax.f32 %v344, 0.0
      %v373 = vmax.f32 %v345, 0.0
      %v374 = vmax.f32 %v346, 0.0
      %v375 = vmax.f32 %v347, 0.0
      %v376 = vmax.f32 %v348, 0.0
      %v377 = vmax.f32 %v349, 0.0
      %v378 = vmax.f32 %v350, 0.0
      %v379 = vmax.f32 %v351, 0.0
      %v380 = vmax.f32 %v352, 0.0
      %v381 = vmax.f32 %v353, 0.0
      %v382 = vmax.f32 %v354, 0.0
      %v383 = vmax.f32 %v355, 0.0
      %v384 = vmax.f32 %v356, 0.0
      %v385 = vmax.f32 %v357, 0.0
      %v386 = vmax.f32 %v358, 0.0
      %v387 = vmax.f32 %v359, 0.0
      %v388 = vmax.f32 %v360, 0.0
      %v389 = vmax.f32 %v361, 0.0
      %v390 = vpack.c.bf16 %v363, %v362
      %v391 = vpack.c.bf16 %v365, %v364
      %v392 = vpack.c.bf16 %v367, %v366
      %v393 = vpack.c.bf16 %v369, %v368
      %v394 = vpack.c.bf16 %v371, %v370
      %v395 = vpack.c.bf16 %v373, %v372
      %v396 = vpack.c.bf16 %v375, %v374
      %v397 = vpack.c.bf16 %v377, %v376
      %v398 = vpack.c.bf16 %v379, %v378
      %v399 = vpack.c.bf16 %v381, %v380
      %v400 = vpack.c.bf16 %v383, %v382
      %v401 = vpack.c.bf16 %v385, %v384
      %v402 = vpack.c.bf16 %v387, %v386
      %v403 = vpack.c.bf16 %v389, %v388
      %v416 = vcombine.high %v390, %v390
      %v418 = vunpack.c.l.s4 1983009808
      %v419 = vunpack.c.0.s8 %v418
      %v420 = vlaneseq
      %v421 = vshrl.u32 %v420, 7
      %v422 = vsub.s32 %v419, %v421
      %v423 = vrot.slane %v390, %v422
      %v425 = vunpack.c.l.s4 1983009808
      %v426 = vunpack.c.0.s8 %v425
      %v427 = vlaneseq
      %v428 = vshrl.u32 %v427, 7
      %v429 = vsub.s32 %v426, %v428
      %v430 = vrot.slane %v416, %v429
      %v431 = vcombine.high %v423, %v423
      %v432 = vcombine.high %v391, %v391
      %v434 = vunpack.c.l.s4 1983009808
      %v435 = vunpack.c.0.s8 %v434
      %v436 = vlaneseq
      %v437 = vshrl.u32 %v436, 7
      %v438 = vsub.s32 %v435, %v437
      %v439 = vrot.slane %v391, %v438
      %v441 = vunpack.c.l.s4 1983009808
      %v442 = vunpack.c.0.s8 %v441
      %v443 = vlaneseq
      %v444 = vshrl.u32 %v443, 7
      %v445 = vsub.s32 %v442, %v444
      %v446 = vrot.slane %v432, %v445
      %v447 = vcombine.high %v439, %v439
      %v448 = vcombine.high %v392, %v392
      %v450 = vunpack.c.l.s4 1983009808
      %v451 = vunpack.c.0.s8 %v450
      %v452 = vlaneseq
      %v453 = vshrl.u32 %v452, 7
      %v454 = vsub.s32 %v451, %v453
      %v455 = vrot.slane %v392, %v454
      %v457 = vunpack.c.l.s4 1983009808
      %v458 = vunpack.c.0.s8 %v457
      %v459 = vlaneseq
      %v460 = vshrl.u32 %v459, 7
      %v461 = vsub.s32 %v458, %v460
      %v462 = vrot.slane %v448, %v461
      %v463 = vcombine.high %v455, %v455
      %v464 = vcombine.high %v393, %v393
      %v466 = vunpack.c.l.s4 1983009808
      %v467 = vunpack.c.0.s8 %v466
      %v468 = vlaneseq
      %v469 = vshrl.u32 %v468, 7
      %v470 = vsub.s32 %v467, %v469
      %v471 = vrot.slane %v393, %v470
      %v473 = vunpack.c.l.s4 1983009808
      %v474 = vunpack.c.0.s8 %v473
      %v475 = vlaneseq
      %v476 = vshrl.u32 %v475, 7
      %v477 = vsub.s32 %v474, %v476
      %v478 = vrot.slane %v464, %v477
      %v479 = vcombine.high %v471, %v471
      %v480 = vcombine.high %v394, %v394
      %v482 = vunpack.c.l.s4 1983009808
      %v483 = vunpack.c.0.s8 %v482
      %v484 = vlaneseq
      %v485 = vshrl.u32 %v484, 7
      %v486 = vsub.s32 %v483, %v485
      %v487 = vrot.slane %v394, %v486
      %v489 = vunpack.c.l.s4 1983009808
      %v490 = vunpack.c.0.s8 %v489
      %v491 = vlaneseq
      %v492 = vshrl.u32 %v491, 7
      %v493 = vsub.s32 %v490, %v492
      %v494 = vrot.slane %v480, %v493
      %v495 = vcombine.high %v487, %v487
      %v496 = vcombine.high %v395, %v395
      %v498 = vunpack.c.l.s4 1983009808
      %v499 = vunpack.c.0.s8 %v498
      %v500 = vlaneseq
      %v501 = vshrl.u32 %v500, 7
      %v502 = vsub.s32 %v499, %v501
      %v503 = vrot.slane %v395, %v502
      %v505 = vunpack.c.l.s4 1983009808
      %v506 = vunpack.c.0.s8 %v505
      %v507 = vlaneseq
      %v508 = vshrl.u32 %v507, 7
      %v509 = vsub.s32 %v506, %v508
      %v510 = vrot.slane %v496, %v509
      %v511 = vcombine.high %v503, %v503
      %v512 = vcombine.high %v396, %v396
      %v514 = vunpack.c.l.s4 1983009808
      %v515 = vunpack.c.0.s8 %v514
      %v516 = vlaneseq
      %v517 = vshrl.u32 %v516, 7
      %v518 = vsub.s32 %v515, %v517
      %v519 = vrot.slane %v396, %v518
      %v521 = vunpack.c.l.s4 1983009808
      %v522 = vunpack.c.0.s8 %v521
      %v523 = vlaneseq
      %v524 = vshrl.u32 %v523, 7
      %v525 = vsub.s32 %v522, %v524
      %v526 = vrot.slane %v512, %v525
      %v527 = vcombine.high %v519, %v519
      %v528 = vcombine.high %v397, %v397
      %v530 = vunpack.c.l.s4 1983009808
      %v531 = vunpack.c.0.s8 %v530
      %v532 = vlaneseq
      %v533 = vshrl.u32 %v532, 7
      %v534 = vsub.s32 %v531, %v533
      %v535 = vrot.slane %v397, %v534
      %v537 = vunpack.c.l.s4 1983009808
      %v538 = vunpack.c.0.s8 %v537
      %v539 = vlaneseq
      %v540 = vshrl.u32 %v539, 7
      %v541 = vsub.s32 %v538, %v540
      %v542 = vrot.slane %v528, %v541
      %v543 = vcombine.high %v535, %v535
      %v544 = vcombine.high %v398, %v398
      %v546 = vunpack.c.l.s4 1983009808
      %v547 = vunpack.c.0.s8 %v546
      %v548 = vlaneseq
      %v549 = vshrl.u32 %v548, 7
      %v550 = vsub.s32 %v547, %v549
      %v551 = vrot.slane %v398, %v550
      %v553 = vunpack.c.l.s4 1983009808
      %v554 = vunpack.c.0.s8 %v553
      %v555 = vlaneseq
      %v556 = vshrl.u32 %v555, 7
      %v557 = vsub.s32 %v554, %v556
      %v558 = vrot.slane %v544, %v557
      %v559 = vcombine.high %v551, %v551
      %v560 = vcombine.high %v399, %v399
      %v562 = vunpack.c.l.s4 1983009808
      %v563 = vunpack.c.0.s8 %v562
      %v564 = vlaneseq
      %v565 = vshrl.u32 %v564, 7
      %v566 = vsub.s32 %v563, %v565
      %v567 = vrot.slane %v399, %v566
      %v569 = vunpack.c.l.s4 1983009808
      %v570 = vunpack.c.0.s8 %v569
      %v571 = vlaneseq
      %v572 = vshrl.u32 %v571, 7
      %v573 = vsub.s32 %v570, %v572
      %v574 = vrot.slane %v560, %v573
      %v575 = vcombine.high %v567, %v567
      %v576 = vcombine.high %v400, %v400
      %v578 = vunpack.c.l.s4 1983009808
      %v579 = vunpack.c.0.s8 %v578
      %v580 = vlaneseq
      %v581 = vshrl.u32 %v580, 7
      %v582 = vsub.s32 %v579, %v581
      %v583 = vrot.slane %v400, %v582
      %v585 = vunpack.c.l.s4 1983009808
      %v586 = vunpack.c.0.s8 %v585
      %v587 = vlaneseq
      %v588 = vshrl.u32 %v587, 7
      %v589 = vsub.s32 %v586, %v588
      %v590 = vrot.slane %v576, %v589
      %v591 = vcombine.high %v583, %v583
      %v592 = vcombine.high %v401, %v401
      %v594 = vunpack.c.l.s4 1983009808
      %v595 = vunpack.c.0.s8 %v594
      %v596 = vlaneseq
      %v597 = vshrl.u32 %v596, 7
      %v598 = vsub.s32 %v595, %v597
      %v599 = vrot.slane %v401, %v598
      %v601 = vunpack.c.l.s4 1983009808
      %v602 = vunpack.c.0.s8 %v601
      %v603 = vlaneseq
      %v604 = vshrl.u32 %v603, 7
      %v605 = vsub.s32 %v602, %v604
      %v606 = vrot.slane %v592, %v605
      %v607 = vcombine.high %v599, %v599
      %v608 = vcombine.high %v430, %v430
      %v609 = vcombine.high %v446, %v446
      %v610 = vcombine.high %v462, %v462
      %v611 = vcombine.high %v478, %v478
      %v612 = vcombine.high %v494, %v494
      %v613 = vcombine.high %v510, %v510
      %v614 = vcombine.high %v526, %v526
      %v615 = vcombine.high %v542, %v542
      %v616 = vcombine.high %v558, %v558
      %v617 = vcombine.high %v574, %v574
      %v618 = vcombine.high %v590, %v590
      %v619 = vcombine.high %v606, %v606
      %vm620 = vsmask.f32 1280
      %vm621 = vsmask.f32 3336
      %vm622 = vmor %vm620, %vm621
      %vm623 = vsmask.f32 5392
      %vm624 = vmor %vm622, %vm623
      %vm625 = vsmask.f32 7448
      %vm626 = vmor %vm624, %vm625
      %v628 = vshrl.u32 %v423, 16
      %v630 = vrot.slane %v628, 6
      %v631 = vshll.u32 %v423, 16
      %v633 = vrot.slane %v631, 7
      %v634 = vor.u32 %v630, %v633
      %v635 = vrot.slane %v634, 2
      %v637 = vshll.u32 %v431, 16
      %v639 = vrot.slane %v637, 7
      %v640 = vsel %vm626, %v635, %v639
      %v641 = vshrl.u32 %v431, 16
      %v643 = vrot.slane %v641, 6
      %v644 = vor.u32 %v643, %v639
      %v645 = vrot.slane %v644, 2
      %v647 = vshll.u32 %v430, 16
      %v649 = vrot.slane %v647, 7
      %v650 = vsel %vm626, %v645, %v649
      %v651 = vshrl.u32 %v430, 16
      %v653 = vrot.slane %v651, 6
      %v654 = vor.u32 %v653, %v649
      %v655 = vrot.slane %v654, 2
      %v657 = vshll.u32 %v608, 16
      %v659 = vrot.slane %v657, 7
      %v660 = vsel %vm626, %v655, %v659
      %v662 = vshrl.u32 %v439, 16
      %v664 = vrot.slane %v662, 6
      %v665 = vshll.u32 %v439, 16
      %v667 = vrot.slane %v665, 7
      %v668 = vor.u32 %v664, %v667
      %v669 = vrot.slane %v668, 2
      %v671 = vshll.u32 %v447, 16
      %v673 = vrot.slane %v671, 7
      %v674 = vsel %vm626, %v669, %v673
      %v675 = vshrl.u32 %v447, 16
      %v677 = vrot.slane %v675, 6
      %v678 = vor.u32 %v677, %v673
      %v679 = vrot.slane %v678, 2
      %v681 = vshll.u32 %v446, 16
      %v683 = vrot.slane %v681, 7
      %v684 = vsel %vm626, %v679, %v683
      %v685 = vshrl.u32 %v446, 16
      %v687 = vrot.slane %v685, 6
      %v688 = vor.u32 %v687, %v683
      %v689 = vrot.slane %v688, 2
      %v691 = vshll.u32 %v609, 16
      %v693 = vrot.slane %v691, 7
      %v694 = vsel %vm626, %v689, %v693
      %v696 = vshrl.u32 %v455, 16
      %v698 = vrot.slane %v696, 6
      %v699 = vshll.u32 %v455, 16
      %v701 = vrot.slane %v699, 7
      %v702 = vor.u32 %v698, %v701
      %v703 = vrot.slane %v702, 2
      %v705 = vshll.u32 %v463, 16
      %v707 = vrot.slane %v705, 7
      %v708 = vsel %vm626, %v703, %v707
      %v709 = vshrl.u32 %v463, 16
      %v711 = vrot.slane %v709, 6
      %v712 = vor.u32 %v711, %v707
      %v713 = vrot.slane %v712, 2
      %v715 = vshll.u32 %v462, 16
      %v717 = vrot.slane %v715, 7
      %v718 = vsel %vm626, %v713, %v717
      %v719 = vshrl.u32 %v462, 16
      %v721 = vrot.slane %v719, 6
      %v722 = vor.u32 %v721, %v717
      %v723 = vrot.slane %v722, 2
      %v725 = vshll.u32 %v610, 16
      %v727 = vrot.slane %v725, 7
      %v728 = vsel %vm626, %v723, %v727
      %v730 = vshrl.u32 %v471, 16
      %v732 = vrot.slane %v730, 6
      %v733 = vshll.u32 %v471, 16
      %v735 = vrot.slane %v733, 7
      %v736 = vor.u32 %v732, %v735
      %v737 = vrot.slane %v736, 2
      %v739 = vshll.u32 %v479, 16
      %v741 = vrot.slane %v739, 7
      %v742 = vsel %vm626, %v737, %v741
      %v743 = vshrl.u32 %v479, 16
      %v745 = vrot.slane %v743, 6
      %v746 = vor.u32 %v745, %v741
      %v747 = vrot.slane %v746, 2
      %v749 = vshll.u32 %v478, 16
      %v751 = vrot.slane %v749, 7
      %v752 = vsel %vm626, %v747, %v751
      %v753 = vshrl.u32 %v478, 16
      %v755 = vrot.slane %v753, 6
      %v756 = vor.u32 %v755, %v751
      %v757 = vrot.slane %v756, 2
      %v759 = vshll.u32 %v611, 16
      %v761 = vrot.slane %v759, 7
      %v762 = vsel %vm626, %v757, %v761
      %v764 = vshrl.u32 %v487, 16
      %v766 = vrot.slane %v764, 6
      %v767 = vshll.u32 %v487, 16
      %v769 = vrot.slane %v767, 7
      %v770 = vor.u32 %v766, %v769
      %v771 = vrot.slane %v770, 2
      %v773 = vshll.u32 %v495, 16
      %v775 = vrot.slane %v773, 7
      %v776 = vsel %vm626, %v771, %v775
      %v777 = vshrl.u32 %v495, 16
      %v779 = vrot.slane %v777, 6
      %v780 = vor.u32 %v779, %v775
      %v781 = vrot.slane %v780, 2
      %v783 = vshll.u32 %v494, 16
      %v785 = vrot.slane %v783, 7
      %v786 = vsel %vm626, %v781, %v785
      %v787 = vshrl.u32 %v494, 16
      %v789 = vrot.slane %v787, 6
      %v790 = vor.u32 %v789, %v785
      %v791 = vrot.slane %v790, 2
      %v793 = vshll.u32 %v612, 16
      %v795 = vrot.slane %v793, 7
      %v796 = vsel %vm626, %v791, %v795
      %v798 = vshrl.u32 %v503, 16
      %v800 = vrot.slane %v798, 6
      %v801 = vshll.u32 %v503, 16
      %v803 = vrot.slane %v801, 7
      %v804 = vor.u32 %v800, %v803
      %v805 = vrot.slane %v804, 2
      %v807 = vshll.u32 %v511, 16
      %v809 = vrot.slane %v807, 7
      %v810 = vsel %vm626, %v805, %v809
      %v811 = vshrl.u32 %v511, 16
      %v813 = vrot.slane %v811, 6
      %v814 = vor.u32 %v813, %v809
      %v815 = vrot.slane %v814, 2
      %v817 = vshll.u32 %v510, 16
      %v819 = vrot.slane %v817, 7
      %v820 = vsel %vm626, %v815, %v819
      %v821 = vshrl.u32 %v510, 16
      %v823 = vrot.slane %v821, 6
      %v824 = vor.u32 %v823, %v819
      %v825 = vrot.slane %v824, 2
      %v827 = vshll.u32 %v613, 16
      %v829 = vrot.slane %v827, 7
      %v830 = vsel %vm626, %v825, %v829
      %v832 = vshrl.u32 %v519, 16
      %v834 = vrot.slane %v832, 6
      %v835 = vshll.u32 %v519, 16
      %v837 = vrot.slane %v835, 7
      %v838 = vor.u32 %v834, %v837
      %v839 = vrot.slane %v838, 2
      %v841 = vshll.u32 %v527, 16
      %v843 = vrot.slane %v841, 7
      %v844 = vsel %vm626, %v839, %v843
      %v845 = vshrl.u32 %v527, 16
      %v847 = vrot.slane %v845, 6
      %v848 = vor.u32 %v847, %v843
      %v849 = vrot.slane %v848, 2
      %v851 = vshll.u32 %v526, 16
      %v853 = vrot.slane %v851, 7
      %v854 = vsel %vm626, %v849, %v853
      %v855 = vshrl.u32 %v526, 16
      %v857 = vrot.slane %v855, 6
      %v858 = vor.u32 %v857, %v853
      %v859 = vrot.slane %v858, 2
      %v861 = vshll.u32 %v614, 16
      %v863 = vrot.slane %v861, 7
      %v864 = vsel %vm626, %v859, %v863
      %v866 = vshrl.u32 %v535, 16
      %v868 = vrot.slane %v866, 6
      %v869 = vshll.u32 %v535, 16
      %v871 = vrot.slane %v869, 7
      %v872 = vor.u32 %v868, %v871
      %v873 = vrot.slane %v872, 2
      %v875 = vshll.u32 %v543, 16
      %v877 = vrot.slane %v875, 7
      %v878 = vsel %vm626, %v873, %v877
      %v879 = vshrl.u32 %v543, 16
      %v881 = vrot.slane %v879, 6
      %v882 = vor.u32 %v881, %v877
      %v883 = vrot.slane %v882, 2
      %v885 = vshll.u32 %v542, 16
      %v887 = vrot.slane %v885, 7
      %v888 = vsel %vm626, %v883, %v887
      %v889 = vshrl.u32 %v542, 16
      %v891 = vrot.slane %v889, 6
      %v892 = vor.u32 %v891, %v887
      %v893 = vrot.slane %v892, 2
      %v895 = vshll.u32 %v615, 16
      %v897 = vrot.slane %v895, 7
      %v898 = vsel %vm626, %v893, %v897
      %v900 = vshrl.u32 %v551, 16
      %v902 = vrot.slane %v900, 6
      %v903 = vshll.u32 %v551, 16
      %v905 = vrot.slane %v903, 7
      %v906 = vor.u32 %v902, %v905
      %v907 = vrot.slane %v906, 2
      %v909 = vshll.u32 %v559, 16
      %v911 = vrot.slane %v909, 7
      %v912 = vsel %vm626, %v907, %v911
      %v913 = vshrl.u32 %v559, 16
      %v915 = vrot.slane %v913, 6
      %v916 = vor.u32 %v915, %v911
      %v917 = vrot.slane %v916, 2
      %v919 = vshll.u32 %v558, 16
      %v921 = vrot.slane %v919, 7
      %v922 = vsel %vm626, %v917, %v921
      %v923 = vshrl.u32 %v558, 16
      %v925 = vrot.slane %v923, 6
      %v926 = vor.u32 %v925, %v921
      %v927 = vrot.slane %v926, 2
      %v929 = vshll.u32 %v616, 16
      %v931 = vrot.slane %v929, 7
      %v932 = vsel %vm626, %v927, %v931
      %v934 = vshrl.u32 %v567, 16
      %v936 = vrot.slane %v934, 6
      %v937 = vshll.u32 %v567, 16
      %v939 = vrot.slane %v937, 7
      %v940 = vor.u32 %v936, %v939
      %v941 = vrot.slane %v940, 2
      %v943 = vshll.u32 %v575, 16
      %v945 = vrot.slane %v943, 7
      %v946 = vsel %vm626, %v941, %v945
      %v947 = vshrl.u32 %v575, 16
      %v949 = vrot.slane %v947, 6
      %v950 = vor.u32 %v949, %v945
      %v951 = vrot.slane %v950, 2
      %v953 = vshll.u32 %v574, 16
      %v955 = vrot.slane %v953, 7
      %v956 = vsel %vm626, %v951, %v955
      %v957 = vshrl.u32 %v574, 16
      %v959 = vrot.slane %v957, 6
      %v960 = vor.u32 %v959, %v955
      %v961 = vrot.slane %v960, 2
      %v963 = vshll.u32 %v617, 16
      %v965 = vrot.slane %v963, 7
      %v966 = vsel %vm626, %v961, %v965
      %v968 = vshrl.u32 %v583, 16
      %v970 = vrot.slane %v968, 6
      %v971 = vshll.u32 %v583, 16
      %v973 = vrot.slane %v971, 7
      %v974 = vor.u32 %v970, %v973
      %v975 = vrot.slane %v974, 2
      %v977 = vshll.u32 %v591, 16
      %v979 = vrot.slane %v977, 7
      %v980 = vsel %vm626, %v975, %v979
      %v981 = vshrl.u32 %v591, 16
      %v983 = vrot.slane %v981, 6
      %v984 = vor.u32 %v983, %v979
      %v985 = vrot.slane %v984, 2
      %v987 = vshll.u32 %v590, 16
      %v989 = vrot.slane %v987, 7
      %v990 = vsel %vm626, %v985, %v989
      %v991 = vshrl.u32 %v590, 16
      %v993 = vrot.slane %v991, 6
      %v994 = vor.u32 %v993, %v989
      %v995 = vrot.slane %v994, 2
      %v997 = vshll.u32 %v618, 16
      %v999 = vrot.slane %v997, 7
      %v1000 = vsel %vm626, %v995, %v999
      %v1002 = vshrl.u32 %v599, 16
      %v1004 = vrot.slane %v1002, 6
      %v1005 = vshll.u32 %v599, 16
      %v1007 = vrot.slane %v1005, 7
      %v1008 = vor.u32 %v1004, %v1007
      %v1009 = vrot.slane %v1008, 2
      %v1011 = vshll.u32 %v607, 16
      %v1013 = vrot.slane %v1011, 7
      %v1014 = vsel %vm626, %v1009, %v1013
      %v1015 = vshrl.u32 %v607, 16
      %v1017 = vrot.slane %v1015, 6
      %v1018 = vor.u32 %v1017, %v1013
      %v1019 = vrot.slane %v1018, 2
      %v1021 = vshll.u32 %v606, 16
      %v1023 = vrot.slane %v1021, 7
      %v1024 = vsel %vm626, %v1019, %v1023
      %v1025 = vshrl.u32 %v606, 16
      %v1027 = vrot.slane %v1025, 6
      %v1028 = vor.u32 %v1027, %v1023
      %v1029 = vrot.slane %v1028, 2
      %v1031 = vshll.u32 %v619, 16
      %v1033 = vrot.slane %v1031, 7
      %v1034 = vsel %vm626, %v1029, %v1033
      %vm1035 = vcmask 1040384
      %vm1036 = vcmask 1042434
      %vm1037 = vmor %vm1035, %vm1036
      %vm1038 = vcmask 1044484
      %vm1039 = vmor %vm1037, %vm1038
      %vm1040 = vcmask 1046534
      %vm1041 = vmor %vm1039, %vm1040
      %v1042 = vrot.slane %v423, 7
      %v1043 = vrot.slane %v1042, 2
      %v1044 = vrot.slane %v431, 7
      %v1045 = vsel %vm1041, %v1043, %v1044
      %v1046 = vrot.slane %v1044, 2
      %v1047 = vrot.slane %v430, 7
      %v1048 = vsel %vm1041, %v1046, %v1047
      %v1049 = vrot.slane %v1047, 2
      %v1050 = vrot.slane %v608, 7
      %v1051 = vsel %vm1041, %v1049, %v1050
      %v1052 = vrot.slane %v439, 7
      %v1053 = vrot.slane %v1052, 2
      %v1054 = vrot.slane %v447, 7
      %v1055 = vsel %vm1041, %v1053, %v1054
      %v1056 = vrot.slane %v1054, 2
      %v1057 = vrot.slane %v446, 7
      %v1058 = vsel %vm1041, %v1056, %v1057
      %v1059 = vrot.slane %v1057, 2
      %v1060 = vrot.slane %v609, 7
      %v1061 = vsel %vm1041, %v1059, %v1060
      %v1062 = vrot.slane %v455, 7
      %v1063 = vrot.slane %v1062, 2
      %v1064 = vrot.slane %v463, 7
      %v1065 = vsel %vm1041, %v1063, %v1064
      %v1066 = vrot.slane %v1064, 2
      %v1067 = vrot.slane %v462, 7
      %v1068 = vsel %vm1041, %v1066, %v1067
      %v1069 = vrot.slane %v1067, 2
      %v1070 = vrot.slane %v610, 7
      %v1071 = vsel %vm1041, %v1069, %v1070
      %v1072 = vrot.slane %v471, 7
      %v1073 = vrot.slane %v1072, 2
      %v1074 = vrot.slane %v479, 7
      %v1075 = vsel %vm1041, %v1073, %v1074
      %v1076 = vrot.slane %v1074, 2
      %v1077 = vrot.slane %v478, 7
      %v1078 = vsel %vm1041, %v1076, %v1077
      %v1079 = vrot.slane %v1077, 2
      %v1080 = vrot.slane %v611, 7
      %v1081 = vsel %vm1041, %v1079, %v1080
      %v1082 = vrot.slane %v487, 7
      %v1083 = vrot.slane %v1082, 2
      %v1084 = vrot.slane %v495, 7
      %v1085 = vsel %vm1041, %v1083, %v1084
      %v1086 = vrot.slane %v1084, 2
      %v1087 = vrot.slane %v494, 7
      %v1088 = vsel %vm1041, %v1086, %v1087
      %v1089 = vrot.slane %v1087, 2
      %v1090 = vrot.slane %v612, 7
      %v1091 = vsel %vm1041, %v1089, %v1090
      %v1092 = vrot.slane %v503, 7
      %v1093 = vrot.slane %v1092, 2
      %v1094 = vrot.slane %v511, 7
      %v1095 = vsel %vm1041, %v1093, %v1094
      %v1096 = vrot.slane %v1094, 2
      %v1097 = vrot.slane %v510, 7
      %v1098 = vsel %vm1041, %v1096, %v1097
      %v1099 = vrot.slane %v1097, 2
      %v1100 = vrot.slane %v613, 7
      %v1101 = vsel %vm1041, %v1099, %v1100
      %v1102 = vrot.slane %v519, 7
      %v1103 = vrot.slane %v1102, 2
      %v1104 = vrot.slane %v527, 7
      %v1105 = vsel %vm1041, %v1103, %v1104
      %v1106 = vrot.slane %v1104, 2
      %v1107 = vrot.slane %v526, 7
      %v1108 = vsel %vm1041, %v1106, %v1107
      %v1109 = vrot.slane %v1107, 2
      %v1110 = vrot.slane %v614, 7
      %v1111 = vsel %vm1041, %v1109, %v1110
      %v1112 = vrot.slane %v535, 7
      %v1113 = vrot.slane %v1112, 2
      %v1114 = vrot.slane %v543, 7
      %v1115 = vsel %vm1041, %v1113, %v1114
      %v1116 = vrot.slane %v1114, 2
      %v1117 = vrot.slane %v542, 7
      %v1118 = vsel %vm1041, %v1116, %v1117
      %v1119 = vrot.slane %v1117, 2
      %v1120 = vrot.slane %v615, 7
      %v1121 = vsel %vm1041, %v1119, %v1120
      %v1122 = vrot.slane %v551, 7
      %v1123 = vrot.slane %v1122, 2
      %v1124 = vrot.slane %v559, 7
      %v1125 = vsel %vm1041, %v1123, %v1124
      %v1126 = vrot.slane %v1124, 2
      %v1127 = vrot.slane %v558, 7
      %v1128 = vsel %vm1041, %v1126, %v1127
      %v1129 = vrot.slane %v1127, 2
      %v1130 = vrot.slane %v616, 7
      %v1131 = vsel %vm1041, %v1129, %v1130
      %v1132 = vrot.slane %v567, 7
      %v1133 = vrot.slane %v1132, 2
      %v1134 = vrot.slane %v575, 7
      %v1135 = vsel %vm1041, %v1133, %v1134
      %v1136 = vrot.slane %v1134, 2
      %v1137 = vrot.slane %v574, 7
      %v1138 = vsel %vm1041, %v1136, %v1137
      %v1139 = vrot.slane %v1137, 2
      %v1140 = vrot.slane %v617, 7
      %v1141 = vsel %vm1041, %v1139, %v1140
      %v1142 = vrot.slane %v583, 7
      %v1143 = vrot.slane %v1142, 2
      %v1144 = vrot.slane %v591, 7
      %v1145 = vsel %vm1041, %v1143, %v1144
      %v1146 = vrot.slane %v1144, 2
      %v1147 = vrot.slane %v590, 7
      %v1148 = vsel %vm1041, %v1146, %v1147
      %v1149 = vrot.slane %v1147, 2
      %v1150 = vrot.slane %v618, 7
      %v1151 = vsel %vm1041, %v1149, %v1150
      %v1152 = vrot.slane %v599, 7
      %v1153 = vrot.slane %v1152, 2
      %v1154 = vrot.slane %v607, 7
      %v1155 = vsel %vm1041, %v1153, %v1154
      %v1156 = vrot.slane %v1154, 2
      %v1157 = vrot.slane %v606, 7
      %v1158 = vsel %vm1041, %v1156, %v1157
      %v1159 = vrot.slane %v1157, 2
      %v1160 = vrot.slane %v619, 7
      %v1161 = vsel %vm1041, %v1159, %v1160
      %v1163 = vcombine.high %v402, %v402
      %v1165 = vunpack.c.l.s4 1983009808
      %v1166 = vunpack.c.0.s8 %v1165
      %v1167 = vlaneseq
      %v1168 = vshrl.u32 %v1167, 7
      %v1169 = vsub.s32 %v1166, %v1168
      %v1170 = vrot.slane %v402, %v1169
      %v1172 = vunpack.c.l.s4 1983009808
      %v1173 = vunpack.c.0.s8 %v1172
      %v1174 = vlaneseq
      %v1175 = vshrl.u32 %v1174, 7
      %v1176 = vsub.s32 %v1173, %v1175
      %v1177 = vrot.slane %v1163, %v1176
      %v1178 = vcombine.high %v1170, %v1170
      %v1179 = vcombine.high %v1177, %v1177
      %v1181 = vshrl.u32 %v1170, 16
      %v1183 = vrot.slane %v1181, 6
      %v1184 = vshll.u32 %v1170, 16
      %v1186 = vrot.slane %v1184, 7
      %v1187 = vor.u32 %v1183, %v1186
      %v1188 = vrot.slane %v1187, 2
      %v1190 = vshll.u32 %v1178, 16
      %v1192 = vrot.slane %v1190, 7
      %v1193 = vsel %vm626, %v1188, %v1192
      %v1194 = vshrl.u32 %v1178, 16
      %v1196 = vrot.slane %v1194, 6
      %v1197 = vor.u32 %v1196, %v1192
      %v1198 = vrot.slane %v1197, 2
      %v1200 = vshll.u32 %v1177, 16
      %v1202 = vrot.slane %v1200, 7
      %v1203 = vsel %vm626, %v1198, %v1202
      %v1204 = vshrl.u32 %v1177, 16
      %v1206 = vrot.slane %v1204, 6
      %v1207 = vor.u32 %v1206, %v1202
      %v1208 = vrot.slane %v1207, 2
      %v1210 = vshll.u32 %v1179, 16
      %v1212 = vrot.slane %v1210, 7
      %v1213 = vsel %vm626, %v1208, %v1212
      %v1214 = vrot.slane %v1170, 7
      %v1215 = vrot.slane %v1214, 2
      %v1216 = vrot.slane %v1178, 7
      %v1217 = vsel %vm1041, %v1215, %v1216
      %v1218 = vrot.slane %v1216, 2
      %v1219 = vrot.slane %v1177, 7
      %v1220 = vsel %vm1041, %v1218, %v1219
      %v1221 = vrot.slane %v1219, 2
      %v1222 = vrot.slane %v1179, 7
      %v1223 = vsel %vm1041, %v1221, %v1222
      %v1225 = vcombine.high %v403, %v403
      %v1227 = vunpack.c.l.s4 1983009808
      %v1228 = vunpack.c.0.s8 %v1227
      %v1229 = vlaneseq
      %v1230 = vshrl.u32 %v1229, 7
      %v1231 = vsub.s32 %v1228, %v1230
      %v1232 = vrot.slane %v403, %v1231
      %v1234 = vunpack.c.l.s4 1983009808
      %v1235 = vunpack.c.0.s8 %v1234
      %v1236 = vlaneseq
      %v1237 = vshrl.u32 %v1236, 7
      %v1238 = vsub.s32 %v1235, %v1237
      %v1239 = vrot.slane %v1225, %v1238
      %v1240 = vcombine.high %v1232, %v1232
      %v1241 = vcombine.high %v1239, %v1239
      %v1243 = vshrl.u32 %v1232, 16
      %v1245 = vrot.slane %v1243, 6
      %v1246 = vshll.u32 %v1232, 16
      %v1248 = vrot.slane %v1246, 7
      %v1249 = vor.u32 %v1245, %v1248
      %v1250 = vrot.slane %v1249, 2
      %v1252 = vshll.u32 %v1240, 16
      %v1254 = vrot.slane %v1252, 7
      %v1255 = vsel %vm626, %v1250, %v1254
      %v1256 = vshrl.u32 %v1240, 16
      %v1258 = vrot.slane %v1256, 6
      %v1259 = vor.u32 %v1258, %v1254
      %v1260 = vrot.slane %v1259, 2
      %v1262 = vshll.u32 %v1239, 16
      %v1264 = vrot.slane %v1262, 7
      %v1265 = vsel %vm626, %v1260, %v1264
      %v1266 = vshrl.u32 %v1239, 16
      %v1268 = vrot.slane %v1266, 6
      %v1269 = vor.u32 %v1268, %v1264
      %v1270 = vrot.slane %v1269, 2
      %v1272 = vshll.u32 %v1241, 16
      %v1274 = vrot.slane %v1272, 7
      %v1275 = vsel %vm626, %v1270, %v1274
      %v1276 = vrot.slane %v1232, 7
      %v1277 = vrot.slane %v1276, 2
      %v1278 = vrot.slane %v1240, 7
      %v1279 = vsel %vm1041, %v1277, %v1278
      %v1280 = vrot.slane %v1278, 2
      %v1281 = vrot.slane %v1239, 7
      %v1282 = vsel %vm1041, %v1280, %v1281
      %v1283 = vrot.slane %v1281, 2
      %v1284 = vrot.slane %v1241, 7
      %v1285 = vsel %vm1041, %v1283, %v1284
      %v1286 = vcombine.low %v423, %v431
      %v1287 = vcombine.low %v430, %v439
      %v1289 = vunpack.c.l.s4 1983009808
      %v1290 = vunpack.c.0.s8 %v1289
      %v1291 = vlaneseq
      %v1292 = vshrl.u32 %v1291, 7
      %v1293 = vsub.s32 %v1290, %v1292
      %v1294 = vrot.slane %v1286, %v1293
      %v1296 = vunpack.c.l.s4 1983009808
      %v1297 = vunpack.c.0.s8 %v1296
      %v1298 = vlaneseq
      %v1299 = vshrl.u32 %v1298, 7
      %v1300 = vsub.s32 %v1297, %v1299
      %v1301 = vrot.slane %v1287, %v1300
      %v1302 = vcombine.low %v1294, %v1301
      %v1303 = vcombine.low %v447, %v446
      %v1304 = vcombine.low %v455, %v463
      %v1306 = vunpack.c.l.s4 1983009808
      %v1307 = vunpack.c.0.s8 %v1306
      %v1308 = vlaneseq
      %v1309 = vshrl.u32 %v1308, 7
      %v1310 = vsub.s32 %v1307, %v1309
      %v1311 = vrot.slane %v1303, %v1310
      %v1313 = vunpack.c.l.s4 1983009808
      %v1314 = vunpack.c.0.s8 %v1313
      %v1315 = vlaneseq
      %v1316 = vshrl.u32 %v1315, 7
      %v1317 = vsub.s32 %v1314, %v1316
      %v1318 = vrot.slane %v1304, %v1317
      %v1319 = vcombine.low %v1311, %v1318
      %v1320 = vcombine.low %v462, %v471
      %v1321 = vcombine.low %v479, %v478
      %v1323 = vunpack.c.l.s4 1983009808
      %v1324 = vunpack.c.0.s8 %v1323
      %v1325 = vlaneseq
      %v1326 = vshrl.u32 %v1325, 7
      %v1327 = vsub.s32 %v1324, %v1326
      %v1328 = vrot.slane %v1320, %v1327
      %v1330 = vunpack.c.l.s4 1983009808
      %v1331 = vunpack.c.0.s8 %v1330
      %v1332 = vlaneseq
      %v1333 = vshrl.u32 %v1332, 7
      %v1334 = vsub.s32 %v1331, %v1333
      %v1335 = vrot.slane %v1321, %v1334
      %v1336 = vcombine.low %v1328, %v1335
      %v1337 = vcombine.low %v487, %v495
      %v1338 = vcombine.low %v494, %v503
      %v1340 = vunpack.c.l.s4 1983009808
      %v1341 = vunpack.c.0.s8 %v1340
      %v1342 = vlaneseq
      %v1343 = vshrl.u32 %v1342, 7
      %v1344 = vsub.s32 %v1341, %v1343
      %v1345 = vrot.slane %v1337, %v1344
      %v1347 = vunpack.c.l.s4 1983009808
      %v1348 = vunpack.c.0.s8 %v1347
      %v1349 = vlaneseq
      %v1350 = vshrl.u32 %v1349, 7
      %v1351 = vsub.s32 %v1348, %v1350
      %v1352 = vrot.slane %v1338, %v1351
      %v1353 = vcombine.low %v1345, %v1352
      %v1354 = vcombine.low %v511, %v510
      %v1355 = vcombine.low %v519, %v527
      %v1357 = vunpack.c.l.s4 1983009808
      %v1358 = vunpack.c.0.s8 %v1357
      %v1359 = vlaneseq
      %v1360 = vshrl.u32 %v1359, 7
      %v1361 = vsub.s32 %v1358, %v1360
      %v1362 = vrot.slane %v1354, %v1361
      %v1364 = vunpack.c.l.s4 1983009808
      %v1365 = vunpack.c.0.s8 %v1364
      %v1366 = vlaneseq
      %v1367 = vshrl.u32 %v1366, 7
      %v1368 = vsub.s32 %v1365, %v1367
      %v1369 = vrot.slane %v1355, %v1368
      %v1370 = vcombine.low %v1362, %v1369
      %v1371 = vcombine.low %v526, %v535
      %v1372 = vcombine.low %v543, %v542
      %v1374 = vunpack.c.l.s4 1983009808
      %v1375 = vunpack.c.0.s8 %v1374
      %v1376 = vlaneseq
      %v1377 = vshrl.u32 %v1376, 7
      %v1378 = vsub.s32 %v1375, %v1377
      %v1379 = vrot.slane %v1371, %v1378
      %v1381 = vunpack.c.l.s4 1983009808
      %v1382 = vunpack.c.0.s8 %v1381
      %v1383 = vlaneseq
      %v1384 = vshrl.u32 %v1383, 7
      %v1385 = vsub.s32 %v1382, %v1384
      %v1386 = vrot.slane %v1372, %v1385
      %v1387 = vcombine.low %v1379, %v1386
      %v1388 = vcombine.low %v551, %v559
      %v1389 = vcombine.low %v558, %v567
      %v1391 = vunpack.c.l.s4 1983009808
      %v1392 = vunpack.c.0.s8 %v1391
      %v1393 = vlaneseq
      %v1394 = vshrl.u32 %v1393, 7
      %v1395 = vsub.s32 %v1392, %v1394
      %v1396 = vrot.slane %v1388, %v1395
      %v1398 = vunpack.c.l.s4 1983009808
      %v1399 = vunpack.c.0.s8 %v1398
      %v1400 = vlaneseq
      %v1401 = vshrl.u32 %v1400, 7
      %v1402 = vsub.s32 %v1399, %v1401
      %v1403 = vrot.slane %v1389, %v1402
      %v1404 = vcombine.low %v1396, %v1403
      %v1405 = vcombine.low %v575, %v574
      %v1406 = vcombine.low %v583, %v591
      %v1408 = vunpack.c.l.s4 1983009808
      %v1409 = vunpack.c.0.s8 %v1408
      %v1410 = vlaneseq
      %v1411 = vshrl.u32 %v1410, 7
      %v1412 = vsub.s32 %v1409, %v1411
      %v1413 = vrot.slane %v1405, %v1412
      %v1415 = vunpack.c.l.s4 1983009808
      %v1416 = vunpack.c.0.s8 %v1415
      %v1417 = vlaneseq
      %v1418 = vshrl.u32 %v1417, 7
      %v1419 = vsub.s32 %v1416, %v1418
      %v1420 = vrot.slane %v1406, %v1419
      %v1421 = vcombine.low %v1413, %v1420
      %v1422 = vcombine.low %v590, %v599
      %v1423 = vcombine.low %v607, %v606
      %v1425 = vunpack.c.l.s4 1983009808
      %v1426 = vunpack.c.0.s8 %v1425
      %v1427 = vlaneseq
      %v1428 = vshrl.u32 %v1427, 7
      %v1429 = vsub.s32 %v1426, %v1428
      %v1430 = vrot.slane %v1422, %v1429
      %v1432 = vunpack.c.l.s4 1983009808
      %v1433 = vunpack.c.0.s8 %v1432
      %v1434 = vlaneseq
      %v1435 = vshrl.u32 %v1434, 7
      %v1436 = vsub.s32 %v1433, %v1435
      %v1437 = vrot.slane %v1423, %v1436
      %v1438 = vcombine.low %v1430, %v1437
      %v1439 = vcombine.low %v640, %v650
      %v1440 = vcombine.low %v660, %v674
      %v1442 = vunpack.c.l.s4 1983009808
      %v1443 = vunpack.c.0.s8 %v1442
      %v1444 = vlaneseq
      %v1445 = vshrl.u32 %v1444, 7
      %v1446 = vsub.s32 %v1443, %v1445
      %v1447 = vrot.slane %v1439, %v1446
      %v1449 = vunpack.c.l.s4 1983009808
      %v1450 = vunpack.c.0.s8 %v1449
      %v1451 = vlaneseq
      %v1452 = vshrl.u32 %v1451, 7
      %v1453 = vsub.s32 %v1450, %v1452
      %v1454 = vrot.slane %v1440, %v1453
      %v1455 = vcombine.low %v1447, %v1454
      %v1456 = vcombine.low %v684, %v694
      %v1457 = vcombine.low %v708, %v718
      %v1459 = vunpack.c.l.s4 1983009808
      %v1460 = vunpack.c.0.s8 %v1459
      %v1461 = vlaneseq
      %v1462 = vshrl.u32 %v1461, 7
      %v1463 = vsub.s32 %v1460, %v1462
      %v1464 = vrot.slane %v1456, %v1463
      %v1466 = vunpack.c.l.s4 1983009808
      %v1467 = vunpack.c.0.s8 %v1466
      %v1468 = vlaneseq
      %v1469 = vshrl.u32 %v1468, 7
      %v1470 = vsub.s32 %v1467, %v1469
      %v1471 = vrot.slane %v1457, %v1470
      %v1472 = vcombine.low %v1464, %v1471
      %v1473 = vcombine.low %v728, %v742
      %v1474 = vcombine.low %v752, %v762
      %v1476 = vunpack.c.l.s4 1983009808
      %v1477 = vunpack.c.0.s8 %v1476
      %v1478 = vlaneseq
      %v1479 = vshrl.u32 %v1478, 7
      %v1480 = vsub.s32 %v1477, %v1479
      %v1481 = vrot.slane %v1473, %v1480
      %v1483 = vunpack.c.l.s4 1983009808
      %v1484 = vunpack.c.0.s8 %v1483
      %v1485 = vlaneseq
      %v1486 = vshrl.u32 %v1485, 7
      %v1487 = vsub.s32 %v1484, %v1486
      %v1488 = vrot.slane %v1474, %v1487
      %v1489 = vcombine.low %v1481, %v1488
      %v1490 = vcombine.low %v776, %v786
      %v1491 = vcombine.low %v796, %v810
      %v1493 = vunpack.c.l.s4 1983009808
      %v1494 = vunpack.c.0.s8 %v1493
      %v1495 = vlaneseq
      %v1496 = vshrl.u32 %v1495, 7
      %v1497 = vsub.s32 %v1494, %v1496
      %v1498 = vrot.slane %v1490, %v1497
      %v1500 = vunpack.c.l.s4 1983009808
      %v1501 = vunpack.c.0.s8 %v1500
      %v1502 = vlaneseq
      %v1503 = vshrl.u32 %v1502, 7
      %v1504 = vsub.s32 %v1501, %v1503
      %v1505 = vrot.slane %v1491, %v1504
      %v1506 = vcombine.low %v1498, %v1505
      %v1507 = vcombine.low %v820, %v830
      %v1508 = vcombine.low %v844, %v854
      %v1510 = vunpack.c.l.s4 1983009808
      %v1511 = vunpack.c.0.s8 %v1510
      %v1512 = vlaneseq
      %v1513 = vshrl.u32 %v1512, 7
      %v1514 = vsub.s32 %v1511, %v1513
      %v1515 = vrot.slane %v1507, %v1514
      %v1517 = vunpack.c.l.s4 1983009808
      %v1518 = vunpack.c.0.s8 %v1517
      %v1519 = vlaneseq
      %v1520 = vshrl.u32 %v1519, 7
      %v1521 = vsub.s32 %v1518, %v1520
      %v1522 = vrot.slane %v1508, %v1521
      %v1523 = vcombine.low %v1515, %v1522
      %v1524 = vcombine.low %v864, %v878
      %v1525 = vcombine.low %v888, %v898
      %v1527 = vunpack.c.l.s4 1983009808
      %v1528 = vunpack.c.0.s8 %v1527
      %v1529 = vlaneseq
      %v1530 = vshrl.u32 %v1529, 7
      %v1531 = vsub.s32 %v1528, %v1530
      %v1532 = vrot.slane %v1524, %v1531
      %v1534 = vunpack.c.l.s4 1983009808
      %v1535 = vunpack.c.0.s8 %v1534
      %v1536 = vlaneseq
      %v1537 = vshrl.u32 %v1536, 7
      %v1538 = vsub.s32 %v1535, %v1537
      %v1539 = vrot.slane %v1525, %v1538
      %v1540 = vcombine.low %v1532, %v1539
      %v1541 = vcombine.low %v912, %v922
      %v1542 = vcombine.low %v932, %v946
      %v1544 = vunpack.c.l.s4 1983009808
      %v1545 = vunpack.c.0.s8 %v1544
      %v1546 = vlaneseq
      %v1547 = vshrl.u32 %v1546, 7
      %v1548 = vsub.s32 %v1545, %v1547
      %v1549 = vrot.slane %v1541, %v1548
      %v1551 = vunpack.c.l.s4 1983009808
      %v1552 = vunpack.c.0.s8 %v1551
      %v1553 = vlaneseq
      %v1554 = vshrl.u32 %v1553, 7
      %v1555 = vsub.s32 %v1552, %v1554
      %v1556 = vrot.slane %v1542, %v1555
      %v1557 = vcombine.low %v1549, %v1556
      %v1558 = vcombine.low %v956, %v966
      %v1559 = vcombine.low %v980, %v990
      %v1561 = vunpack.c.l.s4 1983009808
      %v1562 = vunpack.c.0.s8 %v1561
      %v1563 = vlaneseq
      %v1564 = vshrl.u32 %v1563, 7
      %v1565 = vsub.s32 %v1562, %v1564
      %v1566 = vrot.slane %v1558, %v1565
      %v1568 = vunpack.c.l.s4 1983009808
      %v1569 = vunpack.c.0.s8 %v1568
      %v1570 = vlaneseq
      %v1571 = vshrl.u32 %v1570, 7
      %v1572 = vsub.s32 %v1569, %v1571
      %v1573 = vrot.slane %v1559, %v1572
      %v1574 = vcombine.low %v1566, %v1573
      %v1575 = vcombine.low %v1000, %v1014
      %v1576 = vcombine.low %v1024, %v1034
      %v1578 = vunpack.c.l.s4 1983009808
      %v1579 = vunpack.c.0.s8 %v1578
      %v1580 = vlaneseq
      %v1581 = vshrl.u32 %v1580, 7
      %v1582 = vsub.s32 %v1579, %v1581
      %v1583 = vrot.slane %v1575, %v1582
      %v1585 = vunpack.c.l.s4 1983009808
      %v1586 = vunpack.c.0.s8 %v1585
      %v1587 = vlaneseq
      %v1588 = vshrl.u32 %v1587, 7
      %v1589 = vsub.s32 %v1586, %v1588
      %v1590 = vrot.slane %v1576, %v1589
      %v1591 = vcombine.low %v1583, %v1590
      %1592 = vrot.lane.b32.xlu0 %v1455, 8
      %v1593 = vpop.permute.xlu0 %1592
      %1594 = vrot.lane.b32.xlu0 %v1472, 8
      %v1595 = vpop.permute.xlu0 %1594
      %1596 = vrot.lane.b32.xlu0 %v1489, 8
      %v1597 = vpop.permute.xlu0 %1596
      %1598 = vrot.lane.b32.xlu0 %v1506, 8
      %v1599 = vpop.permute.xlu0 %1598
      %1600 = vrot.lane.b32.xlu0 %v1523, 8
      %v1601 = vpop.permute.xlu0 %1600
      %1602 = vrot.lane.b32.xlu0 %v1540, 8
      %v1603 = vpop.permute.xlu0 %1602
      %1604 = vrot.lane.b32.xlu0 %v1557, 8
      %v1605 = vpop.permute.xlu0 %1604
      %1606 = vrot.lane.b32.xlu0 %v1574, 8
      %v1607 = vpop.permute.xlu0 %1606
      %1608 = vrot.lane.b32.xlu0 %v1591, 8
      %v1609 = vpop.permute.xlu0 %1608
      %v1610 = vcombine.low %v1045, %v1048
      %v1611 = vcombine.low %v1051, %v1055
      %v1613 = vunpack.c.l.s4 1983009808
      %v1614 = vunpack.c.0.s8 %v1613
      %v1615 = vlaneseq
      %v1616 = vshrl.u32 %v1615, 7
      %v1617 = vsub.s32 %v1614, %v1616
      %v1618 = vrot.slane %v1610, %v1617
      %v1620 = vunpack.c.l.s4 1983009808
      %v1621 = vunpack.c.0.s8 %v1620
      %v1622 = vlaneseq
      %v1623 = vshrl.u32 %v1622, 7
      %v1624 = vsub.s32 %v1621, %v1623
      %v1625 = vrot.slane %v1611, %v1624
      %v1626 = vcombine.low %v1618, %v1625
      %v1627 = vcombine.low %v1058, %v1061
      %v1628 = vcombine.low %v1065, %v1068
      %v1630 = vunpack.c.l.s4 1983009808
      %v1631 = vunpack.c.0.s8 %v1630
      %v1632 = vlaneseq
      %v1633 = vshrl.u32 %v1632, 7
      %v1634 = vsub.s32 %v1631, %v1633
      %v1635 = vrot.slane %v1627, %v1634
      %v1637 = vunpack.c.l.s4 1983009808
      %v1638 = vunpack.c.0.s8 %v1637
      %v1639 = vlaneseq
      %v1640 = vshrl.u32 %v1639, 7
      %v1641 = vsub.s32 %v1638, %v1640
      %v1642 = vrot.slane %v1628, %v1641
      %v1643 = vcombine.low %v1635, %v1642
      %v1644 = vcombine.low %v1071, %v1075
      %v1645 = vcombine.low %v1078, %v1081
      %v1647 = vunpack.c.l.s4 1983009808
      %v1648 = vunpack.c.0.s8 %v1647
      %v1649 = vlaneseq
      %v1650 = vshrl.u32 %v1649, 7
      %v1651 = vsub.s32 %v1648, %v1650
      %v1652 = vrot.slane %v1644, %v1651
      %v1654 = vunpack.c.l.s4 1983009808
      %v1655 = vunpack.c.0.s8 %v1654
      %v1656 = vlaneseq
      %v1657 = vshrl.u32 %v1656, 7
      %v1658 = vsub.s32 %v1655, %v1657
      %v1659 = vrot.slane %v1645, %v1658
      %v1660 = vcombine.low %v1652, %v1659
      %v1661 = vcombine.low %v1085, %v1088
      %v1662 = vcombine.low %v1091, %v1095
      %v1664 = vunpack.c.l.s4 1983009808
      %v1665 = vunpack.c.0.s8 %v1664
      %v1666 = vlaneseq
      %v1667 = vshrl.u32 %v1666, 7
      %v1668 = vsub.s32 %v1665, %v1667
      %v1669 = vrot.slane %v1661, %v1668
      %v1671 = vunpack.c.l.s4 1983009808
      %v1672 = vunpack.c.0.s8 %v1671
      %v1673 = vlaneseq
      %v1674 = vshrl.u32 %v1673, 7
      %v1675 = vsub.s32 %v1672, %v1674
      %v1676 = vrot.slane %v1662, %v1675
      %v1677 = vcombine.low %v1669, %v1676
      %v1678 = vcombine.low %v1098, %v1101
      %v1679 = vcombine.low %v1105, %v1108
      %v1681 = vunpack.c.l.s4 1983009808
      %v1682 = vunpack.c.0.s8 %v1681
      %v1683 = vlaneseq
      %v1684 = vshrl.u32 %v1683, 7
      %v1685 = vsub.s32 %v1682, %v1684
      %v1686 = vrot.slane %v1678, %v1685
      %v1688 = vunpack.c.l.s4 1983009808
      %v1689 = vunpack.c.0.s8 %v1688
      %v1690 = vlaneseq
      %v1691 = vshrl.u32 %v1690, 7
      %v1692 = vsub.s32 %v1689, %v1691
      %v1693 = vrot.slane %v1679, %v1692
      %v1694 = vcombine.low %v1686, %v1693
      %v1695 = vcombine.low %v1111, %v1115
      %v1696 = vcombine.low %v1118, %v1121
      %v1698 = vunpack.c.l.s4 1983009808
      %v1699 = vunpack.c.0.s8 %v1698
      %v1700 = vlaneseq
      %v1701 = vshrl.u32 %v1700, 7
      %v1702 = vsub.s32 %v1699, %v1701
      %v1703 = vrot.slane %v1695, %v1702
      %v1705 = vunpack.c.l.s4 1983009808
      %v1706 = vunpack.c.0.s8 %v1705
      %v1707 = vlaneseq
      %v1708 = vshrl.u32 %v1707, 7
      %v1709 = vsub.s32 %v1706, %v1708
      %v1710 = vrot.slane %v1696, %v1709
      %v1711 = vcombine.low %v1703, %v1710
      %v1712 = vcombine.low %v1125, %v1128
      %v1713 = vcombine.low %v1131, %v1135
      %v1715 = vunpack.c.l.s4 1983009808
      %v1716 = vunpack.c.0.s8 %v1715
      %v1717 = vlaneseq
      %v1718 = vshrl.u32 %v1717, 7
      %v1719 = vsub.s32 %v1716, %v1718
      %v1720 = vrot.slane %v1712, %v1719
      %v1722 = vunpack.c.l.s4 1983009808
      %v1723 = vunpack.c.0.s8 %v1722
      %v1724 = vlaneseq
      %v1725 = vshrl.u32 %v1724, 7
      %v1726 = vsub.s32 %v1723, %v1725
      %v1727 = vrot.slane %v1713, %v1726
      %v1728 = vcombine.low %v1720, %v1727
      %v1729 = vcombine.low %v1138, %v1141
      %v1730 = vcombine.low %v1145, %v1148
      %v1732 = vunpack.c.l.s4 1983009808
      %v1733 = vunpack.c.0.s8 %v1732
      %v1734 = vlaneseq
      %v1735 = vshrl.u32 %v1734, 7
      %v1736 = vsub.s32 %v1733, %v1735
      %v1737 = vrot.slane %v1729, %v1736
      %v1739 = vunpack.c.l.s4 1983009808
      %v1740 = vunpack.c.0.s8 %v1739
      %v1741 = vlaneseq
      %v1742 = vshrl.u32 %v1741, 7
      %v1743 = vsub.s32 %v1740, %v1742
      %v1744 = vrot.slane %v1730, %v1743
      %v1745 = vcombine.low %v1737, %v1744
      %v1746 = vcombine.low %v1151, %v1155
      %v1747 = vcombine.low %v1158, %v1161
      %v1749 = vunpack.c.l.s4 1983009808
      %v1750 = vunpack.c.0.s8 %v1749
      %v1751 = vlaneseq
      %v1752 = vshrl.u32 %v1751, 7
      %v1753 = vsub.s32 %v1750, %v1752
      %v1754 = vrot.slane %v1746, %v1753
      %v1756 = vunpack.c.l.s4 1983009808
      %v1757 = vunpack.c.0.s8 %v1756
      %v1758 = vlaneseq
      %v1759 = vshrl.u32 %v1758, 7
      %v1760 = vsub.s32 %v1757, %v1759
      %v1761 = vrot.slane %v1747, %v1760
      %v1762 = vcombine.low %v1754, %v1761
      %1763 = vrot.lane.b32.xlu0 %v1626, 16
      %v1764 = vpop.permute.xlu0 %1763
      %1765 = vrot.lane.b32.xlu0 %v1643, 16
      %v1766 = vpop.permute.xlu0 %1765
      %1767 = vrot.lane.b32.xlu0 %v1660, 16
      %v1768 = vpop.permute.xlu0 %1767
      %1769 = vrot.lane.b32.xlu0 %v1677, 16
      %v1770 = vpop.permute.xlu0 %1769
      %1771 = vrot.lane.b32.xlu0 %v1694, 16
      %v1772 = vpop.permute.xlu0 %1771
      %1773 = vrot.lane.b32.xlu0 %v1711, 16
      %v1774 = vpop.permute.xlu0 %1773
      %1775 = vrot.lane.b32.xlu0 %v1728, 16
      %v1776 = vpop.permute.xlu0 %1775
      %1777 = vrot.lane.b32.xlu0 %v1745, 16
      %v1778 = vpop.permute.xlu0 %1777
      %1779 = vrot.lane.b32.xlu0 %v1762, 16
      %v1780 = vpop.permute.xlu0 %1779
      %v1781 = vcombine.low %v439, %v447
      %v1782 = vcombine.low %v446, %v455
      %v1784 = vunpack.c.l.s4 1983009808
      %v1785 = vunpack.c.0.s8 %v1784
      %v1786 = vlaneseq
      %v1787 = vshrl.u32 %v1786, 7
      %v1788 = vsub.s32 %v1785, %v1787
      %v1789 = vrot.slane %v1781, %v1788
      %v1791 = vunpack.c.l.s4 1983009808
      %v1792 = vunpack.c.0.s8 %v1791
      %v1793 = vlaneseq
      %v1794 = vshrl.u32 %v1793, 7
      %v1795 = vsub.s32 %v1792, %v1794
      %v1796 = vrot.slane %v1782, %v1795
      %v1797 = vcombine.low %v1789, %v1796
      %v1798 = vcombine.low %v463, %v462
      %v1799 = vcombine.low %v471, %v479
      %v1801 = vunpack.c.l.s4 1983009808
      %v1802 = vunpack.c.0.s8 %v1801
      %v1803 = vlaneseq
      %v1804 = vshrl.u32 %v1803, 7
      %v1805 = vsub.s32 %v1802, %v1804
      %v1806 = vrot.slane %v1798, %v1805
      %v1808 = vunpack.c.l.s4 1983009808
      %v1809 = vunpack.c.0.s8 %v1808
      %v1810 = vlaneseq
      %v1811 = vshrl.u32 %v1810, 7
      %v1812 = vsub.s32 %v1809, %v1811
      %v1813 = vrot.slane %v1799, %v1812
      %v1814 = vcombine.low %v1806, %v1813
      %v1815 = vcombine.low %v478, %v487
      %v1816 = vcombine.low %v495, %v494
      %v1818 = vunpack.c.l.s4 1983009808
      %v1819 = vunpack.c.0.s8 %v1818
      %v1820 = vlaneseq
      %v1821 = vshrl.u32 %v1820, 7
      %v1822 = vsub.s32 %v1819, %v1821
      %v1823 = vrot.slane %v1815, %v1822
      %v1825 = vunpack.c.l.s4 1983009808
      %v1826 = vunpack.c.0.s8 %v1825
      %v1827 = vlaneseq
      %v1828 = vshrl.u32 %v1827, 7
      %v1829 = vsub.s32 %v1826, %v1828
      %v1830 = vrot.slane %v1816, %v1829
      %v1831 = vcombine.low %v1823, %v1830
      %v1832 = vcombine.low %v503, %v511
      %v1833 = vcombine.low %v510, %v519
      %v1835 = vunpack.c.l.s4 1983009808
      %v1836 = vunpack.c.0.s8 %v1835
      %v1837 = vlaneseq
      %v1838 = vshrl.u32 %v1837, 7
      %v1839 = vsub.s32 %v1836, %v1838
      %v1840 = vrot.slane %v1832, %v1839
      %v1842 = vunpack.c.l.s4 1983009808
      %v1843 = vunpack.c.0.s8 %v1842
      %v1844 = vlaneseq
      %v1845 = vshrl.u32 %v1844, 7
      %v1846 = vsub.s32 %v1843, %v1845
      %v1847 = vrot.slane %v1833, %v1846
      %v1848 = vcombine.low %v1840, %v1847
      %v1849 = vcombine.low %v527, %v526
      %v1850 = vcombine.low %v535, %v543
      %v1852 = vunpack.c.l.s4 1983009808
      %v1853 = vunpack.c.0.s8 %v1852
      %v1854 = vlaneseq
      %v1855 = vshrl.u32 %v1854, 7
      %v1856 = vsub.s32 %v1853, %v1855
      %v1857 = vrot.slane %v1849, %v1856
      %v1859 = vunpack.c.l.s4 1983009808
      %v1860 = vunpack.c.0.s8 %v1859
      %v1861 = vlaneseq
      %v1862 = vshrl.u32 %v1861, 7
      %v1863 = vsub.s32 %v1860, %v1862
      %v1864 = vrot.slane %v1850, %v1863
      %v1865 = vcombine.low %v1857, %v1864
      %v1866 = vcombine.low %v542, %v551
      %v1867 = vcombine.low %v559, %v558
      %v1869 = vunpack.c.l.s4 1983009808
      %v1870 = vunpack.c.0.s8 %v1869
      %v1871 = vlaneseq
      %v1872 = vshrl.u32 %v1871, 7
      %v1873 = vsub.s32 %v1870, %v1872
      %v1874 = vrot.slane %v1866, %v1873
      %v1876 = vunpack.c.l.s4 1983009808
      %v1877 = vunpack.c.0.s8 %v1876
      %v1878 = vlaneseq
      %v1879 = vshrl.u32 %v1878, 7
      %v1880 = vsub.s32 %v1877, %v1879
      %v1881 = vrot.slane %v1867, %v1880
      %v1882 = vcombine.low %v1874, %v1881
      %v1883 = vcombine.low %v567, %v575
      %v1884 = vcombine.low %v574, %v583
      %v1886 = vunpack.c.l.s4 1983009808
      %v1887 = vunpack.c.0.s8 %v1886
      %v1888 = vlaneseq
      %v1889 = vshrl.u32 %v1888, 7
      %v1890 = vsub.s32 %v1887, %v1889
      %v1891 = vrot.slane %v1883, %v1890
      %v1893 = vunpack.c.l.s4 1983009808
      %v1894 = vunpack.c.0.s8 %v1893
      %v1895 = vlaneseq
      %v1896 = vshrl.u32 %v1895, 7
      %v1897 = vsub.s32 %v1894, %v1896
      %v1898 = vrot.slane %v1884, %v1897
      %v1899 = vcombine.low %v1891, %v1898
      %v1900 = vcombine.low %v591, %v590
      %v1901 = vcombine.low %v599, %v607
      %v1903 = vunpack.c.l.s4 1983009808
      %v1904 = vunpack.c.0.s8 %v1903
      %v1905 = vlaneseq
      %v1906 = vshrl.u32 %v1905, 7
      %v1907 = vsub.s32 %v1904, %v1906
      %v1908 = vrot.slane %v1900, %v1907
      %v1910 = vunpack.c.l.s4 1983009808
      %v1911 = vunpack.c.0.s8 %v1910
      %v1912 = vlaneseq
      %v1913 = vshrl.u32 %v1912, 7
      %v1914 = vsub.s32 %v1911, %v1913
      %v1915 = vrot.slane %v1901, %v1914
      %v1916 = vcombine.low %v1908, %v1915
      %v1917 = vcombine.low %v606, %v1170
      %v1918 = vcombine.low %v1178, %v1177
      %v1920 = vunpack.c.l.s4 1983009808
      %v1921 = vunpack.c.0.s8 %v1920
      %v1922 = vlaneseq
      %v1923 = vshrl.u32 %v1922, 7
      %v1924 = vsub.s32 %v1921, %v1923
      %v1925 = vrot.slane %v1917, %v1924
      %v1927 = vunpack.c.l.s4 1983009808
      %v1928 = vunpack.c.0.s8 %v1927
      %v1929 = vlaneseq
      %v1930 = vshrl.u32 %v1929, 7
      %v1931 = vsub.s32 %v1928, %v1930
      %v1932 = vrot.slane %v1918, %v1931
      %v1933 = vcombine.low %v1925, %v1932
      %1934 = vrot.lane.b32.xlu0 %v1797, 24
      %v1935 = vpop.permute.xlu0 %1934
      %1936 = vrot.lane.b32.xlu0 %v1814, 24
      %v1937 = vpop.permute.xlu0 %1936
      %1938 = vrot.lane.b32.xlu0 %v1831, 24
      %v1939 = vpop.permute.xlu0 %1938
      %1940 = vrot.lane.b32.xlu0 %v1848, 24
      %v1941 = vpop.permute.xlu0 %1940
      %1942 = vrot.lane.b32.xlu0 %v1865, 24
      %v1943 = vpop.permute.xlu0 %1942
      %1944 = vrot.lane.b32.xlu0 %v1882, 24
      %v1945 = vpop.permute.xlu0 %1944
      %1946 = vrot.lane.b32.xlu0 %v1899, 24
      %v1947 = vpop.permute.xlu0 %1946
      %1948 = vrot.lane.b32.xlu0 %v1916, 24
      %v1949 = vpop.permute.xlu0 %1948
      %1950 = vrot.lane.b32.xlu0 %v1933, 24
      %v1951 = vpop.permute.xlu0 %1950
      %v1952 = vcombine.low %v674, %v684
      %v1953 = vcombine.low %v694, %v708
      %v1955 = vunpack.c.l.s4 1983009808
      %v1956 = vunpack.c.0.s8 %v1955
      %v1957 = vlaneseq
      %v1958 = vshrl.u32 %v1957, 7
      %v1959 = vsub.s32 %v1956, %v1958
      %v1960 = vrot.slane %v1952, %v1959
      %v1962 = vunpack.c.l.s4 1983009808
      %v1963 = vunpack.c.0.s8 %v1962
      %v1964 = vlaneseq
      %v1965 = vshrl.u32 %v1964, 7
      %v1966 = vsub.s32 %v1963, %v1965
      %v1967 = vrot.slane %v1953, %v1966
      %v1968 = vcombine.low %v1960, %v1967
      %v1969 = vcombine.low %v718, %v728
      %v1970 = vcombine.low %v742, %v752
      %v1972 = vunpack.c.l.s4 1983009808
      %v1973 = vunpack.c.0.s8 %v1972
      %v1974 = vlaneseq
      %v1975 = vshrl.u32 %v1974, 7
      %v1976 = vsub.s32 %v1973, %v1975
      %v1977 = vrot.slane %v1969, %v1976
      %v1979 = vunpack.c.l.s4 1983009808
      %v1980 = vunpack.c.0.s8 %v1979
      %v1981 = vlaneseq
      %v1982 = vshrl.u32 %v1981, 7
      %v1983 = vsub.s32 %v1980, %v1982
      %v1984 = vrot.slane %v1970, %v1983
      %v1985 = vcombine.low %v1977, %v1984
      %v1986 = vcombine.low %v762, %v776
      %v1987 = vcombine.low %v786, %v796
      %v1989 = vunpack.c.l.s4 1983009808
      %v1990 = vunpack.c.0.s8 %v1989
      %v1991 = vlaneseq
      %v1992 = vshrl.u32 %v1991, 7
      %v1993 = vsub.s32 %v1990, %v1992
      %v1994 = vrot.slane %v1986, %v1993
      %v1996 = vunpack.c.l.s4 1983009808
      %v1997 = vunpack.c.0.s8 %v1996
      %v1998 = vlaneseq
      %v1999 = vshrl.u32 %v1998, 7
      %v2000 = vsub.s32 %v1997, %v1999
      %v2001 = vrot.slane %v1987, %v2000
      %v2002 = vcombine.low %v1994, %v2001
      %v2003 = vcombine.low %v810, %v820
      %v2004 = vcombine.low %v830, %v844
      %v2006 = vunpack.c.l.s4 1983009808
      %v2007 = vunpack.c.0.s8 %v2006
      %v2008 = vlaneseq
      %v2009 = vshrl.u32 %v2008, 7
      %v2010 = vsub.s32 %v2007, %v2009
      %v2011 = vrot.slane %v2003, %v2010
      %v2013 = vunpack.c.l.s4 1983009808
      %v2014 = vunpack.c.0.s8 %v2013
      %v2015 = vlaneseq
      %v2016 = vshrl.u32 %v2015, 7
      %v2017 = vsub.s32 %v2014, %v2016
      %v2018 = vrot.slane %v2004, %v2017
      %v2019 = vcombine.low %v2011, %v2018
      %v2020 = vcombine.low %v854, %v864
      %v2021 = vcombine.low %v878, %v888
      %v2023 = vunpack.c.l.s4 1983009808
      %v2024 = vunpack.c.0.s8 %v2023
      %v2025 = vlaneseq
      %v2026 = vshrl.u32 %v2025, 7
      %v2027 = vsub.s32 %v2024, %v2026
      %v2028 = vrot.slane %v2020, %v2027
      %v2030 = vunpack.c.l.s4 1983009808
      %v2031 = vunpack.c.0.s8 %v2030
      %v2032 = vlaneseq
      %v2033 = vshrl.u32 %v2032, 7
      %v2034 = vsub.s32 %v2031, %v2033
      %v2035 = vrot.slane %v2021, %v2034
      %v2036 = vcombine.low %v2028, %v2035
      %v2037 = vcombine.low %v898, %v912
      %v2038 = vcombine.low %v922, %v932
      %v2040 = vunpack.c.l.s4 1983009808
      %v2041 = vunpack.c.0.s8 %v2040
      %v2042 = vlaneseq
      %v2043 = vshrl.u32 %v2042, 7
      %v2044 = vsub.s32 %v2041, %v2043
      %v2045 = vrot.slane %v2037, %v2044
      %v2047 = vunpack.c.l.s4 1983009808
      %v2048 = vunpack.c.0.s8 %v2047
      %v2049 = vlaneseq
      %v2050 = vshrl.u32 %v2049, 7
      %v2051 = vsub.s32 %v2048, %v2050
      %v2052 = vrot.slane %v2038, %v2051
      %v2053 = vcombine.low %v2045, %v2052
      %v2054 = vcombine.low %v946, %v956
      %v2055 = vcombine.low %v966, %v980
      %v2057 = vunpack.c.l.s4 1983009808
      %v2058 = vunpack.c.0.s8 %v2057
      %v2059 = vlaneseq
      %v2060 = vshrl.u32 %v2059, 7
      %v2061 = vsub.s32 %v2058, %v2060
      %v2062 = vrot.slane %v2054, %v2061
      %v2064 = vunpack.c.l.s4 1983009808
      %v2065 = vunpack.c.0.s8 %v2064
      %v2066 = vlaneseq
      %v2067 = vshrl.u32 %v2066, 7
      %v2068 = vsub.s32 %v2065, %v2067
      %v2069 = vrot.slane %v2055, %v2068
      %v2070 = vcombine.low %v2062, %v2069
      %v2071 = vcombine.low %v990, %v1000
      %v2072 = vcombine.low %v1014, %v1024
      %v2074 = vunpack.c.l.s4 1983009808
      %v2075 = vunpack.c.0.s8 %v2074
      %v2076 = vlaneseq
      %v2077 = vshrl.u32 %v2076, 7
      %v2078 = vsub.s32 %v2075, %v2077
      %v2079 = vrot.slane %v2071, %v2078
      %v2081 = vunpack.c.l.s4 1983009808
      %v2082 = vunpack.c.0.s8 %v2081
      %v2083 = vlaneseq
      %v2084 = vshrl.u32 %v2083, 7
      %v2085 = vsub.s32 %v2082, %v2084
      %v2086 = vrot.slane %v2072, %v2085
      %v2087 = vcombine.low %v2079, %v2086
      %v2088 = vcombine.low %v1034, %v1193
      %v2089 = vcombine.low %v1203, %v1213
      %v2091 = vunpack.c.l.s4 1983009808
      %v2092 = vunpack.c.0.s8 %v2091
      %v2093 = vlaneseq
      %v2094 = vshrl.u32 %v2093, 7
      %v2095 = vsub.s32 %v2092, %v2094
      %v2096 = vrot.slane %v2088, %v2095
      %v2098 = vunpack.c.l.s4 1983009808
      %v2099 = vunpack.c.0.s8 %v2098
      %v2100 = vlaneseq
      %v2101 = vshrl.u32 %v2100, 7
      %v2102 = vsub.s32 %v2099, %v2101
      %v2103 = vrot.slane %v2089, %v2102
      %v2104 = vcombine.low %v2096, %v2103
      %2105 = vrot.lane.b32.xlu0 %v1968, 32
      %v2106 = vpop.permute.xlu0 %2105
      %2107 = vrot.lane.b32.xlu0 %v1985, 32
      %v2108 = vpop.permute.xlu0 %2107
      %2109 = vrot.lane.b32.xlu0 %v2002, 32
      %v2110 = vpop.permute.xlu0 %2109
      %2111 = vrot.lane.b32.xlu0 %v2019, 32
      %v2112 = vpop.permute.xlu0 %2111
      %2113 = vrot.lane.b32.xlu0 %v2036, 32
      %v2114 = vpop.permute.xlu0 %2113
      %2115 = vrot.lane.b32.xlu0 %v2053, 32
      %v2116 = vpop.permute.xlu0 %2115
      %2117 = vrot.lane.b32.xlu0 %v2070, 32
      %v2118 = vpop.permute.xlu0 %2117
      %2119 = vrot.lane.b32.xlu0 %v2087, 32
      %v2120 = vpop.permute.xlu0 %2119
      %2121 = vrot.lane.b32.xlu0 %v2104, 32
      %v2122 = vpop.permute.xlu0 %2121
      %v2123 = vcombine.low %v1055, %v1058
      %v2124 = vcombine.low %v1061, %v1065
      %v2126 = vunpack.c.l.s4 1983009808
      %v2127 = vunpack.c.0.s8 %v2126
      %v2128 = vlaneseq
      %v2129 = vshrl.u32 %v2128, 7
      %v2130 = vsub.s32 %v2127, %v2129
      %v2131 = vrot.slane %v2123, %v2130
      %v2133 = vunpack.c.l.s4 1983009808
      %v2134 = vunpack.c.0.s8 %v2133
      %v2135 = vlaneseq
      %v2136 = vshrl.u32 %v2135, 7
      %v2137 = vsub.s32 %v2134, %v2136
      %v2138 = vrot.slane %v2124, %v2137
      %v2139 = vcombine.low %v2131, %v2138
      %v2140 = vcombine.low %v1068, %v1071
      %v2141 = vcombine.low %v1075, %v1078
      %v2143 = vunpack.c.l.s4 1983009808
      %v2144 = vunpack.c.0.s8 %v2143
      %v2145 = vlaneseq
      %v2146 = vshrl.u32 %v2145, 7
      %v2147 = vsub.s32 %v2144, %v2146
      %v2148 = vrot.slane %v2140, %v2147
      %v2150 = vunpack.c.l.s4 1983009808
      %v2151 = vunpack.c.0.s8 %v2150
      %v2152 = vlaneseq
      %v2153 = vshrl.u32 %v2152, 7
      %v2154 = vsub.s32 %v2151, %v2153
      %v2155 = vrot.slane %v2141, %v2154
      %v2156 = vcombine.low %v2148, %v2155
      %v2157 = vcombine.low %v1081, %v1085
      %v2158 = vcombine.low %v1088, %v1091
      %v2160 = vunpack.c.l.s4 1983009808
      %v2161 = vunpack.c.0.s8 %v2160
      %v2162 = vlaneseq
      %v2163 = vshrl.u32 %v2162, 7
      %v2164 = vsub.s32 %v2161, %v2163
      %v2165 = vrot.slane %v2157, %v2164
      %v2167 = vunpack.c.l.s4 1983009808
      %v2168 = vunpack.c.0.s8 %v2167
      %v2169 = vlaneseq
      %v2170 = vshrl.u32 %v2169, 7
      %v2171 = vsub.s32 %v2168, %v2170
      %v2172 = vrot.slane %v2158, %v2171
      %v2173 = vcombine.low %v2165, %v2172
      %v2174 = vcombine.low %v1095, %v1098
      %v2175 = vcombine.low %v1101, %v1105
      %v2177 = vunpack.c.l.s4 1983009808
      %v2178 = vunpack.c.0.s8 %v2177
      %v2179 = vlaneseq
      %v2180 = vshrl.u32 %v2179, 7
      %v2181 = vsub.s32 %v2178, %v2180
      %v2182 = vrot.slane %v2174, %v2181
      %v2184 = vunpack.c.l.s4 1983009808
      %v2185 = vunpack.c.0.s8 %v2184
      %v2186 = vlaneseq
      %v2187 = vshrl.u32 %v2186, 7
      %v2188 = vsub.s32 %v2185, %v2187
      %v2189 = vrot.slane %v2175, %v2188
      %v2190 = vcombine.low %v2182, %v2189
      %v2191 = vcombine.low %v1108, %v1111
      %v2192 = vcombine.low %v1115, %v1118
      %v2194 = vunpack.c.l.s4 1983009808
      %v2195 = vunpack.c.0.s8 %v2194
      %v2196 = vlaneseq
      %v2197 = vshrl.u32 %v2196, 7
      %v2198 = vsub.s32 %v2195, %v2197
      %v2199 = vrot.slane %v2191, %v2198
      %v2201 = vunpack.c.l.s4 1983009808
      %v2202 = vunpack.c.0.s8 %v2201
      %v2203 = vlaneseq
      %v2204 = vshrl.u32 %v2203, 7
      %v2205 = vsub.s32 %v2202, %v2204
      %v2206 = vrot.slane %v2192, %v2205
      %v2207 = vcombine.low %v2199, %v2206
      %v2208 = vcombine.low %v1121, %v1125
      %v2209 = vcombine.low %v1128, %v1131
      %v2211 = vunpack.c.l.s4 1983009808
      %v2212 = vunpack.c.0.s8 %v2211
      %v2213 = vlaneseq
      %v2214 = vshrl.u32 %v2213, 7
      %v2215 = vsub.s32 %v2212, %v2214
      %v2216 = vrot.slane %v2208, %v2215
      %v2218 = vunpack.c.l.s4 1983009808
      %v2219 = vunpack.c.0.s8 %v2218
      %v2220 = vlaneseq
      %v2221 = vshrl.u32 %v2220, 7
      %v2222 = vsub.s32 %v2219, %v2221
      %v2223 = vrot.slane %v2209, %v2222
      %v2224 = vcombine.low %v2216, %v2223
      %v2225 = vcombine.low %v1135, %v1138
      %v2226 = vcombine.low %v1141, %v1145
      %v2228 = vunpack.c.l.s4 1983009808
      %v2229 = vunpack.c.0.s8 %v2228
      %v2230 = vlaneseq
      %v2231 = vshrl.u32 %v2230, 7
      %v2232 = vsub.s32 %v2229, %v2231
      %v2233 = vrot.slane %v2225, %v2232
      %v2235 = vunpack.c.l.s4 1983009808
      %v2236 = vunpack.c.0.s8 %v2235
      %v2237 = vlaneseq
      %v2238 = vshrl.u32 %v2237, 7
      %v2239 = vsub.s32 %v2236, %v2238
      %v2240 = vrot.slane %v2226, %v2239
      %v2241 = vcombine.low %v2233, %v2240
      %v2242 = vcombine.low %v1148, %v1151
      %v2243 = vcombine.low %v1155, %v1158
      %v2245 = vunpack.c.l.s4 1983009808
      %v2246 = vunpack.c.0.s8 %v2245
      %v2247 = vlaneseq
      %v2248 = vshrl.u32 %v2247, 7
      %v2249 = vsub.s32 %v2246, %v2248
      %v2250 = vrot.slane %v2242, %v2249
      %v2252 = vunpack.c.l.s4 1983009808
      %v2253 = vunpack.c.0.s8 %v2252
      %v2254 = vlaneseq
      %v2255 = vshrl.u32 %v2254, 7
      %v2256 = vsub.s32 %v2253, %v2255
      %v2257 = vrot.slane %v2243, %v2256
      %v2258 = vcombine.low %v2250, %v2257
      %v2259 = vcombine.low %v1161, %v1217
      %v2260 = vcombine.low %v1220, %v1223
      %v2262 = vunpack.c.l.s4 1983009808
      %v2263 = vunpack.c.0.s8 %v2262
      %v2264 = vlaneseq
      %v2265 = vshrl.u32 %v2264, 7
      %v2266 = vsub.s32 %v2263, %v2265
      %v2267 = vrot.slane %v2259, %v2266
      %v2269 = vunpack.c.l.s4 1983009808
      %v2270 = vunpack.c.0.s8 %v2269
      %v2271 = vlaneseq
      %v2272 = vshrl.u32 %v2271, 7
      %v2273 = vsub.s32 %v2270, %v2272
      %v2274 = vrot.slane %v2260, %v2273
      %v2275 = vcombine.low %v2267, %v2274
      %2276 = vrot.lane.b32.xlu0 %v2139, 40
      %v2277 = vpop.permute.xlu0 %2276
      %2278 = vrot.lane.b32.xlu0 %v2156, 40
      %v2279 = vpop.permute.xlu0 %2278
      %2280 = vrot.lane.b32.xlu0 %v2173, 40
      %v2281 = vpop.permute.xlu0 %2280
      %2282 = vrot.lane.b32.xlu0 %v2190, 40
      %v2283 = vpop.permute.xlu0 %2282
      %2284 = vrot.lane.b32.xlu0 %v2207, 40
      %v2285 = vpop.permute.xlu0 %2284
      %2286 = vrot.lane.b32.xlu0 %v2224, 40
      %v2287 = vpop.permute.xlu0 %2286
      %2288 = vrot.lane.b32.xlu0 %v2241, 40
      %v2289 = vpop.permute.xlu0 %2288
      %2290 = vrot.lane.b32.xlu0 %v2258, 40
      %v2291 = vpop.permute.xlu0 %2290
      %2292 = vrot.lane.b32.xlu0 %v2275, 40
      %v2293 = vpop.permute.xlu0 %2292
      %v2294 = vcombine.low %v1318, %v1328
      %v2295 = vcombine.low %v1335, %v1345
      %v2296 = vcombine.low %v1352, %v1362
      %v2297 = vcombine.low %v1369, %v1379
      %v2298 = vcombine.low %v1386, %v1396
      %v2299 = vcombine.low %v1403, %v1413
      %v2300 = vcombine.low %v1420, %v1430
      %v2301 = vcombine.low %v1170, %v1178
      %v2303 = vunpack.c.l.s4 1983009808
      %v2304 = vunpack.c.0.s8 %v2303
      %v2305 = vlaneseq
      %v2306 = vshrl.u32 %v2305, 7
      %v2307 = vsub.s32 %v2304, %v2306
      %v2308 = vrot.slane %v2301, %v2307
      %v2309 = vcombine.low %v1437, %v2308
      %v2310 = vcombine.low %v1177, %v1232
      %v2311 = vcombine.low %v1240, %v1239
      %v2313 = vunpack.c.l.s4 1983009808
      %v2314 = vunpack.c.0.s8 %v2313
      %v2315 = vlaneseq
      %v2316 = vshrl.u32 %v2315, 7
      %v2317 = vsub.s32 %v2314, %v2316
      %v2318 = vrot.slane %v2310, %v2317
      %v2320 = vunpack.c.l.s4 1983009808
      %v2321 = vunpack.c.0.s8 %v2320
      %v2322 = vlaneseq
      %v2323 = vshrl.u32 %v2322, 7
      %v2324 = vsub.s32 %v2321, %v2323
      %v2325 = vrot.slane %v2311, %v2324
      %v2326 = vcombine.low %v2318, %v2325
      %2327 = vrot.lane.b32.xlu0 %v2294, 48
      %v2328 = vpop.permute.xlu0 %2327
      %2329 = vrot.lane.b32.xlu0 %v2295, 48
      %v2330 = vpop.permute.xlu0 %2329
      %2331 = vrot.lane.b32.xlu0 %v2296, 48
      %v2332 = vpop.permute.xlu0 %2331
      %2333 = vrot.lane.b32.xlu0 %v2297, 48
      %v2334 = vpop.permute.xlu0 %2333
      %2335 = vrot.lane.b32.xlu0 %v2298, 48
      %v2336 = vpop.permute.xlu0 %2335
      %2337 = vrot.lane.b32.xlu0 %v2299, 48
      %v2338 = vpop.permute.xlu0 %2337
      %2339 = vrot.lane.b32.xlu0 %v2300, 48
      %v2340 = vpop.permute.xlu0 %2339
      %2341 = vrot.lane.b32.xlu0 %v2309, 48
      %v2342 = vpop.permute.xlu0 %2341
      %2343 = vrot.lane.b32.xlu0 %v2326, 48
      %v2344 = vpop.permute.xlu0 %2343
      %v2345 = vcombine.low %v1471, %v1481
      %v2346 = vcombine.low %v1488, %v1498
      %v2347 = vcombine.low %v1505, %v1515
      %v2348 = vcombine.low %v1522, %v1532
      %v2349 = vcombine.low %v1539, %v1549
      %v2350 = vcombine.low %v1556, %v1566
      %v2351 = vcombine.low %v1573, %v1583
      %v2352 = vcombine.low %v1193, %v1203
      %v2354 = vunpack.c.l.s4 1983009808
      %v2355 = vunpack.c.0.s8 %v2354
      %v2356 = vlaneseq
      %v2357 = vshrl.u32 %v2356, 7
      %v2358 = vsub.s32 %v2355, %v2357
      %v2359 = vrot.slane %v2352, %v2358
      %v2360 = vcombine.low %v1590, %v2359
      %v2361 = vcombine.low %v1213, %v1255
      %v2362 = vcombine.low %v1265, %v1275
      %v2364 = vunpack.c.l.s4 1983009808
      %v2365 = vunpack.c.0.s8 %v2364
      %v2366 = vlaneseq
      %v2367 = vshrl.u32 %v2366, 7
      %v2368 = vsub.s32 %v2365, %v2367
      %v2369 = vrot.slane %v2361, %v2368
      %v2371 = vunpack.c.l.s4 1983009808
      %v2372 = vunpack.c.0.s8 %v2371
      %v2373 = vlaneseq
      %v2374 = vshrl.u32 %v2373, 7
      %v2375 = vsub.s32 %v2372, %v2374
      %v2376 = vrot.slane %v2362, %v2375
      %v2377 = vcombine.low %v2369, %v2376
      %2378 = vrot.lane.b32.xlu0 %v2345, 56
      %v2379 = vpop.permute.xlu0 %2378
      %2380 = vrot.lane.b32.xlu0 %v2346, 56
      %v2381 = vpop.permute.xlu0 %2380
      %2382 = vrot.lane.b32.xlu0 %v2347, 56
      %v2383 = vpop.permute.xlu0 %2382
      %2384 = vrot.lane.b32.xlu0 %v2348, 56
      %v2385 = vpop.permute.xlu0 %2384
      %2386 = vrot.lane.b32.xlu0 %v2349, 56
      %v2387 = vpop.permute.xlu0 %2386
      %2388 = vrot.lane.b32.xlu0 %v2350, 56
      %v2389 = vpop.permute.xlu0 %2388
      %2390 = vrot.lane.b32.xlu0 %v2351, 56
      %v2391 = vpop.permute.xlu0 %2390
      %2392 = vrot.lane.b32.xlu0 %v2360, 56
      %v2393 = vpop.permute.xlu0 %2392
      %2394 = vrot.lane.b32.xlu0 %v2377, 56
      %v2395 = vpop.permute.xlu0 %2394
      %v2396 = vcombine.low %v1642, %v1652
      %v2397 = vcombine.low %v1659, %v1669
      %v2398 = vcombine.low %v1676, %v1686
      %v2399 = vcombine.low %v1693, %v1703
      %v2400 = vcombine.low %v1710, %v1720
      %v2401 = vcombine.low %v1727, %v1737
      %v2402 = vcombine.low %v1744, %v1754
      %v2403 = vcombine.low %v1217, %v1220
      %v2405 = vunpack.c.l.s4 1983009808
      %v2406 = vunpack.c.0.s8 %v2405
      %v2407 = vlaneseq
      %v2408 = vshrl.u32 %v2407, 7
      %v2409 = vsub.s32 %v2406, %v2408
      %v2410 = vrot.slane %v2403, %v2409
      %v2411 = vcombine.low %v1761, %v2410
      %v2412 = vcombine.low %v1223, %v1279
      %v2413 = vcombine.low %v1282, %v1285
      %v2415 = vunpack.c.l.s4 1983009808
      %v2416 = vunpack.c.0.s8 %v2415
      %v2417 = vlaneseq
      %v2418 = vshrl.u32 %v2417, 7
      %v2419 = vsub.s32 %v2416, %v2418
      %v2420 = vrot.slane %v2412, %v2419
      %v2422 = vunpack.c.l.s4 1983009808
      %v2423 = vunpack.c.0.s8 %v2422
      %v2424 = vlaneseq
      %v2425 = vshrl.u32 %v2424, 7
      %v2426 = vsub.s32 %v2423, %v2425
      %v2427 = vrot.slane %v2413, %v2426
      %v2428 = vcombine.low %v2420, %v2427
      %2429 = vrot.lane.b32.xlu0 %v2396, 64
      %v2430 = vpop.permute.xlu0 %2429
      %2431 = vrot.lane.b32.xlu0 %v2397, 64
      %v2432 = vpop.permute.xlu0 %2431
      %2433 = vrot.lane.b32.xlu0 %v2398, 64
      %v2434 = vpop.permute.xlu0 %2433
      %2435 = vrot.lane.b32.xlu0 %v2399, 64
      %v2436 = vpop.permute.xlu0 %2435
      %2437 = vrot.lane.b32.xlu0 %v2400, 64
      %v2438 = vpop.permute.xlu0 %2437
      %2439 = vrot.lane.b32.xlu0 %v2401, 64
      %v2440 = vpop.permute.xlu0 %2439
      %2441 = vrot.lane.b32.xlu0 %v2402, 64
      %v2442 = vpop.permute.xlu0 %2441
      %2443 = vrot.lane.b32.xlu0 %v2411, 64
      %v2444 = vpop.permute.xlu0 %2443
      %2445 = vrot.lane.b32.xlu0 %v2428, 64
      %v2446 = vpop.permute.xlu0 %2445
      %vm2447 = vcmask 64512
      %v2450 = vsel %vm2447, %v1302, %v1593
      %v2453 = vsel %vm2447, %v1319, %v1595
      %v2456 = vsel %vm2447, %v1336, %v1597
      %v2459 = vsel %vm2447, %v1353, %v1599
      %v2462 = vsel %vm2447, %v1370, %v1601
      %v2465 = vsel %vm2447, %v1387, %v1603
      %v2468 = vsel %vm2447, %v1404, %v1605
      %v2471 = vsel %vm2447, %v1421, %v1607
      %v2474 = vsel %vm2447, %v1438, %v1609
      %vm2475 = vcmask 130048
      %v2477 = vsel %vm2475, %v2450, %v1764
      %v2479 = vsel %vm2475, %v2453, %v1766
      %v2481 = vsel %vm2475, %v2456, %v1768
      %v2483 = vsel %vm2475, %v2459, %v1770
      %v2485 = vsel %vm2475, %v2462, %v1772
      %v2487 = vsel %vm2475, %v2465, %v1774
      %v2489 = vsel %vm2475, %v2468, %v1776
      %v2491 = vsel %vm2475, %v2471, %v1778
      %v2493 = vsel %vm2475, %v2474, %v1780
      %vm2494 = vcmask 195584
      %v2496 = vsel %vm2494, %v2477, %v1935
      %v2498 = vsel %vm2494, %v2479, %v1937
      %v2500 = vsel %vm2494, %v2481, %v1939
      %v2502 = vsel %vm2494, %v2483, %v1941
      %v2504 = vsel %vm2494, %v2485, %v1943
      %v2506 = vsel %vm2494, %v2487, %v1945
      %v2508 = vsel %vm2494, %v2489, %v1947
      %v2510 = vsel %vm2494, %v2491, %v1949
      %v2512 = vsel %vm2494, %v2493, %v1951
      %vm2513 = vcmask 261120
      %v2515 = vsel %vm2513, %v2496, %v2106
      %v2517 = vsel %vm2513, %v2498, %v2108
      %v2519 = vsel %vm2513, %v2500, %v2110
      %v2521 = vsel %vm2513, %v2502, %v2112
      %v2523 = vsel %vm2513, %v2504, %v2114
      %v2525 = vsel %vm2513, %v2506, %v2116
      %v2527 = vsel %vm2513, %v2508, %v2118
      %v2529 = vsel %vm2513, %v2510, %v2120
      %v2531 = vsel %vm2513, %v2512, %v2122
      %vm2532 = vcmask 326656
      %v2534 = vsel %vm2532, %v2515, %v2277
      %v2536 = vsel %vm2532, %v2517, %v2279
      %v2538 = vsel %vm2532, %v2519, %v2281
      %v2540 = vsel %vm2532, %v2521, %v2283
      %v2542 = vsel %vm2532, %v2523, %v2285
      %v2544 = vsel %vm2532, %v2525, %v2287
      %v2546 = vsel %vm2532, %v2527, %v2289
      %v2548 = vsel %vm2532, %v2529, %v2291
      %v2550 = vsel %vm2532, %v2531, %v2293
      %vm2551 = vcmask 392192
      %v2553 = vsel %vm2551, %v2534, %v2328
      %v2555 = vsel %vm2551, %v2536, %v2330
      %v2557 = vsel %vm2551, %v2538, %v2332
      %v2559 = vsel %vm2551, %v2540, %v2334
      %v2561 = vsel %vm2551, %v2542, %v2336
      %v2563 = vsel %vm2551, %v2544, %v2338
      %v2565 = vsel %vm2551, %v2546, %v2340
      %v2567 = vsel %vm2551, %v2548, %v2342
      %v2569 = vsel %vm2551, %v2550, %v2344
      %vm2570 = vcmask 457728
      %v2572 = vsel %vm2570, %v2553, %v2379
      %v2574 = vsel %vm2570, %v2555, %v2381
      %v2576 = vsel %vm2570, %v2557, %v2383
      %v2578 = vsel %vm2570, %v2559, %v2385
      %v2580 = vsel %vm2570, %v2561, %v2387
      %v2582 = vsel %vm2570, %v2563, %v2389
      %v2584 = vsel %vm2570, %v2565, %v2391
      %v2586 = vsel %vm2570, %v2567, %v2393
      %v2588 = vsel %vm2570, %v2569, %v2395
      %vm2589 = vcmask 523264
      %v2591 = vsel %vm2589, %v2572, %v2430
      %v2593 = vsel %vm2589, %v2574, %v2432
      %v2595 = vsel %vm2589, %v2576, %v2434
      %v2597 = vsel %vm2589, %v2578, %v2436
      %v2599 = vsel %vm2589, %v2580, %v2438
      %v2601 = vsel %vm2589, %v2582, %v2440
      %v2603 = vsel %vm2589, %v2584, %v2442
      %v2605 = vsel %vm2589, %v2586, %v2444
      %v2607 = vsel %vm2589, %v2588, %v2446
      %v2608 = vld [vmem:[%s3] sm:$0xf]
      %v2609 = vld [vmem:[%s3 + $0x4] sm:$0xf]
      %v2610 = vld [vmem:[%s3 + $0x8] sm:$0xf]
      %v2611 = vld [vmem:[%s3 + $0xc] sm:$0xf]
      %v2612 = vld [vmem:[%s3 + $0x10] sm:$0xf]
      %v2613 = vld [vmem:[%s3 + $0x14] sm:$0xf]
      %v2614 = vld [vmem:[%s3 + $0x18] sm:$0xf]
      %v2615 = vld [vmem:[%s3 + $0x1c] sm:$0xf]
      %v2616 = vld [vmem:[%s3 + $0x20] sm:$0xf]
      %v2617 = vld [vmem:[%s4] sm:$0x1]
      %v2619 = vlaneseq
      %v2620 = vshrl.u32 %v2619, 7
      %v2621 = vsub.s32 0, %v2620
      %v2622 = vrot.slane %v2617, %v2621
      %v2633 = vunpack.c.l.b16 %v2608
      %v2634 = vunpack.c.l.b16 %v2609
      %v2635 = vunpack.c.l.b16 %v2610
      %v2636 = vunpack.c.l.b16 %v2611
      %v2637 = vunpack.c.l.b16 %v2612
      %v2638 = vunpack.c.l.b16 %v2613
      %v2639 = vunpack.c.l.b16 %v2614
      %v2640 = vunpack.c.l.b16 %v2615
      %v2641 = vunpack.c.l.b16 %v2616
      %v2642 = vpack.c.b16 %v2634, %v2633
      %v2643 = vpack.c.b16 %v2636, %v2635
      %v2644 = vpack.c.b16 %v2638, %v2637
      %v2645 = vpack.c.b16 %v2640, %v2639
      %v2646 = vpack.c.b16 %v2641, %v2641
      %vm2651 = vcmask 588800
      %v2652 = vsel %vm2651, %v2591, 0
      %v2654 = vsel %vm2651, %v2593, 0
      %v2656 = vsel %vm2651, %v2595, 0
      %v2658 = vsel %vm2651, %v2597, 0
      %v2660 = vsel %vm2651, %v2599, 0
      %v2662 = vsel %vm2651, %v2601, 0
      %v2664 = vsel %vm2651, %v2603, 0
      %v2666 = vsel %vm2651, %v2605, 0
      %v2668 = vsel %vm2651, %v2607, 0
      %vm2670 = vcmask 1043456
      %v2672 = vsel %vm2670, %v2646, 0
      %2674 = vmatprep.subr.bf16.mxu0 0
      %2675 = vmatpush1.bf16.msra.mxu0 0
      %2676 = vmatprep.subr.bf16.mxu0 0
      %2677 = vmatpush1.bf16.msra.mxu0 0
      %2678 = vmatprep.subr.bf16.mxu0 0
      %2679 = vmatpush1.bf16.msra.mxu0 0
      %2680 = vmatprep.subr.bf16.mxu0 0
      %2681 = vmatpush1.bf16.msra.mxu0 %v2672
      %2682 = vmatprep.subr.bf16.mxu0 0
      %2683 = vmatpush1.bf16.msra.mxu0 %v2645
      %2684 = vmatprep.subr.bf16.mxu0 0
      %2685 = vmatpush1.bf16.msra.mxu0 %v2644
      %2686 = vmatprep.subr.bf16.mxu0 0
      %2687 = vmatpush1.bf16.msra.mxu0 %v2643
      %2688 = vmatprep.subr.bf16.mxu0 0
      %2689 = vmatpush1.bf16.msra.mxu0 %v2642
      %2690 = vmatprep.subr.bf16.mxu0 0
      %2691 = vmatpush2.bf16.msra.mxu0 0
      %2692 = vmatprep.subr.bf16.mxu0 0
      %2693 = vmatpush2.bf16.msra.mxu0 0
      %2694 = vmatprep.subr.bf16.mxu0 0
      %2695 = vmatpush2.bf16.msra.mxu0 0
      %2696 = vmatprep.subr.bf16.mxu0 0
      %2697 = vmatpush2.bf16.msra.mxu0 0
      %2698 = vmatprep.subr.bf16.mxu0 0
      %2699 = vmatpush2.bf16.msra.mxu0 0
      %2700 = vmatprep.subr.bf16.mxu0 0
      %2701 = vmatpush2.bf16.msra.mxu0 0
      %2702 = vmatprep.subr.bf16.mxu0 0
      %2703 = vmatpush2.bf16.msra.mxu0 0
      %2704 = vmatprep.subr.bf16.mxu0 0
      %2705 = vmatpush2.bf16.msra.mxu0 0
      %2706 = vmatprep.mubr.bf16.mxu0 0
      %2707 = vmatmul.mubr.bf16.gmra.mxu0 %v2652
      %v2708 = vpop.f32.mrf.mxu0
      %v2709 = vadd.f32 %v2622, %v2708
      %v2710 = vpop.f32.mrf.mxu0
      %v2711 = vpop.f32.mrf.mxu0
      %v2712 = vadd.f32 %v2622, %v2711
      %v2713 = vpop.f32.mrf.mxu0
      %2714 = vmatprep.mubr.bf16.mxu0 0
      %2715 = vmatmul.mubr.bf16.gmra.mxu0 %v2654
      %v2716 = vpop.f32.mrf.mxu0
      %v2717 = vadd.f32 %v2622, %v2716
      %v2718 = vpop.f32.mrf.mxu0
      %v2719 = vpop.f32.mrf.mxu0
      %v2720 = vadd.f32 %v2622, %v2719
      %v2721 = vpop.f32.mrf.mxu0
      %2722 = vmatprep.mubr.bf16.mxu0 0
      %2723 = vmatmul.mubr.bf16.gmra.mxu0 %v2656
      %v2724 = vpop.f32.mrf.mxu0
      %v2725 = vadd.f32 %v2622, %v2724
      %v2726 = vpop.f32.mrf.mxu0
      %v2727 = vpop.f32.mrf.mxu0
      %v2728 = vadd.f32 %v2622, %v2727
      %v2729 = vpop.f32.mrf.mxu0
      %2730 = vmatprep.mubr.bf16.mxu0 0
      %2731 = vmatmul.mubr.bf16.gmra.mxu0 %v2658
      %v2732 = vpop.f32.mrf.mxu0
      %v2733 = vadd.f32 %v2622, %v2732
      %v2734 = vpop.f32.mrf.mxu0
      %v2735 = vpop.f32.mrf.mxu0
      %v2736 = vadd.f32 %v2622, %v2735
      %v2737 = vpop.f32.mrf.mxu0
      %2738 = vmatprep.mubr.bf16.mxu0 0
      %2739 = vmatmul.mubr.bf16.gmra.mxu0 %v2660
      %v2740 = vpop.f32.mrf.mxu0
      %v2741 = vadd.f32 %v2622, %v2740
      %v2742 = vpop.f32.mrf.mxu0
      %v2743 = vpop.f32.mrf.mxu0
      %v2744 = vadd.f32 %v2622, %v2743
      %v2745 = vpop.f32.mrf.mxu0
      %2746 = vmatprep.mubr.bf16.mxu0 0
      %2747 = vmatmul.mubr.bf16.gmra.mxu0 %v2662
      %v2748 = vpop.f32.mrf.mxu0
      %v2749 = vadd.f32 %v2622, %v2748
      %v2750 = vpop.f32.mrf.mxu0
      %v2751 = vpop.f32.mrf.mxu0
      %v2752 = vadd.f32 %v2622, %v2751
      %v2753 = vpop.f32.mrf.mxu0
      %2754 = vmatprep.mubr.bf16.mxu0 0
      %2755 = vmatmul.mubr.bf16.gmra.mxu0 %v2664
      %v2756 = vpop.f32.mrf.mxu0
      %v2757 = vadd.f32 %v2622, %v2756
      %v2758 = vpop.f32.mrf.mxu0
      %v2759 = vpop.f32.mrf.mxu0
      %v2760 = vadd.f32 %v2622, %v2759
      %v2761 = vpop.f32.mrf.mxu0
      %2762 = vmatprep.mubr.bf16.mxu0 0
      %2763 = vmatmul.mubr.bf16.gmra.mxu0 %v2666
      %v2764 = vpop.f32.mrf.mxu0
      %v2765 = vadd.f32 %v2622, %v2764
      %v2766 = vpop.f32.mrf.mxu0
      %v2767 = vpop.f32.mrf.mxu0
      %v2768 = vadd.f32 %v2622, %v2767
      %v2769 = vpop.f32.mrf.mxu0
      %2770 = vmatprep.mubr.bf16.mxu0 0
      %2771 = vmatmul.mubr.bf16.gmra.mxu0 %v2668
      %v2772 = vpop.f32.mrf.mxu0
      %v2773 = vadd.f32 %v2622, %v2772
      %v2774 = vpop.f32.mrf.mxu0
      %v2775 = vpop.f32.mrf.mxu0
      %v2776 = vadd.f32 %v2622, %v2775
      %v2777 = vpop.f32.mrf.mxu0
      %2778 = vdwg.mxu0
      %v2779 = vsel %vm2447, %v2709, 0.0
      %v2780 = vsel %vm2447, %v2712, 0.0
      %v2781 = vadd.f32 %v2779, %v2780
      %v2782 = vsel %vm2447, %v2717, 0.0
      %v2783 = vadd.f32 %v2781, %v2782
      %v2784 = vsel %vm2447, %v2720, 0.0
      %v2785 = vadd.f32 %v2783, %v2784
      %v2786 = vsel %vm2447, %v2725, 0.0
      %v2787 = vadd.f32 %v2785, %v2786
      %v2788 = vsel %vm2447, %v2728, 0.0
      %v2789 = vadd.f32 %v2787, %v2788
      %v2790 = vsel %vm2447, %v2733, 0.0
      %v2791 = vadd.f32 %v2789, %v2790
      %v2792 = vsel %vm2447, %v2736, 0.0
      %v2793 = vadd.f32 %v2791, %v2792
      %v2794 = vsel %vm2447, %v2741, 0.0
      %v2795 = vadd.f32 %v2793, %v2794
      %v2796 = vsel %vm2447, %v2744, 0.0
      %v2797 = vadd.f32 %v2795, %v2796
      %v2798 = vsel %vm2447, %v2749, 0.0
      %v2799 = vadd.f32 %v2797, %v2798
      %v2800 = vsel %vm2447, %v2752, 0.0
      %v2801 = vadd.f32 %v2799, %v2800
      %v2802 = vsel %vm2447, %v2757, 0.0
      %v2803 = vadd.f32 %v2801, %v2802
      %v2804 = vsel %vm2447, %v2760, 0.0
      %v2805 = vadd.f32 %v2803, %v2804
      %v2806 = vsel %vm2447, %v2765, 0.0
      %v2807 = vadd.f32 %v2805, %v2806
      %v2808 = vsel %vm2447, %v2768, 0.0
      %v2809 = vadd.f32 %v2807, %v2808
      %v2810 = vsel %vm2447, %v2773, 0.0
      %v2811 = vadd.f32 %v2809, %v2810
      %v2812 = vsel %vm2447, %v2776, 0.0
      %v2813 = vadd.f32 %v2811, %v2812
      %v2814 = vrot.slane %v2813, 4
      %v2815 = vadd.f32 %v2813, %v2814
      %v2816 = vrot.slane %v2815, 2
      %v2817 = vadd.f32 %v2815, %v2816
      %v2818 = vrot.slane %v2817, 1
      %v2819 = vadd.f32 %v2817, %v2818
      %v2820 = vmul.f32 %v2709, %v2709
      %v2821 = vmul.f32 %v2712, %v2712
      %v2822 = vmul.f32 %v2717, %v2717
      %v2823 = vmul.f32 %v2720, %v2720
      %v2824 = vmul.f32 %v2725, %v2725
      %v2825 = vmul.f32 %v2728, %v2728
      %v2826 = vmul.f32 %v2733, %v2733
      %v2827 = vmul.f32 %v2736, %v2736
      %v2828 = vmul.f32 %v2741, %v2741
      %v2829 = vmul.f32 %v2744, %v2744
      %v2830 = vmul.f32 %v2749, %v2749
      %v2831 = vmul.f32 %v2752, %v2752
      %v2832 = vmul.f32 %v2757, %v2757
      %v2833 = vmul.f32 %v2760, %v2760
      %v2834 = vmul.f32 %v2765, %v2765
      %v2835 = vmul.f32 %v2768, %v2768
      %v2836 = vmul.f32 %v2773, %v2773
      %v2837 = vmul.f32 %v2776, %v2776
      %v2838 = vsel %vm2447, %v2820, 0.0
      %v2839 = vsel %vm2447, %v2821, 0.0
      %v2840 = vadd.f32 %v2838, %v2839
      %v2841 = vsel %vm2447, %v2822, 0.0
      %v2842 = vadd.f32 %v2840, %v2841
      %v2843 = vsel %vm2447, %v2823, 0.0
      %v2844 = vadd.f32 %v2842, %v2843
      %v2845 = vsel %vm2447, %v2824, 0.0
      %v2846 = vadd.f32 %v2844, %v2845
      %v2847 = vsel %vm2447, %v2825, 0.0
      %v2848 = vadd.f32 %v2846, %v2847
      %v2849 = vsel %vm2447, %v2826, 0.0
      %v2850 = vadd.f32 %v2848, %v2849
      %v2851 = vsel %vm2447, %v2827, 0.0
      %v2852 = vadd.f32 %v2850, %v2851
      %v2853 = vsel %vm2447, %v2828, 0.0
      %v2854 = vadd.f32 %v2852, %v2853
      %v2855 = vsel %vm2447, %v2829, 0.0
      %v2856 = vadd.f32 %v2854, %v2855
      %v2857 = vsel %vm2447, %v2830, 0.0
      %v2858 = vadd.f32 %v2856, %v2857
      %v2859 = vsel %vm2447, %v2831, 0.0
      %v2860 = vadd.f32 %v2858, %v2859
      %v2861 = vsel %vm2447, %v2832, 0.0
      %v2862 = vadd.f32 %v2860, %v2861
      %v2863 = vsel %vm2447, %v2833, 0.0
      %v2864 = vadd.f32 %v2862, %v2863
      %v2865 = vsel %vm2447, %v2834, 0.0
      %v2866 = vadd.f32 %v2864, %v2865
      %v2867 = vsel %vm2447, %v2835, 0.0
      %v2868 = vadd.f32 %v2866, %v2867
      %v2869 = vsel %vm2447, %v2836, 0.0
      %v2870 = vadd.f32 %v2868, %v2869
      %v2871 = vsel %vm2447, %v2837, 0.0
      %v2872 = vadd.f32 %v2870, %v2871
      %v2873 = vrot.slane %v2872, 4
      %v2874 = vadd.f32 %v2872, %v2873
      %v2875 = vrot.slane %v2874, 2
      %v2876 = vadd.f32 %v2874, %v2875
      %v2877 = vrot.slane %v2876, 1
      %v2878 = vadd.f32 %v2876, %v2877
      %vm2879 = vcmask 1040384
      %v2880 = vsel %vm2879, %v2819, %v2878
      %vm2881 = vcmask 58368
      %2882 = vst.msk [vmem:[%s262] sm:$0x3] %vm2881, %v2880
      %v2901 = vcombine.high %v2709, %v2709
      %v2902 = vcombine.high %v2712, %v2712
      %v2903 = vcombine.high %v2717, %v2717
      %v2904 = vcombine.high %v2720, %v2720
      %v2905 = vcombine.high %v2725, %v2725
      %v2906 = vcombine.high %v2728, %v2728
      %v2907 = vcombine.high %v2733, %v2733
      %v2908 = vcombine.high %v2736, %v2736
      %v2909 = vcombine.high %v2741, %v2741
      %v2910 = vcombine.high %v2744, %v2744
      %v2911 = vcombine.high %v2749, %v2749
      %v2912 = vcombine.high %v2752, %v2752
      %v2913 = vcombine.high %v2757, %v2757
      %v2914 = vcombine.high %v2760, %v2760
      %v2915 = vcombine.high %v2765, %v2765
      %v2916 = vcombine.high %v2768, %v2768
      %v2917 = vcombine.high %v2773, %v2773
      %v2918 = vcombine.high %v2776, %v2776
      %v2925 = vcombine.low %v2709, %v2901
      %v2926 = vcombine.low %v2902, %v2717
      %v2927 = vcombine.low %v2720, %v2904
      %v2928 = vcombine.low %v2905, %v2728
      %v2929 = vcombine.low %v2733, %v2907
      %v2930 = vcombine.low %v2908, %v2741
      %v2931 = vcombine.low %v2744, %v2910
      %v2932 = vcombine.low %v2911, %v2752
      %v2933 = vcombine.low %v2757, %v2913
      %v2934 = vcombine.low %v2914, %v2765
      %v2935 = vcombine.low %v2768, %v2916
      %v2936 = vcombine.low %v2917, %v2776
      %2949 = vst.msk [vmem:[%s258] sm:$0xff] %vm2447, %v2925
      %vm2950 = vcmask 60416
      %2951 = vst.msk [vmem:[%s258 + $0x8] sm:$0xf] %vm2950, %v2712
      %2952 = vst.msk [vmem:[%s258 + $0x10] sm:$0xff] %vm2447, %v2926
      %2953 = vst.msk [vmem:[%s258 + $0x18] sm:$0xf] %vm2950, %v2903
      %2954 = vst.msk [vmem:[%s258 + $0x20] sm:$0xff] %vm2447, %v2927
      %2955 = vst.msk [vmem:[%s258 + $0x28] sm:$0xf] %vm2950, %v2725
      %2956 = vst.msk [vmem:[%s258 + $0x30] sm:$0xff] %vm2447, %v2928
      %2957 = vst.msk [vmem:[%s258 + $0x38] sm:$0xf] %vm2950, %v2906
      %2958 = vst.msk [vmem:[%s258 + $0x40] sm:$0xff] %vm2447, %v2929
      %2959 = vst.msk [vmem:[%s258 + $0x48] sm:$0xf] %vm2950, %v2736
      %2960 = vst.msk [vmem:[%s258 + $0x50] sm:$0xff] %vm2447, %v2930
      %2961 = vst.msk [vmem:[%s258 + $0x58] sm:$0xf] %vm2950, %v2909
      %2962 = vst.msk [vmem:[%s258 + $0x60] sm:$0xff] %vm2447, %v2931
      %2963 = vst.msk [vmem:[%s258 + $0x68] sm:$0xf] %vm2950, %v2749
      %2964 = vst.msk [vmem:[%s258 + $0x70] sm:$0xff] %vm2447, %v2932
      %2965 = vst.msk [vmem:[%s258 + $0x78] sm:$0xf] %vm2950, %v2912
      %2966 = vst.msk [vmem:[%s258 + $0x80] sm:$0xff] %vm2447, %v2933
      %2967 = vst.msk [vmem:[%s258 + $0x88] sm:$0xf] %vm2950, %v2760
      %2968 = vst.msk [vmem:[%s258 + $0x90] sm:$0xff] %vm2447, %v2934
      %2969 = vst.msk [vmem:[%s258 + $0x98] sm:$0xf] %vm2950, %v2915
      %2970 = vst.msk [vmem:[%s258 + $0xa0] sm:$0xff] %vm2447, %v2935
      %2971 = vst.msk [vmem:[%s258 + $0xa8] sm:$0xf] %vm2950, %v2773
      %2972 = vst.msk [vmem:[%s258 + $0xb0] sm:$0xff] %vm2447, %v2936
      %2973 = vst.msk [vmem:[%s258 + $0xb8] sm:$0xf] %vm2950, %v2918
      %p2974 = scmp.lt.s32.totalorder %s18, 1
      %s2975 = scalar_select %p2974, %s18, 1
      %s2976 = smul.addr %s2975, 24
      %s2977 = smul.addr %s2976, 8
      %s2978 = scalar_lea.vmem %s5, %s2977
      %p2979 = scmp.lt.s32.totalorder %s18, 1
      %s2980 = scalar_select %p2979, %s18, 1
      %s2981 = smul.addr %s2980, 2
      %s2982 = scalar_lea.vmem %s6, %s2981
      // Predicated region
      $region41: #{encoder_block.4} parent=39 // pred_check
        %p2983 = pneg %p146
      $region42: #{encoder_block.4} parent=39 // pred_check_branch
        %2985 = sbr.rel (%p2983) target = $region44
      $region43: #{encoder_block.4} parent=39 // pred_region
        _
      $region44: #{encoder_block.4} parent=39 // pred_fallthru
        _
      // Predicated region
      $region45: #{encoder_block.4} parent=39 // pred_check
        %p2986 = pneg %p172
      $region46: #{encoder_block.4} parent=39 // pred_check_branch
        %2988 = sbr.rel (%p2986) target = $region48
      $region47: #{encoder_block.4} parent=39 // pred_region
        _
      $region48: #{encoder_block.4} parent=39 // pred_fallthru
        _
    $region40: #{encoder_block.4} parent=5 // pred_fallthru
      _
    %p2989 = scmp.le.s32.totalorder 2, %s13
    // Predicated region
    $region49: #{encoder_block.4} parent=5 // pred_check
      %p2990 = pneg %p2989
    $region50: #{encoder_block.4} parent=5 // pred_check_branch
      %2992 = sbr.rel (%p2990) target = $region52
    $region51: #{encoder_block.4} parent=5 // pred_region
      %s2993 = ssub.s32 %s13, 2
      // Predicated region
      $region53: #{encoder_block.4} parent=51 // pred_check
        %p2994 = pneg %p152
      $region54: #{encoder_block.4} parent=51 // pred_check_branch
        %2996 = sbr.rel (%p2994) target = $region56
      $region55: #{encoder_block.4} parent=51 // pred_region
        %p2997 = scmp.lt.s32.totalorder %s19, 1
        %s2998 = scalar_select %p2997, %s19, 1
        %s2999 = smul.addr %s2998, 24
        %s3000 = smul.addr %s2999, 8
        %s3001 = scalar_lea.vmem %s5, %s3000
      $region56: #{encoder_block.4} parent=51 // pred_fallthru
        _
      // Predicated region
      $region57: #{encoder_block.4} parent=51 // pred_check
        %p3002 = pneg %p178
      $region58: #{encoder_block.4} parent=51 // pred_check_branch
        %3004 = sbr.rel (%p3002) target = $region60
      $region59: #{encoder_block.4} parent=51 // pred_region
        %p3005 = scmp.lt.s32.totalorder %s19, 1
        %s3006 = scalar_select %p3005, %s19, 1
        %s3007 = smul.addr %s3006, 2
        %s3008 = scalar_lea.vmem %s6, %s3007
      $region60: #{encoder_block.4} parent=51 // pred_fallthru
        _
    $region52: #{encoder_block.4} parent=5 // pred_fallthru
      _
  $region6: #{encoder_block.4} parent=0 // loop_footer
    %s17 = sadd.s32 1, %s13
  $region7: #{encoder_block.4} parent=0 // loop_footer_branch
    %12 = sbr.rel target = $region3
  $region8: #{encoder_block.4} parent=0 // loop_exit
    _

// kernel: encoder_block.3
$region0: #{encoder_block.3}
  #allocation0 [shape = 'u32[]', space=smem, size = 0x4, offset = 0x4, fixed_abs, tag = 'smem constant byte address 0x4 - core index']
  #allocation1 [shape = 'u32[144,128]{1,0:T(1,128)}', space=vmem, size = 0x12000, scoped, tag = 'internal scratch']
  %s0 = inlined_call_operand.vmem [shape: f32[2,16,16,4], index: 0, kind: input, shape index: {}]
  %s1 = inlined_call_operand.vmem [shape: bf16[36,8], index: 1, kind: input, shape index: {}]
  %s2 = inlined_call_operand.vmem [shape: f32[1,8], index: 2, kind: input, shape index: {}]
  %s3 = inlined_call_operand.vmem [shape: f32[2,14,14,8], index: 3, kind: output, shape index: {0}]
  %s4 = inlined_call_operand.vmem [shape: f32[2,2,8], index: 4, kind: output, shape index: {1}]
  %5 = xla_tuple %s3, %s4
  %s6 = sld [smem:[#allocation0]]
  $region53: #{encoder_block.3} parent=0
    _
  %s8 = ssub.s32 1, %s6
  %s9 = scalar_select 0, %s8, %s6
  loop: start=0, step=1, limit=4
  $region2: #{encoder_block.3} parent=0 // loop_pre_header
    _
  $region3: #{encoder_block.3} parent=0 // loop_header
    %s11 = sphi 0, %s15
    %p12 = scmp.ge.s32.totalorder %s11, 4
    %s21 = sphi 0, %s23
    %s24 = sphi 0, %s21
    %s25 = sphi 0, %s24
    %s41 = sphi 0, %s25
    %s45 = sphi 0, %s45
    %s47 = sphi 0, %s45
    %s48 = sphi 0, %s47
    %s62 = sphi 0, %s48
    %s66 = sphi 0, %s66
    %s68 = sphi 0, %s66
    %s69 = sphi 0, %s68
    %s83 = sphi 0, %s69
    %s89 = sphi 0, %s91
    %s92 = sphi 0, %s89
    %s93 = sphi 0, %s92
    %s109 = sphi 0, %s93
    %s115 = sphi 0, %s117
    %s118 = sphi 0, %s115
    %s119 = sphi 0, %s118
    %s135 = sphi 0, %s119
  $region4: #{encoder_block.3} parent=0 // loop_header_branch
    %14 = sbr.rel (%p12) target = $region8
  $region5: #{encoder_block.3} parent=0 // loop_body
    %s16 = ssub.s32 %s11, 1
    %s17 = ssub.s32 %s11, 2
    %s18 = sadd.s32 %s11, 1
    %s19 = ssub.s32 %s11, %s18
    %p20 = scmp.eq.s32.totalorder %s19, 0
    %s22 = sadd.s32 %s21, 1
    %s23 = scalar_select %p20, %s21, %s22
    %p26 = pneg %p20
    %p27 = scmp.eq.s32.totalorder %s11, 1
    %p28 = por %p26, %p27
    %p29 = scmp.ne.s32.totalorder %s21, %s24
    %p30 = scmp.eq.s32.totalorder %s11, 0
    %p31 = por %p29, %p30
    %p32 = scmp.ne.s32.totalorder %s21, %s24
    %p33 = scmp.eq.s32.totalorder %s16, 1
    %p34 = por %p32, %p33
    %p35 = scmp.ne.s32.totalorder %s24, %s25
    %p36 = scmp.eq.s32.totalorder %s16, 0
    %p37 = por %p35, %p36
    %p38 = scmp.ne.s32.totalorder %s24, %s25
    %p39 = scmp.eq.s32.totalorder %s17, 1
    %p40 = por %p38, %p39
    %p42 = scmp.ne.s32.totalorder %s25, %s41
    %p43 = scmp.eq.s32.totalorder %s17, 0
    %p44 = por %p42, %p43
    %s46 = sadd.s32 %s45, 1
    %p49 = scmp.eq.s32.totalorder %s11, 1
    %p50 = scmp.ne.s32.totalorder %s45, %s47
    %p51 = scmp.eq.s32.totalorder %s11, 0
    %p52 = por %p50, %p51
    %p53 = scmp.ne.s32.totalorder %s45, %s47
    %p54 = scmp.eq.s32.totalorder %s16, 1
    %p55 = por %p53, %p54
    %p56 = scmp.ne.s32.totalorder %s47, %s48
    %p57 = scmp.eq.s32.totalorder %s16, 0
    %p58 = por %p56, %p57
    %p59 = scmp.ne.s32.totalorder %s47, %s48
    %p60 = scmp.eq.s32.totalorder %s17, 1
    %p61 = por %p59, %p60
    %p63 = scmp.ne.s32.totalorder %s48, %s62
    %p64 = scmp.eq.s32.totalorder %s17, 0
    %p65 = por %p63, %p64
    %s67 = sadd.s32 %s66, 1
    %p70 = scmp.eq.s32.totalorder %s11, 1
    %p71 = scmp.ne.s32.totalorder %s66, %s68
    %p72 = scmp.eq.s32.totalorder %s11, 0
    %p73 = por %p71, %p72
    %p74 = scmp.ne.s32.totalorder %s66, %s68
    %p75 = scmp.eq.s32.totalorder %s16, 1
    %p76 = por %p74, %p75
    %p77 = scmp.ne.s32.totalorder %s68, %s69
    %p78 = scmp.eq.s32.totalorder %s16, 0
    %p79 = por %p77, %p78
    %p80 = scmp.ne.s32.totalorder %s68, %s69
    %p81 = scmp.eq.s32.totalorder %s17, 1
    %p82 = por %p80, %p81
    %p84 = scmp.ne.s32.totalorder %s69, %s83
    %p85 = scmp.eq.s32.totalorder %s17, 0
    %p86 = por %p84, %p85
    %s87 = ssub.s32 %s11, %s18
    %p88 = scmp.eq.s32.totalorder %s87, 0
    %s90 = sadd.s32 %s89, 1
    %s91 = scalar_select %p88, %s89, %s90
    %p94 = pneg %p88
    %p95 = scmp.eq.s32.totalorder %s11, 1
    %p96 = por %p94, %p95
    %p97 = scmp.ne.s32.totalorder %s89, %s92
    %p98 = scmp.eq.s32.totalorder %s11, 0
    %p99 = por %p97, %p98
    %p100 = scmp.ne.s32.totalorder %s89, %s92
    %p101 = scmp.eq.s32.totalorder %s16, 1
    %p102 = por %p100, %p101
    %p103 = scmp.ne.s32.totalorder %s92, %s93
    %p104 = scmp.eq.s32.totalorder %s16, 0
    %p105 = por %p103, %p104
    %p106 = scmp.ne.s32.totalorder %s92, %s93
    %p107 = scmp.eq.s32.totalorder %s17, 1
    %p108 = por %p106, %p107
    %p110 = scmp.ne.s32.totalorder %s93, %s109
    %p111 = scmp.eq.s32.totalorder %s17, 0
    %p112 = por %p110, %p111
    %s113 = ssub.s32 %s11, %s18
    %p114 = scmp.eq.s32.totalorder %s113, 0
    %s116 = sadd.s32 %s115, 1
    %s117 = scalar_select %p114, %s115, %s116
    %p120 = pneg %p114
    %p121 = scmp.eq.s32.totalorder %s11, 1
    %p122 = por %p120, %p121
    %p123 = scmp.ne.s32.totalorder %s115, %s118
    %p124 = scmp.eq.s32.totalorder %s11, 0
    %p125 = por %p123, %p124
    %p126 = scmp.ne.s32.totalorder %s115, %s118
    %p127 = scmp.eq.s32.totalorder %s16, 1
    %p128 = por %p126, %p127
    %p129 = scmp.ne.s32.totalorder %s118, %s119
    %p130 = scmp.eq.s32.totalorder %s16, 0
    %p131 = por %p129, %p130
    %p132 = scmp.ne.s32.totalorder %s118, %s119
    %p133 = scmp.eq.s32.totalorder %s17, 1
    %p134 = por %p132, %p133
    %p136 = scmp.ne.s32.totalorder %s119, %s135
    %p137 = scmp.eq.s32.totalorder %s17, 0
    %p138 = por %p136, %p137
    %p139 = scmp.le.s32.totalorder 1, %s11
    %p140 = scmp.lt.s32.totalorder %s11, 3
    %p141 = pnand %p139, %p140
    %p142 = pneg %p141
    // Predicated region
    $region9: #{encoder_block.3} parent=5 // pred_check
      _
    $region10: #{encoder_block.3} parent=5 // pred_check_branch
      %144 = sbr.rel (%p141) target = $region12
    $region11: #{encoder_block.3} parent=5 // pred_region
      %s145 = ssub.s32 %s11, 1
      // Predicated region
      $region13: #{encoder_block.3} parent=11 // pred_check
        %p146 = pneg %p58
      $region14: #{encoder_block.3} parent=11 // pred_check_branch
        %148 = sbr.rel (%p146) target = $region16
      $region15: #{encoder_block.3} parent=11 // pred_region
        _
      $region16: #{encoder_block.3} parent=11 // pred_fallthru
        _
      // Predicated region
      $region17: #{encoder_block.3} parent=11 // pred_check
        %p149 = pneg %p79
      $region18: #{encoder_block.3} parent=11 // pred_check_branch
        %151 = sbr.rel (%p149) target = $region20
      $region19: #{encoder_block.3} parent=11 // pred_region
        _
      $region20: #{encoder_block.3} parent=11 // pred_fallthru
        _
    $region12: #{encoder_block.3} parent=5 // pred_fallthru
      _
    %p152 = scmp.lt.s32.totalorder %s11, 2
    // Predicated region
    $region21: #{encoder_block.3} parent=5 // pred_check
      %p153 = pneg %p152
    $region22: #{encoder_block.3} parent=5 // pred_check_branch
      %155 = sbr.rel (%p153) target = $region24
    $region23: #{encoder_block.3} parent=5 // pred_region
      // Predicated region
      $region25: #{encoder_block.3} parent=23 // pred_check
        %p156 = pneg %p31
      $region26: #{encoder_block.3} parent=23 // pred_check_branch
        %158 = sbr.rel (%p156) target = $region28
      $region27: #{encoder_block.3} parent=23 // pred_region
        %p159 = scmp.lt.s32.totalorder %s11, 1
        %s160 = scalar_select %p159, %s11, 1
        %s161 = smul.addr %s160, 32
        %s162 = smul.addr %s161, 8
        %s163 = scalar_lea.vmem %s0, %s162
      $region28: #{encoder_block.3} parent=23 // pred_fallthru
        _
    $region24: #{encoder_block.3} parent=5 // pred_fallthru
      _
    %p164 = scmp.le.s32.totalorder 1, %s11
    %p165 = scmp.lt.s32.totalorder %s11, 3
    %p166 = pnand %p164, %p165
    %p167 = pneg %p166
    // Predicated region
    $region29: #{encoder_block.3} parent=5 // pred_check
      _
    $region30: #{encoder_block.3} parent=5 // pred_check_branch
      %169 = sbr.rel (%p166) target = $region32
    $region31: #{encoder_block.3} parent=5 // pred_region
      %s170 = ssub.s32 %s11, 1
      %p171 = scmp.lt.s32.totalorder %s16, 1
      %s172 = scalar_select %p171, %s16, 1
      %s173 = smul.addr %s172, 32
      %s174 = smul.addr %s173, 8
      %s175 = scalar_lea.vmem %s0, %s174
      %p176 = pneg %p37
      %p177 = pneg %p34
      %p178 = pneg %p58
      %p179 = pneg %p55
      %p180 = pneg %p79
      %p181 = pneg %p76
      %p182 = pneg %p105
      %p183 = pneg %p102
      %p184 = scmp.lt.s32.totalorder %s16, 1
      %s185 = scalar_select %p184, %s16, 1
      %s186 = smul.addr %s185, 28
      %s187 = smul.addr %s186, 8
      %s188 = scalar_lea.vmem %s3, %s187
      %p189 = pneg %p131
      %p190 = pneg %p128
      %p191 = scmp.lt.s32.totalorder %s16, 1
      %s192 = scalar_select %p191, %s16, 1
      %s193 = smul.addr %s192, 2
      %s194 = scalar_lea.vmem %s4, %s193
      %p195 = scmp.lt.s32.totalorder %s16, 1
      %s196 = scalar_select %p195, %s16, 1
      %s197 = smul.addr %s196, 32
      %s198 = smul.addr %s197, 8
      %s199 = scalar_lea.vmem %s0, %s198
      %p200 = scmp.lt.s32.totalorder %s16, 1
      %s201 = scalar_select %p200, %s16, 1
      %s202 = smul.addr %s201, 28
      %s203 = smul.addr %s202, 8
      %s204 = scalar_lea.vmem %s3, %s203
      %p205 = scmp.lt.s32.totalorder %s16, 1
      %s206 = scalar_select %p205, %s16, 1
      %s207 = smul.addr %s206, 2
      %s208 = scalar_lea.vmem %s4, %s207
      %v210 = vld [vmem:[%s199] sm:$0xff]
      %v211 = vld [vmem:[%s199 + $0x8] sm:$0xff]
      %v212 = vld [vmem:[%s199 + $0x10] sm:$0xff]
      %v213 = vld [vmem:[%s199 + $0x18] sm:$0xff]
      %v214 = vld [vmem:[%s199 + $0x20] sm:$0xff]
      %v215 = vld [vmem:[%s199 + $0x28] sm:$0xff]
      %v216 = vld [vmem:[%s199 + $0x30] sm:$0xff]
      %v217 = vld [vmem:[%s199 + $0x38] sm:$0xff]
      %v218 = vld [vmem:[%s199 + $0x40] sm:$0xff]
      %v219 = vld [vmem:[%s199 + $0x48] sm:$0xff]
      %v220 = vld [vmem:[%s199 + $0x50] sm:$0xff]
      %v221 = vld [vmem:[%s199 + $0x58] sm:$0xff]
      %v222 = vld [vmem:[%s199 + $0x60] sm:$0xff]
      %v223 = vld [vmem:[%s199 + $0x68] sm:$0xff]
      %v224 = vld [vmem:[%s199 + $0x70] sm:$0xff]
      %v225 = vld [vmem:[%s199 + $0x78] sm:$0xff]
      %v226 = vld [vmem:[%s199 + $0x80] sm:$0xff]
      %v227 = vld [vmem:[%s199 + $0x88] sm:$0xff]
      %v228 = vld [vmem:[%s199 + $0x90] sm:$0xff]
      %v229 = vld [vmem:[%s199 + $0x98] sm:$0xff]
      %v230 = vld [vmem:[%s199 + $0xa0] sm:$0xff]
      %v231 = vld [vmem:[%s199 + $0xa8] sm:$0xff]
      %v232 = vld [vmem:[%s199 + $0xb0] sm:$0xff]
      %v233 = vld [vmem:[%s199 + $0xb8] sm:$0xff]
      %v234 = vld [vmem:[%s199 + $0xc0] sm:$0xff]
      %v235 = vld [vmem:[%s199 + $0xc8] sm:$0xff]
      %v236 = vld [vmem:[%s199 + $0xd0] sm:$0xff]
      %v237 = vld [vmem:[%s199 + $0xd8] sm:$0xff]
      %v238 = vld [vmem:[%s199 + $0xe0] sm:$0xff]
      %v239 = vld [vmem:[%s199 + $0xe8] sm:$0xff]
      %v240 = vld [vmem:[%s199 + $0xf0] sm:$0xff]
      %v241 = vld [vmem:[%s199 + $0xf8] sm:$0xff]
      %v242 = vpack.c.bf16 %v211, %v210
      %v243 = vpack.c.bf16 %v213, %v212
      %v244 = vpack.c.bf16 %v215, %v214
      %v245 = vpack.c.bf16 %v217, %v216
      %v246 = vpack.c.bf16 %v219, %v218
      %v247 = vpack.c.bf16 %v221, %v220
      %v248 = vpack.c.bf16 %v223, %v222
      %v249 = vpack.c.bf16 %v225, %v224
      %v250 = vpack.c.bf16 %v227, %v226
      %v251 = vpack.c.bf16 %v229, %v228
      %v252 = vpack.c.bf16 %v231, %v230
      %v253 = vpack.c.bf16 %v233, %v232
      %v254 = vpack.c.bf16 %v235, %v234
      %v255 = vpack.c.bf16 %v237, %v236
      %v256 = vpack.c.bf16 %v239, %v238
      %v257 = vpack.c.bf16 %v241, %v240
      %v272 = vcombine.high %v242, %v242
      %v274 = vunpack.c.l.s4 1966171168
      %v275 = vunpack.c.0.s8 %v274
      %v276 = vlaneseq
      %v277 = vshrl.u32 %v276, 7
      %v278 = vsub.s32 %v275, %v277
      %v279 = vrot.slane %v242, %v278
      %v281 = vunpack.c.l.s4 1966171168
      %v282 = vunpack.c.0.s8 %v281
      %v283 = vlaneseq
      %v284 = vshrl.u32 %v283, 7
      %v285 = vsub.s32 %v282, %v284
      %v286 = vrot.slane %v272, %v285
      %v287 = vcombine.high %v279, %v279
      %v288 = vcombine.high %v286, %v286
      %v290 = vunpack.c.l.s4 1966171168
      %v291 = vunpack.c.0.s8 %v290
      %v292 = vlaneseq
      %v293 = vshrl.u32 %v292, 7
      %v294 = vsub.s32 %v291, %v293
      %v295 = vrot.slane %v279, %v294
      %v297 = vunpack.c.l.s4 1966171168
      %v298 = vunpack.c.0.s8 %v297
      %v299 = vlaneseq
      %v300 = vshrl.u32 %v299, 7
      %v301 = vsub.s32 %v298, %v300
      %v302 = vrot.slane %v286, %v301
      %v304 = vunpack.c.l.s4 1966171168
      %v305 = vunpack.c.0.s8 %v304
      %v306 = vlaneseq
      %v307 = vshrl.u32 %v306, 7
      %v308 = vsub.s32 %v305, %v307
      %v309 = vrot.slane %v287, %v308
      %v311 = vunpack.c.l.s4 1966171168
      %v312 = vunpack.c.0.s8 %v311
      %v313 = vlaneseq
      %v314 = vshrl.u32 %v313, 7
      %v315 = vsub.s32 %v312, %v314
      %v316 = vrot.slane %v288, %v315
      %v317 = vcombine.high %v295, %v295
      %v318 = vcombine.high %v302, %v302
      %v319 = vcombine.high %v309, %v309
      %v320 = vcombine.high %v243, %v243
      %v322 = vunpack.c.l.s4 1966171168
      %v323 = vunpack.c.0.s8 %v322
      %v324 = vlaneseq
      %v325 = vshrl.u32 %v324, 7
      %v326 = vsub.s32 %v323, %v325
      %v327 = vrot.slane %v243, %v326
      %v329 = vunpack.c.l.s4 1966171168
      %v330 = vunpack.c.0.s8 %v329
      %v331 = vlaneseq
      %v332 = vshrl.u32 %v331, 7
      %v333 = vsub.s32 %v330, %v332
      %v334 = vrot.slane %v320, %v333
      %v335 = vcombine.high %v327, %v327
      %v336 = vcombine.high %v334, %v334
      %v338 = vunpack.c.l.s4 1966171168
      %v339 = vunpack.c.0.s8 %v338
      %v340 = vlaneseq
      %v341 = vshrl.u32 %v340, 7
      %v342 = vsub.s32 %v339, %v341
      %v343 = vrot.slane %v327, %v342
      %v345 = vunpack.c.l.s4 1966171168
      %v346 = vunpack.c.0.s8 %v345
      %v347 = vlaneseq
      %v348 = vshrl.u32 %v347, 7
      %v349 = vsub.s32 %v346, %v348
      %v350 = vrot.slane %v334, %v349
      %v352 = vunpack.c.l.s4 1966171168
      %v353 = vunpack.c.0.s8 %v352
      %v354 = vlaneseq
      %v355 = vshrl.u32 %v354, 7
      %v356 = vsub.s32 %v353, %v355
      %v357 = vrot.slane %v335, %v356
      %v359 = vunpack.c.l.s4 1966171168
      %v360 = vunpack.c.0.s8 %v359
      %v361 = vlaneseq
      %v362 = vshrl.u32 %v361, 7
      %v363 = vsub.s32 %v360, %v362
      %v364 = vrot.slane %v336, %v363
      %v365 = vcombine.high %v343, %v343
      %v366 = vcombine.high %v350, %v350
      %v367 = vcombine.high %v357, %v357
      %v368 = vcombine.high %v244, %v244
      %v370 = vunpack.c.l.s4 1966171168
      %v371 = vunpack.c.0.s8 %v370
      %v372 = vlaneseq
      %v373 = vshrl.u32 %v372, 7
      %v374 = vsub.s32 %v371, %v373
      %v375 = vrot.slane %v244, %v374
      %v377 = vunpack.c.l.s4 1966171168
      %v378 = vunpack.c.0.s8 %v377
      %v379 = vlaneseq
      %v380 = vshrl.u32 %v379, 7
      %v381 = vsub.s32 %v378, %v380
      %v382 = vrot.slane %v368, %v381
      %v383 = vcombine.high %v375, %v375
      %v384 = vcombine.high %v382, %v382
      %v386 = vunpack.c.l.s4 1966171168
      %v387 = vunpack.c.0.s8 %v386
      %v388 = vlaneseq
      %v389 = vshrl.u32 %v388, 7
      %v390 = vsub.s32 %v387, %v389
      %v391 = vrot.slane %v375, %v390
      %v393 = vunpack.c.l.s4 1966171168
      %v394 = vunpack.c.0.s8 %v393
      %v395 = vlaneseq
      %v396 = vshrl.u32 %v395, 7
      %v397 = vsub.s32 %v394, %v396
      %v398 = vrot.slane %v382, %v397
      %v400 = vunpack.c.l.s4 1966171168
      %v401 = vunpack.c.0.s8 %v400
      %v402 = vlaneseq
      %v403 = vshrl.u32 %v402, 7
      %v404 = vsub.s32 %v401, %v403
      %v405 = vrot.slane %v383, %v404
      %v407 = vunpack.c.l.s4 1966171168
      %v408 = vunpack.c.0.s8 %v407
      %v409 = vlaneseq
      %v410 = vshrl.u32 %v409, 7
      %v411 = vsub.s32 %v408, %v410
      %v412 = vrot.slane %v384, %v411
      %v413 = vcombine.high %v391, %v391
      %v414 = vcombine.high %v398, %v398
      %v415 = vcombine.high %v405, %v405
      %v416 = vcombine.high %v245, %v245
      %v418 = vunpack.c.l.s4 1966171168
      %v419 = vunpack.c.0.s8 %v418
      %v420 = vlaneseq
      %v421 = vshrl.u32 %v420, 7
      %v422 = vsub.s32 %v419, %v421
      %v423 = vrot.slane %v245, %v422
      %v425 = vunpack.c.l.s4 1966171168
      %v426 = vunpack.c.0.s8 %v425
      %v427 = vlaneseq
      %v428 = vshrl.u32 %v427, 7
      %v429 = vsub.s32 %v426, %v428
      %v430 = vrot.slane %v416, %v429
      %v431 = vcombine.high %v423, %v423
      %v432 = vcombine.high %v430, %v430
      %v434 = vunpack.c.l.s4 1966171168
      %v435 = vunpack.c.0.s8 %v434
      %v436 = vlaneseq
      %v437 = vshrl.u32 %v436, 7
      %v438 = vsub.s32 %v435, %v437
      %v439 = vrot.slane %v423, %v438
      %v441 = vunpack.c.l.s4 1966171168
      %v442 = vunpack.c.0.s8 %v441
      %v443 = vlaneseq
      %v444 = vshrl.u32 %v443, 7
      %v445 = vsub.s32 %v442, %v444
      %v446 = vrot.slane %v430, %v445
      %v448 = vunpack.c.l.s4 1966171168
      %v449 = vunpack.c.0.s8 %v448
      %v450 = vlaneseq
      %v451 = vshrl.u32 %v450, 7
      %v452 = vsub.s32 %v449, %v451
      %v453 = vrot.slane %v431, %v452
      %v455 = vunpack.c.l.s4 1966171168
      %v456 = vunpack.c.0.s8 %v455
      %v457 = vlaneseq
      %v458 = vshrl.u32 %v457, 7
      %v459 = vsub.s32 %v456, %v458
      %v460 = vrot.slane %v432, %v459
      %v461 = vcombine.high %v439, %v439
      %v462 = vcombine.high %v446, %v446
      %v463 = vcombine.high %v453, %v453
      %v464 = vcombine.high %v246, %v246
      %v466 = vunpack.c.l.s4 1966171168
      %v467 = vunpack.c.0.s8 %v466
      %v468 = vlaneseq
      %v469 = vshrl.u32 %v468, 7
      %v470 = vsub.s32 %v467, %v469
      %v471 = vrot.slane %v246, %v470
      %v473 = vunpack.c.l.s4 1966171168
      %v474 = vunpack.c.0.s8 %v473
      %v475 = vlaneseq
      %v476 = vshrl.u32 %v475, 7
      %v477 = vsub.s32 %v474, %v476
      %v478 = vrot.slane %v464, %v477
      %v479 = vcombine.high %v471, %v471
      %v480 = vcombine.high %v478, %v478
      %v482 = vunpack.c.l.s4 1966171168
      %v483 = vunpack.c.0.s8 %v482
      %v484 = vlaneseq
      %v485 = vshrl.u32 %v484, 7
      %v486 = vsub.s32 %v483, %v485
      %v487 = vrot.slane %v471, %v486
      %v489 = vunpack.c.l.s4 1966171168
      %v490 = vunpack.c.0.s8 %v489
      %v491 = vlaneseq
      %v492 = vshrl.u32 %v491, 7
      %v493 = vsub.s32 %v490, %v492
      %v494 = vrot.slane %v478, %v493
      %v496 = vunpack.c.l.s4 1966171168
      %v497 = vunpack.c.0.s8 %v496
      %v498 = vlaneseq
      %v499 = vshrl.u32 %v498, 7
      %v500 = vsub.s32 %v497, %v499
      %v501 = vrot.slane %v479, %v500
      %v503 = vunpack.c.l.s4 1966171168
      %v504 = vunpack.c.0.s8 %v503
      %v505 = vlaneseq
      %v506 = vshrl.u32 %v505, 7
      %v507 = vsub.s32 %v504, %v506
      %v508 = vrot.slane %v480, %v507
      %v509 = vcombine.high %v487, %v487
      %v510 = vcombine.high %v494, %v494
      %v511 = vcombine.high %v501, %v501
      %v512 = vcombine.high %v247, %v247
      %v514 = vunpack.c.l.s4 1966171168
      %v515 = vunpack.c.0.s8 %v514
      %v516 = vlaneseq
      %v517 = vshrl.u32 %v516, 7
      %v518 = vsub.s32 %v515, %v517
      %v519 = vrot.slane %v247, %v518
      %v521 = vunpack.c.l.s4 1966171168
      %v522 = vunpack.c.0.s8 %v521
      %v523 = vlaneseq
      %v524 = vshrl.u32 %v523, 7
      %v525 = vsub.s32 %v522, %v524
      %v526 = vrot.slane %v512, %v525
      %v527 = vcombine.high %v519, %v519
      %v528 = vcombine.high %v526, %v526
      %v530 = vunpack.c.l.s4 1966171168
      %v531 = vunpack.c.0.s8 %v530
      %v532 = vlaneseq
      %v533 = vshrl.u32 %v532, 7
      %v534 = vsub.s32 %v531, %v533
      %v535 = vrot.slane %v519, %v534
      %v537 = vunpack.c.l.s4 1966171168
      %v538 = vunpack.c.0.s8 %v537
      %v539 = vlaneseq
      %v540 = vshrl.u32 %v539, 7
      %v541 = vsub.s32 %v538, %v540
      %v542 = vrot.slane %v526, %v541
      %v544 = vunpack.c.l.s4 1966171168
      %v545 = vunpack.c.0.s8 %v544
      %v546 = vlaneseq
      %v547 = vshrl.u32 %v546, 7
      %v548 = vsub.s32 %v545, %v547
      %v549 = vrot.slane %v527, %v548
      %v551 = vunpack.c.l.s4 1966171168
      %v552 = vunpack.c.0.s8 %v551
      %v553 = vlaneseq
      %v554 = vshrl.u32 %v553, 7
      %v555 = vsub.s32 %v552, %v554
      %v556 = vrot.slane %v528, %v555
      %v557 = vcombine.high %v535, %v535
      %v558 = vcombine.high %v542, %v542
      %v559 = vcombine.high %v549, %v549
      %v560 = vcombine.high %v248, %v248
      %v562 = vunpack.c.l.s4 1966171168
      %v563 = vunpack.c.0.s8 %v562
      %v564 = vlaneseq
      %v565 = vshrl.u32 %v564, 7
      %v566 = vsub.s32 %v563, %v565
      %v567 = vrot.slane %v248, %v566
      %v569 = vunpack.c.l.s4 1966171168
      %v570 = vunpack.c.0.s8 %v569
      %v571 = vlaneseq
      %v572 = vshrl.u32 %v571, 7
      %v573 = vsub.s32 %v570, %v572
      %v574 = vrot.slane %v560, %v573
      %v575 = vcombine.high %v567, %v567
      %v576 = vcombine.high %v574, %v574
      %v578 = vunpack.c.l.s4 1966171168
      %v579 = vunpack.c.0.s8 %v578
      %v580 = vlaneseq
      %v581 = vshrl.u32 %v580, 7
      %v582 = vsub.s32 %v579, %v581
      %v583 = vrot.slane %v567, %v582
      %v585 = vunpack.c.l.s4 1966171168
      %v586 = vunpack.c.0.s8 %v585
      %v587 = vlaneseq
      %v588 = vshrl.u32 %v587, 7
      %v589 = vsub.s32 %v586, %v588
      %v590 = vrot.slane %v574, %v589
      %v592 = vunpack.c.l.s4 1966171168
      %v593 = vunpack.c.0.s8 %v592
      %v594 = vlaneseq
      %v595 = vshrl.u32 %v594, 7
      %v596 = vsub.s32 %v593, %v595
      %v597 = vrot.slane %v575, %v596
      %v599 = vunpack.c.l.s4 1966171168
      %v600 = vunpack.c.0.s8 %v599
      %v601 = vlaneseq
      %v602 = vshrl.u32 %v601, 7
      %v603 = vsub.s32 %v600, %v602
      %v604 = vrot.slane %v576, %v603
      %v605 = vcombine.high %v583, %v583
      %v606 = vcombine.high %v590, %v590
      %v607 = vcombine.high %v597, %v597
      %v608 = vcombine.high %v249, %v249
      %v610 = vunpack.c.l.s4 1966171168
      %v611 = vunpack.c.0.s8 %v610
      %v612 = vlaneseq
      %v613 = vshrl.u32 %v612, 7
      %v614 = vsub.s32 %v611, %v613
      %v615 = vrot.slane %v249, %v614
      %v617 = vunpack.c.l.s4 1966171168
      %v618 = vunpack.c.0.s8 %v617
      %v619 = vlaneseq
      %v620 = vshrl.u32 %v619, 7
      %v621 = vsub.s32 %v618, %v620
      %v622 = vrot.slane %v608, %v621
      %v623 = vcombine.high %v615, %v615
      %v624 = vcombine.high %v622, %v622
      %v626 = vunpack.c.l.s4 1966171168
      %v627 = vunpack.c.0.s8 %v626
      %v628 = vlaneseq
      %v629 = vshrl.u32 %v628, 7
      %v630 = vsub.s32 %v627, %v629
      %v631 = vrot.slane %v615, %v630
      %v633 = vunpack.c.l.s4 1966171168
      %v634 = vunpack.c.0.s8 %v633
      %v635 = vlaneseq
      %v636 = vshrl.u32 %v635, 7
      %v637 = vsub.s32 %v634, %v636
      %v638 = vrot.slane %v622, %v637
      %v640 = vunpack.c.l.s4 1966171168
      %v641 = vunpack.c.0.s8 %v640
      %v642 = vlaneseq
      %v643 = vshrl.u32 %v642, 7
      %v644 = vsub.s32 %v641, %v643
      %v645 = vrot.slane %v623, %v644
      %v647 = vunpack.c.l.s4 1966171168
      %v648 = vunpack.c.0.s8 %v647
      %v649 = vlaneseq
      %v650 = vshrl.u32 %v649, 7
      %v651 = vsub.s32 %v648, %v650
      %v652 = vrot.slane %v624, %v651
      %v653 = vcombine.high %v631, %v631
      %v654 = vcombine.high %v638, %v638
      %v655 = vcombine.high %v645, %v645
      %v656 = vcombine.high %v250, %v250
      %v658 = vunpack.c.l.s4 1966171168
      %v659 = vunpack.c.0.s8 %v658
      %v660 = vlaneseq
      %v661 = vshrl.u32 %v660, 7
      %v662 = vsub.s32 %v659, %v661
      %v663 = vrot.slane %v250, %v662
      %v665 = vunpack.c.l.s4 1966171168
      %v666 = vunpack.c.0.s8 %v665
      %v667 = vlaneseq
      %v668 = vshrl.u32 %v667, 7
      %v669 = vsub.s32 %v666, %v668
      %v670 = vrot.slane %v656, %v669
      %v671 = vcombine.high %v663, %v663
      %v672 = vcombine.high %v670, %v670
      %v674 = vunpack.c.l.s4 1966171168
      %v675 = vunpack.c.0.s8 %v674
      %v676 = vlaneseq
      %v677 = vshrl.u32 %v676, 7
      %v678 = vsub.s32 %v675, %v677
      %v679 = vrot.slane %v663, %v678
      %v681 = vunpack.c.l.s4 1966171168
      %v682 = vunpack.c.0.s8 %v681
      %v683 = vlaneseq
      %v684 = vshrl.u32 %v683, 7
      %v685 = vsub.s32 %v682, %v684
      %v686 = vrot.slane %v670, %v685
      %v688 = vunpack.c.l.s4 1966171168
      %v689 = vunpack.c.0.s8 %v688
      %v690 = vlaneseq
      %v691 = vshrl.u32 %v690, 7
      %v692 = vsub.s32 %v689, %v691
      %v693 = vrot.slane %v671, %v692
      %v695 = vunpack.c.l.s4 1966171168
      %v696 = vunpack.c.0.s8 %v695
      %v697 = vlaneseq
      %v698 = vshrl.u32 %v697, 7
      %v699 = vsub.s32 %v696, %v698
      %v700 = vrot.slane %v672, %v699
      %v701 = vcombine.high %v679, %v679
      %v702 = vcombine.high %v686, %v686
      %v703 = vcombine.high %v693, %v693
      %v704 = vcombine.high %v251, %v251
      %v706 = vunpack.c.l.s4 1966171168
      %v707 = vunpack.c.0.s8 %v706
      %v708 = vlaneseq
      %v709 = vshrl.u32 %v708, 7
      %v710 = vsub.s32 %v707, %v709
      %v711 = vrot.slane %v251, %v710
      %v713 = vunpack.c.l.s4 1966171168
      %v714 = vunpack.c.0.s8 %v713
      %v715 = vlaneseq
      %v716 = vshrl.u32 %v715, 7
      %v717 = vsub.s32 %v714, %v716
      %v718 = vrot.slane %v704, %v717
      %v719 = vcombine.high %v711, %v711
      %v720 = vcombine.high %v718, %v718
      %v722 = vunpack.c.l.s4 1966171168
      %v723 = vunpack.c.0.s8 %v722
      %v724 = vlaneseq
      %v725 = vshrl.u32 %v724, 7
      %v726 = vsub.s32 %v723, %v725
      %v727 = vrot.slane %v711, %v726
      %v729 = vunpack.c.l.s4 1966171168
      %v730 = vunpack.c.0.s8 %v729
      %v731 = vlaneseq
      %v732 = vshrl.u32 %v731, 7
      %v733 = vsub.s32 %v730, %v732
      %v734 = vrot.slane %v718, %v733
      %v736 = vunpack.c.l.s4 1966171168
      %v737 = vunpack.c.0.s8 %v736
      %v738 = vlaneseq
      %v739 = vshrl.u32 %v738, 7
      %v740 = vsub.s32 %v737, %v739
      %v741 = vrot.slane %v719, %v740
      %v743 = vunpack.c.l.s4 1966171168
      %v744 = vunpack.c.0.s8 %v743
      %v745 = vlaneseq
      %v746 = vshrl.u32 %v745, 7
      %v747 = vsub.s32 %v744, %v746
      %v748 = vrot.slane %v720, %v747
      %v749 = vcombine.high %v727, %v727
      %v750 = vcombine.high %v734, %v734
      %v751 = vcombine.high %v741, %v741
      %v752 = vcombine.high %v252, %v252
      %v754 = vunpack.c.l.s4 1966171168
      %v755 = vunpack.c.0.s8 %v754
      %v756 = vlaneseq
      %v757 = vshrl.u32 %v756, 7
      %v758 = vsub.s32 %v755, %v757
      %v759 = vrot.slane %v252, %v758
      %v761 = vunpack.c.l.s4 1966171168
      %v762 = vunpack.c.0.s8 %v761
      %v763 = vlaneseq
      %v764 = vshrl.u32 %v763, 7
      %v765 = vsub.s32 %v762, %v764
      %v766 = vrot.slane %v752, %v765
      %v767 = vcombine.high %v759, %v759
      %v768 = vcombine.high %v766, %v766
      %v770 = vunpack.c.l.s4 1966171168
      %v771 = vunpack.c.0.s8 %v770
      %v772 = vlaneseq
      %v773 = vshrl.u32 %v772, 7
      %v774 = vsub.s32 %v771, %v773
      %v775 = vrot.slane %v759, %v774
      %v777 = vunpack.c.l.s4 1966171168
      %v778 = vunpack.c.0.s8 %v777
      %v779 = vlaneseq
      %v780 = vshrl.u32 %v779, 7
      %v781 = vsub.s32 %v778, %v780
      %v782 = vrot.slane %v766, %v781
      %v784 = vunpack.c.l.s4 1966171168
      %v785 = vunpack.c.0.s8 %v784
      %v786 = vlaneseq
      %v787 = vshrl.u32 %v786, 7
      %v788 = vsub.s32 %v785, %v787
      %v789 = vrot.slane %v767, %v788
      %v791 = vunpack.c.l.s4 1966171168
      %v792 = vunpack.c.0.s8 %v791
      %v793 = vlaneseq
      %v794 = vshrl.u32 %v793, 7
      %v795 = vsub.s32 %v792, %v794
      %v796 = vrot.slane %v768, %v795
      %v797 = vcombine.high %v775, %v775
      %v798 = vcombine.high %v782, %v782
      %v799 = vcombine.high %v789, %v789
      %v800 = vcombine.high %v253, %v253
      %v802 = vunpack.c.l.s4 1966171168
      %v803 = vunpack.c.0.s8 %v802
      %v804 = vlaneseq
      %v805 = vshrl.u32 %v804, 7
      %v806 = vsub.s32 %v803, %v805
      %v807 = vrot.slane %v253, %v806
      %v809 = vunpack.c.l.s4 1966171168
      %v810 = vunpack.c.0.s8 %v809
      %v811 = vlaneseq
      %v812 = vshrl.u32 %v811, 7
      %v813 = vsub.s32 %v810, %v812
      %v814 = vrot.slane %v800, %v813
      %v815 = vcombine.high %v807, %v807
      %v816 = vcombine.high %v814, %v814
      %v818 = vunpack.c.l.s4 1966171168
      %v819 = vunpack.c.0.s8 %v818
      %v820 = vlaneseq
      %v821 = vshrl.u32 %v820, 7
      %v822 = vsub.s32 %v819, %v821
      %v823 = vrot.slane %v807, %v822
      %v825 = vunpack.c.l.s4 1966171168
      %v826 = vunpack.c.0.s8 %v825
      %v827 = vlaneseq
      %v828 = vshrl.u32 %v827, 7
      %v829 = vsub.s32 %v826, %v828
      %v830 = vrot.slane %v814, %v829
      %v832 = vunpack.c.l.s4 1966171168
      %v833 = vunpack.c.0.s8 %v832
      %v834 = vlaneseq
      %v835 = vshrl.u32 %v834, 7
      %v836 = vsub.s32 %v833, %v835
      %v837 = vrot.slane %v815, %v836
      %v839 = vunpack.c.l.s4 1966171168
      %v840 = vunpack.c.0.s8 %v839
      %v841 = vlaneseq
      %v842 = vshrl.u32 %v841, 7
      %v843 = vsub.s32 %v840, %v842
      %v844 = vrot.slane %v816, %v843
      %v845 = vcombine.high %v823, %v823
      %v846 = vcombine.high %v830, %v830
      %v847 = vcombine.high %v837, %v837
      %v848 = vcombine.high %v254, %v254
      %v850 = vunpack.c.l.s4 1966171168
      %v851 = vunpack.c.0.s8 %v850
      %v852 = vlaneseq
      %v853 = vshrl.u32 %v852, 7
      %v854 = vsub.s32 %v851, %v853
      %v855 = vrot.slane %v254, %v854
      %v857 = vunpack.c.l.s4 1966171168
      %v858 = vunpack.c.0.s8 %v857
      %v859 = vlaneseq
      %v860 = vshrl.u32 %v859, 7
      %v861 = vsub.s32 %v858, %v860
      %v862 = vrot.slane %v848, %v861
      %v863 = vcombine.high %v855, %v855
      %v864 = vcombine.high %v862, %v862
      %v866 = vunpack.c.l.s4 1966171168
      %v867 = vunpack.c.0.s8 %v866
      %v868 = vlaneseq
      %v869 = vshrl.u32 %v868, 7
      %v870 = vsub.s32 %v867, %v869
      %v871 = vrot.slane %v855, %v870
      %v873 = vunpack.c.l.s4 1966171168
      %v874 = vunpack.c.0.s8 %v873
      %v875 = vlaneseq
      %v876 = vshrl.u32 %v875, 7
      %v877 = vsub.s32 %v874, %v876
      %v878 = vrot.slane %v862, %v877
      %v880 = vunpack.c.l.s4 1966171168
      %v881 = vunpack.c.0.s8 %v880
      %v882 = vlaneseq
      %v883 = vshrl.u32 %v882, 7
      %v884 = vsub.s32 %v881, %v883
      %v885 = vrot.slane %v863, %v884
      %v887 = vunpack.c.l.s4 1966171168
      %v888 = vunpack.c.0.s8 %v887
      %v889 = vlaneseq
      %v890 = vshrl.u32 %v889, 7
      %v891 = vsub.s32 %v888, %v890
      %v892 = vrot.slane %v864, %v891
      %v893 = vcombine.high %v871, %v871
      %v894 = vcombine.high %v878, %v878
      %v895 = vcombine.high %v885, %v885
      %v896 = vcombine.high %v255, %v255
      %v898 = vunpack.c.l.s4 1966171168
      %v899 = vunpack.c.0.s8 %v898
      %v900 = vlaneseq
      %v901 = vshrl.u32 %v900, 7
      %v902 = vsub.s32 %v899, %v901
      %v903 = vrot.slane %v255, %v902
      %v905 = vunpack.c.l.s4 1966171168
      %v906 = vunpack.c.0.s8 %v905
      %v907 = vlaneseq
      %v908 = vshrl.u32 %v907, 7
      %v909 = vsub.s32 %v906, %v908
      %v910 = vrot.slane %v896, %v909
      %v911 = vcombine.high %v903, %v903
      %v912 = vcombine.high %v910, %v910
      %v914 = vunpack.c.l.s4 1966171168
      %v915 = vunpack.c.0.s8 %v914
      %v916 = vlaneseq
      %v917 = vshrl.u32 %v916, 7
      %v918 = vsub.s32 %v915, %v917
      %v919 = vrot.slane %v903, %v918
      %v921 = vunpack.c.l.s4 1966171168
      %v922 = vunpack.c.0.s8 %v921
      %v923 = vlaneseq
      %v924 = vshrl.u32 %v923, 7
      %v925 = vsub.s32 %v922, %v924
      %v926 = vrot.slane %v910, %v925
      %v928 = vunpack.c.l.s4 1966171168
      %v929 = vunpack.c.0.s8 %v928
      %v930 = vlaneseq
      %v931 = vshrl.u32 %v930, 7
      %v932 = vsub.s32 %v929, %v931
      %v933 = vrot.slane %v911, %v932
      %v935 = vunpack.c.l.s4 1966171168
      %v936 = vunpack.c.0.s8 %v935
      %v937 = vlaneseq
      %v938 = vshrl.u32 %v937, 7
      %v939 = vsub.s32 %v936, %v938
      %v940 = vrot.slane %v912, %v939
      %v941 = vcombine.high %v919, %v919
      %v942 = vcombine.high %v926, %v926
      %v943 = vcombine.high %v933, %v933
      %v944 = vcombine.high %v316, %v316
      %v945 = vcombine.high %v364, %v364
      %v946 = vcombine.high %v412, %v412
      %v947 = vcombine.high %v460, %v460
      %v948 = vcombine.high %v508, %v508
      %v949 = vcombine.high %v556, %v556
      %v950 = vcombine.high %v604, %v604
      %v951 = vcombine.high %v652, %v652
      %v952 = vcombine.high %v700, %v700
      %v953 = vcombine.high %v748, %v748
      %v954 = vcombine.high %v796, %v796
      %v955 = vcombine.high %v844, %v844
      %v956 = vcombine.high %v892, %v892
      %v957 = vcombine.high %v940, %v940
      %vm958 = vsmask.f32 256
      %vm959 = vsmask.f32 1284
      %vm960 = vmor %vm958, %vm959
      %vm961 = vsmask.f32 2312
      %vm962 = vmor %vm960, %vm961
      %vm963 = vsmask.f32 3340
      %vm964 = vmor %vm962, %vm963
      %vm965 = vsmask.f32 4368
      %vm966 = vmor %vm964, %vm965
      %vm967 = vsmask.f32 5396
      %vm968 = vmor %vm966, %vm967
      %vm969 = vsmask.f32 6424
      %vm970 = vmor %vm968, %vm969
      %vm971 = vsmask.f32 7452
      %vm972 = vmor %vm970, %vm971
      %v974 = vshrl.u32 %v295, 16
      %v976 = vrot.slane %v974, 7
      %v977 = vrot.slane %v976, 1
      %v979 = vshll.u32 %v309, 16
      %v981 = vsel %vm972, %v977, %v979
      %v982 = vshrl.u32 %v309, 16
      %v984 = vrot.slane %v982, 7
      %v985 = vrot.slane %v984, 1
      %v987 = vshll.u32 %v317, 16
      %v989 = vsel %vm972, %v985, %v987
      %v990 = vshrl.u32 %v317, 16
      %v992 = vrot.slane %v990, 7
      %v993 = vrot.slane %v992, 1
      %v995 = vshll.u32 %v319, 16
      %v997 = vsel %vm972, %v993, %v995
      %v998 = vshrl.u32 %v319, 16
      %v1000 = vrot.slane %v998, 7
      %v1001 = vrot.slane %v1000, 1
      %v1003 = vshll.u32 %v302, 16
      %v1005 = vsel %vm972, %v1001, %v1003
      %v1006 = vshrl.u32 %v302, 16
      %v1008 = vrot.slane %v1006, 7
      %v1009 = vrot.slane %v1008, 1
      %v1011 = vshll.u32 %v316, 16
      %v1013 = vsel %vm972, %v1009, %v1011
      %v1014 = vshrl.u32 %v316, 16
      %v1016 = vrot.slane %v1014, 7
      %v1017 = vrot.slane %v1016, 1
      %v1019 = vshll.u32 %v318, 16
      %v1021 = vsel %vm972, %v1017, %v1019
      %v1022 = vshrl.u32 %v318, 16
      %v1024 = vrot.slane %v1022, 7
      %v1025 = vrot.slane %v1024, 1
      %v1027 = vshll.u32 %v944, 16
      %v1029 = vsel %vm972, %v1025, %v1027
      %v1031 = vshrl.u32 %v343, 16
      %v1033 = vrot.slane %v1031, 7
      %v1034 = vrot.slane %v1033, 1
      %v1036 = vshll.u32 %v357, 16
      %v1038 = vsel %vm972, %v1034, %v1036
      %v1039 = vshrl.u32 %v357, 16
      %v1041 = vrot.slane %v1039, 7
      %v1042 = vrot.slane %v1041, 1
      %v1044 = vshll.u32 %v365, 16
      %v1046 = vsel %vm972, %v1042, %v1044
      %v1047 = vshrl.u32 %v365, 16
      %v1049 = vrot.slane %v1047, 7
      %v1050 = vrot.slane %v1049, 1
      %v1052 = vshll.u32 %v367, 16
      %v1054 = vsel %vm972, %v1050, %v1052
      %v1055 = vshrl.u32 %v367, 16
      %v1057 = vrot.slane %v1055, 7
      %v1058 = vrot.slane %v1057, 1
      %v1060 = vshll.u32 %v350, 16
      %v1062 = vsel %vm972, %v1058, %v1060
      %v1063 = vshrl.u32 %v350, 16
      %v1065 = vrot.slane %v1063, 7
      %v1066 = vrot.slane %v1065, 1
      %v1068 = vshll.u32 %v364, 16
      %v1070 = vsel %vm972, %v1066, %v1068
      %v1071 = vshrl.u32 %v364, 16
      %v1073 = vrot.slane %v1071, 7
      %v1074 = vrot.slane %v1073, 1
      %v1076 = vshll.u32 %v366, 16
      %v1078 = vsel %vm972, %v1074, %v1076
      %v1079 = vshrl.u32 %v366, 16
      %v1081 = vrot.slane %v1079, 7
      %v1082 = vrot.slane %v1081, 1
      %v1084 = vshll.u32 %v945, 16
      %v1086 = vsel %vm972, %v1082, %v1084
      %v1088 = vshrl.u32 %v391, 16
      %v1090 = vrot.slane %v1088, 7
      %v1091 = vrot.slane %v1090, 1
      %v1093 = vshll.u32 %v405, 16
      %v1095 = vsel %vm972, %v1091, %v1093
      %v1096 = vshrl.u32 %v405, 16
      %v1098 = vrot.slane %v1096, 7
      %v1099 = vrot.slane %v1098, 1
      %v1101 = vshll.u32 %v413, 16
      %v1103 = vsel %vm972, %v1099, %v1101
      %v1104 = vshrl.u32 %v413, 16
      %v1106 = vrot.slane %v1104, 7
      %v1107 = vrot.slane %v1106, 1
      %v1109 = vshll.u32 %v415, 16
      %v1111 = vsel %vm972, %v1107, %v1109
      %v1112 = vshrl.u32 %v415, 16
      %v1114 = vrot.slane %v1112, 7
      %v1115 = vrot.slane %v1114, 1
      %v1117 = vshll.u32 %v398, 16
      %v1119 = vsel %vm972, %v1115, %v1117
      %v1120 = vshrl.u32 %v398, 16
      %v1122 = vrot.slane %v1120, 7
      %v1123 = vrot.slane %v1122, 1
      %v1125 = vshll.u32 %v412, 16
      %v1127 = vsel %vm972, %v1123, %v1125
      %v1128 = vshrl.u32 %v412, 16
      %v1130 = vrot.slane %v1128, 7
      %v1131 = vrot.slane %v1130, 1
      %v1133 = vshll.u32 %v414, 16
      %v1135 = vsel %vm972, %v1131, %v1133
      %v1136 = vshrl.u32 %v414, 16
      %v1138 = vrot.slane %v1136, 7
      %v1139 = vrot.slane %v1138, 1
      %v1141 = vshll.u32 %v946, 16
      %v1143 = vsel %vm972, %v1139, %v1141
      %v1145 = vshrl.u32 %v439, 16
      %v1147 = vrot.slane %v1145, 7
      %v1148 = vrot.slane %v1147, 1
      %v1150 = vshll.u32 %v453, 16
      %v1152 = vsel %vm972, %v1148, %v1150
      %v1153 = vshrl.u32 %v453, 16
      %v1155 = vrot.slane %v1153, 7
      %v1156 = vrot.slane %v1155, 1
      %v1158 = vshll.u32 %v461, 16
      %v1160 = vsel %vm972, %v1156, %v1158
      %v1161 = vshrl.u32 %v461, 16
      %v1163 = vrot.slane %v1161, 7
      %v1164 = vrot.slane %v1163, 1
      %v1166 = vshll.u32 %v463, 16
      %v1168 = vsel %vm972, %v1164, %v1166
      %v1169 = vshrl.u32 %v463, 16
      %v1171 = vrot.slane %v1169, 7
      %v1172 = vrot.slane %v1171, 1
      %v1174 = vshll.u32 %v446, 16
      %v1176 = vsel %vm972, %v1172, %v1174
      %v1177 = vshrl.u32 %v446, 16
      %v1179 = vrot.slane %v1177, 7
      %v1180 = vrot.slane %v1179, 1
      %v1182 = vshll.u32 %v460, 16
      %v1184 = vsel %vm972, %v1180, %v1182
      %v1185 = vshrl.u32 %v460, 16
      %v1187 = vrot.slane %v1185, 7
      %v1188 = vrot.slane %v1187, 1
      %v1190 = vshll.u32 %v462, 16
      %v1192 = vsel %vm972, %v1188, %v1190
      %v1193 = vshrl.u32 %v462, 16
      %v1195 = vrot.slane %v1193, 7
      %v1196 = vrot.slane %v1195, 1
      %v1198 = vshll.u32 %v947, 16
      %v1200 = vsel %vm972, %v1196, %v1198
      %v1202 = vshrl.u32 %v487, 16
      %v1204 = vrot.slane %v1202, 7
      %v1205 = vrot.slane %v1204, 1
      %v1207 = vshll.u32 %v501, 16
      %v1209 = vsel %vm972, %v1205, %v1207
      %v1210 = vshrl.u32 %v501, 16
      %v1212 = vrot.slane %v1210, 7
      %v1213 = vrot.slane %v1212, 1
      %v1215 = vshll.u32 %v509, 16
      %v1217 = vsel %vm972, %v1213, %v1215
      %v1218 = vshrl.u32 %v509, 16
      %v1220 = vrot.slane %v1218, 7
      %v1221 = vrot.slane %v1220, 1
      %v1223 = vshll.u32 %v511, 16
      %v1225 = vsel %vm972, %v1221, %v1223
      %v1226 = vshrl.u32 %v511, 16
      %v1228 = vrot.slane %v1226, 7
      %v1229 = vrot.slane %v1228, 1
      %v1231 = vshll.u32 %v494, 16
      %v1233 = vsel %vm972, %v1229, %v1231
      %v1234 = vshrl.u32 %v494, 16
      %v1236 = vrot.slane %v1234, 7
      %v1237 = vrot.slane %v1236, 1
      %v1239 = vshll.u32 %v508, 16
      %v1241 = vsel %vm972, %v1237, %v1239
      %v1242 = vshrl.u32 %v508, 16
      %v1244 = vrot.slane %v1242, 7
      %v1245 = vrot.slane %v1244, 1
      %v1247 = vshll.u32 %v510, 16
      %v1249 = vsel %vm972, %v1245, %v1247
      %v1250 = vshrl.u32 %v510, 16
      %v1252 = vrot.slane %v1250, 7
      %v1253 = vrot.slane %v1252, 1
      %v1255 = vshll.u32 %v948, 16
      %v1257 = vsel %vm972, %v1253, %v1255
      %v1259 = vshrl.u32 %v535, 16
      %v1261 = vrot.slane %v1259, 7
      %v1262 = vrot.slane %v1261, 1
      %v1264 = vshll.u32 %v549, 16
      %v1266 = vsel %vm972, %v1262, %v1264
      %v1267 = vshrl.u32 %v549, 16
      %v1269 = vrot.slane %v1267, 7
      %v1270 = vrot.slane %v1269, 1
      %v1272 = vshll.u32 %v557, 16
      %v1274 = vsel %vm972, %v1270, %v1272
      %v1275 = vshrl.u32 %v557, 16
      %v1277 = vrot.slane %v1275, 7
      %v1278 = vrot.slane %v1277, 1
      %v1280 = vshll.u32 %v559, 16
      %v1282 = vsel %vm972, %v1278, %v1280
      %v1283 = vshrl.u32 %v559, 16
      %v1285 = vrot.slane %v1283, 7
      %v1286 = vrot.slane %v1285, 1
      %v1288 = vshll.u32 %v542, 16
      %v1290 = vsel %vm972, %v1286, %v1288
      %v1291 = vshrl.u32 %v542, 16
      %v1293 = vrot.slane %v1291, 7
      %v1294 = vrot.slane %v1293, 1
      %v1296 = vshll.u32 %v556, 16
      %v1298 = vsel %vm972, %v1294, %v1296
      %v1299 = vshrl.u32 %v556, 16
      %v1301 = vrot.slane %v1299, 7
      %v1302 = vrot.slane %v1301, 1
      %v1304 = vshll.u32 %v558, 16
      %v1306 = vsel %vm972, %v1302, %v1304
      %v1307 = vshrl.u32 %v558, 16
      %v1309 = vrot.slane %v1307, 7
      %v1310 = vrot.slane %v1309, 1
      %v1312 = vshll.u32 %v949, 16
      %v1314 = vsel %vm972, %v1310, %v1312
      %v1316 = vshrl.u32 %v583, 16
      %v1318 = vrot.slane %v1316, 7
      %v1319 = vrot.slane %v1318, 1
      %v1321 = vshll.u32 %v597, 16
      %v1323 = vsel %vm972, %v1319, %v1321
      %v1324 = vshrl.u32 %v597, 16
      %v1326 = vrot.slane %v1324, 7
      %v1327 = vrot.slane %v1326, 1
      %v1329 = vshll.u32 %v605, 16
      %v1331 = vsel %vm972, %v1327, %v1329
      %v1332 = vshrl.u32 %v605, 16
      %v1334 = vrot.slane %v1332, 7
      %v1335 = vrot.slane %v1334, 1
      %v1337 = vshll.u32 %v607, 16
      %v1339 = vsel %vm972, %v1335, %v1337
      %v1340 = vshrl.u32 %v607, 16
      %v1342 = vrot.slane %v1340, 7
      %v1343 = vrot.slane %v1342, 1
      %v1345 = vshll.u32 %v590, 16
      %v1347 = vsel %vm972, %v1343, %v1345
      %v1348 = vshrl.u32 %v590, 16
      %v1350 = vrot.slane %v1348, 7
      %v1351 = vrot.slane %v1350, 1
      %v1353 = vshll.u32 %v604, 16
      %v1355 = vsel %vm972, %v1351, %v1353
      %v1356 = vshrl.u32 %v604, 16
      %v1358 = vrot.slane %v1356, 7
      %v1359 = vrot.slane %v1358, 1
      %v1361 = vshll.u32 %v606, 16
      %v1363 = vsel %vm972, %v1359, %v1361
      %v1364 = vshrl.u32 %v606, 16
      %v1366 = vrot.slane %v1364, 7
      %v1367 = vrot.slane %v1366, 1
      %v1369 = vshll.u32 %v950, 16
      %v1371 = vsel %vm972, %v1367, %v1369
      %v1373 = vshrl.u32 %v631, 16
      %v1375 = vrot.slane %v1373, 7
      %v1376 = vrot.slane %v1375, 1
      %v1378 = vshll.u32 %v645, 16
      %v1380 = vsel %vm972, %v1376, %v1378
      %v1381 = vshrl.u32 %v645, 16
      %v1383 = vrot.slane %v1381, 7
      %v1384 = vrot.slane %v1383, 1
      %v1386 = vshll.u32 %v653, 16
      %v1388 = vsel %vm972, %v1384, %v1386
      %v1389 = vshrl.u32 %v653, 16
      %v1391 = vrot.slane %v1389, 7
      %v1392 = vrot.slane %v1391, 1
      %v1394 = vshll.u32 %v655, 16
      %v1396 = vsel %vm972, %v1392, %v1394
      %v1397 = vshrl.u32 %v655, 16
      %v1399 = vrot.slane %v1397, 7
      %v1400 = vrot.slane %v1399, 1
      %v1402 = vshll.u32 %v638, 16
      %v1404 = vsel %vm972, %v1400, %v1402
      %v1405 = vshrl.u32 %v638, 16
      %v1407 = vrot.slane %v1405, 7
      %v1408 = vrot.slane %v1407, 1
      %v1410 = vshll.u32 %v652, 16
      %v1412 = vsel %vm972, %v1408, %v1410
      %v1413 = vshrl.u32 %v652, 16
      %v1415 = vrot.slane %v1413, 7
      %v1416 = vrot.slane %v1415, 1
      %v1418 = vshll.u32 %v654, 16
      %v1420 = vsel %vm972, %v1416, %v1418
      %v1421 = vshrl.u32 %v654, 16
      %v1423 = vrot.slane %v1421, 7
      %v1424 = vrot.slane %v1423, 1
      %v1426 = vshll.u32 %v951, 16
      %v1428 = vsel %vm972, %v1424, %v1426
      %v1430 = vshrl.u32 %v679, 16
      %v1432 = vrot.slane %v1430, 7
      %v1433 = vrot.slane %v1432, 1
      %v1435 = vshll.u32 %v693, 16
      %v1437 = vsel %vm972, %v1433, %v1435
      %v1438 = vshrl.u32 %v693, 16
      %v1440 = vrot.slane %v1438, 7
      %v1441 = vrot.slane %v1440, 1
      %v1443 = vshll.u32 %v701, 16
      %v1445 = vsel %vm972, %v1441, %v1443
      %v1446 = vshrl.u32 %v701, 16
      %v1448 = vrot.slane %v1446, 7
      %v1449 = vrot.slane %v1448, 1
      %v1451 = vshll.u32 %v703, 16
      %v1453 = vsel %vm972, %v1449, %v1451
      %v1454 = vshrl.u32 %v703, 16
      %v1456 = vrot.slane %v1454, 7
      %v1457 = vrot.slane %v1456, 1
      %v1459 = vshll.u32 %v686, 16
      %v1461 = vsel %vm972, %v1457, %v1459
      %v1462 = vshrl.u32 %v686, 16
      %v1464 = vrot.slane %v1462, 7
      %v1465 = vrot.slane %v1464, 1
      %v1467 = vshll.u32 %v700, 16
      %v1469 = vsel %vm972, %v1465, %v1467
      %v1470 = vshrl.u32 %v700, 16
      %v1472 = vrot.slane %v1470, 7
      %v1473 = vrot.slane %v1472, 1
      %v1475 = vshll.u32 %v702, 16
      %v1477 = vsel %vm972, %v1473, %v1475
      %v1478 = vshrl.u32 %v702, 16
      %v1480 = vrot.slane %v1478, 7
      %v1481 = vrot.slane %v1480, 1
      %v1483 = vshll.u32 %v952, 16
      %v1485 = vsel %vm972, %v1481, %v1483
      %v1487 = vshrl.u32 %v727, 16
      %v1489 = vrot.slane %v1487, 7
      %v1490 = vrot.slane %v1489, 1
      %v1492 = vshll.u32 %v741, 16
      %v1494 = vsel %vm972, %v1490, %v1492
      %v1495 = vshrl.u32 %v741, 16
      %v1497 = vrot.slane %v1495, 7
      %v1498 = vrot.slane %v1497, 1
      %v1500 = vshll.u32 %v749, 16
      %v1502 = vsel %vm972, %v1498, %v1500
      %v1503 = vshrl.u32 %v749, 16
      %v1505 = vrot.slane %v1503, 7
      %v1506 = vrot.slane %v1505, 1
      %v1508 = vshll.u32 %v751, 16
      %v1510 = vsel %vm972, %v1506, %v1508
      %v1511 = vshrl.u32 %v751, 16
      %v1513 = vrot.slane %v1511, 7
      %v1514 = vrot.slane %v1513, 1
      %v1516 = vshll.u32 %v734, 16
      %v1518 = vsel %vm972, %v1514, %v1516
      %v1519 = vshrl.u32 %v734, 16
      %v1521 = vrot.slane %v1519, 7
      %v1522 = vrot.slane %v1521, 1
      %v1524 = vshll.u32 %v748, 16
      %v1526 = vsel %vm972, %v1522, %v1524
      %v1527 = vshrl.u32 %v748, 16
      %v1529 = vrot.slane %v1527, 7
      %v1530 = vrot.slane %v1529, 1
      %v1532 = vshll.u32 %v750, 16
      %v1534 = vsel %vm972, %v1530, %v1532
      %v1535 = vshrl.u32 %v750, 16
      %v1537 = vrot.slane %v1535, 7
      %v1538 = vrot.slane %v1537, 1
      %v1540 = vshll.u32 %v953, 16
      %v1542 = vsel %vm972, %v1538, %v1540
      %v1544 = vshrl.u32 %v775, 16
      %v1546 = vrot.slane %v1544, 7
      %v1547 = vrot.slane %v1546, 1
      %v1549 = vshll.u32 %v789, 16
      %v1551 = vsel %vm972, %v1547, %v1549
      %v1552 = vshrl.u32 %v789, 16
      %v1554 = vrot.slane %v1552, 7
      %v1555 = vrot.slane %v1554, 1
      %v1557 = vshll.u32 %v797, 16
      %v1559 = vsel %vm972, %v1555, %v1557
      %v1560 = vshrl.u32 %v797, 16
      %v1562 = vrot.slane %v1560, 7
      %v1563 = vrot.slane %v1562, 1
      %v1565 = vshll.u32 %v799, 16
      %v1567 = vsel %vm972, %v1563, %v1565
      %v1568 = vshrl.u32 %v799, 16
      %v1570 = vrot.slane %v1568, 7
      %v1571 = vrot.slane %v1570, 1
      %v1573 = vshll.u32 %v782, 16
      %v1575 = vsel %vm972, %v1571, %v1573
      %v1576 = vshrl.u32 %v782, 16
      %v1578 = vrot.slane %v1576, 7
      %v1579 = vrot.slane %v1578, 1
      %v1581 = vshll.u32 %v796, 16
      %v1583 = vsel %vm972, %v1579, %v1581
      %v1584 = vshrl.u32 %v796, 16
      %v1586 = vrot.slane %v1584, 7
      %v1587 = vrot.slane %v1586, 1
      %v1589 = vshll.u32 %v798, 16
      %v1591 = vsel %vm972, %v1587, %v1589
      %v1592 = vshrl.u32 %v798, 16
      %v1594 = vrot.slane %v1592, 7
      %v1595 = vrot.slane %v1594, 1
      %v1597 = vshll.u32 %v954, 16
      %v1599 = vsel %vm972, %v1595, %v1597
      %v1601 = vshrl.u32 %v823, 16
      %v1603 = vrot.slane %v1601, 7
      %v1604 = vrot.slane %v1603, 1
      %v1606 = vshll.u32 %v837, 16
      %v1608 = vsel %vm972, %v1604, %v1606
      %v1609 = vshrl.u32 %v837, 16
      %v1611 = vrot.slane %v1609, 7
      %v1612 = vrot.slane %v1611, 1
      %v1614 = vshll.u32 %v845, 16
      %v1616 = vsel %vm972, %v1612, %v1614
      %v1617 = vshrl.u32 %v845, 16
      %v1619 = vrot.slane %v1617, 7
      %v1620 = vrot.slane %v1619, 1
      %v1622 = vshll.u32 %v847, 16
      %v1624 = vsel %vm972, %v1620, %v1622
      %v1625 = vshrl.u32 %v847, 16
      %v1627 = vrot.slane %v1625, 7
      %v1628 = vrot.slane %v1627, 1
      %v1630 = vshll.u32 %v830, 16
      %v1632 = vsel %vm972, %v1628, %v1630
      %v1633 = vshrl.u32 %v830, 16
      %v1635 = vrot.slane %v1633, 7
      %v1636 = vrot.slane %v1635, 1
      %v1638 = vshll.u32 %v844, 16
      %v1640 = vsel %vm972, %v1636, %v1638
      %v1641 = vshrl.u32 %v844, 16
      %v1643 = vrot.slane %v1641, 7
      %v1644 = vrot.slane %v1643, 1
      %v1646 = vshll.u32 %v846, 16
      %v1648 = vsel %vm972, %v1644, %v1646
      %v1649 = vshrl.u32 %v846, 16
      %v1651 = vrot.slane %v1649, 7
      %v1652 = vrot.slane %v1651, 1
      %v1654 = vshll.u32 %v955, 16
      %v1656 = vsel %vm972, %v1652, %v1654
      %v1658 = vshrl.u32 %v871, 16
      %v1660 = vrot.slane %v1658, 7
      %v1661 = vrot.slane %v1660, 1
      %v1663 = vshll.u32 %v885, 16
      %v1665 = vsel %vm972, %v1661, %v1663
      %v1666 = vshrl.u32 %v885, 16
      %v1668 = vrot.slane %v1666, 7
      %v1669 = vrot.slane %v1668, 1
      %v1671 = vshll.u32 %v893, 16
      %v1673 = vsel %vm972, %v1669, %v1671
      %v1674 = vshrl.u32 %v893, 16
      %v1676 = vrot.slane %v1674, 7
      %v1677 = vrot.slane %v1676, 1
      %v1679 = vshll.u32 %v895, 16
      %v1681 = vsel %vm972, %v1677, %v1679
      %v1682 = vshrl.u32 %v895, 16
      %v1684 = vrot.slane %v1682, 7
      %v1685 = vrot.slane %v1684, 1
      %v1687 = vshll.u32 %v878, 16
      %v1689 = vsel %vm972, %v1685, %v1687
      %v1690 = vshrl.u32 %v878, 16
      %v1692 = vrot.slane %v1690, 7
      %v1693 = vrot.slane %v1692, 1
      %v1695 = vshll.u32 %v892, 16
      %v1697 = vsel %vm972, %v1693, %v1695
      %v1698 = vshrl.u32 %v892, 16
      %v1700 = vrot.slane %v1698, 7
      %v1701 = vrot.slane %v1700, 1
      %v1703 = vshll.u32 %v894, 16
      %v1705 = vsel %vm972, %v1701, %v1703
      %v1706 = vshrl.u32 %v894, 16
      %v1708 = vrot.slane %v1706, 7
      %v1709 = vrot.slane %v1708, 1
      %v1711 = vshll.u32 %v956, 16
      %v1713 = vsel %vm972, %v1709, %v1711
      %v1715 = vshrl.u32 %v919, 16
      %v1717 = vrot.slane %v1715, 7
      %v1718 = vrot.slane %v1717, 1
      %v1720 = vshll.u32 %v933, 16
      %v1722 = vsel %vm972, %v1718, %v1720
      %v1723 = vshrl.u32 %v933, 16
      %v1725 = vrot.slane %v1723, 7
      %v1726 = vrot.slane %v1725, 1
      %v1728 = vshll.u32 %v941, 16
      %v1730 = vsel %vm972, %v1726, %v1728
      %v1731 = vshrl.u32 %v941, 16
      %v1733 = vrot.slane %v1731, 7
      %v1734 = vrot.slane %v1733, 1
      %v1736 = vshll.u32 %v943, 16
      %v1738 = vsel %vm972, %v1734, %v1736
      %v1739 = vshrl.u32 %v943, 16
      %v1741 = vrot.slane %v1739, 7
      %v1742 = vrot.slane %v1741, 1
      %v1744 = vshll.u32 %v926, 16
      %v1746 = vsel %vm972, %v1742, %v1744
      %v1747 = vshrl.u32 %v926, 16
      %v1749 = vrot.slane %v1747, 7
      %v1750 = vrot.slane %v1749, 1
      %v1752 = vshll.u32 %v940, 16
      %v1754 = vsel %vm972, %v1750, %v1752
      %v1755 = vshrl.u32 %v940, 16
      %v1757 = vrot.slane %v1755, 7
      %v1758 = vrot.slane %v1757, 1
      %v1760 = vshll.u32 %v942, 16
      %v1762 = vsel %vm972, %v1758, %v1760
      %v1763 = vshrl.u32 %v942, 16
      %v1765 = vrot.slane %v1763, 7
      %v1766 = vrot.slane %v1765, 1
      %v1768 = vshll.u32 %v957, 16
      %v1770 = vsel %vm972, %v1766, %v1768
      %v1772 = vcombine.high %v256, %v256
      %v1774 = vunpack.c.l.s4 1966171168
      %v1775 = vunpack.c.0.s8 %v1774
      %v1776 = vlaneseq
      %v1777 = vshrl.u32 %v1776, 7
      %v1778 = vsub.s32 %v1775, %v1777
      %v1779 = vrot.slane %v256, %v1778
      %v1781 = vunpack.c.l.s4 1966171168
      %v1782 = vunpack.c.0.s8 %v1781
      %v1783 = vlaneseq
      %v1784 = vshrl.u32 %v1783, 7
      %v1785 = vsub.s32 %v1782, %v1784
      %v1786 = vrot.slane %v1772, %v1785
      %v1787 = vcombine.high %v1779, %v1779
      %v1788 = vcombine.high %v1786, %v1786
      %v1790 = vunpack.c.l.s4 1966171168
      %v1791 = vunpack.c.0.s8 %v1790
      %v1792 = vlaneseq
      %v1793 = vshrl.u32 %v1792, 7
      %v1794 = vsub.s32 %v1791, %v1793
      %v1795 = vrot.slane %v1779, %v1794
      %v1797 = vunpack.c.l.s4 1966171168
      %v1798 = vunpack.c.0.s8 %v1797
      %v1799 = vlaneseq
      %v1800 = vshrl.u32 %v1799, 7
      %v1801 = vsub.s32 %v1798, %v1800
      %v1802 = vrot.slane %v1786, %v1801
      %v1804 = vunpack.c.l.s4 1966171168
      %v1805 = vunpack.c.0.s8 %v1804
      %v1806 = vlaneseq
      %v1807 = vshrl.u32 %v1806, 7
      %v1808 = vsub.s32 %v1805, %v1807
      %v1809 = vrot.slane %v1787, %v1808
      %v1811 = vunpack.c.l.s4 1966171168
      %v1812 = vunpack.c.0.s8 %v1811
      %v1813 = vlaneseq
      %v1814 = vshrl.u32 %v1813, 7
      %v1815 = vsub.s32 %v1812, %v1814
      %v1816 = vrot.slane %v1788, %v1815
      %v1817 = vcombine.high %v1795, %v1795
      %v1818 = vcombine.high %v1802, %v1802
      %v1819 = vcombine.high %v1809, %v1809
      %v1820 = vcombine.high %v1816, %v1816
      %v1822 = vshrl.u32 %v1795, 16
      %v1824 = vrot.slane %v1822, 7
      %v1825 = vrot.slane %v1824, 1
      %v1827 = vshll.u32 %v1809, 16
      %v1829 = vsel %vm972, %v1825, %v1827
      %v1830 = vshrl.u32 %v1809, 16
      %v1832 = vrot.slane %v1830, 7
      %v1833 = vrot.slane %v1832, 1
      %v1835 = vshll.u32 %v1817, 16
      %v1837 = vsel %vm972, %v1833, %v1835
      %v1838 = vshrl.u32 %v1817, 16
      %v1840 = vrot.slane %v1838, 7
      %v1841 = vrot.slane %v1840, 1
      %v1843 = vshll.u32 %v1819, 16
      %v1845 = vsel %vm972, %v1841, %v1843
      %v1846 = vshrl.u32 %v1819, 16
      %v1848 = vrot.slane %v1846, 7
      %v1849 = vrot.slane %v1848, 1
      %v1851 = vshll.u32 %v1802, 16
      %v1853 = vsel %vm972, %v1849, %v1851
      %v1854 = vshrl.u32 %v1802, 16
      %v1856 = vrot.slane %v1854, 7
      %v1857 = vrot.slane %v1856, 1
      %v1859 = vshll.u32 %v1816, 16
      %v1861 = vsel %vm972, %v1857, %v1859
      %v1862 = vshrl.u32 %v1816, 16
      %v1864 = vrot.slane %v1862, 7
      %v1865 = vrot.slane %v1864, 1
      %v1867 = vshll.u32 %v1818, 16
      %v1869 = vsel %vm972, %v1865, %v1867
      %v1870 = vshrl.u32 %v1818, 16
      %v1872 = vrot.slane %v1870, 7
      %v1873 = vrot.slane %v1872, 1
      %v1875 = vshll.u32 %v1820, 16
      %v1877 = vsel %vm972, %v1873, %v1875
      %v1879 = vcombine.high %v257, %v257
      %v1881 = vunpack.c.l.s4 1966171168
      %v1882 = vunpack.c.0.s8 %v1881
      %v1883 = vlaneseq
      %v1884 = vshrl.u32 %v1883, 7
      %v1885 = vsub.s32 %v1882, %v1884
      %v1886 = vrot.slane %v257, %v1885
      %v1888 = vunpack.c.l.s4 1966171168
      %v1889 = vunpack.c.0.s8 %v1888
      %v1890 = vlaneseq
      %v1891 = vshrl.u32 %v1890, 7
      %v1892 = vsub.s32 %v1889, %v1891
      %v1893 = vrot.slane %v1879, %v1892
      %v1894 = vcombine.high %v1886, %v1886
      %v1895 = vcombine.high %v1893, %v1893
      %v1897 = vunpack.c.l.s4 1966171168
      %v1898 = vunpack.c.0.s8 %v1897
      %v1899 = vlaneseq
      %v1900 = vshrl.u32 %v1899, 7
      %v1901 = vsub.s32 %v1898, %v1900
      %v1902 = vrot.slane %v1886, %v1901
      %v1904 = vunpack.c.l.s4 1966171168
      %v1905 = vunpack.c.0.s8 %v1904
      %v1906 = vlaneseq
      %v1907 = vshrl.u32 %v1906, 7
      %v1908 = vsub.s32 %v1905, %v1907
      %v1909 = vrot.slane %v1893, %v1908
      %v1911 = vunpack.c.l.s4 1966171168
      %v1912 = vunpack.c.0.s8 %v1911
      %v1913 = vlaneseq
      %v1914 = vshrl.u32 %v1913, 7
      %v1915 = vsub.s32 %v1912, %v1914
      %v1916 = vrot.slane %v1894, %v1915
      %v1918 = vunpack.c.l.s4 1966171168
      %v1919 = vunpack.c.0.s8 %v1918
      %v1920 = vlaneseq
      %v1921 = vshrl.u32 %v1920, 7
      %v1922 = vsub.s32 %v1919, %v1921
      %v1923 = vrot.slane %v1895, %v1922
      %v1924 = vcombine.high %v1902, %v1902
      %v1925 = vcombine.high %v1909, %v1909
      %v1926 = vcombine.high %v1916, %v1916
      %v1927 = vcombine.high %v1923, %v1923
      %v1929 = vshrl.u32 %v1902, 16
      %v1931 = vrot.slane %v1929, 7
      %v1932 = vrot.slane %v1931, 1
      %v1934 = vshll.u32 %v1916, 16
      %v1936 = vsel %vm972, %v1932, %v1934
      %v1937 = vshrl.u32 %v1916, 16
      %v1939 = vrot.slane %v1937, 7
      %v1940 = vrot.slane %v1939, 1
      %v1942 = vshll.u32 %v1924, 16
      %v1944 = vsel %vm972, %v1940, %v1942
      %v1945 = vshrl.u32 %v1924, 16
      %v1947 = vrot.slane %v1945, 7
      %v1948 = vrot.slane %v1947, 1
      %v1950 = vshll.u32 %v1926, 16
      %v1952 = vsel %vm972, %v1948, %v1950
      %v1953 = vshrl.u32 %v1926, 16
      %v1955 = vrot.slane %v1953, 7
      %v1956 = vrot.slane %v1955, 1
      %v1958 = vshll.u32 %v1909, 16
      %v1960 = vsel %vm972, %v1956, %v1958
      %v1961 = vshrl.u32 %v1909, 16
      %v1963 = vrot.slane %v1961, 7
      %v1964 = vrot.slane %v1963, 1
      %v1966 = vshll.u32 %v1923, 16
      %v1968 = vsel %vm972, %v1964, %v1966
      %v1969 = vshrl.u32 %v1923, 16
      %v1971 = vrot.slane %v1969, 7
      %v1972 = vrot.slane %v1971, 1
      %v1974 = vshll.u32 %v1925, 16
      %v1976 = vsel %vm972, %v1972, %v1974
      %v1977 = vshrl.u32 %v1925, 16
      %v1979 = vrot.slane %v1977, 7
      %v1980 = vrot.slane %v1979, 1
      %v1982 = vshll.u32 %v1927, 16
      %v1984 = vsel %vm972, %v1980, %v1982
      %v1985 = vcombine.low %v295, %v309
      %v1986 = vcombine.low %v317, %v319
      %v1987 = vcombine.low %v302, %v316
      %v1988 = vcombine.low %v318, %v343
      %v1990 = vunpack.c.l.s4 1966171168
      %v1991 = vunpack.c.0.s8 %v1990
      %v1992 = vlaneseq
      %v1993 = vshrl.u32 %v1992, 7
      %v1994 = vsub.s32 %v1991, %v1993
      %v1995 = vrot.slane %v1985, %v1994
      %v1997 = vunpack.c.l.s4 1966171168
      %v1998 = vunpack.c.0.s8 %v1997
      %v1999 = vlaneseq
      %v2000 = vshrl.u32 %v1999, 7
      %v2001 = vsub.s32 %v1998, %v2000
      %v2002 = vrot.slane %v1986, %v2001
      %v2004 = vunpack.c.l.s4 1966171168
      %v2005 = vunpack.c.0.s8 %v2004
      %v2006 = vlaneseq
      %v2007 = vshrl.u32 %v2006, 7
      %v2008 = vsub.s32 %v2005, %v2007
      %v2009 = vrot.slane %v1987, %v2008
      %v2011 = vunpack.c.l.s4 1966171168
      %v2012 = vunpack.c.0.s8 %v2011
      %v2013 = vlaneseq
      %v2014 = vshrl.u32 %v2013, 7
      %v2015 = vsub.s32 %v2012, %v2014
      %v2016 = vrot.slane %v1988, %v2015
      %v2017 = vcombine.low %v1995, %v2002
      %v2018 = vcombine.low %v2009, %v2016
      %v2020 = vunpack.c.l.s4 1966171168
      %v2021 = vunpack.c.0.s8 %v2020
      %v2022 = vlaneseq
      %v2023 = vshrl.u32 %v2022, 7
      %v2024 = vsub.s32 %v2021, %v2023
      %v2025 = vrot.slane %v2017, %v2024
      %v2027 = vunpack.c.l.s4 1966171168
      %v2028 = vunpack.c.0.s8 %v2027
      %v2029 = vlaneseq
      %v2030 = vshrl.u32 %v2029, 7
      %v2031 = vsub.s32 %v2028, %v2030
      %v2032 = vrot.slane %v2018, %v2031
      %v2033 = vcombine.low %v2025, %v2032
      %v2034 = vcombine.low %v357, %v365
      %v2035 = vcombine.low %v367, %v350
      %v2036 = vcombine.low %v364, %v366
      %v2037 = vcombine.low %v391, %v405
      %v2039 = vunpack.c.l.s4 1966171168
      %v2040 = vunpack.c.0.s8 %v2039
      %v2041 = vlaneseq
      %v2042 = vshrl.u32 %v2041, 7
      %v2043 = vsub.s32 %v2040, %v2042
      %v2044 = vrot.slane %v2034, %v2043
      %v2046 = vunpack.c.l.s4 1966171168
      %v2047 = vunpack.c.0.s8 %v2046
      %v2048 = vlaneseq
      %v2049 = vshrl.u32 %v2048, 7
      %v2050 = vsub.s32 %v2047, %v2049
      %v2051 = vrot.slane %v2035, %v2050
      %v2053 = vunpack.c.l.s4 1966171168
      %v2054 = vunpack.c.0.s8 %v2053
      %v2055 = vlaneseq
      %v2056 = vshrl.u32 %v2055, 7
      %v2057 = vsub.s32 %v2054, %v2056
      %v2058 = vrot.slane %v2036, %v2057
      %v2060 = vunpack.c.l.s4 1966171168
      %v2061 = vunpack.c.0.s8 %v2060
      %v2062 = vlaneseq
      %v2063 = vshrl.u32 %v2062, 7
      %v2064 = vsub.s32 %v2061, %v2063
      %v2065 = vrot.slane %v2037, %v2064
      %v2066 = vcombine.low %v2044, %v2051
      %v2067 = vcombine.low %v2058, %v2065
      %v2069 = vunpack.c.l.s4 1966171168
      %v2070 = vunpack.c.0.s8 %v2069
      %v2071 = vlaneseq
      %v2072 = vshrl.u32 %v2071, 7
      %v2073 = vsub.s32 %v2070, %v2072
      %v2074 = vrot.slane %v2066, %v2073
      %v2076 = vunpack.c.l.s4 1966171168
      %v2077 = vunpack.c.0.s8 %v2076
      %v2078 = vlaneseq
      %v2079 = vshrl.u32 %v2078, 7
      %v2080 = vsub.s32 %v2077, %v2079
      %v2081 = vrot.slane %v2067, %v2080
      %v2082 = vcombine.low %v2074, %v2081
      %v2083 = vcombine.low %v413, %v415
      %v2084 = vcombine.low %v398, %v412
      %v2085 = vcombine.low %v414, %v439
      %v2086 = vcombine.low %v453, %v461
      %v2088 = vunpack.c.l.s4 1966171168
      %v2089 = vunpack.c.0.s8 %v2088
      %v2090 = vlaneseq
      %v2091 = vshrl.u32 %v2090, 7
      %v2092 = vsub.s32 %v2089, %v2091
      %v2093 = vrot.slane %v2083, %v2092
      %v2095 = vunpack.c.l.s4 1966171168
      %v2096 = vunpack.c.0.s8 %v2095
      %v2097 = vlaneseq
      %v2098 = vshrl.u32 %v2097, 7
      %v2099 = vsub.s32 %v2096, %v2098
      %v2100 = vrot.slane %v2084, %v2099
      %v2102 = vunpack.c.l.s4 1966171168
      %v2103 = vunpack.c.0.s8 %v2102
      %v2104 = vlaneseq
      %v2105 = vshrl.u32 %v2104, 7
      %v2106 = vsub.s32 %v2103, %v2105
      %v2107 = vrot.slane %v2085, %v2106
      %v2109 = vunpack.c.l.s4 1966171168
      %v2110 = vunpack.c.0.s8 %v2109
      %v2111 = vlaneseq
      %v2112 = vshrl.u32 %v2111, 7
      %v2113 = vsub.s32 %v2110, %v2112
      %v2114 = vrot.slane %v2086, %v2113
      %v2115 = vcombine.low %v2093, %v2100
      %v2116 = vcombine.low %v2107, %v2114
      %v2118 = vunpack.c.l.s4 1966171168
      %v2119 = vunpack.c.0.s8 %v2118
      %v2120 = vlaneseq
      %v2121 = vshrl.u32 %v2120, 7
      %v2122 = vsub.s32 %v2119, %v2121
      %v2123 = vrot.slane %v2115, %v2122
      %v2125 = vunpack.c.l.s4 1966171168
      %v2126 = vunpack.c.0.s8 %v2125
      %v2127 = vlaneseq
      %v2128 = vshrl.u32 %v2127, 7
      %v2129 = vsub.s32 %v2126, %v2128
      %v2130 = vrot.slane %v2116, %v2129
      %v2131 = vcombine.low %v2123, %v2130
      %v2132 = vcombine.low %v463, %v446
      %v2133 = vcombine.low %v460, %v462
      %v2134 = vcombine.low %v487, %v501
      %v2135 = vcombine.low %v509, %v511
      %v2137 = vunpack.c.l.s4 1966171168
      %v2138 = vunpack.c.0.s8 %v2137
      %v2139 = vlaneseq
      %v2140 = vshrl.u32 %v2139, 7
      %v2141 = vsub.s32 %v2138, %v2140
      %v2142 = vrot.slane %v2132, %v2141
      %v2144 = vunpack.c.l.s4 1966171168
      %v2145 = vunpack.c.0.s8 %v2144
      %v2146 = vlaneseq
      %v2147 = vshrl.u32 %v2146, 7
      %v2148 = vsub.s32 %v2145, %v2147
      %v2149 = vrot.slane %v2133, %v2148
      %v2151 = vunpack.c.l.s4 1966171168
      %v2152 = vunpack.c.0.s8 %v2151
      %v2153 = vlaneseq
      %v2154 = vshrl.u32 %v2153, 7
      %v2155 = vsub.s32 %v2152, %v2154
      %v2156 = vrot.slane %v2134, %v2155
      %v2158 = vunpack.c.l.s4 1966171168
      %v2159 = vunpack.c.0.s8 %v2158
      %v2160 = vlaneseq
      %v2161 = vshrl.u32 %v2160, 7
      %v2162 = vsub.s32 %v2159, %v2161
      %v2163 = vrot.slane %v2135, %v2162
      %v2164 = vcombine.low %v2142, %v2149
      %v2165 = vcombine.low %v2156, %v2163
      %v2167 = vunpack.c.l.s4 1966171168
      %v2168 = vunpack.c.0.s8 %v2167
      %v2169 = vlaneseq
      %v2170 = vshrl.u32 %v2169, 7
      %v2171 = vsub.s32 %v2168, %v2170
      %v2172 = vrot.slane %v2164, %v2171
      %v2174 = vunpack.c.l.s4 1966171168
      %v2175 = vunpack.c.0.s8 %v2174
      %v2176 = vlaneseq
      %v2177 = vshrl.u32 %v2176, 7
      %v2178 = vsub.s32 %v2175, %v2177
      %v2179 = vrot.slane %v2165, %v2178
      %v2180 = vcombine.low %v2172, %v2179
      %v2181 = vcombine.low %v494, %v508
      %v2182 = vcombine.low %v510, %v535
      %v2183 = vcombine.low %v549, %v557
      %v2184 = vcombine.low %v559, %v542
      %v2186 = vunpack.c.l.s4 1966171168
      %v2187 = vunpack.c.0.s8 %v2186
      %v2188 = vlaneseq
      %v2189 = vshrl.u32 %v2188, 7
      %v2190 = vsub.s32 %v2187, %v2189
      %v2191 = vrot.slane %v2181, %v2190
      %v2193 = vunpack.c.l.s4 1966171168
      %v2194 = vunpack.c.0.s8 %v2193
      %v2195 = vlaneseq
      %v2196 = vshrl.u32 %v2195, 7
      %v2197 = vsub.s32 %v2194, %v2196
      %v2198 = vrot.slane %v2182, %v2197
      %v2200 = vunpack.c.l.s4 1966171168
      %v2201 = vunpack.c.0.s8 %v2200
      %v2202 = vlaneseq
      %v2203 = vshrl.u32 %v2202, 7
      %v2204 = vsub.s32 %v2201, %v2203
      %v2205 = vrot.slane %v2183, %v2204
      %v2207 = vunpack.c.l.s4 1966171168
      %v2208 = vunpack.c.0.s8 %v2207
      %v2209 = vlaneseq
      %v2210 = vshrl.u32 %v2209, 7
      %v2211 = vsub.s32 %v2208, %v2210
      %v2212 = vrot.slane %v2184, %v2211
      %v2213 = vcombine.low %v2191, %v2198
      %v2214 = vcombine.low %v2205, %v2212
      %v2216 = vunpack.c.l.s4 1966171168
      %v2217 = vunpack.c.0.s8 %v2216
      %v2218 = vlaneseq
      %v2219 = vshrl.u32 %v2218, 7
      %v2220 = vsub.s32 %v2217, %v2219
      %v2221 = vrot.slane %v2213, %v2220
      %v2223 = vunpack.c.l.s4 1966171168
      %v2224 = vunpack.c.0.s8 %v2223
      %v2225 = vlaneseq
      %v2226 = vshrl.u32 %v2225, 7
      %v2227 = vsub.s32 %v2224, %v2226
      %v2228 = vrot.slane %v2214, %v2227
      %v2229 = vcombine.low %v2221, %v2228
      %v2230 = vcombine.low %v556, %v558
      %v2231 = vcombine.low %v583, %v597
      %v2232 = vcombine.low %v605, %v607
      %v2233 = vcombine.low %v590, %v604
      %v2235 = vunpack.c.l.s4 1966171168
      %v2236 = vunpack.c.0.s8 %v2235
      %v2237 = vlaneseq
      %v2238 = vshrl.u32 %v2237, 7
      %v2239 = vsub.s32 %v2236, %v2238
      %v2240 = vrot.slane %v2230, %v2239
      %v2242 = vunpack.c.l.s4 1966171168
      %v2243 = vunpack.c.0.s8 %v2242
      %v2244 = vlaneseq
      %v2245 = vshrl.u32 %v2244, 7
      %v2246 = vsub.s32 %v2243, %v2245
      %v2247 = vrot.slane %v2231, %v2246
      %v2249 = vunpack.c.l.s4 1966171168
      %v2250 = vunpack.c.0.s8 %v2249
      %v2251 = vlaneseq
      %v2252 = vshrl.u32 %v2251, 7
      %v2253 = vsub.s32 %v2250, %v2252
      %v2254 = vrot.slane %v2232, %v2253
      %v2256 = vunpack.c.l.s4 1966171168
      %v2257 = vunpack.c.0.s8 %v2256
      %v2258 = vlaneseq
      %v2259 = vshrl.u32 %v2258, 7
      %v2260 = vsub.s32 %v2257, %v2259
      %v2261 = vrot.slane %v2233, %v2260
      %v2262 = vcombine.low %v2240, %v2247
      %v2263 = vcombine.low %v2254, %v2261
      %v2265 = vunpack.c.l.s4 1966171168
      %v2266 = vunpack.c.0.s8 %v2265
      %v2267 = vlaneseq
      %v2268 = vshrl.u32 %v2267, 7
      %v2269 = vsub.s32 %v2266, %v2268
      %v2270 = vrot.slane %v2262, %v2269
      %v2272 = vunpack.c.l.s4 1966171168
      %v2273 = vunpack.c.0.s8 %v2272
      %v2274 = vlaneseq
      %v2275 = vshrl.u32 %v2274, 7
      %v2276 = vsub.s32 %v2273, %v2275
      %v2277 = vrot.slane %v2263, %v2276
      %v2278 = vcombine.low %v2270, %v2277
      %v2279 = vcombine.low %v606, %v631
      %v2280 = vcombine.low %v645, %v653
      %v2281 = vcombine.low %v655, %v638
      %v2282 = vcombine.low %v652, %v654
      %v2284 = vunpack.c.l.s4 1966171168
      %v2285 = vunpack.c.0.s8 %v2284
      %v2286 = vlaneseq
      %v2287 = vshrl.u32 %v2286, 7
      %v2288 = vsub.s32 %v2285, %v2287
      %v2289 = vrot.slane %v2279, %v2288
      %v2291 = vunpack.c.l.s4 1966171168
      %v2292 = vunpack.c.0.s8 %v2291
      %v2293 = vlaneseq
      %v2294 = vshrl.u32 %v2293, 7
      %v2295 = vsub.s32 %v2292, %v2294
      %v2296 = vrot.slane %v2280, %v2295
      %v2298 = vunpack.c.l.s4 1966171168
      %v2299 = vunpack.c.0.s8 %v2298
      %v2300 = vlaneseq
      %v2301 = vshrl.u32 %v2300, 7
      %v2302 = vsub.s32 %v2299, %v2301
      %v2303 = vrot.slane %v2281, %v2302
      %v2305 = vunpack.c.l.s4 1966171168
      %v2306 = vunpack.c.0.s8 %v2305
      %v2307 = vlaneseq
      %v2308 = vshrl.u32 %v2307, 7
      %v2309 = vsub.s32 %v2306, %v2308
      %v2310 = vrot.slane %v2282, %v2309
      %v2311 = vcombine.low %v2289, %v2296
      %v2312 = vcombine.low %v2303, %v2310
      %v2314 = vunpack.c.l.s4 1966171168
      %v2315 = vunpack.c.0.s8 %v2314
      %v2316 = vlaneseq
      %v2317 = vshrl.u32 %v2316, 7
      %v2318 = vsub.s32 %v2315, %v2317
      %v2319 = vrot.slane %v2311, %v2318
      %v2321 = vunpack.c.l.s4 1966171168
      %v2322 = vunpack.c.0.s8 %v2321
      %v2323 = vlaneseq
      %v2324 = vshrl.u32 %v2323, 7
      %v2325 = vsub.s32 %v2322, %v2324
      %v2326 = vrot.slane %v2312, %v2325
      %v2327 = vcombine.low %v2319, %v2326
      %v2328 = vcombine.low %v679, %v693
      %v2329 = vcombine.low %v701, %v703
      %v2330 = vcombine.low %v686, %v700
      %v2331 = vcombine.low %v702, %v727
      %v2333 = vunpack.c.l.s4 1966171168
      %v2334 = vunpack.c.0.s8 %v2333
      %v2335 = vlaneseq
      %v2336 = vshrl.u32 %v2335, 7
      %v2337 = vsub.s32 %v2334, %v2336
      %v2338 = vrot.slane %v2328, %v2337
      %v2340 = vunpack.c.l.s4 1966171168
      %v2341 = vunpack.c.0.s8 %v2340
      %v2342 = vlaneseq
      %v2343 = vshrl.u32 %v2342, 7
      %v2344 = vsub.s32 %v2341, %v2343
      %v2345 = vrot.slane %v2329, %v2344
      %v2347 = vunpack.c.l.s4 1966171168
      %v2348 = vunpack.c.0.s8 %v2347
      %v2349 = vlaneseq
      %v2350 = vshrl.u32 %v2349, 7
      %v2351 = vsub.s32 %v2348, %v2350
      %v2352 = vrot.slane %v2330, %v2351
      %v2354 = vunpack.c.l.s4 1966171168
      %v2355 = vunpack.c.0.s8 %v2354
      %v2356 = vlaneseq
      %v2357 = vshrl.u32 %v2356, 7
      %v2358 = vsub.s32 %v2355, %v2357
      %v2359 = vrot.slane %v2331, %v2358
      %v2360 = vcombine.low %v2338, %v2345
      %v2361 = vcombine.low %v2352, %v2359
      %v2363 = vunpack.c.l.s4 1966171168
      %v2364 = vunpack.c.0.s8 %v2363
      %v2365 = vlaneseq
      %v2366 = vshrl.u32 %v2365, 7
      %v2367 = vsub.s32 %v2364, %v2366
      %v2368 = vrot.slane %v2360, %v2367
      %v2370 = vunpack.c.l.s4 1966171168
      %v2371 = vunpack.c.0.s8 %v2370
      %v2372 = vlaneseq
      %v2373 = vshrl.u32 %v2372, 7
      %v2374 = vsub.s32 %v2371, %v2373
      %v2375 = vrot.slane %v2361, %v2374
      %v2376 = vcombine.low %v2368, %v2375
      %v2377 = vcombine.low %v741, %v749
      %v2378 = vcombine.low %v751, %v734
      %v2379 = vcombine.low %v748, %v750
      %v2380 = vcombine.low %v775, %v789
      %v2382 = vunpack.c.l.s4 1966171168
      %v2383 = vunpack.c.0.s8 %v2382
      %v2384 = vlaneseq
      %v2385 = vshrl.u32 %v2384, 7
      %v2386 = vsub.s32 %v2383, %v2385
      %v2387 = vrot.slane %v2377, %v2386
      %v2389 = vunpack.c.l.s4 1966171168
      %v2390 = vunpack.c.0.s8 %v2389
      %v2391 = vlaneseq
      %v2392 = vshrl.u32 %v2391, 7
      %v2393 = vsub.s32 %v2390, %v2392
      %v2394 = vrot.slane %v2378, %v2393
      %v2396 = vunpack.c.l.s4 1966171168
      %v2397 = vunpack.c.0.s8 %v2396
      %v2398 = vlaneseq
      %v2399 = vshrl.u32 %v2398, 7
      %v2400 = vsub.s32 %v2397, %v2399
      %v2401 = vrot.slane %v2379, %v2400
      %v2403 = vunpack.c.l.s4 1966171168
      %v2404 = vunpack.c.0.s8 %v2403
      %v2405 = vlaneseq
      %v2406 = vshrl.u32 %v2405, 7
      %v2407 = vsub.s32 %v2404, %v2406
      %v2408 = vrot.slane %v2380, %v2407
      %v2409 = vcombine.low %v2387, %v2394
      %v2410 = vcombine.low %v2401, %v2408
      %v2412 = vunpack.c.l.s4 1966171168
      %v2413 = vunpack.c.0.s8 %v2412
      %v2414 = vlaneseq
      %v2415 = vshrl.u32 %v2414, 7
      %v2416 = vsub.s32 %v2413, %v2415
      %v2417 = vrot.slane %v2409, %v2416
      %v2419 = vunpack.c.l.s4 1966171168
      %v2420 = vunpack.c.0.s8 %v2419
      %v2421 = vlaneseq
      %v2422 = vshrl.u32 %v2421, 7
      %v2423 = vsub.s32 %v2420, %v2422
      %v2424 = vrot.slane %v2410, %v2423
      %v2425 = vcombine.low %v2417, %v2424
      %v2426 = vcombine.low %v797, %v799
      %v2427 = vcombine.low %v782, %v796
      %v2428 = vcombine.low %v798, %v823
      %v2429 = vcombine.low %v837, %v845
      %v2431 = vunpack.c.l.s4 1966171168
      %v2432 = vunpack.c.0.s8 %v2431
      %v2433 = vlaneseq
      %v2434 = vshrl.u32 %v2433, 7
      %v2435 = vsub.s32 %v2432, %v2434
      %v2436 = vrot.slane %v2426, %v2435
      %v2438 = vunpack.c.l.s4 1966171168
      %v2439 = vunpack.c.0.s8 %v2438
      %v2440 = vlaneseq
      %v2441 = vshrl.u32 %v2440, 7
      %v2442 = vsub.s32 %v2439, %v2441
      %v2443 = vrot.slane %v2427, %v2442
      %v2445 = vunpack.c.l.s4 1966171168
      %v2446 = vunpack.c.0.s8 %v2445
      %v2447 = vlaneseq
      %v2448 = vshrl.u32 %v2447, 7
      %v2449 = vsub.s32 %v2446, %v2448
      %v2450 = vrot.slane %v2428, %v2449
      %v2452 = vunpack.c.l.s4 1966171168
      %v2453 = vunpack.c.0.s8 %v2452
      %v2454 = vlaneseq
      %v2455 = vshrl.u32 %v2454, 7
      %v2456 = vsub.s32 %v2453, %v2455
      %v2457 = vrot.slane %v2429, %v2456
      %v2458 = vcombine.low %v2436, %v2443
      %v2459 = vcombine.low %v2450, %v2457
      %v2461 = vunpack.c.l.s4 1966171168
      %v2462 = vunpack.c.0.s8 %v2461
      %v2463 = vlaneseq
      %v2464 = vshrl.u32 %v2463, 7
      %v2465 = vsub.s32 %v2462, %v2464
      %v2466 = vrot.slane %v2458, %v2465
      %v2468 = vunpack.c.l.s4 1966171168
      %v2469 = vunpack.c.0.s8 %v2468
      %v2470 = vlaneseq
      %v2471 = vshrl.u32 %v2470, 7
      %v2472 = vsub.s32 %v2469, %v2471
      %v2473 = vrot.slane %v2459, %v2472
      %v2474 = vcombine.low %v2466, %v2473
      %v2475 = vcombine.low %v847, %v830
      %v2476 = vcombine.low %v844, %v846
      %v2477 = vcombine.low %v871, %v885
      %v2478 = vcombine.low %v893, %v895
      %v2480 = vunpack.c.l.s4 1966171168
      %v2481 = vunpack.c.0.s8 %v2480
      %v2482 = vlaneseq
      %v2483 = vshrl.u32 %v2482, 7
      %v2484 = vsub.s32 %v2481, %v2483
      %v2485 = vrot.slane %v2475, %v2484
      %v2487 = vunpack.c.l.s4 1966171168
      %v2488 = vunpack.c.0.s8 %v2487
      %v2489 = vlaneseq
      %v2490 = vshrl.u32 %v2489, 7
      %v2491 = vsub.s32 %v2488, %v2490
      %v2492 = vrot.slane %v2476, %v2491
      %v2494 = vunpack.c.l.s4 1966171168
      %v2495 = vunpack.c.0.s8 %v2494
      %v2496 = vlaneseq
      %v2497 = vshrl.u32 %v2496, 7
      %v2498 = vsub.s32 %v2495, %v2497
      %v2499 = vrot.slane %v2477, %v2498
      %v2501 = vunpack.c.l.s4 1966171168
      %v2502 = vunpack.c.0.s8 %v2501
      %v2503 = vlaneseq
      %v2504 = vshrl.u32 %v2503, 7
      %v2505 = vsub.s32 %v2502, %v2504
      %v2506 = vrot.slane %v2478, %v2505
      %v2507 = vcombine.low %v2485, %v2492
      %v2508 = vcombine.low %v2499, %v2506
      %v2510 = vunpack.c.l.s4 1966171168
      %v2511 = vunpack.c.0.s8 %v2510
      %v2512 = vlaneseq
      %v2513 = vshrl.u32 %v2512, 7
      %v2514 = vsub.s32 %v2511, %v2513
      %v2515 = vrot.slane %v2507, %v2514
      %v2517 = vunpack.c.l.s4 1966171168
      %v2518 = vunpack.c.0.s8 %v2517
      %v2519 = vlaneseq
      %v2520 = vshrl.u32 %v2519, 7
      %v2521 = vsub.s32 %v2518, %v2520
      %v2522 = vrot.slane %v2508, %v2521
      %v2523 = vcombine.low %v2515, %v2522
      %v2524 = vcombine.low %v878, %v892
      %v2525 = vcombine.low %v894, %v919
      %v2526 = vcombine.low %v933, %v941
      %v2527 = vcombine.low %v943, %v926
      %v2529 = vunpack.c.l.s4 1966171168
      %v2530 = vunpack.c.0.s8 %v2529
      %v2531 = vlaneseq
      %v2532 = vshrl.u32 %v2531, 7
      %v2533 = vsub.s32 %v2530, %v2532
      %v2534 = vrot.slane %v2524, %v2533
      %v2536 = vunpack.c.l.s4 1966171168
      %v2537 = vunpack.c.0.s8 %v2536
      %v2538 = vlaneseq
      %v2539 = vshrl.u32 %v2538, 7
      %v2540 = vsub.s32 %v2537, %v2539
      %v2541 = vrot.slane %v2525, %v2540
      %v2543 = vunpack.c.l.s4 1966171168
      %v2544 = vunpack.c.0.s8 %v2543
      %v2545 = vlaneseq
      %v2546 = vshrl.u32 %v2545, 7
      %v2547 = vsub.s32 %v2544, %v2546
      %v2548 = vrot.slane %v2526, %v2547
      %v2550 = vunpack.c.l.s4 1966171168
      %v2551 = vunpack.c.0.s8 %v2550
      %v2552 = vlaneseq
      %v2553 = vshrl.u32 %v2552, 7
      %v2554 = vsub.s32 %v2551, %v2553
      %v2555 = vrot.slane %v2527, %v2554
      %v2556 = vcombine.low %v2534, %v2541
      %v2557 = vcombine.low %v2548, %v2555
      %v2559 = vunpack.c.l.s4 1966171168
      %v2560 = vunpack.c.0.s8 %v2559
      %v2561 = vlaneseq
      %v2562 = vshrl.u32 %v2561, 7
      %v2563 = vsub.s32 %v2560, %v2562
      %v2564 = vrot.slane %v2556, %v2563
      %v2566 = vunpack.c.l.s4 1966171168
      %v2567 = vunpack.c.0.s8 %v2566
      %v2568 = vlaneseq
      %v2569 = vshrl.u32 %v2568, 7
      %v2570 = vsub.s32 %v2567, %v2569
      %v2571 = vrot.slane %v2557, %v2570
      %v2572 = vcombine.low %v2564, %v2571
      %v2573 = vcombine.low %v940, %v942
      %v2575 = vunpack.c.l.s4 1966171168
      %v2576 = vunpack.c.0.s8 %v2575
      %v2577 = vlaneseq
      %v2578 = vshrl.u32 %v2577, 7
      %v2579 = vsub.s32 %v2576, %v2578
      %v2580 = vrot.slane %v2573, %v2579
      %v2582 = vunpack.c.l.s4 1966171168
      %v2583 = vunpack.c.0.s8 %v2582
      %v2584 = vlaneseq
      %v2585 = vshrl.u32 %v2584, 7
      %v2586 = vsub.s32 %v2583, %v2585
      %v2587 = vrot.slane %v2580, %v2586
      %v2588 = vcombine.low %v981, %v989
      %v2589 = vcombine.low %v997, %v1005
      %v2590 = vcombine.low %v1013, %v1021
      %v2591 = vcombine.low %v1029, %v1038
      %v2593 = vunpack.c.l.s4 1966171168
      %v2594 = vunpack.c.0.s8 %v2593
      %v2595 = vlaneseq
      %v2596 = vshrl.u32 %v2595, 7
      %v2597 = vsub.s32 %v2594, %v2596
      %v2598 = vrot.slane %v2588, %v2597
      %v2600 = vunpack.c.l.s4 1966171168
      %v2601 = vunpack.c.0.s8 %v2600
      %v2602 = vlaneseq
      %v2603 = vshrl.u32 %v2602, 7
      %v2604 = vsub.s32 %v2601, %v2603
      %v2605 = vrot.slane %v2589, %v2604
      %v2607 = vunpack.c.l.s4 1966171168
      %v2608 = vunpack.c.0.s8 %v2607
      %v2609 = vlaneseq
      %v2610 = vshrl.u32 %v2609, 7
      %v2611 = vsub.s32 %v2608, %v2610
      %v2612 = vrot.slane %v2590, %v2611
      %v2614 = vunpack.c.l.s4 1966171168
      %v2615 = vunpack.c.0.s8 %v2614
      %v2616 = vlaneseq
      %v2617 = vshrl.u32 %v2616, 7
      %v2618 = vsub.s32 %v2615, %v2617
      %v2619 = vrot.slane %v2591, %v2618
      %v2620 = vcombine.low %v2598, %v2605
      %v2621 = vcombine.low %v2612, %v2619
      %v2623 = vunpack.c.l.s4 1966171168
      %v2624 = vunpack.c.0.s8 %v2623
      %v2625 = vlaneseq
      %v2626 = vshrl.u32 %v2625, 7
      %v2627 = vsub.s32 %v2624, %v2626
      %v2628 = vrot.slane %v2620, %v2627
      %v2630 = vunpack.c.l.s4 1966171168
      %v2631 = vunpack.c.0.s8 %v2630
      %v2632 = vlaneseq
      %v2633 = vshrl.u32 %v2632, 7
      %v2634 = vsub.s32 %v2631, %v2633
      %v2635 = vrot.slane %v2621, %v2634
      %v2636 = vcombine.low %v2628, %v2635
      %v2637 = vcombine.low %v1046, %v1054
      %v2638 = vcombine.low %v1062, %v1070
      %v2639 = vcombine.low %v1078, %v1086
      %v2640 = vcombine.low %v1095, %v1103
      %v2642 = vunpack.c.l.s4 1966171168
      %v2643 = vunpack.c.0.s8 %v2642
      %v2644 = vlaneseq
      %v2645 = vshrl.u32 %v2644, 7
      %v2646 = vsub.s32 %v2643, %v2645
      %v2647 = vrot.slane %v2637, %v2646
      %v2649 = vunpack.c.l.s4 1966171168
      %v2650 = vunpack.c.0.s8 %v2649
      %v2651 = vlaneseq
      %v2652 = vshrl.u32 %v2651, 7
      %v2653 = vsub.s32 %v2650, %v2652
      %v2654 = vrot.slane %v2638, %v2653
      %v2656 = vunpack.c.l.s4 1966171168
      %v2657 = vunpack.c.0.s8 %v2656
      %v2658 = vlaneseq
      %v2659 = vshrl.u32 %v2658, 7
      %v2660 = vsub.s32 %v2657, %v2659
      %v2661 = vrot.slane %v2639, %v2660
      %v2663 = vunpack.c.l.s4 1966171168
      %v2664 = vunpack.c.0.s8 %v2663
      %v2665 = vlaneseq
      %v2666 = vshrl.u32 %v2665, 7
      %v2667 = vsub.s32 %v2664, %v2666
      %v2668 = vrot.slane %v2640, %v2667
      %v2669 = vcombine.low %v2647, %v2654
      %v2670 = vcombine.low %v2661, %v2668
      %v2672 = vunpack.c.l.s4 1966171168
      %v2673 = vunpack.c.0.s8 %v2672
      %v2674 = vlaneseq
      %v2675 = vshrl.u32 %v2674, 7
      %v2676 = vsub.s32 %v2673, %v2675
      %v2677 = vrot.slane %v2669, %v2676
      %v2679 = vunpack.c.l.s4 1966171168
      %v2680 = vunpack.c.0.s8 %v2679
      %v2681 = vlaneseq
      %v2682 = vshrl.u32 %v2681, 7
      %v2683 = vsub.s32 %v2680, %v2682
      %v2684 = vrot.slane %v2670, %v2683
      %v2685 = vcombine.low %v2677, %v2684
      %v2686 = vcombine.low %v1111, %v1119
      %v2687 = vcombine.low %v1127, %v1135
      %v2688 = vcombine.low %v1143, %v1152
      %v2689 = vcombine.low %v1160, %v1168
      %v2691 = vunpack.c.l.s4 1966171168
      %v2692 = vunpack.c.0.s8 %v2691
      %v2693 = vlaneseq
      %v2694 = vshrl.u32 %v2693, 7
      %v2695 = vsub.s32 %v2692, %v2694
      %v2696 = vrot.slane %v2686, %v2695
      %v2698 = vunpack.c.l.s4 1966171168
      %v2699 = vunpack.c.0.s8 %v2698
      %v2700 = vlaneseq
      %v2701 = vshrl.u32 %v2700, 7
      %v2702 = vsub.s32 %v2699, %v2701
      %v2703 = vrot.slane %v2687, %v2702
      %v2705 = vunpack.c.l.s4 1966171168
      %v2706 = vunpack.c.0.s8 %v2705
      %v2707 = vlaneseq
      %v2708 = vshrl.u32 %v2707, 7
      %v2709 = vsub.s32 %v2706, %v2708
      %v2710 = vrot.slane %v2688, %v2709
      %v2712 = vunpack.c.l.s4 1966171168
      %v2713 = vunpack.c.0.s8 %v2712
      %v2714 = vlaneseq
      %v2715 = vshrl.u32 %v2714, 7
      %v2716 = vsub.s32 %v2713, %v2715
      %v2717 = vrot.slane %v2689, %v2716
      %v2718 = vcombine.low %v2696, %v2703
      %v2719 = vcombine.low %v2710, %v2717
      %v2721 = vunpack.c.l.s4 1966171168
      %v2722 = vunpack.c.0.s8 %v2721
      %v2723 = vlaneseq
      %v2724 = vshrl.u32 %v2723, 7
      %v2725 = vsub.s32 %v2722, %v2724
      %v2726 = vrot.slane %v2718, %v2725
      %v2728 = vunpack.c.l.s4 1966171168
      %v2729 = vunpack.c.0.s8 %v2728
      %v2730 = vlaneseq
      %v2731 = vshrl.u32 %v2730, 7
      %v2732 = vsub.s32 %v2729, %v2731
      %v2733 = vrot.slane %v2719, %v2732
      %v2734 = vcombine.low %v2726, %v2733
      %v2735 = vcombine.low %v1176, %v1184
      %v2736 = vcombine.low %v1192, %v1200
      %v2737 = vcombine.low %v1209, %v1217
      %v2738 = vcombine.low %v1225, %v1233
      %v2740 = vunpack.c.l.s4 1966171168
      %v2741 = vunpack.c.0.s8 %v2740
      %v2742 = vlaneseq
      %v2743 = vshrl.u32 %v2742, 7
      %v2744 = vsub.s32 %v2741, %v2743
      %v2745 = vrot.slane %v2735, %v2744
      %v2747 = vunpack.c.l.s4 1966171168
      %v2748 = vunpack.c.0.s8 %v2747
      %v2749 = vlaneseq
      %v2750 = vshrl.u32 %v2749, 7
      %v2751 = vsub.s32 %v2748, %v2750
      %v2752 = vrot.slane %v2736, %v2751
      %v2754 = vunpack.c.l.s4 1966171168
      %v2755 = vunpack.c.0.s8 %v2754
      %v2756 = vlaneseq
      %v2757 = vshrl.u32 %v2756, 7
      %v2758 = vsub.s32 %v2755, %v2757
      %v2759 = vrot.slane %v2737, %v2758
      %v2761 = vunpack.c.l.s4 1966171168
      %v2762 = vunpack.c.0.s8 %v2761
      %v2763 = vlaneseq
      %v2764 = vshrl.u32 %v2763, 7
      %v2765 = vsub.s32 %v2762, %v2764
      %v2766 = vrot.slane %v2738, %v2765
      %v2767 = vcombine.low %v2745, %v2752
      %v2768 = vcombine.low %v2759, %v2766
      %v2770 = vunpack.c.l.s4 1966171168
      %v2771 = vunpack.c.0.s8 %v2770
      %v2772 = vlaneseq
      %v2773 = vshrl.u32 %v2772, 7
      %v2774 = vsub.s32 %v2771, %v2773
      %v2775 = vrot.slane %v2767, %v2774
      %v2777 = vunpack.c.l.s4 1966171168
      %v2778 = vunpack.c.0.s8 %v2777
      %v2779 = vlaneseq
      %v2780 = vshrl.u32 %v2779, 7
      %v2781 = vsub.s32 %v2778, %v2780
      %v2782 = vrot.slane %v2768, %v2781
      %v2783 = vcombine.low %v2775, %v2782
      %v2784 = vcombine.low %v1241, %v1249
      %v2785 = vcombine.low %v1257, %v1266
      %v2786 = vcombine.low %v1274, %v1282
      %v2787 = vcombine.low %v1290, %v1298
      %v2789 = vunpack.c.l.s4 1966171168
      %v2790 = vunpack.c.0.s8 %v2789
      %v2791 = vlaneseq
      %v2792 = vshrl.u32 %v2791, 7
      %v2793 = vsub.s32 %v2790, %v2792
      %v2794 = vrot.slane %v2784, %v2793
      %v2796 = vunpack.c.l.s4 1966171168
      %v2797 = vunpack.c.0.s8 %v2796
      %v2798 = vlaneseq
      %v2799 = vshrl.u32 %v2798, 7
      %v2800 = vsub.s32 %v2797, %v2799
      %v2801 = vrot.slane %v2785, %v2800
      %v2803 = vunpack.c.l.s4 1966171168
      %v2804 = vunpack.c.0.s8 %v2803
      %v2805 = vlaneseq
      %v2806 = vshrl.u32 %v2805, 7
      %v2807 = vsub.s32 %v2804, %v2806
      %v2808 = vrot.slane %v2786, %v2807
      %v2810 = vunpack.c.l.s4 1966171168
      %v2811 = vunpack.c.0.s8 %v2810
      %v2812 = vlaneseq
      %v2813 = vshrl.u32 %v2812, 7
      %v2814 = vsub.s32 %v2811, %v2813
      %v2815 = vrot.slane %v2787, %v2814
      %v2816 = vcombine.low %v2794, %v2801
      %v2817 = vcombine.low %v2808, %v2815
      %v2819 = vunpack.c.l.s4 1966171168
      %v2820 = vunpack.c.0.s8 %v2819
      %v2821 = vlaneseq
      %v2822 = vshrl.u32 %v2821, 7
      %v2823 = vsub.s32 %v2820, %v2822
      %v2824 = vrot.slane %v2816, %v2823
      %v2826 = vunpack.c.l.s4 1966171168
      %v2827 = vunpack.c.0.s8 %v2826
      %v2828 = vlaneseq
      %v2829 = vshrl.u32 %v2828, 7
      %v2830 = vsub.s32 %v2827, %v2829
      %v2831 = vrot.slane %v2817, %v2830
      %v2832 = vcombine.low %v2824, %v2831
      %v2833 = vcombine.low %v1306, %v1314
      %v2834 = vcombine.low %v1323, %v1331
      %v2835 = vcombine.low %v1339, %v1347
      %v2836 = vcombine.low %v1355, %v1363
      %v2838 = vunpack.c.l.s4 1966171168
      %v2839 = vunpack.c.0.s8 %v2838
      %v2840 = vlaneseq
      %v2841 = vshrl.u32 %v2840, 7
      %v2842 = vsub.s32 %v2839, %v2841
      %v2843 = vrot.slane %v2833, %v2842
      %v2845 = vunpack.c.l.s4 1966171168
      %v2846 = vunpack.c.0.s8 %v2845
      %v2847 = vlaneseq
      %v2848 = vshrl.u32 %v2847, 7
      %v2849 = vsub.s32 %v2846, %v2848
      %v2850 = vrot.slane %v2834, %v2849
      %v2852 = vunpack.c.l.s4 1966171168
      %v2853 = vunpack.c.0.s8 %v2852
      %v2854 = vlaneseq
      %v2855 = vshrl.u32 %v2854, 7
      %v2856 = vsub.s32 %v2853, %v2855
      %v2857 = vrot.slane %v2835, %v2856
      %v2859 = vunpack.c.l.s4 1966171168
      %v2860 = vunpack.c.0.s8 %v2859
      %v2861 = vlaneseq
      %v2862 = vshrl.u32 %v2861, 7
      %v2863 = vsub.s32 %v2860, %v2862
      %v2864 = vrot.slane %v2836, %v2863
      %v2865 = vcombine.low %v2843, %v2850
      %v2866 = vcombine.low %v2857, %v2864
      %v2868 = vunpack.c.l.s4 1966171168
      %v2869 = vunpack.c.0.s8 %v2868
      %v2870 = vlaneseq
      %v2871 = vshrl.u32 %v2870, 7
      %v2872 = vsub.s32 %v2869, %v2871
      %v2873 = vrot.slane %v2865, %v2872
      %v2875 = vunpack.c.l.s4 1966171168
      %v2876 = vunpack.c.0.s8 %v2875
      %v2877 = vlaneseq
      %v2878 = vshrl.u32 %v2877, 7
      %v2879 = vsub.s32 %v2876, %v2878
      %v2880 = vrot.slane %v2866, %v2879
      %v2881 = vcombine.low %v2873, %v2880
      %v2882 = vcombine.low %v1371, %v1380
      %v2883 = vcombine.low %v1388, %v1396
      %v2884 = vcombine.low %v1404, %v1412
      %v2885 = vcombine.low %v1420, %v1428
      %v2887 = vunpack.c.l.s4 1966171168
      %v2888 = vunpack.c.0.s8 %v2887
      %v2889 = vlaneseq
      %v2890 = vshrl.u32 %v2889, 7
      %v2891 = vsub.s32 %v2888, %v2890
      %v2892 = vrot.slane %v2882, %v2891
      %v2894 = vunpack.c.l.s4 1966171168
      %v2895 = vunpack.c.0.s8 %v2894
      %v2896 = vlaneseq
      %v2897 = vshrl.u32 %v2896, 7
      %v2898 = vsub.s32 %v2895, %v2897
      %v2899 = vrot.slane %v2883, %v2898
      %v2901 = vunpack.c.l.s4 1966171168
      %v2902 = vunpack.c.0.s8 %v2901
      %v2903 = vlaneseq
      %v2904 = vshrl.u32 %v2903, 7
      %v2905 = vsub.s32 %v2902, %v2904
      %v2906 = vrot.slane %v2884, %v2905
      %v2908 = vunpack.c.l.s4 1966171168
      %v2909 = vunpack.c.0.s8 %v2908
      %v2910 = vlaneseq
      %v2911 = vshrl.u32 %v2910, 7
      %v2912 = vsub.s32 %v2909, %v2911
      %v2913 = vrot.slane %v2885, %v2912
      %v2914 = vcombine.low %v2892, %v2899
      %v2915 = vcombine.low %v2906, %v2913
      %v2917 = vunpack.c.l.s4 1966171168
      %v2918 = vunpack.c.0.s8 %v2917
      %v2919 = vlaneseq
      %v2920 = vshrl.u32 %v2919, 7
      %v2921 = vsub.s32 %v2918, %v2920
      %v2922 = vrot.slane %v2914, %v2921
      %v2924 = vunpack.c.l.s4 1966171168
      %v2925 = vunpack.c.0.s8 %v2924
      %v2926 = vlaneseq
      %v2927 = vshrl.u32 %v2926, 7
      %v2928 = vsub.s32 %v2925, %v2927
      %v2929 = vrot.slane %v2915, %v2928
      %v2930 = vcombine.low %v2922, %v2929
      %v2931 = vcombine.low %v1437, %v1445
      %v2932 = vcombine.low %v1453, %v1461
      %v2933 = vcombine.low %v1469, %v1477
      %v2934 = vcombine.low %v1485, %v1494
      %v2936 = vunpack.c.l.s4 1966171168
      %v2937 = vunpack.c.0.s8 %v2936
      %v2938 = vlaneseq
      %v2939 = vshrl.u32 %v2938, 7
      %v2940 = vsub.s32 %v2937, %v2939
      %v2941 = vrot.slane %v2931, %v2940
      %v2943 = vunpack.c.l.s4 1966171168
      %v2944 = vunpack.c.0.s8 %v2943
      %v2945 = vlaneseq
      %v2946 = vshrl.u32 %v2945, 7
      %v2947 = vsub.s32 %v2944, %v2946
      %v2948 = vrot.slane %v2932, %v2947
      %v2950 = vunpack.c.l.s4 1966171168
      %v2951 = vunpack.c.0.s8 %v2950
      %v2952 = vlaneseq
      %v2953 = vshrl.u32 %v2952, 7
      %v2954 = vsub.s32 %v2951, %v2953
      %v2955 = vrot.slane %v2933, %v2954
      %v2957 = vunpack.c.l.s4 1966171168
      %v2958 = vunpack.c.0.s8 %v2957
      %v2959 = vlaneseq
      %v2960 = vshrl.u32 %v2959, 7
      %v2961 = vsub.s32 %v2958, %v2960
      %v2962 = vrot.slane %v2934, %v2961
      %v2963 = vcombine.low %v2941, %v2948
      %v2964 = vcombine.low %v2955, %v2962
      %v2966 = vunpack.c.l.s4 1966171168
      %v2967 = vunpack.c.0.s8 %v2966
      %v2968 = vlaneseq
      %v2969 = vshrl.u32 %v2968, 7
      %v2970 = vsub.s32 %v2967, %v2969
      %v2971 = vrot.slane %v2963, %v2970
      %v2973 = vunpack.c.l.s4 1966171168
      %v2974 = vunpack.c.0.s8 %v2973
      %v2975 = vlaneseq
      %v2976 = vshrl.u32 %v2975, 7
      %v2977 = vsub.s32 %v2974, %v2976
      %v2978 = vrot.slane %v2964, %v2977
      %v2979 = vcombine.low %v2971, %v2978
      %v2980 = vcombine.low %v1502, %v1510
      %v2981 = vcombine.low %v1518, %v1526
      %v2982 = vcombine.low %v1534, %v1542
      %v2983 = vcombine.low %v1551, %v1559
      %v2985 = vunpack.c.l.s4 1966171168
      %v2986 = vunpack.c.0.s8 %v2985
      %v2987 = vlaneseq
      %v2988 = vshrl.u32 %v2987, 7
      %v2989 = vsub.s32 %v2986, %v2988
      %v2990 = vrot.slane %v2980, %v2989
      %v2992 = vunpack.c.l.s4 1966171168
      %v2993 = vunpack.c.0.s8 %v2992
      %v2994 = vlaneseq
      %v2995 = vshrl.u32 %v2994, 7
      %v2996 = vsub.s32 %v2993, %v2995
      %v2997 = vrot.slane %v2981, %v2996
      %v2999 = vunpack.c.l.s4 1966171168
      %v3000 = vunpack.c.0.s8 %v2999
      %v3001 = vlaneseq
      %v3002 = vshrl.u32 %v3001, 7
      %v3003 = vsub.s32 %v3000, %v3002
      %v3004 = vrot.slane %v2982, %v3003
      %v3006 = vunpack.c.l.s4 1966171168
      %v3007 = vunpack.c.0.s8 %v3006
      %v3008 = vlaneseq
      %v3009 = vshrl.u32 %v3008, 7
      %v3010 = vsub.s32 %v3007, %v3009
      %v3011 = vrot.slane %v2983, %v3010
      %v3012 = vcombine.low %v2990, %v2997
      %v3013 = vcombine.low %v3004, %v3011
      %v3015 = vunpack.c.l.s4 1966171168
      %v3016 = vunpack.c.0.s8 %v3015
      %v3017 = vlaneseq
      %v3018 = vshrl.u32 %v3017, 7
      %v3019 = vsub.s32 %v3016, %v3018
      %v3020 = vrot.slane %v3012, %v3019
      %v3022 = vunpack.c.l.s4 1966171168
      %v3023 = vunpack.c.0.s8 %v3022
      %v3024 = vlaneseq
      %v3025 = vshrl.u32 %v3024, 7
      %v3026 = vsub.s32 %v3023, %v3025
      %v3027 = vrot.slane %v3013, %v3026
      %v3028 = vcombine.low %v3020, %v3027
      %v3029 = vcombine.low %v1567, %v1575
      %v3030 = vcombine.low %v1583, %v1591
      %v3031 = vcombine.low %v1599, %v1608
      %v3032 = vcombine.low %v1616, %v1624
      %v3034 = vunpack.c.l.s4 1966171168
      %v3035 = vunpack.c.0.s8 %v3034
      %v3036 = vlaneseq
      %v3037 = vshrl.u32 %v3036, 7
      %v3038 = vsub.s32 %v3035, %v3037
      %v3039 = vrot.slane %v3029, %v3038
      %v3041 = vunpack.c.l.s4 1966171168
      %v3042 = vunpack.c.0.s8 %v3041
      %v3043 = vlaneseq
      %v3044 = vshrl.u32 %v3043, 7
      %v3045 = vsub.s32 %v3042, %v3044
      %v3046 = vrot.slane %v3030, %v3045
      %v3048 = vunpack.c.l.s4 1966171168
      %v3049 = vunpack.c.0.s8 %v3048
      %v3050 = vlaneseq
      %v3051 = vshrl.u32 %v3050, 7
      %v3052 = vsub.s32 %v3049, %v3051
      %v3053 = vrot.slane %v3031, %v3052
      %v3055 = vunpack.c.l.s4 1966171168
      %v3056 = vunpack.c.0.s8 %v3055
      %v3057 = vlaneseq
      %v3058 = vshrl.u32 %v3057, 7
      %v3059 = vsub.s32 %v3056, %v3058
      %v3060 = vrot.slane %v3032, %v3059
      %v3061 = vcombine.low %v3039, %v3046
      %v3062 = vcombine.low %v3053, %v3060
      %v3064 = vunpack.c.l.s4 1966171168
      %v3065 = vunpack.c.0.s8 %v3064
      %v3066 = vlaneseq
      %v3067 = vshrl.u32 %v3066, 7
      %v3068 = vsub.s32 %v3065, %v3067
      %v3069 = vrot.slane %v3061, %v3068
      %v3071 = vunpack.c.l.s4 1966171168
      %v3072 = vunpack.c.0.s8 %v3071
      %v3073 = vlaneseq
      %v3074 = vshrl.u32 %v3073, 7
      %v3075 = vsub.s32 %v3072, %v3074
      %v3076 = vrot.slane %v3062, %v3075
      %v3077 = vcombine.low %v3069, %v3076
      %v3078 = vcombine.low %v1632, %v1640
      %v3079 = vcombine.low %v1648, %v1656
      %v3080 = vcombine.low %v1665, %v1673
      %v3081 = vcombine.low %v1681, %v1689
      %v3083 = vunpack.c.l.s4 1966171168
      %v3084 = vunpack.c.0.s8 %v3083
      %v3085 = vlaneseq
      %v3086 = vshrl.u32 %v3085, 7
      %v3087 = vsub.s32 %v3084, %v3086
      %v3088 = vrot.slane %v3078, %v3087
      %v3090 = vunpack.c.l.s4 1966171168
      %v3091 = vunpack.c.0.s8 %v3090
      %v3092 = vlaneseq
      %v3093 = vshrl.u32 %v3092, 7
      %v3094 = vsub.s32 %v3091, %v3093
      %v3095 = vrot.slane %v3079, %v3094
      %v3097 = vunpack.c.l.s4 1966171168
      %v3098 = vunpack.c.0.s8 %v3097
      %v3099 = vlaneseq
      %v3100 = vshrl.u32 %v3099, 7
      %v3101 = vsub.s32 %v3098, %v3100
      %v3102 = vrot.slane %v3080, %v3101
      %v3104 = vunpack.c.l.s4 1966171168
      %v3105 = vunpack.c.0.s8 %v3104
      %v3106 = vlaneseq
      %v3107 = vshrl.u32 %v3106, 7
      %v3108 = vsub.s32 %v3105, %v3107
      %v3109 = vrot.slane %v3081, %v3108
      %v3110 = vcombine.low %v3088, %v3095
      %v3111 = vcombine.low %v3102, %v3109
      %v3113 = vunpack.c.l.s4 1966171168
      %v3114 = vunpack.c.0.s8 %v3113
      %v3115 = vlaneseq
      %v3116 = vshrl.u32 %v3115, 7
      %v3117 = vsub.s32 %v3114, %v3116
      %v3118 = vrot.slane %v3110, %v3117
      %v3120 = vunpack.c.l.s4 1966171168
      %v3121 = vunpack.c.0.s8 %v3120
      %v3122 = vlaneseq
      %v3123 = vshrl.u32 %v3122, 7
      %v3124 = vsub.s32 %v3121, %v3123
      %v3125 = vrot.slane %v3111, %v3124
      %v3126 = vcombine.low %v3118, %v3125
      %v3127 = vcombine.low %v1697, %v1705
      %v3128 = vcombine.low %v1713, %v1722
      %v3129 = vcombine.low %v1730, %v1738
      %v3130 = vcombine.low %v1746, %v1754
      %v3132 = vunpack.c.l.s4 1966171168
      %v3133 = vunpack.c.0.s8 %v3132
      %v3134 = vlaneseq
      %v3135 = vshrl.u32 %v3134, 7
      %v3136 = vsub.s32 %v3133, %v3135
      %v3137 = vrot.slane %v3127, %v3136
      %v3139 = vunpack.c.l.s4 1966171168
      %v3140 = vunpack.c.0.s8 %v3139
      %v3141 = vlaneseq
      %v3142 = vshrl.u32 %v3141, 7
      %v3143 = vsub.s32 %v3140, %v3142
      %v3144 = vrot.slane %v3128, %v3143
      %v3146 = vunpack.c.l.s4 1966171168
      %v3147 = vunpack.c.0.s8 %v3146
      %v3148 = vlaneseq
      %v3149 = vshrl.u32 %v3148, 7
      %v3150 = vsub.s32 %v3147, %v3149
      %v3151 = vrot.slane %v3129, %v3150
      %v3153 = vunpack.c.l.s4 1966171168
      %v3154 = vunpack.c.0.s8 %v3153
      %v3155 = vlaneseq
      %v3156 = vshrl.u32 %v3155, 7
      %v3157 = vsub.s32 %v3154, %v3156
      %v3158 = vrot.slane %v3130, %v3157
      %v3159 = vcombine.low %v3137, %v3144
      %v3160 = vcombine.low %v3151, %v3158
      %v3162 = vunpack.c.l.s4 1966171168
      %v3163 = vunpack.c.0.s8 %v3162
      %v3164 = vlaneseq
      %v3165 = vshrl.u32 %v3164, 7
      %v3166 = vsub.s32 %v3163, %v3165
      %v3167 = vrot.slane %v3159, %v3166
      %v3169 = vunpack.c.l.s4 1966171168
      %v3170 = vunpack.c.0.s8 %v3169
      %v3171 = vlaneseq
      %v3172 = vshrl.u32 %v3171, 7
      %v3173 = vsub.s32 %v3170, %v3172
      %v3174 = vrot.slane %v3160, %v3173
      %v3175 = vcombine.low %v3167, %v3174
      %v3176 = vcombine.low %v1762, %v1770
      %v3178 = vunpack.c.l.s4 1966171168
      %v3179 = vunpack.c.0.s8 %v3178
      %v3180 = vlaneseq
      %v3181 = vshrl.u32 %v3180, 7
      %v3182 = vsub.s32 %v3179, %v3181
      %v3183 = vrot.slane %v3176, %v3182
      %v3185 = vunpack.c.l.s4 1966171168
      %v3186 = vunpack.c.0.s8 %v3185
      %v3187 = vlaneseq
      %v3188 = vshrl.u32 %v3187, 7
      %v3189 = vsub.s32 %v3186, %v3188
      %v3190 = vrot.slane %v3183, %v3189
      %3191 = vrot.lane.b32.xlu0 %v2636, 4
      %v3192 = vpop.permute.xlu0 %3191
      %3193 = vrot.lane.b32.xlu0 %v2685, 4
      %v3194 = vpop.permute.xlu0 %3193
      %3195 = vrot.lane.b32.xlu0 %v2734, 4
      %v3196 = vpop.permute.xlu0 %3195
      %3197 = vrot.lane.b32.xlu0 %v2783, 4
      %v3198 = vpop.permute.xlu0 %3197
      %3199 = vrot.lane.b32.xlu0 %v2832, 4
      %v3200 = vpop.permute.xlu0 %3199
      %3201 = vrot.lane.b32.xlu0 %v2881, 4
      %v3202 = vpop.permute.xlu0 %3201
      %3203 = vrot.lane.b32.xlu0 %v2930, 4
      %v3204 = vpop.permute.xlu0 %3203
      %3205 = vrot.lane.b32.xlu0 %v2979, 4
      %v3206 = vpop.permute.xlu0 %3205
      %3207 = vrot.lane.b32.xlu0 %v3028, 4
      %v3208 = vpop.permute.xlu0 %3207
      %3209 = vrot.lane.b32.xlu0 %v3077, 4
      %v3210 = vpop.permute.xlu0 %3209
      %3211 = vrot.lane.b32.xlu0 %v3126, 4
      %v3212 = vpop.permute.xlu0 %3211
      %3213 = vrot.lane.b32.xlu0 %v3175, 4
      %v3214 = vpop.permute.xlu0 %3213
      %3215 = vrot.lane.b32.xlu0 %v3190, 4
      %v3216 = vpop.permute.xlu0 %3215
      %v3217 = vcombine.low %v309, %v317
      %v3218 = vcombine.low %v319, %v302
      %v3219 = vcombine.low %v316, %v318
      %v3220 = vcombine.low %v944, %v357
      %v3222 = vunpack.c.l.s4 1966171168
      %v3223 = vunpack.c.0.s8 %v3222
      %v3224 = vlaneseq
      %v3225 = vshrl.u32 %v3224, 7
      %v3226 = vsub.s32 %v3223, %v3225
      %v3227 = vrot.slane %v3217, %v3226
      %v3229 = vunpack.c.l.s4 1966171168
      %v3230 = vunpack.c.0.s8 %v3229
      %v3231 = vlaneseq
      %v3232 = vshrl.u32 %v3231, 7
      %v3233 = vsub.s32 %v3230, %v3232
      %v3234 = vrot.slane %v3218, %v3233
      %v3236 = vunpack.c.l.s4 1966171168
      %v3237 = vunpack.c.0.s8 %v3236
      %v3238 = vlaneseq
      %v3239 = vshrl.u32 %v3238, 7
      %v3240 = vsub.s32 %v3237, %v3239
      %v3241 = vrot.slane %v3219, %v3240
      %v3243 = vunpack.c.l.s4 1966171168
      %v3244 = vunpack.c.0.s8 %v3243
      %v3245 = vlaneseq
      %v3246 = vshrl.u32 %v3245, 7
      %v3247 = vsub.s32 %v3244, %v3246
      %v3248 = vrot.slane %v3220, %v3247
      %v3249 = vcombine.low %v3227, %v3234
      %v3250 = vcombine.low %v3241, %v3248
      %v3252 = vunpack.c.l.s4 1966171168
      %v3253 = vunpack.c.0.s8 %v3252
      %v3254 = vlaneseq
      %v3255 = vshrl.u32 %v3254, 7
      %v3256 = vsub.s32 %v3253, %v3255
      %v3257 = vrot.slane %v3249, %v3256
      %v3259 = vunpack.c.l.s4 1966171168
      %v3260 = vunpack.c.0.s8 %v3259
      %v3261 = vlaneseq
      %v3262 = vshrl.u32 %v3261, 7
      %v3263 = vsub.s32 %v3260, %v3262
      %v3264 = vrot.slane %v3250, %v3263
      %v3265 = vcombine.low %v3257, %v3264
      %v3266 = vcombine.low %v365, %v367
      %v3267 = vcombine.low %v350, %v364
      %v3268 = vcombine.low %v366, %v945
      %v3269 = vcombine.low %v405, %v413
      %v3271 = vunpack.c.l.s4 1966171168
      %v3272 = vunpack.c.0.s8 %v3271
      %v3273 = vlaneseq
      %v3274 = vshrl.u32 %v3273, 7
      %v3275 = vsub.s32 %v3272, %v3274
      %v3276 = vrot.slane %v3266, %v3275
      %v3278 = vunpack.c.l.s4 1966171168
      %v3279 = vunpack.c.0.s8 %v3278
      %v3280 = vlaneseq
      %v3281 = vshrl.u32 %v3280, 7
      %v3282 = vsub.s32 %v3279, %v3281
      %v3283 = vrot.slane %v3267, %v3282
      %v3285 = vunpack.c.l.s4 1966171168
      %v3286 = vunpack.c.0.s8 %v3285
      %v3287 = vlaneseq
      %v3288 = vshrl.u32 %v3287, 7
      %v3289 = vsub.s32 %v3286, %v3288
      %v3290 = vrot.slane %v3268, %v3289
      %v3292 = vunpack.c.l.s4 1966171168
      %v3293 = vunpack.c.0.s8 %v3292
      %v3294 = vlaneseq
      %v3295 = vshrl.u32 %v3294, 7
      %v3296 = vsub.s32 %v3293, %v3295
      %v3297 = vrot.slane %v3269, %v3296
      %v3298 = vcombine.low %v3276, %v3283
      %v3299 = vcombine.low %v3290, %v3297
      %v3301 = vunpack.c.l.s4 1966171168
      %v3302 = vunpack.c.0.s8 %v3301
      %v3303 = vlaneseq
      %v3304 = vshrl.u32 %v3303, 7
      %v3305 = vsub.s32 %v3302, %v3304
      %v3306 = vrot.slane %v3298, %v3305
      %v3308 = vunpack.c.l.s4 1966171168
      %v3309 = vunpack.c.0.s8 %v3308
      %v3310 = vlaneseq
      %v3311 = vshrl.u32 %v3310, 7
      %v3312 = vsub.s32 %v3309, %v3311
      %v3313 = vrot.slane %v3299, %v3312
      %v3314 = vcombine.low %v3306, %v3313
      %v3315 = vcombine.low %v415, %v398
      %v3316 = vcombine.low %v412, %v414
      %v3317 = vcombine.low %v946, %v453
      %v3318 = vcombine.low %v461, %v463
      %v3320 = vunpack.c.l.s4 1966171168
      %v3321 = vunpack.c.0.s8 %v3320
      %v3322 = vlaneseq
      %v3323 = vshrl.u32 %v3322, 7
      %v3324 = vsub.s32 %v3321, %v3323
      %v3325 = vrot.slane %v3315, %v3324
      %v3327 = vunpack.c.l.s4 1966171168
      %v3328 = vunpack.c.0.s8 %v3327
      %v3329 = vlaneseq
      %v3330 = vshrl.u32 %v3329, 7
      %v3331 = vsub.s32 %v3328, %v3330
      %v3332 = vrot.slane %v3316, %v3331
      %v3334 = vunpack.c.l.s4 1966171168
      %v3335 = vunpack.c.0.s8 %v3334
      %v3336 = vlaneseq
      %v3337 = vshrl.u32 %v3336, 7
      %v3338 = vsub.s32 %v3335, %v3337
      %v3339 = vrot.slane %v3317, %v3338
      %v3341 = vunpack.c.l.s4 1966171168
      %v3342 = vunpack.c.0.s8 %v3341
      %v3343 = vlaneseq
      %v3344 = vshrl.u32 %v3343, 7
      %v3345 = vsub.s32 %v3342, %v3344
      %v3346 = vrot.slane %v3318, %v3345
      %v3347 = vcombine.low %v3325, %v3332
      %v3348 = vcombine.low %v3339, %v3346
      %v3350 = vunpack.c.l.s4 1966171168
      %v3351 = vunpack.c.0.s8 %v3350
      %v3352 = vlaneseq
      %v3353 = vshrl.u32 %v3352, 7
      %v3354 = vsub.s32 %v3351, %v3353
      %v3355 = vrot.slane %v3347, %v3354
      %v3357 = vunpack.c.l.s4 1966171168
      %v3358 = vunpack.c.0.s8 %v3357
      %v3359 = vlaneseq
      %v3360 = vshrl.u32 %v3359, 7
      %v3361 = vsub.s32 %v3358, %v3360
      %v3362 = vrot.slane %v3348, %v3361
      %v3363 = vcombine.low %v3355, %v3362
      %v3364 = vcombine.low %v446, %v460
      %v3365 = vcombine.low %v462, %v947
      %v3366 = vcombine.low %v501, %v509
      %v3367 = vcombine.low %v511, %v494
      %v3369 = vunpack.c.l.s4 1966171168
      %v3370 = vunpack.c.0.s8 %v3369
      %v3371 = vlaneseq
      %v3372 = vshrl.u32 %v3371, 7
      %v3373 = vsub.s32 %v3370, %v3372
      %v3374 = vrot.slane %v3364, %v3373
      %v3376 = vunpack.c.l.s4 1966171168
      %v3377 = vunpack.c.0.s8 %v3376
      %v3378 = vlaneseq
      %v3379 = vshrl.u32 %v3378, 7
      %v3380 = vsub.s32 %v3377, %v3379
      %v3381 = vrot.slane %v3365, %v3380
      %v3383 = vunpack.c.l.s4 1966171168
      %v3384 = vunpack.c.0.s8 %v3383
      %v3385 = vlaneseq
      %v3386 = vshrl.u32 %v3385, 7
      %v3387 = vsub.s32 %v3384, %v3386
      %v3388 = vrot.slane %v3366, %v3387
      %v3390 = vunpack.c.l.s4 1966171168
      %v3391 = vunpack.c.0.s8 %v3390
      %v3392 = vlaneseq
      %v3393 = vshrl.u32 %v3392, 7
      %v3394 = vsub.s32 %v3391, %v3393
      %v3395 = vrot.slane %v3367, %v3394
      %v3396 = vcombine.low %v3374, %v3381
      %v3397 = vcombine.low %v3388, %v3395
      %v3399 = vunpack.c.l.s4 1966171168
      %v3400 = vunpack.c.0.s8 %v3399
      %v3401 = vlaneseq
      %v3402 = vshrl.u32 %v3401, 7
      %v3403 = vsub.s32 %v3400, %v3402
      %v3404 = vrot.slane %v3396, %v3403
      %v3406 = vunpack.c.l.s4 1966171168
      %v3407 = vunpack.c.0.s8 %v3406
      %v3408 = vlaneseq
      %v3409 = vshrl.u32 %v3408, 7
      %v3410 = vsub.s32 %v3407, %v3409
      %v3411 = vrot.slane %v3397, %v3410
      %v3412 = vcombine.low %v3404, %v3411
      %v3413 = vcombine.low %v508, %v510
      %v3414 = vcombine.low %v948, %v549
      %v3415 = vcombine.low %v557, %v559
      %v3416 = vcombine.low %v542, %v556
      %v3418 = vunpack.c.l.s4 1966171168
      %v3419 = vunpack.c.0.s8 %v3418
      %v3420 = vlaneseq
      %v3421 = vshrl.u32 %v3420, 7
      %v3422 = vsub.s32 %v3419, %v3421
      %v3423 = vrot.slane %v3413, %v3422
      %v3425 = vunpack.c.l.s4 1966171168
      %v3426 = vunpack.c.0.s8 %v3425
      %v3427 = vlaneseq
      %v3428 = vshrl.u32 %v3427, 7
      %v3429 = vsub.s32 %v3426, %v3428
      %v3430 = vrot.slane %v3414, %v3429
      %v3432 = vunpack.c.l.s4 1966171168
      %v3433 = vunpack.c.0.s8 %v3432
      %v3434 = vlaneseq
      %v3435 = vshrl.u32 %v3434, 7
      %v3436 = vsub.s32 %v3433, %v3435
      %v3437 = vrot.slane %v3415, %v3436
      %v3439 = vunpack.c.l.s4 1966171168
      %v3440 = vunpack.c.0.s8 %v3439
      %v3441 = vlaneseq
      %v3442 = vshrl.u32 %v3441, 7
      %v3443 = vsub.s32 %v3440, %v3442
      %v3444 = vrot.slane %v3416, %v3443
      %v3445 = vcombine.low %v3423, %v3430
      %v3446 = vcombine.low %v3437, %v3444
      %v3448 = vunpack.c.l.s4 1966171168
      %v3449 = vunpack.c.0.s8 %v3448
      %v3450 = vlaneseq
      %v3451 = vshrl.u32 %v3450, 7
      %v3452 = vsub.s32 %v3449, %v3451
      %v3453 = vrot.slane %v3445, %v3452
      %v3455 = vunpack.c.l.s4 1966171168
      %v3456 = vunpack.c.0.s8 %v3455
      %v3457 = vlaneseq
      %v3458 = vshrl.u32 %v3457, 7
      %v3459 = vsub.s32 %v3456, %v3458
      %v3460 = vrot.slane %v3446, %v3459
      %v3461 = vcombine.low %v3453, %v3460
      %v3462 = vcombine.low %v558, %v949
      %v3463 = vcombine.low %v597, %v605
      %v3464 = vcombine.low %v607, %v590
      %v3465 = vcombine.low %v604, %v606
      %v3467 = vunpack.c.l.s4 1966171168
      %v3468 = vunpack.c.0.s8 %v3467
      %v3469 = vlaneseq
      %v3470 = vshrl.u32 %v3469, 7
      %v3471 = vsub.s32 %v3468, %v3470
      %v3472 = vrot.slane %v3462, %v3471
      %v3474 = vunpack.c.l.s4 1966171168
      %v3475 = vunpack.c.0.s8 %v3474
      %v3476 = vlaneseq
      %v3477 = vshrl.u32 %v3476, 7
      %v3478 = vsub.s32 %v3475, %v3477
      %v3479 = vrot.slane %v3463, %v3478
      %v3481 = vunpack.c.l.s4 1966171168
      %v3482 = vunpack.c.0.s8 %v3481
      %v3483 = vlaneseq
      %v3484 = vshrl.u32 %v3483, 7
      %v3485 = vsub.s32 %v3482, %v3484
      %v3486 = vrot.slane %v3464, %v3485
      %v3488 = vunpack.c.l.s4 1966171168
      %v3489 = vunpack.c.0.s8 %v3488
      %v3490 = vlaneseq
      %v3491 = vshrl.u32 %v3490, 7
      %v3492 = vsub.s32 %v3489, %v3491
      %v3493 = vrot.slane %v3465, %v3492
      %v3494 = vcombine.low %v3472, %v3479
      %v3495 = vcombine.low %v3486, %v3493
      %v3497 = vunpack.c.l.s4 1966171168
      %v3498 = vunpack.c.0.s8 %v3497
      %v3499 = vlaneseq
      %v3500 = vshrl.u32 %v3499, 7
      %v3501 = vsub.s32 %v3498, %v3500
      %v3502 = vrot.slane %v3494, %v3501
      %v3504 = vunpack.c.l.s4 1966171168
      %v3505 = vunpack.c.0.s8 %v3504
      %v3506 = vlaneseq
      %v3507 = vshrl.u32 %v3506, 7
      %v3508 = vsub.s32 %v3505, %v3507
      %v3509 = vrot.slane %v3495, %v3508
      %v3510 = vcombine.low %v3502, %v3509
      %v3511 = vcombine.low %v950, %v645
      %v3512 = vcombine.low %v653, %v655
      %v3513 = vcombine.low %v638, %v652
      %v3514 = vcombine.low %v654, %v951
      %v3516 = vunpack.c.l.s4 1966171168
      %v3517 = vunpack.c.0.s8 %v3516
      %v3518 = vlaneseq
      %v3519 = vshrl.u32 %v3518, 7
      %v3520 = vsub.s32 %v3517, %v3519
      %v3521 = vrot.slane %v3511, %v3520
      %v3523 = vunpack.c.l.s4 1966171168
      %v3524 = vunpack.c.0.s8 %v3523
      %v3525 = vlaneseq
      %v3526 = vshrl.u32 %v3525, 7
      %v3527 = vsub.s32 %v3524, %v3526
      %v3528 = vrot.slane %v3512, %v3527
      %v3530 = vunpack.c.l.s4 1966171168
      %v3531 = vunpack.c.0.s8 %v3530
      %v3532 = vlaneseq
      %v3533 = vshrl.u32 %v3532, 7
      %v3534 = vsub.s32 %v3531, %v3533
      %v3535 = vrot.slane %v3513, %v3534
      %v3537 = vunpack.c.l.s4 1966171168
      %v3538 = vunpack.c.0.s8 %v3537
      %v3539 = vlaneseq
      %v3540 = vshrl.u32 %v3539, 7
      %v3541 = vsub.s32 %v3538, %v3540
      %v3542 = vrot.slane %v3514, %v3541
      %v3543 = vcombine.low %v3521, %v3528
      %v3544 = vcombine.low %v3535, %v3542
      %v3546 = vunpack.c.l.s4 1966171168
      %v3547 = vunpack.c.0.s8 %v3546
      %v3548 = vlaneseq
      %v3549 = vshrl.u32 %v3548, 7
      %v3550 = vsub.s32 %v3547, %v3549
      %v3551 = vrot.slane %v3543, %v3550
      %v3553 = vunpack.c.l.s4 1966171168
      %v3554 = vunpack.c.0.s8 %v3553
      %v3555 = vlaneseq
      %v3556 = vshrl.u32 %v3555, 7
      %v3557 = vsub.s32 %v3554, %v3556
      %v3558 = vrot.slane %v3544, %v3557
      %v3559 = vcombine.low %v3551, %v3558
      %v3560 = vcombine.low %v693, %v701
      %v3561 = vcombine.low %v703, %v686
      %v3562 = vcombine.low %v700, %v702
      %v3563 = vcombine.low %v952, %v741
      %v3565 = vunpack.c.l.s4 1966171168
      %v3566 = vunpack.c.0.s8 %v3565
      %v3567 = vlaneseq
      %v3568 = vshrl.u32 %v3567, 7
      %v3569 = vsub.s32 %v3566, %v3568
      %v3570 = vrot.slane %v3560, %v3569
      %v3572 = vunpack.c.l.s4 1966171168
      %v3573 = vunpack.c.0.s8 %v3572
      %v3574 = vlaneseq
      %v3575 = vshrl.u32 %v3574, 7
      %v3576 = vsub.s32 %v3573, %v3575
      %v3577 = vrot.slane %v3561, %v3576
      %v3579 = vunpack.c.l.s4 1966171168
      %v3580 = vunpack.c.0.s8 %v3579
      %v3581 = vlaneseq
      %v3582 = vshrl.u32 %v3581, 7
      %v3583 = vsub.s32 %v3580, %v3582
      %v3584 = vrot.slane %v3562, %v3583
      %v3586 = vunpack.c.l.s4 1966171168
      %v3587 = vunpack.c.0.s8 %v3586
      %v3588 = vlaneseq
      %v3589 = vshrl.u32 %v3588, 7
      %v3590 = vsub.s32 %v3587, %v3589
      %v3591 = vrot.slane %v3563, %v3590
      %v3592 = vcombine.low %v3570, %v3577
      %v3593 = vcombine.low %v3584, %v3591
      %v3595 = vunpack.c.l.s4 1966171168
      %v3596 = vunpack.c.0.s8 %v3595
      %v3597 = vlaneseq
      %v3598 = vshrl.u32 %v3597, 7
      %v3599 = vsub.s32 %v3596, %v3598
      %v3600 = vrot.slane %v3592, %v3599
      %v3602 = vunpack.c.l.s4 1966171168
      %v3603 = vunpack.c.0.s8 %v3602
      %v3604 = vlaneseq
      %v3605 = vshrl.u32 %v3604, 7
      %v3606 = vsub.s32 %v3603, %v3605
      %v3607 = vrot.slane %v3593, %v3606
      %v3608 = vcombine.low %v3600, %v3607
      %v3609 = vcombine.low %v749, %v751
      %v3610 = vcombine.low %v734, %v748
      %v3611 = vcombine.low %v750, %v953
      %v3612 = vcombine.low %v789, %v797
      %v3614 = vunpack.c.l.s4 1966171168
      %v3615 = vunpack.c.0.s8 %v3614
      %v3616 = vlaneseq
      %v3617 = vshrl.u32 %v3616, 7
      %v3618 = vsub.s32 %v3615, %v3617
      %v3619 = vrot.slane %v3609, %v3618
      %v3621 = vunpack.c.l.s4 1966171168
      %v3622 = vunpack.c.0.s8 %v3621
      %v3623 = vlaneseq
      %v3624 = vshrl.u32 %v3623, 7
      %v3625 = vsub.s32 %v3622, %v3624
      %v3626 = vrot.slane %v3610, %v3625
      %v3628 = vunpack.c.l.s4 1966171168
      %v3629 = vunpack.c.0.s8 %v3628
      %v3630 = vlaneseq
      %v3631 = vshrl.u32 %v3630, 7
      %v3632 = vsub.s32 %v3629, %v3631
      %v3633 = vrot.slane %v3611, %v3632
      %v3635 = vunpack.c.l.s4 1966171168
      %v3636 = vunpack.c.0.s8 %v3635
      %v3637 = vlaneseq
      %v3638 = vshrl.u32 %v3637, 7
      %v3639 = vsub.s32 %v3636, %v3638
      %v3640 = vrot.slane %v3612, %v3639
      %v3641 = vcombine.low %v3619, %v3626
      %v3642 = vcombine.low %v3633, %v3640
      %v3644 = vunpack.c.l.s4 1966171168
      %v3645 = vunpack.c.0.s8 %v3644
      %v3646 = vlaneseq
      %v3647 = vshrl.u32 %v3646, 7
      %v3648 = vsub.s32 %v3645, %v3647
      %v3649 = vrot.slane %v3641, %v3648
      %v3651 = vunpack.c.l.s4 1966171168
      %v3652 = vunpack.c.0.s8 %v3651
      %v3653 = vlaneseq
      %v3654 = vshrl.u32 %v3653, 7
      %v3655 = vsub.s32 %v3652, %v3654
      %v3656 = vrot.slane %v3642, %v3655
      %v3657 = vcombine.low %v3649, %v3656
      %v3658 = vcombine.low %v799, %v782
      %v3659 = vcombine.low %v796, %v798
      %v3660 = vcombine.low %v954, %v837
      %v3661 = vcombine.low %v845, %v847
      %v3663 = vunpack.c.l.s4 1966171168
      %v3664 = vunpack.c.0.s8 %v3663
      %v3665 = vlaneseq
      %v3666 = vshrl.u32 %v3665, 7
      %v3667 = vsub.s32 %v3664, %v3666
      %v3668 = vrot.slane %v3658, %v3667
      %v3670 = vunpack.c.l.s4 1966171168
      %v3671 = vunpack.c.0.s8 %v3670
      %v3672 = vlaneseq
      %v3673 = vshrl.u32 %v3672, 7
      %v3674 = vsub.s32 %v3671, %v3673
      %v3675 = vrot.slane %v3659, %v3674
      %v3677 = vunpack.c.l.s4 1966171168
      %v3678 = vunpack.c.0.s8 %v3677
      %v3679 = vlaneseq
      %v3680 = vshrl.u32 %v3679, 7
      %v3681 = vsub.s32 %v3678, %v3680
      %v3682 = vrot.slane %v3660, %v3681
      %v3684 = vunpack.c.l.s4 1966171168
      %v3685 = vunpack.c.0.s8 %v3684
      %v3686 = vlaneseq
      %v3687 = vshrl.u32 %v3686, 7
      %v3688 = vsub.s32 %v3685, %v3687
      %v3689 = vrot.slane %v3661, %v3688
      %v3690 = vcombine.low %v3668, %v3675
      %v3691 = vcombine.low %v3682, %v3689
      %v3693 = vunpack.c.l.s4 1966171168
      %v3694 = vunpack.c.0.s8 %v3693
      %v3695 = vlaneseq
      %v3696 = vshrl.u32 %v3695, 7
      %v3697 = vsub.s32 %v3694, %v3696
      %v3698 = vrot.slane %v3690, %v3697
      %v3700 = vunpack.c.l.s4 1966171168
      %v3701 = vunpack.c.0.s8 %v3700
      %v3702 = vlaneseq
      %v3703 = vshrl.u32 %v3702, 7
      %v3704 = vsub.s32 %v3701, %v3703
      %v3705 = vrot.slane %v3691, %v3704
      %v3706 = vcombine.low %v3698, %v3705
      %v3707 = vcombine.low %v830, %v844
      %v3708 = vcombine.low %v846, %v955
      %v3709 = vcombine.low %v885, %v893
      %v3710 = vcombine.low %v895, %v878
      %v3712 = vunpack.c.l.s4 1966171168
      %v3713 = vunpack.c.0.s8 %v3712
      %v3714 = vlaneseq
      %v3715 = vshrl.u32 %v3714, 7
      %v3716 = vsub.s32 %v3713, %v3715
      %v3717 = vrot.slane %v3707, %v3716
      %v3719 = vunpack.c.l.s4 1966171168
      %v3720 = vunpack.c.0.s8 %v3719
      %v3721 = vlaneseq
      %v3722 = vshrl.u32 %v3721, 7
      %v3723 = vsub.s32 %v3720, %v3722
      %v3724 = vrot.slane %v3708, %v3723
      %v3726 = vunpack.c.l.s4 1966171168
      %v3727 = vunpack.c.0.s8 %v3726
      %v3728 = vlaneseq
      %v3729 = vshrl.u32 %v3728, 7
      %v3730 = vsub.s32 %v3727, %v3729
      %v3731 = vrot.slane %v3709, %v3730
      %v3733 = vunpack.c.l.s4 1966171168
      %v3734 = vunpack.c.0.s8 %v3733
      %v3735 = vlaneseq
      %v3736 = vshrl.u32 %v3735, 7
      %v3737 = vsub.s32 %v3734, %v3736
      %v3738 = vrot.slane %v3710, %v3737
      %v3739 = vcombine.low %v3717, %v3724
      %v3740 = vcombine.low %v3731, %v3738
      %v3742 = vunpack.c.l.s4 1966171168
      %v3743 = vunpack.c.0.s8 %v3742
      %v3744 = vlaneseq
      %v3745 = vshrl.u32 %v3744, 7
      %v3746 = vsub.s32 %v3743, %v3745
      %v3747 = vrot.slane %v3739, %v3746
      %v3749 = vunpack.c.l.s4 1966171168
      %v3750 = vunpack.c.0.s8 %v3749
      %v3751 = vlaneseq
      %v3752 = vshrl.u32 %v3751, 7
      %v3753 = vsub.s32 %v3750, %v3752
      %v3754 = vrot.slane %v3740, %v3753
      %v3755 = vcombine.low %v3747, %v3754
      %v3756 = vcombine.low %v892, %v894
      %v3757 = vcombine.low %v956, %v933
      %v3758 = vcombine.low %v941, %v943
      %v3759 = vcombine.low %v926, %v940
      %v3761 = vunpack.c.l.s4 1966171168
      %v3762 = vunpack.c.0.s8 %v3761
      %v3763 = vlaneseq
      %v3764 = vshrl.u32 %v3763, 7
      %v3765 = vsub.s32 %v3762, %v3764
      %v3766 = vrot.slane %v3756, %v3765
      %v3768 = vunpack.c.l.s4 1966171168
      %v3769 = vunpack.c.0.s8 %v3768
      %v3770 = vlaneseq
      %v3771 = vshrl.u32 %v3770, 7
      %v3772 = vsub.s32 %v3769, %v3771
      %v3773 = vrot.slane %v3757, %v3772
      %v3775 = vunpack.c.l.s4 1966171168
      %v3776 = vunpack.c.0.s8 %v3775
      %v3777 = vlaneseq
      %v3778 = vshrl.u32 %v3777, 7
      %v3779 = vsub.s32 %v3776, %v3778
      %v3780 = vrot.slane %v3758, %v3779
      %v3782 = vunpack.c.l.s4 1966171168
      %v3783 = vunpack.c.0.s8 %v3782
      %v3784 = vlaneseq
      %v3785 = vshrl.u32 %v3784, 7
      %v3786 = vsub.s32 %v3783, %v3785
      %v3787 = vrot.slane %v3759, %v3786
      %v3788 = vcombine.low %v3766, %v3773
      %v3789 = vcombine.low %v3780, %v3787
      %v3791 = vunpack.c.l.s4 1966171168
      %v3792 = vunpack.c.0.s8 %v3791
      %v3793 = vlaneseq
      %v3794 = vshrl.u32 %v3793, 7
      %v3795 = vsub.s32 %v3792, %v3794
      %v3796 = vrot.slane %v3788, %v3795
      %v3798 = vunpack.c.l.s4 1966171168
      %v3799 = vunpack.c.0.s8 %v3798
      %v3800 = vlaneseq
      %v3801 = vshrl.u32 %v3800, 7
      %v3802 = vsub.s32 %v3799, %v3801
      %v3803 = vrot.slane %v3789, %v3802
      %v3804 = vcombine.low %v3796, %v3803
      %v3805 = vcombine.low %v942, %v957
      %v3807 = vunpack.c.l.s4 1966171168
      %v3808 = vunpack.c.0.s8 %v3807
      %v3809 = vlaneseq
      %v3810 = vshrl.u32 %v3809, 7
      %v3811 = vsub.s32 %v3808, %v3810
      %v3812 = vrot.slane %v3805, %v3811
      %v3814 = vunpack.c.l.s4 1966171168
      %v3815 = vunpack.c.0.s8 %v3814
      %v3816 = vlaneseq
      %v3817 = vshrl.u32 %v3816, 7
      %v3818 = vsub.s32 %v3815, %v3817
      %v3819 = vrot.slane %v3812, %v3818
      %3820 = vrot.lane.b32.xlu0 %v3265, 8
      %v3821 = vpop.permute.xlu0 %3820
      %3822 = vrot.lane.b32.xlu0 %v3314, 8
      %v3823 = vpop.permute.xlu0 %3822
      %3824 = vrot.lane.b32.xlu0 %v3363, 8
      %v3825 = vpop.permute.xlu0 %3824
      %3826 = vrot.lane.b32.xlu0 %v3412, 8
      %v3827 = vpop.permute.xlu0 %3826
      %3828 = vrot.lane.b32.xlu0 %v3461, 8
      %v3829 = vpop.permute.xlu0 %3828
      %3830 = vrot.lane.b32.xlu0 %v3510, 8
      %v3831 = vpop.permute.xlu0 %3830
      %3832 = vrot.lane.b32.xlu0 %v3559, 8
      %v3833 = vpop.permute.xlu0 %3832
      %3834 = vrot.lane.b32.xlu0 %v3608, 8
      %v3835 = vpop.permute.xlu0 %3834
      %3836 = vrot.lane.b32.xlu0 %v3657, 8
      %v3837 = vpop.permute.xlu0 %3836
      %3838 = vrot.lane.b32.xlu0 %v3706, 8
      %v3839 = vpop.permute.xlu0 %3838
      %3840 = vrot.lane.b32.xlu0 %v3755, 8
      %v3841 = vpop.permute.xlu0 %3840
      %3842 = vrot.lane.b32.xlu0 %v3804, 8
      %v3843 = vpop.permute.xlu0 %3842
      %3844 = vrot.lane.b32.xlu0 %v3819, 8
      %v3845 = vpop.permute.xlu0 %3844
      %v3846 = vcombine.low %v343, %v357
      %v3847 = vcombine.low %v366, %v391
      %v3849 = vunpack.c.l.s4 1966171168
      %v3850 = vunpack.c.0.s8 %v3849
      %v3851 = vlaneseq
      %v3852 = vshrl.u32 %v3851, 7
      %v3853 = vsub.s32 %v3850, %v3852
      %v3854 = vrot.slane %v3846, %v3853
      %v3856 = vunpack.c.l.s4 1966171168
      %v3857 = vunpack.c.0.s8 %v3856
      %v3858 = vlaneseq
      %v3859 = vshrl.u32 %v3858, 7
      %v3860 = vsub.s32 %v3857, %v3859
      %v3861 = vrot.slane %v3847, %v3860
      %v3862 = vcombine.low %v3854, %v3276
      %v3863 = vcombine.low %v3283, %v3861
      %v3865 = vunpack.c.l.s4 1966171168
      %v3866 = vunpack.c.0.s8 %v3865
      %v3867 = vlaneseq
      %v3868 = vshrl.u32 %v3867, 7
      %v3869 = vsub.s32 %v3866, %v3868
      %v3870 = vrot.slane %v3862, %v3869
      %v3872 = vunpack.c.l.s4 1966171168
      %v3873 = vunpack.c.0.s8 %v3872
      %v3874 = vlaneseq
      %v3875 = vshrl.u32 %v3874, 7
      %v3876 = vsub.s32 %v3873, %v3875
      %v3877 = vrot.slane %v3863, %v3876
      %v3878 = vcombine.low %v3870, %v3877
      %v3879 = vcombine.low %v439, %v453
      %v3881 = vunpack.c.l.s4 1966171168
      %v3882 = vunpack.c.0.s8 %v3881
      %v3883 = vlaneseq
      %v3884 = vshrl.u32 %v3883, 7
      %v3885 = vsub.s32 %v3882, %v3884
      %v3886 = vrot.slane %v3879, %v3885
      %v3887 = vcombine.low %v3297, %v3325
      %v3888 = vcombine.low %v3332, %v3886
      %v3890 = vunpack.c.l.s4 1966171168
      %v3891 = vunpack.c.0.s8 %v3890
      %v3892 = vlaneseq
      %v3893 = vshrl.u32 %v3892, 7
      %v3894 = vsub.s32 %v3891, %v3893
      %v3895 = vrot.slane %v3887, %v3894
      %v3897 = vunpack.c.l.s4 1966171168
      %v3898 = vunpack.c.0.s8 %v3897
      %v3899 = vlaneseq
      %v3900 = vshrl.u32 %v3899, 7
      %v3901 = vsub.s32 %v3898, %v3900
      %v3902 = vrot.slane %v3888, %v3901
      %v3903 = vcombine.low %v3895, %v3902
      %v3904 = vcombine.low %v462, %v487
      %v3906 = vunpack.c.l.s4 1966171168
      %v3907 = vunpack.c.0.s8 %v3906
      %v3908 = vlaneseq
      %v3909 = vshrl.u32 %v3908, 7
      %v3910 = vsub.s32 %v3907, %v3909
      %v3911 = vrot.slane %v3904, %v3910
      %v3912 = vcombine.low %v3346, %v3374
      %v3913 = vcombine.low %v3911, %v3388
      %v3915 = vunpack.c.l.s4 1966171168
      %v3916 = vunpack.c.0.s8 %v3915
      %v3917 = vlaneseq
      %v3918 = vshrl.u32 %v3917, 7
      %v3919 = vsub.s32 %v3916, %v3918
      %v3920 = vrot.slane %v3912, %v3919
      %v3922 = vunpack.c.l.s4 1966171168
      %v3923 = vunpack.c.0.s8 %v3922
      %v3924 = vlaneseq
      %v3925 = vshrl.u32 %v3924, 7
      %v3926 = vsub.s32 %v3923, %v3925
      %v3927 = vrot.slane %v3913, %v3926
      %v3928 = vcombine.low %v3920, %v3927
      %v3929 = vcombine.low %v535, %v549
      %v3931 = vunpack.c.l.s4 1966171168
      %v3932 = vunpack.c.0.s8 %v3931
      %v3933 = vlaneseq
      %v3934 = vshrl.u32 %v3933, 7
      %v3935 = vsub.s32 %v3932, %v3934
      %v3936 = vrot.slane %v3929, %v3935
      %v3937 = vcombine.low %v3395, %v3423
      %v3938 = vcombine.low %v3936, %v3437
      %v3940 = vunpack.c.l.s4 1966171168
      %v3941 = vunpack.c.0.s8 %v3940
      %v3942 = vlaneseq
      %v3943 = vshrl.u32 %v3942, 7
      %v3944 = vsub.s32 %v3941, %v3943
      %v3945 = vrot.slane %v3937, %v3944
      %v3947 = vunpack.c.l.s4 1966171168
      %v3948 = vunpack.c.0.s8 %v3947
      %v3949 = vlaneseq
      %v3950 = vshrl.u32 %v3949, 7
      %v3951 = vsub.s32 %v3948, %v3950
      %v3952 = vrot.slane %v3938, %v3951
      %v3953 = vcombine.low %v3945, %v3952
      %v3954 = vcombine.low %v558, %v583
      %v3956 = vunpack.c.l.s4 1966171168
      %v3957 = vunpack.c.0.s8 %v3956
      %v3958 = vlaneseq
      %v3959 = vshrl.u32 %v3958, 7
      %v3960 = vsub.s32 %v3957, %v3959
      %v3961 = vrot.slane %v3954, %v3960
      %v3962 = vcombine.low %v3444, %v3961
      %v3963 = vcombine.low %v3479, %v3486
      %v3965 = vunpack.c.l.s4 1966171168
      %v3966 = vunpack.c.0.s8 %v3965
      %v3967 = vlaneseq
      %v3968 = vshrl.u32 %v3967, 7
      %v3969 = vsub.s32 %v3966, %v3968
      %v3970 = vrot.slane %v3962, %v3969
      %v3972 = vunpack.c.l.s4 1966171168
      %v3973 = vunpack.c.0.s8 %v3972
      %v3974 = vlaneseq
      %v3975 = vshrl.u32 %v3974, 7
      %v3976 = vsub.s32 %v3973, %v3975
      %v3977 = vrot.slane %v3963, %v3976
      %v3978 = vcombine.low %v3970, %v3977
      %v3979 = vcombine.low %v631, %v645
      %v3981 = vunpack.c.l.s4 1966171168
      %v3982 = vunpack.c.0.s8 %v3981
      %v3983 = vlaneseq
      %v3984 = vshrl.u32 %v3983, 7
      %v3985 = vsub.s32 %v3982, %v3984
      %v3986 = vrot.slane %v3979, %v3985
      %v3987 = vcombine.low %v3493, %v3986
      %v3988 = vcombine.low %v3528, %v3535
      %v3990 = vunpack.c.l.s4 1966171168
      %v3991 = vunpack.c.0.s8 %v3990
      %v3992 = vlaneseq
      %v3993 = vshrl.u32 %v3992, 7
      %v3994 = vsub.s32 %v3991, %v3993
      %v3995 = vrot.slane %v3987, %v3994
      %v3997 = vunpack.c.l.s4 1966171168
      %v3998 = vunpack.c.0.s8 %v3997
      %v3999 = vlaneseq
      %v4000 = vshrl.u32 %v3999, 7
      %v4001 = vsub.s32 %v3998, %v4000
      %v4002 = vrot.slane %v3988, %v4001
      %v4003 = vcombine.low %v3995, %v4002
      %v4004 = vcombine.low %v654, %v679
      %v4006 = vunpack.c.l.s4 1966171168
      %v4007 = vunpack.c.0.s8 %v4006
      %v4008 = vlaneseq
      %v4009 = vshrl.u32 %v4008, 7
      %v4010 = vsub.s32 %v4007, %v4009
      %v4011 = vrot.slane %v4004, %v4010
      %v4012 = vcombine.low %v4011, %v3570
      %v4013 = vcombine.low %v3577, %v3584
      %v4015 = vunpack.c.l.s4 1966171168
      %v4016 = vunpack.c.0.s8 %v4015
      %v4017 = vlaneseq
      %v4018 = vshrl.u32 %v4017, 7
      %v4019 = vsub.s32 %v4016, %v4018
      %v4020 = vrot.slane %v4012, %v4019
      %v4022 = vunpack.c.l.s4 1966171168
      %v4023 = vunpack.c.0.s8 %v4022
      %v4024 = vlaneseq
      %v4025 = vshrl.u32 %v4024, 7
      %v4026 = vsub.s32 %v4023, %v4025
      %v4027 = vrot.slane %v4013, %v4026
      %v4028 = vcombine.low %v4020, %v4027
      %v4029 = vcombine.low %v727, %v741
      %v4030 = vcombine.low %v750, %v775
      %v4032 = vunpack.c.l.s4 1966171168
      %v4033 = vunpack.c.0.s8 %v4032
      %v4034 = vlaneseq
      %v4035 = vshrl.u32 %v4034, 7
      %v4036 = vsub.s32 %v4033, %v4035
      %v4037 = vrot.slane %v4029, %v4036
      %v4039 = vunpack.c.l.s4 1966171168
      %v4040 = vunpack.c.0.s8 %v4039
      %v4041 = vlaneseq
      %v4042 = vshrl.u32 %v4041, 7
      %v4043 = vsub.s32 %v4040, %v4042
      %v4044 = vrot.slane %v4030, %v4043
      %v4045 = vcombine.low %v4037, %v3619
      %v4046 = vcombine.low %v3626, %v4044
      %v4048 = vunpack.c.l.s4 1966171168
      %v4049 = vunpack.c.0.s8 %v4048
      %v4050 = vlaneseq
      %v4051 = vshrl.u32 %v4050, 7
      %v4052 = vsub.s32 %v4049, %v4051
      %v4053 = vrot.slane %v4045, %v4052
      %v4055 = vunpack.c.l.s4 1966171168
      %v4056 = vunpack.c.0.s8 %v4055
      %v4057 = vlaneseq
      %v4058 = vshrl.u32 %v4057, 7
      %v4059 = vsub.s32 %v4056, %v4058
      %v4060 = vrot.slane %v4046, %v4059
      %v4061 = vcombine.low %v4053, %v4060
      %v4062 = vcombine.low %v823, %v837
      %v4064 = vunpack.c.l.s4 1966171168
      %v4065 = vunpack.c.0.s8 %v4064
      %v4066 = vlaneseq
      %v4067 = vshrl.u32 %v4066, 7
      %v4068 = vsub.s32 %v4065, %v4067
      %v4069 = vrot.slane %v4062, %v4068
      %v4070 = vcombine.low %v3640, %v3668
      %v4071 = vcombine.low %v3675, %v4069
      %v4073 = vunpack.c.l.s4 1966171168
      %v4074 = vunpack.c.0.s8 %v4073
      %v4075 = vlaneseq
      %v4076 = vshrl.u32 %v4075, 7
      %v4077 = vsub.s32 %v4074, %v4076
      %v4078 = vrot.slane %v4070, %v4077
      %v4080 = vunpack.c.l.s4 1966171168
      %v4081 = vunpack.c.0.s8 %v4080
      %v4082 = vlaneseq
      %v4083 = vshrl.u32 %v4082, 7
      %v4084 = vsub.s32 %v4081, %v4083
      %v4085 = vrot.slane %v4071, %v4084
      %v4086 = vcombine.low %v4078, %v4085
      %v4087 = vcombine.low %v846, %v871
      %v4089 = vunpack.c.l.s4 1966171168
      %v4090 = vunpack.c.0.s8 %v4089
      %v4091 = vlaneseq
      %v4092 = vshrl.u32 %v4091, 7
      %v4093 = vsub.s32 %v4090, %v4092
      %v4094 = vrot.slane %v4087, %v4093
      %v4095 = vcombine.low %v3689, %v3717
      %v4096 = vcombine.low %v4094, %v3731
      %v4098 = vunpack.c.l.s4 1966171168
      %v4099 = vunpack.c.0.s8 %v4098
      %v4100 = vlaneseq
      %v4101 = vshrl.u32 %v4100, 7
      %v4102 = vsub.s32 %v4099, %v4101
      %v4103 = vrot.slane %v4095, %v4102
      %v4105 = vunpack.c.l.s4 1966171168
      %v4106 = vunpack.c.0.s8 %v4105
      %v4107 = vlaneseq
      %v4108 = vshrl.u32 %v4107, 7
      %v4109 = vsub.s32 %v4106, %v4108
      %v4110 = vrot.slane %v4096, %v4109
      %v4111 = vcombine.low %v4103, %v4110
      %v4112 = vcombine.low %v919, %v933
      %v4114 = vunpack.c.l.s4 1966171168
      %v4115 = vunpack.c.0.s8 %v4114
      %v4116 = vlaneseq
      %v4117 = vshrl.u32 %v4116, 7
      %v4118 = vsub.s32 %v4115, %v4117
      %v4119 = vrot.slane %v4112, %v4118
      %v4120 = vcombine.low %v3738, %v3766
      %v4121 = vcombine.low %v4119, %v3780
      %v4123 = vunpack.c.l.s4 1966171168
      %v4124 = vunpack.c.0.s8 %v4123
      %v4125 = vlaneseq
      %v4126 = vshrl.u32 %v4125, 7
      %v4127 = vsub.s32 %v4124, %v4126
      %v4128 = vrot.slane %v4120, %v4127
      %v4130 = vunpack.c.l.s4 1966171168
      %v4131 = vunpack.c.0.s8 %v4130
      %v4132 = vlaneseq
      %v4133 = vshrl.u32 %v4132, 7
      %v4134 = vsub.s32 %v4131, %v4133
      %v4135 = vrot.slane %v4121, %v4134
      %v4136 = vcombine.low %v4128, %v4135
      %v4137 = vcombine.low %v942, %v1795
      %v4138 = vcombine.low %v1809, %v1817
      %v4139 = vcombine.low %v1819, %v1802
      %v4141 = vunpack.c.l.s4 1966171168
      %v4142 = vunpack.c.0.s8 %v4141
      %v4143 = vlaneseq
      %v4144 = vshrl.u32 %v4143, 7
      %v4145 = vsub.s32 %v4142, %v4144
      %v4146 = vrot.slane %v4137, %v4145
      %v4148 = vunpack.c.l.s4 1966171168
      %v4149 = vunpack.c.0.s8 %v4148
      %v4150 = vlaneseq
      %v4151 = vshrl.u32 %v4150, 7
      %v4152 = vsub.s32 %v4149, %v4151
      %v4153 = vrot.slane %v4138, %v4152
      %v4155 = vunpack.c.l.s4 1966171168
      %v4156 = vunpack.c.0.s8 %v4155
      %v4157 = vlaneseq
      %v4158 = vshrl.u32 %v4157, 7
      %v4159 = vsub.s32 %v4156, %v4158
      %v4160 = vrot.slane %v4139, %v4159
      %v4161 = vcombine.low %v3787, %v4146
      %v4162 = vcombine.low %v4153, %v4160
      %v4164 = vunpack.c.l.s4 1966171168
      %v4165 = vunpack.c.0.s8 %v4164
      %v4166 = vlaneseq
      %v4167 = vshrl.u32 %v4166, 7
      %v4168 = vsub.s32 %v4165, %v4167
      %v4169 = vrot.slane %v4161, %v4168
      %v4171 = vunpack.c.l.s4 1966171168
      %v4172 = vunpack.c.0.s8 %v4171
      %v4173 = vlaneseq
      %v4174 = vshrl.u32 %v4173, 7
      %v4175 = vsub.s32 %v4172, %v4174
      %v4176 = vrot.slane %v4162, %v4175
      %v4177 = vcombine.low %v4169, %v4176
      %v4178 = vcombine.low %v1816, %v1818
      %v4180 = vunpack.c.l.s4 1966171168
      %v4181 = vunpack.c.0.s8 %v4180
      %v4182 = vlaneseq
      %v4183 = vshrl.u32 %v4182, 7
      %v4184 = vsub.s32 %v4181, %v4183
      %v4185 = vrot.slane %v4178, %v4184
      %v4187 = vunpack.c.l.s4 1966171168
      %v4188 = vunpack.c.0.s8 %v4187
      %v4189 = vlaneseq
      %v4190 = vshrl.u32 %v4189, 7
      %v4191 = vsub.s32 %v4188, %v4190
      %v4192 = vrot.slane %v4185, %v4191
      %4193 = vrot.lane.b32.xlu0 %v3878, 12
      %v4194 = vpop.permute.xlu0 %4193
      %4195 = vrot.lane.b32.xlu0 %v3903, 12
      %v4196 = vpop.permute.xlu0 %4195
      %4197 = vrot.lane.b32.xlu0 %v3928, 12
      %v4198 = vpop.permute.xlu0 %4197
      %4199 = vrot.lane.b32.xlu0 %v3953, 12
      %v4200 = vpop.permute.xlu0 %4199
      %4201 = vrot.lane.b32.xlu0 %v3978, 12
      %v4202 = vpop.permute.xlu0 %4201
      %4203 = vrot.lane.b32.xlu0 %v4003, 12
      %v4204 = vpop.permute.xlu0 %4203
      %4205 = vrot.lane.b32.xlu0 %v4028, 12
      %v4206 = vpop.permute.xlu0 %4205
      %4207 = vrot.lane.b32.xlu0 %v4061, 12
      %v4208 = vpop.permute.xlu0 %4207
      %4209 = vrot.lane.b32.xlu0 %v4086, 12
      %v4210 = vpop.permute.xlu0 %4209
      %4211 = vrot.lane.b32.xlu0 %v4111, 12
      %v4212 = vpop.permute.xlu0 %4211
      %4213 = vrot.lane.b32.xlu0 %v4136, 12
      %v4214 = vpop.permute.xlu0 %4213
      %4215 = vrot.lane.b32.xlu0 %v4177, 12
      %v4216 = vpop.permute.xlu0 %4215
      %4217 = vrot.lane.b32.xlu0 %v4192, 12
      %v4218 = vpop.permute.xlu0 %4217
      %v4219 = vcombine.low %v1038, %v1046
      %v4220 = vcombine.low %v1054, %v1062
      %v4221 = vcombine.low %v1070, %v1078
      %v4222 = vcombine.low %v1086, %v1095
      %v4224 = vunpack.c.l.s4 1966171168
      %v4225 = vunpack.c.0.s8 %v4224
      %v4226 = vlaneseq
      %v4227 = vshrl.u32 %v4226, 7
      %v4228 = vsub.s32 %v4225, %v4227
      %v4229 = vrot.slane %v4219, %v4228
      %v4231 = vunpack.c.l.s4 1966171168
      %v4232 = vunpack.c.0.s8 %v4231
      %v4233 = vlaneseq
      %v4234 = vshrl.u32 %v4233, 7
      %v4235 = vsub.s32 %v4232, %v4234
      %v4236 = vrot.slane %v4220, %v4235
      %v4238 = vunpack.c.l.s4 1966171168
      %v4239 = vunpack.c.0.s8 %v4238
      %v4240 = vlaneseq
      %v4241 = vshrl.u32 %v4240, 7
      %v4242 = vsub.s32 %v4239, %v4241
      %v4243 = vrot.slane %v4221, %v4242
      %v4245 = vunpack.c.l.s4 1966171168
      %v4246 = vunpack.c.0.s8 %v4245
      %v4247 = vlaneseq
      %v4248 = vshrl.u32 %v4247, 7
      %v4249 = vsub.s32 %v4246, %v4248
      %v4250 = vrot.slane %v4222, %v4249
      %v4251 = vcombine.low %v4229, %v4236
      %v4252 = vcombine.low %v4243, %v4250
      %v4254 = vunpack.c.l.s4 1966171168
      %v4255 = vunpack.c.0.s8 %v4254
      %v4256 = vlaneseq
      %v4257 = vshrl.u32 %v4256, 7
      %v4258 = vsub.s32 %v4255, %v4257
      %v4259 = vrot.slane %v4251, %v4258
      %v4261 = vunpack.c.l.s4 1966171168
      %v4262 = vunpack.c.0.s8 %v4261
      %v4263 = vlaneseq
      %v4264 = vshrl.u32 %v4263, 7
      %v4265 = vsub.s32 %v4262, %v4264
      %v4266 = vrot.slane %v4252, %v4265
      %v4267 = vcombine.low %v4259, %v4266
      %v4268 = vcombine.low %v1103, %v1111
      %v4269 = vcombine.low %v1119, %v1127
      %v4270 = vcombine.low %v1135, %v1143
      %v4271 = vcombine.low %v1152, %v1160
      %v4273 = vunpack.c.l.s4 1966171168
      %v4274 = vunpack.c.0.s8 %v4273
      %v4275 = vlaneseq
      %v4276 = vshrl.u32 %v4275, 7
      %v4277 = vsub.s32 %v4274, %v4276
      %v4278 = vrot.slane %v4268, %v4277
      %v4280 = vunpack.c.l.s4 1966171168
      %v4281 = vunpack.c.0.s8 %v4280
      %v4282 = vlaneseq
      %v4283 = vshrl.u32 %v4282, 7
      %v4284 = vsub.s32 %v4281, %v4283
      %v4285 = vrot.slane %v4269, %v4284
      %v4287 = vunpack.c.l.s4 1966171168
      %v4288 = vunpack.c.0.s8 %v4287
      %v4289 = vlaneseq
      %v4290 = vshrl.u32 %v4289, 7
      %v4291 = vsub.s32 %v4288, %v4290
      %v4292 = vrot.slane %v4270, %v4291
      %v4294 = vunpack.c.l.s4 1966171168
      %v4295 = vunpack.c.0.s8 %v4294
      %v4296 = vlaneseq
      %v4297 = vshrl.u32 %v4296, 7
      %v4298 = vsub.s32 %v4295, %v4297
      %v4299 = vrot.slane %v4271, %v4298
      %v4300 = vcombine.low %v4278, %v4285
      %v4301 = vcombine.low %v4292, %v4299
      %v4303 = vunpack.c.l.s4 1966171168
      %v4304 = vunpack.c.0.s8 %v4303
      %v4305 = vlaneseq
      %v4306 = vshrl.u32 %v4305, 7
      %v4307 = vsub.s32 %v4304, %v4306
      %v4308 = vrot.slane %v4300, %v4307
      %v4310 = vunpack.c.l.s4 1966171168
      %v4311 = vunpack.c.0.s8 %v4310
      %v4312 = vlaneseq
      %v4313 = vshrl.u32 %v4312, 7
      %v4314 = vsub.s32 %v4311, %v4313
      %v4315 = vrot.slane %v4301, %v4314
      %v4316 = vcombine.low %v4308, %v4315
      %v4317 = vcombine.low %v1168, %v1176
      %v4318 = vcombine.low %v1184, %v1192
      %v4319 = vcombine.low %v1200, %v1209
      %v4320 = vcombine.low %v1217, %v1225
      %v4322 = vunpack.c.l.s4 1966171168
      %v4323 = vunpack.c.0.s8 %v4322
      %v4324 = vlaneseq
      %v4325 = vshrl.u32 %v4324, 7
      %v4326 = vsub.s32 %v4323, %v4325
      %v4327 = vrot.slane %v4317, %v4326
      %v4329 = vunpack.c.l.s4 1966171168
      %v4330 = vunpack.c.0.s8 %v4329
      %v4331 = vlaneseq
      %v4332 = vshrl.u32 %v4331, 7
      %v4333 = vsub.s32 %v4330, %v4332
      %v4334 = vrot.slane %v4318, %v4333
      %v4336 = vunpack.c.l.s4 1966171168
      %v4337 = vunpack.c.0.s8 %v4336
      %v4338 = vlaneseq
      %v4339 = vshrl.u32 %v4338, 7
      %v4340 = vsub.s32 %v4337, %v4339
      %v4341 = vrot.slane %v4319, %v4340
      %v4343 = vunpack.c.l.s4 1966171168
      %v4344 = vunpack.c.0.s8 %v4343
      %v4345 = vlaneseq
      %v4346 = vshrl.u32 %v4345, 7
      %v4347 = vsub.s32 %v4344, %v4346
      %v4348 = vrot.slane %v4320, %v4347
      %v4349 = vcombine.low %v4327, %v4334
      %v4350 = vcombine.low %v4341, %v4348
      %v4352 = vunpack.c.l.s4 1966171168
      %v4353 = vunpack.c.0.s8 %v4352
      %v4354 = vlaneseq
      %v4355 = vshrl.u32 %v4354, 7
      %v4356 = vsub.s32 %v4353, %v4355
      %v4357 = vrot.slane %v4349, %v4356
      %v4359 = vunpack.c.l.s4 1966171168
      %v4360 = vunpack.c.0.s8 %v4359
      %v4361 = vlaneseq
      %v4362 = vshrl.u32 %v4361, 7
      %v4363 = vsub.s32 %v4360, %v4362
      %v4364 = vrot.slane %v4350, %v4363
      %v4365 = vcombine.low %v4357, %v4364
      %v4366 = vcombine.low %v1233, %v1241
      %v4367 = vcombine.low %v1249, %v1257
      %v4368 = vcombine.low %v1266, %v1274
      %v4369 = vcombine.low %v1282, %v1290
      %v4371 = vunpack.c.l.s4 1966171168
      %v4372 = vunpack.c.0.s8 %v4371
      %v4373 = vlaneseq
      %v4374 = vshrl.u32 %v4373, 7
      %v4375 = vsub.s32 %v4372, %v4374
      %v4376 = vrot.slane %v4366, %v4375
      %v4378 = vunpack.c.l.s4 1966171168
      %v4379 = vunpack.c.0.s8 %v4378
      %v4380 = vlaneseq
      %v4381 = vshrl.u32 %v4380, 7
      %v4382 = vsub.s32 %v4379, %v4381
      %v4383 = vrot.slane %v4367, %v4382
      %v4385 = vunpack.c.l.s4 1966171168
      %v4386 = vunpack.c.0.s8 %v4385
      %v4387 = vlaneseq
      %v4388 = vshrl.u32 %v4387, 7
      %v4389 = vsub.s32 %v4386, %v4388
      %v4390 = vrot.slane %v4368, %v4389
      %v4392 = vunpack.c.l.s4 1966171168
      %v4393 = vunpack.c.0.s8 %v4392
      %v4394 = vlaneseq
      %v4395 = vshrl.u32 %v4394, 7
      %v4396 = vsub.s32 %v4393, %v4395
      %v4397 = vrot.slane %v4369, %v4396
      %v4398 = vcombine.low %v4376, %v4383
      %v4399 = vcombine.low %v4390, %v4397
      %v4401 = vunpack.c.l.s4 1966171168
      %v4402 = vunpack.c.0.s8 %v4401
      %v4403 = vlaneseq
      %v4404 = vshrl.u32 %v4403, 7
      %v4405 = vsub.s32 %v4402, %v4404
      %v4406 = vrot.slane %v4398, %v4405
      %v4408 = vunpack.c.l.s4 1966171168
      %v4409 = vunpack.c.0.s8 %v4408
      %v4410 = vlaneseq
      %v4411 = vshrl.u32 %v4410, 7
      %v4412 = vsub.s32 %v4409, %v4411
      %v4413 = vrot.slane %v4399, %v4412
      %v4414 = vcombine.low %v4406, %v4413
      %v4415 = vcombine.low %v1298, %v1306
      %v4416 = vcombine.low %v1314, %v1323
      %v4417 = vcombine.low %v1331, %v1339
      %v4418 = vcombine.low %v1347, %v1355
      %v4420 = vunpack.c.l.s4 1966171168
      %v4421 = vunpack.c.0.s8 %v4420
      %v4422 = vlaneseq
      %v4423 = vshrl.u32 %v4422, 7
      %v4424 = vsub.s32 %v4421, %v4423
      %v4425 = vrot.slane %v4415, %v4424
      %v4427 = vunpack.c.l.s4 1966171168
      %v4428 = vunpack.c.0.s8 %v4427
      %v4429 = vlaneseq
      %v4430 = vshrl.u32 %v4429, 7
      %v4431 = vsub.s32 %v4428, %v4430
      %v4432 = vrot.slane %v4416, %v4431
      %v4434 = vunpack.c.l.s4 1966171168
      %v4435 = vunpack.c.0.s8 %v4434
      %v4436 = vlaneseq
      %v4437 = vshrl.u32 %v4436, 7
      %v4438 = vsub.s32 %v4435, %v4437
      %v4439 = vrot.slane %v4417, %v4438
      %v4441 = vunpack.c.l.s4 1966171168
      %v4442 = vunpack.c.0.s8 %v4441
      %v4443 = vlaneseq
      %v4444 = vshrl.u32 %v4443, 7
      %v4445 = vsub.s32 %v4442, %v4444
      %v4446 = vrot.slane %v4418, %v4445
      %v4447 = vcombine.low %v4425, %v4432
      %v4448 = vcombine.low %v4439, %v4446
      %v4450 = vunpack.c.l.s4 1966171168
      %v4451 = vunpack.c.0.s8 %v4450
      %v4452 = vlaneseq
      %v4453 = vshrl.u32 %v4452, 7
      %v4454 = vsub.s32 %v4451, %v4453
      %v4455 = vrot.slane %v4447, %v4454
      %v4457 = vunpack.c.l.s4 1966171168
      %v4458 = vunpack.c.0.s8 %v4457
      %v4459 = vlaneseq
      %v4460 = vshrl.u32 %v4459, 7
      %v4461 = vsub.s32 %v4458, %v4460
      %v4462 = vrot.slane %v4448, %v4461
      %v4463 = vcombine.low %v4455, %v4462
      %v4464 = vcombine.low %v1363, %v1371
      %v4465 = vcombine.low %v1380, %v1388
      %v4466 = vcombine.low %v1396, %v1404
      %v4467 = vcombine.low %v1412, %v1420
      %v4469 = vunpack.c.l.s4 1966171168
      %v4470 = vunpack.c.0.s8 %v4469
      %v4471 = vlaneseq
      %v4472 = vshrl.u32 %v4471, 7
      %v4473 = vsub.s32 %v4470, %v4472
      %v4474 = vrot.slane %v4464, %v4473
      %v4476 = vunpack.c.l.s4 1966171168
      %v4477 = vunpack.c.0.s8 %v4476
      %v4478 = vlaneseq
      %v4479 = vshrl.u32 %v4478, 7
      %v4480 = vsub.s32 %v4477, %v4479
      %v4481 = vrot.slane %v4465, %v4480
      %v4483 = vunpack.c.l.s4 1966171168
      %v4484 = vunpack.c.0.s8 %v4483
      %v4485 = vlaneseq
      %v4486 = vshrl.u32 %v4485, 7
      %v4487 = vsub.s32 %v4484, %v4486
      %v4488 = vrot.slane %v4466, %v4487
      %v4490 = vunpack.c.l.s4 1966171168
      %v4491 = vunpack.c.0.s8 %v4490
      %v4492 = vlaneseq
      %v4493 = vshrl.u32 %v4492, 7
      %v4494 = vsub.s32 %v4491, %v4493
      %v4495 = vrot.slane %v4467, %v4494
      %v4496 = vcombine.low %v4474, %v4481
      %v4497 = vcombine.low %v4488, %v4495
      %v4499 = vunpack.c.l.s4 1966171168
      %v4500 = vunpack.c.0.s8 %v4499
      %v4501 = vlaneseq
      %v4502 = vshrl.u32 %v4501, 7
      %v4503 = vsub.s32 %v4500, %v4502
      %v4504 = vrot.slane %v4496, %v4503
      %v4506 = vunpack.c.l.s4 1966171168
      %v4507 = vunpack.c.0.s8 %v4506
      %v4508 = vlaneseq
      %v4509 = vshrl.u32 %v4508, 7
      %v4510 = vsub.s32 %v4507, %v4509
      %v4511 = vrot.slane %v4497, %v4510
      %v4512 = vcombine.low %v4504, %v4511
      %v4513 = vcombine.low %v1428, %v1437
      %v4514 = vcombine.low %v1445, %v1453
      %v4515 = vcombine.low %v1461, %v1469
      %v4516 = vcombine.low %v1477, %v1485
      %v4518 = vunpack.c.l.s4 1966171168
      %v4519 = vunpack.c.0.s8 %v4518
      %v4520 = vlaneseq
      %v4521 = vshrl.u32 %v4520, 7
      %v4522 = vsub.s32 %v4519, %v4521
      %v4523 = vrot.slane %v4513, %v4522
      %v4525 = vunpack.c.l.s4 1966171168
      %v4526 = vunpack.c.0.s8 %v4525
      %v4527 = vlaneseq
      %v4528 = vshrl.u32 %v4527, 7
      %v4529 = vsub.s32 %v4526, %v4528
      %v4530 = vrot.slane %v4514, %v4529
      %v4532 = vunpack.c.l.s4 1966171168
      %v4533 = vunpack.c.0.s8 %v4532
      %v4534 = vlaneseq
      %v4535 = vshrl.u32 %v4534, 7
      %v4536 = vsub.s32 %v4533, %v4535
      %v4537 = vrot.slane %v4515, %v4536
      %v4539 = vunpack.c.l.s4 1966171168
      %v4540 = vunpack.c.0.s8 %v4539
      %v4541 = vlaneseq
      %v4542 = vshrl.u32 %v4541, 7
      %v4543 = vsub.s32 %v4540, %v4542
      %v4544 = vrot.slane %v4516, %v4543
      %v4545 = vcombine.low %v4523, %v4530
      %v4546 = vcombine.low %v4537, %v4544
      %v4548 = vunpack.c.l.s4 1966171168
      %v4549 = vunpack.c.0.s8 %v4548
      %v4550 = vlaneseq
      %v4551 = vshrl.u32 %v4550, 7
      %v4552 = vsub.s32 %v4549, %v4551
      %v4553 = vrot.slane %v4545, %v4552
      %v4555 = vunpack.c.l.s4 1966171168
      %v4556 = vunpack.c.0.s8 %v4555
      %v4557 = vlaneseq
      %v4558 = vshrl.u32 %v4557, 7
      %v4559 = vsub.s32 %v4556, %v4558
      %v4560 = vrot.slane %v4546, %v4559
      %v4561 = vcombine.low %v4553, %v4560
      %v4562 = vcombine.low %v1494, %v1502
      %v4563 = vcombine.low %v1510, %v1518
      %v4564 = vcombine.low %v1526, %v1534
      %v4565 = vcombine.low %v1542, %v1551
      %v4567 = vunpack.c.l.s4 1966171168
      %v4568 = vunpack.c.0.s8 %v4567
      %v4569 = vlaneseq
      %v4570 = vshrl.u32 %v4569, 7
      %v4571 = vsub.s32 %v4568, %v4570
      %v4572 = vrot.slane %v4562, %v4571
      %v4574 = vunpack.c.l.s4 1966171168
      %v4575 = vunpack.c.0.s8 %v4574
      %v4576 = vlaneseq
      %v4577 = vshrl.u32 %v4576, 7
      %v4578 = vsub.s32 %v4575, %v4577
      %v4579 = vrot.slane %v4563, %v4578
      %v4581 = vunpack.c.l.s4 1966171168
      %v4582 = vunpack.c.0.s8 %v4581
      %v4583 = vlaneseq
      %v4584 = vshrl.u32 %v4583, 7
      %v4585 = vsub.s32 %v4582, %v4584
      %v4586 = vrot.slane %v4564, %v4585
      %v4588 = vunpack.c.l.s4 1966171168
      %v4589 = vunpack.c.0.s8 %v4588
      %v4590 = vlaneseq
      %v4591 = vshrl.u32 %v4590, 7
      %v4592 = vsub.s32 %v4589, %v4591
      %v4593 = vrot.slane %v4565, %v4592
      %v4594 = vcombine.low %v4572, %v4579
      %v4595 = vcombine.low %v4586, %v4593
      %v4597 = vunpack.c.l.s4 1966171168
      %v4598 = vunpack.c.0.s8 %v4597
      %v4599 = vlaneseq
      %v4600 = vshrl.u32 %v4599, 7
      %v4601 = vsub.s32 %v4598, %v4600
      %v4602 = vrot.slane %v4594, %v4601
      %v4604 = vunpack.c.l.s4 1966171168
      %v4605 = vunpack.c.0.s8 %v4604
      %v4606 = vlaneseq
      %v4607 = vshrl.u32 %v4606, 7
      %v4608 = vsub.s32 %v4605, %v4607
      %v4609 = vrot.slane %v4595, %v4608
      %v4610 = vcombine.low %v4602, %v4609
      %v4611 = vcombine.low %v1559, %v1567
      %v4612 = vcombine.low %v1575, %v1583
      %v4613 = vcombine.low %v1591, %v1599
      %v4614 = vcombine.low %v1608, %v1616
      %v4616 = vunpack.c.l.s4 1966171168
      %v4617 = vunpack.c.0.s8 %v4616
      %v4618 = vlaneseq
      %v4619 = vshrl.u32 %v4618, 7
      %v4620 = vsub.s32 %v4617, %v4619
      %v4621 = vrot.slane %v4611, %v4620
      %v4623 = vunpack.c.l.s4 1966171168
      %v4624 = vunpack.c.0.s8 %v4623
      %v4625 = vlaneseq
      %v4626 = vshrl.u32 %v4625, 7
      %v4627 = vsub.s32 %v4624, %v4626
      %v4628 = vrot.slane %v4612, %v4627
      %v4630 = vunpack.c.l.s4 1966171168
      %v4631 = vunpack.c.0.s8 %v4630
      %v4632 = vlaneseq
      %v4633 = vshrl.u32 %v4632, 7
      %v4634 = vsub.s32 %v4631, %v4633
      %v4635 = vrot.slane %v4613, %v4634
      %v4637 = vunpack.c.l.s4 1966171168
      %v4638 = vunpack.c.0.s8 %v4637
      %v4639 = vlaneseq
      %v4640 = vshrl.u32 %v4639, 7
      %v4641 = vsub.s32 %v4638, %v4640
      %v4642 = vrot.slane %v4614, %v4641
      %v4643 = vcombine.low %v4621, %v4628
      %v4644 = vcombine.low %v4635, %v4642
      %v4646 = vunpack.c.l.s4 1966171168
      %v4647 = vunpack.c.0.s8 %v4646
      %v4648 = vlaneseq
      %v4649 = vshrl.u32 %v4648, 7
      %v4650 = vsub.s32 %v4647, %v4649
      %v4651 = vrot.slane %v4643, %v4650
      %v4653 = vunpack.c.l.s4 1966171168
      %v4654 = vunpack.c.0.s8 %v4653
      %v4655 = vlaneseq
      %v4656 = vshrl.u32 %v4655, 7
      %v4657 = vsub.s32 %v4654, %v4656
      %v4658 = vrot.slane %v4644, %v4657
      %v4659 = vcombine.low %v4651, %v4658
      %v4660 = vcombine.low %v1624, %v1632
      %v4661 = vcombine.low %v1640, %v1648
      %v4662 = vcombine.low %v1656, %v1665
      %v4663 = vcombine.low %v1673, %v1681
      %v4665 = vunpack.c.l.s4 1966171168
      %v4666 = vunpack.c.0.s8 %v4665
      %v4667 = vlaneseq
      %v4668 = vshrl.u32 %v4667, 7
      %v4669 = vsub.s32 %v4666, %v4668
      %v4670 = vrot.slane %v4660, %v4669
      %v4672 = vunpack.c.l.s4 1966171168
      %v4673 = vunpack.c.0.s8 %v4672
      %v4674 = vlaneseq
      %v4675 = vshrl.u32 %v4674, 7
      %v4676 = vsub.s32 %v4673, %v4675
      %v4677 = vrot.slane %v4661, %v4676
      %v4679 = vunpack.c.l.s4 1966171168
      %v4680 = vunpack.c.0.s8 %v4679
      %v4681 = vlaneseq
      %v4682 = vshrl.u32 %v4681, 7
      %v4683 = vsub.s32 %v4680, %v4682
      %v4684 = vrot.slane %v4662, %v4683
      %v4686 = vunpack.c.l.s4 1966171168
      %v4687 = vunpack.c.0.s8 %v4686
      %v4688 = vlaneseq
      %v4689 = vshrl.u32 %v4688, 7
      %v4690 = vsub.s32 %v4687, %v4689
      %v4691 = vrot.slane %v4663, %v4690
      %v4692 = vcombine.low %v4670, %v4677
      %v4693 = vcombine.low %v4684, %v4691
      %v4695 = vunpack.c.l.s4 1966171168
      %v4696 = vunpack.c.0.s8 %v4695
      %v4697 = vlaneseq
      %v4698 = vshrl.u32 %v4697, 7
      %v4699 = vsub.s32 %v4696, %v4698
      %v4700 = vrot.slane %v4692, %v4699
      %v4702 = vunpack.c.l.s4 1966171168
      %v4703 = vunpack.c.0.s8 %v4702
      %v4704 = vlaneseq
      %v4705 = vshrl.u32 %v4704, 7
      %v4706 = vsub.s32 %v4703, %v4705
      %v4707 = vrot.slane %v4693, %v4706
      %v4708 = vcombine.low %v4700, %v4707
      %v4709 = vcombine.low %v1689, %v1697
      %v4710 = vcombine.low %v1705, %v1713
      %v4711 = vcombine.low %v1722, %v1730
      %v4712 = vcombine.low %v1738, %v1746
      %v4714 = vunpack.c.l.s4 1966171168
      %v4715 = vunpack.c.0.s8 %v4714
      %v4716 = vlaneseq
      %v4717 = vshrl.u32 %v4716, 7
      %v4718 = vsub.s32 %v4715, %v4717
      %v4719 = vrot.slane %v4709, %v4718
      %v4721 = vunpack.c.l.s4 1966171168
      %v4722 = vunpack.c.0.s8 %v4721
      %v4723 = vlaneseq
      %v4724 = vshrl.u32 %v4723, 7
      %v4725 = vsub.s32 %v4722, %v4724
      %v4726 = vrot.slane %v4710, %v4725
      %v4728 = vunpack.c.l.s4 1966171168
      %v4729 = vunpack.c.0.s8 %v4728
      %v4730 = vlaneseq
      %v4731 = vshrl.u32 %v4730, 7
      %v4732 = vsub.s32 %v4729, %v4731
      %v4733 = vrot.slane %v4711, %v4732
      %v4735 = vunpack.c.l.s4 1966171168
      %v4736 = vunpack.c.0.s8 %v4735
      %v4737 = vlaneseq
      %v4738 = vshrl.u32 %v4737, 7
      %v4739 = vsub.s32 %v4736, %v4738
      %v4740 = vrot.slane %v4712, %v4739
      %v4741 = vcombine.low %v4719, %v4726
      %v4742 = vcombine.low %v4733, %v4740
      %v4744 = vunpack.c.l.s4 1966171168
      %v4745 = vunpack.c.0.s8 %v4744
      %v4746 = vlaneseq
      %v4747 = vshrl.u32 %v4746, 7
      %v4748 = vsub.s32 %v4745, %v4747
      %v4749 = vrot.slane %v4741, %v4748
      %v4751 = vunpack.c.l.s4 1966171168
      %v4752 = vunpack.c.0.s8 %v4751
      %v4753 = vlaneseq
      %v4754 = vshrl.u32 %v4753, 7
      %v4755 = vsub.s32 %v4752, %v4754
      %v4756 = vrot.slane %v4742, %v4755
      %v4757 = vcombine.low %v4749, %v4756
      %v4758 = vcombine.low %v1754, %v1762
      %v4759 = vcombine.low %v1770, %v1829
      %v4760 = vcombine.low %v1837, %v1845
      %v4761 = vcombine.low %v1853, %v1861
      %v4763 = vunpack.c.l.s4 1966171168
      %v4764 = vunpack.c.0.s8 %v4763
      %v4765 = vlaneseq
      %v4766 = vshrl.u32 %v4765, 7
      %v4767 = vsub.s32 %v4764, %v4766
      %v4768 = vrot.slane %v4758, %v4767
      %v4770 = vunpack.c.l.s4 1966171168
      %v4771 = vunpack.c.0.s8 %v4770
      %v4772 = vlaneseq
      %v4773 = vshrl.u32 %v4772, 7
      %v4774 = vsub.s32 %v4771, %v4773
      %v4775 = vrot.slane %v4759, %v4774
      %v4777 = vunpack.c.l.s4 1966171168
      %v4778 = vunpack.c.0.s8 %v4777
      %v4779 = vlaneseq
      %v4780 = vshrl.u32 %v4779, 7
      %v4781 = vsub.s32 %v4778, %v4780
      %v4782 = vrot.slane %v4760, %v4781
      %v4784 = vunpack.c.l.s4 1966171168
      %v4785 = vunpack.c.0.s8 %v4784
      %v4786 = vlaneseq
      %v4787 = vshrl.u32 %v4786, 7
      %v4788 = vsub.s32 %v4785, %v4787
      %v4789 = vrot.slane %v4761, %v4788
      %v4790 = vcombine.low %v4768, %v4775
      %v4791 = vcombine.low %v4782, %v4789
      %v4793 = vunpack.c.l.s4 1966171168
      %v4794 = vunpack.c.0.s8 %v4793
      %v4795 = vlaneseq
      %v4796 = vshrl.u32 %v4795, 7
      %v4797 = vsub.s32 %v4794, %v4796
      %v4798 = vrot.slane %v4790, %v4797
      %v4800 = vunpack.c.l.s4 1966171168
      %v4801 = vunpack.c.0.s8 %v4800
      %v4802 = vlaneseq
      %v4803 = vshrl.u32 %v4802, 7
      %v4804 = vsub.s32 %v4801, %v4803
      %v4805 = vrot.slane %v4791, %v4804
      %v4806 = vcombine.low %v4798, %v4805
      %v4807 = vcombine.low %v1869, %v1877
      %v4809 = vunpack.c.l.s4 1966171168
      %v4810 = vunpack.c.0.s8 %v4809
      %v4811 = vlaneseq
      %v4812 = vshrl.u32 %v4811, 7
      %v4813 = vsub.s32 %v4810, %v4812
      %v4814 = vrot.slane %v4807, %v4813
      %v4816 = vunpack.c.l.s4 1966171168
      %v4817 = vunpack.c.0.s8 %v4816
      %v4818 = vlaneseq
      %v4819 = vshrl.u32 %v4818, 7
      %v4820 = vsub.s32 %v4817, %v4819
      %v4821 = vrot.slane %v4814, %v4820
      %4822 = vrot.lane.b32.xlu0 %v4267, 16
      %v4823 = vpop.permute.xlu0 %4822
      %4824 = vrot.lane.b32.xlu0 %v4316, 16
      %v4825 = vpop.permute.xlu0 %4824
      %4826 = vrot.lane.b32.xlu0 %v4365, 16
      %v4827 = vpop.permute.xlu0 %4826
      %4828 = vrot.lane.b32.xlu0 %v4414, 16
      %v4829 = vpop.permute.xlu0 %4828
      %4830 = vrot.lane.b32.xlu0 %v4463, 16
      %v4831 = vpop.permute.xlu0 %4830
      %4832 = vrot.lane.b32.xlu0 %v4512, 16
      %v4833 = vpop.permute.xlu0 %4832
      %4834 = vrot.lane.b32.xlu0 %v4561, 16
      %v4835 = vpop.permute.xlu0 %4834
      %4836 = vrot.lane.b32.xlu0 %v4610, 16
      %v4837 = vpop.permute.xlu0 %4836
      %4838 = vrot.lane.b32.xlu0 %v4659, 16
      %v4839 = vpop.permute.xlu0 %4838
      %4840 = vrot.lane.b32.xlu0 %v4708, 16
      %v4841 = vpop.permute.xlu0 %4840
      %4842 = vrot.lane.b32.xlu0 %v4757, 16
      %v4843 = vpop.permute.xlu0 %4842
      %4844 = vrot.lane.b32.xlu0 %v4806, 16
      %v4845 = vpop.permute.xlu0 %4844
      %4846 = vrot.lane.b32.xlu0 %v4821, 16
      %v4847 = vpop.permute.xlu0 %4846
      %v4848 = vcombine.low %v945, %v405
      %v4850 = vunpack.c.l.s4 1966171168
      %v4851 = vunpack.c.0.s8 %v4850
      %v4852 = vlaneseq
      %v4853 = vshrl.u32 %v4852, 7
      %v4854 = vsub.s32 %v4851, %v4853
      %v4855 = vrot.slane %v4848, %v4854
      %v4856 = vcombine.low %v2058, %v4855
      %v4858 = vunpack.c.l.s4 1966171168
      %v4859 = vunpack.c.0.s8 %v4858
      %v4860 = vlaneseq
      %v4861 = vshrl.u32 %v4860, 7
      %v4862 = vsub.s32 %v4859, %v4861
      %v4863 = vrot.slane %v4856, %v4862
      %v4864 = vcombine.low %v2074, %v4863
      %v4865 = vcombine.low %v414, %v946
      %v4867 = vunpack.c.l.s4 1966171168
      %v4868 = vunpack.c.0.s8 %v4867
      %v4869 = vlaneseq
      %v4870 = vshrl.u32 %v4869, 7
      %v4871 = vsub.s32 %v4868, %v4870
      %v4872 = vrot.slane %v4865, %v4871
      %v4873 = vcombine.low %v4872, %v2114
      %v4875 = vunpack.c.l.s4 1966171168
      %v4876 = vunpack.c.0.s8 %v4875
      %v4877 = vlaneseq
      %v4878 = vshrl.u32 %v4877, 7
      %v4879 = vsub.s32 %v4876, %v4878
      %v4880 = vrot.slane %v4873, %v4879
      %v4881 = vcombine.low %v2123, %v4880
      %v4882 = vcombine.low %v947, %v501
      %v4884 = vunpack.c.l.s4 1966171168
      %v4885 = vunpack.c.0.s8 %v4884
      %v4886 = vlaneseq
      %v4887 = vshrl.u32 %v4886, 7
      %v4888 = vsub.s32 %v4885, %v4887
      %v4889 = vrot.slane %v4882, %v4888
      %v4890 = vcombine.low %v4889, %v2163
      %v4892 = vunpack.c.l.s4 1966171168
      %v4893 = vunpack.c.0.s8 %v4892
      %v4894 = vlaneseq
      %v4895 = vshrl.u32 %v4894, 7
      %v4896 = vsub.s32 %v4893, %v4895
      %v4897 = vrot.slane %v4890, %v4896
      %v4898 = vcombine.low %v2172, %v4897
      %v4899 = vcombine.low %v510, %v948
      %v4901 = vunpack.c.l.s4 1966171168
      %v4902 = vunpack.c.0.s8 %v4901
      %v4903 = vlaneseq
      %v4904 = vshrl.u32 %v4903, 7
      %v4905 = vsub.s32 %v4902, %v4904
      %v4906 = vrot.slane %v4899, %v4905
      %v4907 = vcombine.low %v2191, %v4906
      %v4909 = vunpack.c.l.s4 1966171168
      %v4910 = vunpack.c.0.s8 %v4909
      %v4911 = vlaneseq
      %v4912 = vshrl.u32 %v4911, 7
      %v4913 = vsub.s32 %v4910, %v4912
      %v4914 = vrot.slane %v4907, %v4913
      %v4915 = vcombine.low %v4914, %v2228
      %v4916 = vcombine.low %v949, %v597
      %v4918 = vunpack.c.l.s4 1966171168
      %v4919 = vunpack.c.0.s8 %v4918
      %v4920 = vlaneseq
      %v4921 = vshrl.u32 %v4920, 7
      %v4922 = vsub.s32 %v4919, %v4921
      %v4923 = vrot.slane %v4916, %v4922
      %v4924 = vcombine.low %v2240, %v4923
      %v4926 = vunpack.c.l.s4 1966171168
      %v4927 = vunpack.c.0.s8 %v4926
      %v4928 = vlaneseq
      %v4929 = vshrl.u32 %v4928, 7
      %v4930 = vsub.s32 %v4927, %v4929
      %v4931 = vrot.slane %v4924, %v4930
      %v4932 = vcombine.low %v4931, %v2277
      %v4933 = vcombine.low %v606, %v950
      %v4935 = vunpack.c.l.s4 1966171168
      %v4936 = vunpack.c.0.s8 %v4935
      %v4937 = vlaneseq
      %v4938 = vshrl.u32 %v4937, 7
      %v4939 = vsub.s32 %v4936, %v4938
      %v4940 = vrot.slane %v4933, %v4939
      %v4941 = vcombine.low %v4940, %v2296
      %v4943 = vunpack.c.l.s4 1966171168
      %v4944 = vunpack.c.0.s8 %v4943
      %v4945 = vlaneseq
      %v4946 = vshrl.u32 %v4945, 7
      %v4947 = vsub.s32 %v4944, %v4946
      %v4948 = vrot.slane %v4941, %v4947
      %v4949 = vcombine.low %v4948, %v2326
      %v4950 = vcombine.low %v951, %v693
      %v4951 = vcombine.low %v702, %v952
      %v4953 = vunpack.c.l.s4 1966171168
      %v4954 = vunpack.c.0.s8 %v4953
      %v4955 = vlaneseq
      %v4956 = vshrl.u32 %v4955, 7
      %v4957 = vsub.s32 %v4954, %v4956
      %v4958 = vrot.slane %v4950, %v4957
      %v4960 = vunpack.c.l.s4 1966171168
      %v4961 = vunpack.c.0.s8 %v4960
      %v4962 = vlaneseq
      %v4963 = vshrl.u32 %v4962, 7
      %v4964 = vsub.s32 %v4961, %v4963
      %v4965 = vrot.slane %v4951, %v4964
      %v4966 = vcombine.low %v4958, %v2345
      %v4967 = vcombine.low %v2352, %v4965
      %v4969 = vunpack.c.l.s4 1966171168
      %v4970 = vunpack.c.0.s8 %v4969
      %v4971 = vlaneseq
      %v4972 = vshrl.u32 %v4971, 7
      %v4973 = vsub.s32 %v4970, %v4972
      %v4974 = vrot.slane %v4966, %v4973
      %v4976 = vunpack.c.l.s4 1966171168
      %v4977 = vunpack.c.0.s8 %v4976
      %v4978 = vlaneseq
      %v4979 = vshrl.u32 %v4978, 7
      %v4980 = vsub.s32 %v4977, %v4979
      %v4981 = vrot.slane %v4967, %v4980
      %v4982 = vcombine.low %v4974, %v4981
      %v4983 = vcombine.low %v953, %v789
      %v4985 = vunpack.c.l.s4 1966171168
      %v4986 = vunpack.c.0.s8 %v4985
      %v4987 = vlaneseq
      %v4988 = vshrl.u32 %v4987, 7
      %v4989 = vsub.s32 %v4986, %v4988
      %v4990 = vrot.slane %v4983, %v4989
      %v4991 = vcombine.low %v2401, %v4990
      %v4993 = vunpack.c.l.s4 1966171168
      %v4994 = vunpack.c.0.s8 %v4993
      %v4995 = vlaneseq
      %v4996 = vshrl.u32 %v4995, 7
      %v4997 = vsub.s32 %v4994, %v4996
      %v4998 = vrot.slane %v4991, %v4997
      %v4999 = vcombine.low %v2417, %v4998
      %v5000 = vcombine.low %v798, %v954
      %v5002 = vunpack.c.l.s4 1966171168
      %v5003 = vunpack.c.0.s8 %v5002
      %v5004 = vlaneseq
      %v5005 = vshrl.u32 %v5004, 7
      %v5006 = vsub.s32 %v5003, %v5005
      %v5007 = vrot.slane %v5000, %v5006
      %v5008 = vcombine.low %v5007, %v2457
      %v5010 = vunpack.c.l.s4 1966171168
      %v5011 = vunpack.c.0.s8 %v5010
      %v5012 = vlaneseq
      %v5013 = vshrl.u32 %v5012, 7
      %v5014 = vsub.s32 %v5011, %v5013
      %v5015 = vrot.slane %v5008, %v5014
      %v5016 = vcombine.low %v2466, %v5015
      %v5017 = vcombine.low %v955, %v885
      %v5019 = vunpack.c.l.s4 1966171168
      %v5020 = vunpack.c.0.s8 %v5019
      %v5021 = vlaneseq
      %v5022 = vshrl.u32 %v5021, 7
      %v5023 = vsub.s32 %v5020, %v5022
      %v5024 = vrot.slane %v5017, %v5023
      %v5025 = vcombine.low %v5024, %v2506
      %v5027 = vunpack.c.l.s4 1966171168
      %v5028 = vunpack.c.0.s8 %v5027
      %v5029 = vlaneseq
      %v5030 = vshrl.u32 %v5029, 7
      %v5031 = vsub.s32 %v5028, %v5030
      %v5032 = vrot.slane %v5025, %v5031
      %v5033 = vcombine.low %v2515, %v5032
      %v5034 = vcombine.low %v894, %v956
      %v5036 = vunpack.c.l.s4 1966171168
      %v5037 = vunpack.c.0.s8 %v5036
      %v5038 = vlaneseq
      %v5039 = vshrl.u32 %v5038, 7
      %v5040 = vsub.s32 %v5037, %v5039
      %v5041 = vrot.slane %v5034, %v5040
      %v5042 = vcombine.low %v2534, %v5041
      %v5044 = vunpack.c.l.s4 1966171168
      %v5045 = vunpack.c.0.s8 %v5044
      %v5046 = vlaneseq
      %v5047 = vshrl.u32 %v5046, 7
      %v5048 = vsub.s32 %v5045, %v5047
      %v5049 = vrot.slane %v5042, %v5048
      %v5050 = vcombine.low %v5049, %v2571
      %v5051 = vcombine.low %v957, %v1809
      %v5052 = vcombine.low %v1817, %v1819
      %v5053 = vcombine.low %v1802, %v1816
      %v5055 = vunpack.c.l.s4 1966171168
      %v5056 = vunpack.c.0.s8 %v5055
      %v5057 = vlaneseq
      %v5058 = vshrl.u32 %v5057, 7
      %v5059 = vsub.s32 %v5056, %v5058
      %v5060 = vrot.slane %v5051, %v5059
      %v5062 = vunpack.c.l.s4 1966171168
      %v5063 = vunpack.c.0.s8 %v5062
      %v5064 = vlaneseq
      %v5065 = vshrl.u32 %v5064, 7
      %v5066 = vsub.s32 %v5063, %v5065
      %v5067 = vrot.slane %v5052, %v5066
      %v5069 = vunpack.c.l.s4 1966171168
      %v5070 = vunpack.c.0.s8 %v5069
      %v5071 = vlaneseq
      %v5072 = vshrl.u32 %v5071, 7
      %v5073 = vsub.s32 %v5070, %v5072
      %v5074 = vrot.slane %v5053, %v5073
      %v5075 = vcombine.low %v2580, %v5060
      %v5076 = vcombine.low %v5067, %v5074
      %v5078 = vunpack.c.l.s4 1966171168
      %v5079 = vunpack.c.0.s8 %v5078
      %v5080 = vlaneseq
      %v5081 = vshrl.u32 %v5080, 7
      %v5082 = vsub.s32 %v5079, %v5081
      %v5083 = vrot.slane %v5075, %v5082
      %v5085 = vunpack.c.l.s4 1966171168
      %v5086 = vunpack.c.0.s8 %v5085
      %v5087 = vlaneseq
      %v5088 = vshrl.u32 %v5087, 7
      %v5089 = vsub.s32 %v5086, %v5088
      %v5090 = vrot.slane %v5076, %v5089
      %v5091 = vcombine.low %v5083, %v5090
      %v5092 = vcombine.low %v1818, %v1820
      %v5094 = vunpack.c.l.s4 1966171168
      %v5095 = vunpack.c.0.s8 %v5094
      %v5096 = vlaneseq
      %v5097 = vshrl.u32 %v5096, 7
      %v5098 = vsub.s32 %v5095, %v5097
      %v5099 = vrot.slane %v5092, %v5098
      %v5101 = vunpack.c.l.s4 1966171168
      %v5102 = vunpack.c.0.s8 %v5101
      %v5103 = vlaneseq
      %v5104 = vshrl.u32 %v5103, 7
      %v5105 = vsub.s32 %v5102, %v5104
      %v5106 = vrot.slane %v5099, %v5105
      %5107 = vrot.lane.b32.xlu0 %v4864, 20
      %v5108 = vpop.permute.xlu0 %5107
      %5109 = vrot.lane.b32.xlu0 %v4881, 20
      %v5110 = vpop.permute.xlu0 %5109
      %5111 = vrot.lane.b32.xlu0 %v4898, 20
      %v5112 = vpop.permute.xlu0 %5111
      %5113 = vrot.lane.b32.xlu0 %v4915, 20
      %v5114 = vpop.permute.xlu0 %5113
      %5115 = vrot.lane.b32.xlu0 %v4932, 20
      %v5116 = vpop.permute.xlu0 %5115
      %5117 = vrot.lane.b32.xlu0 %v4949, 20
      %v5118 = vpop.permute.xlu0 %5117
      %5119 = vrot.lane.b32.xlu0 %v4982, 20
      %v5120 = vpop.permute.xlu0 %5119
      %5121 = vrot.lane.b32.xlu0 %v4999, 20
      %v5122 = vpop.permute.xlu0 %5121
      %5123 = vrot.lane.b32.xlu0 %v5016, 20
      %v5124 = vpop.permute.xlu0 %5123
      %5125 = vrot.lane.b32.xlu0 %v5033, 20
      %v5126 = vpop.permute.xlu0 %5125
      %5127 = vrot.lane.b32.xlu0 %v5050, 20
      %v5128 = vpop.permute.xlu0 %5127
      %5129 = vrot.lane.b32.xlu0 %v5091, 20
      %v5130 = vpop.permute.xlu0 %5129
      %5131 = vrot.lane.b32.xlu0 %v5106, 20
      %v5132 = vpop.permute.xlu0 %5131
      %v5133 = vcombine.low %v2065, %v2093
      %v5134 = vcombine.low %v2100, %v2107
      %v5136 = vunpack.c.l.s4 1966171168
      %v5137 = vunpack.c.0.s8 %v5136
      %v5138 = vlaneseq
      %v5139 = vshrl.u32 %v5138, 7
      %v5140 = vsub.s32 %v5137, %v5139
      %v5141 = vrot.slane %v5133, %v5140
      %v5143 = vunpack.c.l.s4 1966171168
      %v5144 = vunpack.c.0.s8 %v5143
      %v5145 = vlaneseq
      %v5146 = vshrl.u32 %v5145, 7
      %v5147 = vsub.s32 %v5144, %v5146
      %v5148 = vrot.slane %v5134, %v5147
      %v5149 = vcombine.low %v5141, %v5148
      %v5150 = vcombine.low %v2114, %v2142
      %v5151 = vcombine.low %v2149, %v2156
      %v5153 = vunpack.c.l.s4 1966171168
      %v5154 = vunpack.c.0.s8 %v5153
      %v5155 = vlaneseq
      %v5156 = vshrl.u32 %v5155, 7
      %v5157 = vsub.s32 %v5154, %v5156
      %v5158 = vrot.slane %v5150, %v5157
      %v5160 = vunpack.c.l.s4 1966171168
      %v5161 = vunpack.c.0.s8 %v5160
      %v5162 = vlaneseq
      %v5163 = vshrl.u32 %v5162, 7
      %v5164 = vsub.s32 %v5161, %v5163
      %v5165 = vrot.slane %v5151, %v5164
      %v5166 = vcombine.low %v5158, %v5165
      %v5167 = vcombine.low %v2163, %v2191
      %v5168 = vcombine.low %v2198, %v2205
      %v5170 = vunpack.c.l.s4 1966171168
      %v5171 = vunpack.c.0.s8 %v5170
      %v5172 = vlaneseq
      %v5173 = vshrl.u32 %v5172, 7
      %v5174 = vsub.s32 %v5171, %v5173
      %v5175 = vrot.slane %v5167, %v5174
      %v5177 = vunpack.c.l.s4 1966171168
      %v5178 = vunpack.c.0.s8 %v5177
      %v5179 = vlaneseq
      %v5180 = vshrl.u32 %v5179, 7
      %v5181 = vsub.s32 %v5178, %v5180
      %v5182 = vrot.slane %v5168, %v5181
      %v5183 = vcombine.low %v5175, %v5182
      %v5184 = vcombine.low %v2212, %v2240
      %v5185 = vcombine.low %v2247, %v2254
      %v5187 = vunpack.c.l.s4 1966171168
      %v5188 = vunpack.c.0.s8 %v5187
      %v5189 = vlaneseq
      %v5190 = vshrl.u32 %v5189, 7
      %v5191 = vsub.s32 %v5188, %v5190
      %v5192 = vrot.slane %v5184, %v5191
      %v5194 = vunpack.c.l.s4 1966171168
      %v5195 = vunpack.c.0.s8 %v5194
      %v5196 = vlaneseq
      %v5197 = vshrl.u32 %v5196, 7
      %v5198 = vsub.s32 %v5195, %v5197
      %v5199 = vrot.slane %v5185, %v5198
      %v5200 = vcombine.low %v5192, %v5199
      %v5201 = vcombine.low %v2261, %v2289
      %v5202 = vcombine.low %v2296, %v2303
      %v5204 = vunpack.c.l.s4 1966171168
      %v5205 = vunpack.c.0.s8 %v5204
      %v5206 = vlaneseq
      %v5207 = vshrl.u32 %v5206, 7
      %v5208 = vsub.s32 %v5205, %v5207
      %v5209 = vrot.slane %v5201, %v5208
      %v5211 = vunpack.c.l.s4 1966171168
      %v5212 = vunpack.c.0.s8 %v5211
      %v5213 = vlaneseq
      %v5214 = vshrl.u32 %v5213, 7
      %v5215 = vsub.s32 %v5212, %v5214
      %v5216 = vrot.slane %v5202, %v5215
      %v5217 = vcombine.low %v5209, %v5216
      %v5218 = vcombine.low %v2310, %v2338
      %v5219 = vcombine.low %v2345, %v2352
      %v5221 = vunpack.c.l.s4 1966171168
      %v5222 = vunpack.c.0.s8 %v5221
      %v5223 = vlaneseq
      %v5224 = vshrl.u32 %v5223, 7
      %v5225 = vsub.s32 %v5222, %v5224
      %v5226 = vrot.slane %v5218, %v5225
      %v5228 = vunpack.c.l.s4 1966171168
      %v5229 = vunpack.c.0.s8 %v5228
      %v5230 = vlaneseq
      %v5231 = vshrl.u32 %v5230, 7
      %v5232 = vsub.s32 %v5229, %v5231
      %v5233 = vrot.slane %v5219, %v5232
      %v5234 = vcombine.low %v5226, %v5233
      %v5235 = vcombine.low %v2359, %v2387
      %v5236 = vcombine.low %v2394, %v2401
      %v5238 = vunpack.c.l.s4 1966171168
      %v5239 = vunpack.c.0.s8 %v5238
      %v5240 = vlaneseq
      %v5241 = vshrl.u32 %v5240, 7
      %v5242 = vsub.s32 %v5239, %v5241
      %v5243 = vrot.slane %v5235, %v5242
      %v5245 = vunpack.c.l.s4 1966171168
      %v5246 = vunpack.c.0.s8 %v5245
      %v5247 = vlaneseq
      %v5248 = vshrl.u32 %v5247, 7
      %v5249 = vsub.s32 %v5246, %v5248
      %v5250 = vrot.slane %v5236, %v5249
      %v5251 = vcombine.low %v5243, %v5250
      %v5252 = vcombine.low %v2408, %v2436
      %v5253 = vcombine.low %v2443, %v2450
      %v5255 = vunpack.c.l.s4 1966171168
      %v5256 = vunpack.c.0.s8 %v5255
      %v5257 = vlaneseq
      %v5258 = vshrl.u32 %v5257, 7
      %v5259 = vsub.s32 %v5256, %v5258
      %v5260 = vrot.slane %v5252, %v5259
      %v5262 = vunpack.c.l.s4 1966171168
      %v5263 = vunpack.c.0.s8 %v5262
      %v5264 = vlaneseq
      %v5265 = vshrl.u32 %v5264, 7
      %v5266 = vsub.s32 %v5263, %v5265
      %v5267 = vrot.slane %v5253, %v5266
      %v5268 = vcombine.low %v5260, %v5267
      %v5269 = vcombine.low %v2457, %v2485
      %v5270 = vcombine.low %v2492, %v2499
      %v5272 = vunpack.c.l.s4 1966171168
      %v5273 = vunpack.c.0.s8 %v5272
      %v5274 = vlaneseq
      %v5275 = vshrl.u32 %v5274, 7
      %v5276 = vsub.s32 %v5273, %v5275
      %v5277 = vrot.slane %v5269, %v5276
      %v5279 = vunpack.c.l.s4 1966171168
      %v5280 = vunpack.c.0.s8 %v5279
      %v5281 = vlaneseq
      %v5282 = vshrl.u32 %v5281, 7
      %v5283 = vsub.s32 %v5280, %v5282
      %v5284 = vrot.slane %v5270, %v5283
      %v5285 = vcombine.low %v5277, %v5284
      %v5286 = vcombine.low %v2506, %v2534
      %v5287 = vcombine.low %v2541, %v2548
      %v5289 = vunpack.c.l.s4 1966171168
      %v5290 = vunpack.c.0.s8 %v5289
      %v5291 = vlaneseq
      %v5292 = vshrl.u32 %v5291, 7
      %v5293 = vsub.s32 %v5290, %v5292
      %v5294 = vrot.slane %v5286, %v5293
      %v5296 = vunpack.c.l.s4 1966171168
      %v5297 = vunpack.c.0.s8 %v5296
      %v5298 = vlaneseq
      %v5299 = vshrl.u32 %v5298, 7
      %v5300 = vsub.s32 %v5297, %v5299
      %v5301 = vrot.slane %v5287, %v5300
      %v5302 = vcombine.low %v5294, %v5301
      %v5303 = vcombine.low %v1795, %v1809
      %v5305 = vunpack.c.l.s4 1966171168
      %v5306 = vunpack.c.0.s8 %v5305
      %v5307 = vlaneseq
      %v5308 = vshrl.u32 %v5307, 7
      %v5309 = vsub.s32 %v5306, %v5308
      %v5310 = vrot.slane %v5303, %v5309
      %v5311 = vcombine.low %v2555, %v2580
      %v5312 = vcombine.low %v5310, %v5067
      %v5314 = vunpack.c.l.s4 1966171168
      %v5315 = vunpack.c.0.s8 %v5314
      %v5316 = vlaneseq
      %v5317 = vshrl.u32 %v5316, 7
      %v5318 = vsub.s32 %v5315, %v5317
      %v5319 = vrot.slane %v5311, %v5318
      %v5321 = vunpack.c.l.s4 1966171168
      %v5322 = vunpack.c.0.s8 %v5321
      %v5323 = vlaneseq
      %v5324 = vshrl.u32 %v5323, 7
      %v5325 = vsub.s32 %v5322, %v5324
      %v5326 = vrot.slane %v5312, %v5325
      %v5327 = vcombine.low %v5319, %v5326
      %v5328 = vcombine.low %v1818, %v1902
      %v5329 = vcombine.low %v1916, %v1924
      %v5330 = vcombine.low %v1926, %v1909
      %v5332 = vunpack.c.l.s4 1966171168
      %v5333 = vunpack.c.0.s8 %v5332
      %v5334 = vlaneseq
      %v5335 = vshrl.u32 %v5334, 7
      %v5336 = vsub.s32 %v5333, %v5335
      %v5337 = vrot.slane %v5328, %v5336
      %v5339 = vunpack.c.l.s4 1966171168
      %v5340 = vunpack.c.0.s8 %v5339
      %v5341 = vlaneseq
      %v5342 = vshrl.u32 %v5341, 7
      %v5343 = vsub.s32 %v5340, %v5342
      %v5344 = vrot.slane %v5329, %v5343
      %v5346 = vunpack.c.l.s4 1966171168
      %v5347 = vunpack.c.0.s8 %v5346
      %v5348 = vlaneseq
      %v5349 = vshrl.u32 %v5348, 7
      %v5350 = vsub.s32 %v5347, %v5349
      %v5351 = vrot.slane %v5330, %v5350
      %v5352 = vcombine.low %v5074, %v5337
      %v5353 = vcombine.low %v5344, %v5351
      %v5355 = vunpack.c.l.s4 1966171168
      %v5356 = vunpack.c.0.s8 %v5355
      %v5357 = vlaneseq
      %v5358 = vshrl.u32 %v5357, 7
      %v5359 = vsub.s32 %v5356, %v5358
      %v5360 = vrot.slane %v5352, %v5359
      %v5362 = vunpack.c.l.s4 1966171168
      %v5363 = vunpack.c.0.s8 %v5362
      %v5364 = vlaneseq
      %v5365 = vshrl.u32 %v5364, 7
      %v5366 = vsub.s32 %v5363, %v5365
      %v5367 = vrot.slane %v5353, %v5366
      %v5368 = vcombine.low %v5360, %v5367
      %v5369 = vcombine.low %v1923, %v1925
      %v5371 = vunpack.c.l.s4 1966171168
      %v5372 = vunpack.c.0.s8 %v5371
      %v5373 = vlaneseq
      %v5374 = vshrl.u32 %v5373, 7
      %v5375 = vsub.s32 %v5372, %v5374
      %v5376 = vrot.slane %v5369, %v5375
      %v5378 = vunpack.c.l.s4 1966171168
      %v5379 = vunpack.c.0.s8 %v5378
      %v5380 = vlaneseq
      %v5381 = vshrl.u32 %v5380, 7
      %v5382 = vsub.s32 %v5379, %v5381
      %v5383 = vrot.slane %v5376, %v5382
      %5384 = vrot.lane.b32.xlu0 %v5149, 24
      %v5385 = vpop.permute.xlu0 %5384
      %5386 = vrot.lane.b32.xlu0 %v5166, 24
      %v5387 = vpop.permute.xlu0 %5386
      %5388 = vrot.lane.b32.xlu0 %v5183, 24
      %v5389 = vpop.permute.xlu0 %5388
      %5390 = vrot.lane.b32.xlu0 %v5200, 24
      %v5391 = vpop.permute.xlu0 %5390
      %5392 = vrot.lane.b32.xlu0 %v5217, 24
      %v5393 = vpop.permute.xlu0 %5392
      %5394 = vrot.lane.b32.xlu0 %v5234, 24
      %v5395 = vpop.permute.xlu0 %5394
      %5396 = vrot.lane.b32.xlu0 %v5251, 24
      %v5397 = vpop.permute.xlu0 %5396
      %5398 = vrot.lane.b32.xlu0 %v5268, 24
      %v5399 = vpop.permute.xlu0 %5398
      %5400 = vrot.lane.b32.xlu0 %v5285, 24
      %v5401 = vpop.permute.xlu0 %5400
      %5402 = vrot.lane.b32.xlu0 %v5302, 24
      %v5403 = vpop.permute.xlu0 %5402
      %5404 = vrot.lane.b32.xlu0 %v5327, 24
      %v5405 = vpop.permute.xlu0 %5404
      %5406 = vrot.lane.b32.xlu0 %v5368, 24
      %v5407 = vpop.permute.xlu0 %5406
      %5408 = vrot.lane.b32.xlu0 %v5383, 24
      %v5409 = vpop.permute.xlu0 %5408
      %v5410 = vcombine.low %v2668, %v2696
      %v5411 = vcombine.low %v2703, %v2710
      %v5413 = vunpack.c.l.s4 1966171168
      %v5414 = vunpack.c.0.s8 %v5413
      %v5415 = vlaneseq
      %v5416 = vshrl.u32 %v5415, 7
      %v5417 = vsub.s32 %v5414, %v5416
      %v5418 = vrot.slane %v5410, %v5417
      %v5420 = vunpack.c.l.s4 1966171168
      %v5421 = vunpack.c.0.s8 %v5420
      %v5422 = vlaneseq
      %v5423 = vshrl.u32 %v5422, 7
      %v5424 = vsub.s32 %v5421, %v5423
      %v5425 = vrot.slane %v5411, %v5424
      %v5426 = vcombine.low %v5418, %v5425
      %v5427 = vcombine.low %v2717, %v2745
      %v5428 = vcombine.low %v2752, %v2759
      %v5430 = vunpack.c.l.s4 1966171168
      %v5431 = vunpack.c.0.s8 %v5430
      %v5432 = vlaneseq
      %v5433 = vshrl.u32 %v5432, 7
      %v5434 = vsub.s32 %v5431, %v5433
      %v5435 = vrot.slane %v5427, %v5434
      %v5437 = vunpack.c.l.s4 1966171168
      %v5438 = vunpack.c.0.s8 %v5437
      %v5439 = vlaneseq
      %v5440 = vshrl.u32 %v5439, 7
      %v5441 = vsub.s32 %v5438, %v5440
      %v5442 = vrot.slane %v5428, %v5441
      %v5443 = vcombine.low %v5435, %v5442
      %v5444 = vcombine.low %v2766, %v2794
      %v5445 = vcombine.low %v2801, %v2808
      %v5447 = vunpack.c.l.s4 1966171168
      %v5448 = vunpack.c.0.s8 %v5447
      %v5449 = vlaneseq
      %v5450 = vshrl.u32 %v5449, 7
      %v5451 = vsub.s32 %v5448, %v5450
      %v5452 = vrot.slane %v5444, %v5451
      %v5454 = vunpack.c.l.s4 1966171168
      %v5455 = vunpack.c.0.s8 %v5454
      %v5456 = vlaneseq
      %v5457 = vshrl.u32 %v5456, 7
      %v5458 = vsub.s32 %v5455, %v5457
      %v5459 = vrot.slane %v5445, %v5458
      %v5460 = vcombine.low %v5452, %v5459
      %v5461 = vcombine.low %v2815, %v2843
      %v5462 = vcombine.low %v2850, %v2857
      %v5464 = vunpack.c.l.s4 1966171168
      %v5465 = vunpack.c.0.s8 %v5464
      %v5466 = vlaneseq
      %v5467 = vshrl.u32 %v5466, 7
      %v5468 = vsub.s32 %v5465, %v5467
      %v5469 = vrot.slane %v5461, %v5468
      %v5471 = vunpack.c.l.s4 1966171168
      %v5472 = vunpack.c.0.s8 %v5471
      %v5473 = vlaneseq
      %v5474 = vshrl.u32 %v5473, 7
      %v5475 = vsub.s32 %v5472, %v5474
      %v5476 = vrot.slane %v5462, %v5475
      %v5477 = vcombine.low %v5469, %v5476
      %v5478 = vcombine.low %v2864, %v2892
      %v5479 = vcombine.low %v2899, %v2906
      %v5481 = vunpack.c.l.s4 1966171168
      %v5482 = vunpack.c.0.s8 %v5481
      %v5483 = vlaneseq
      %v5484 = vshrl.u32 %v5483, 7
      %v5485 = vsub.s32 %v5482, %v5484
      %v5486 = vrot.slane %v5478, %v5485
      %v5488 = vunpack.c.l.s4 1966171168
      %v5489 = vunpack.c.0.s8 %v5488
      %v5490 = vlaneseq
      %v5491 = vshrl.u32 %v5490, 7
      %v5492 = vsub.s32 %v5489, %v5491
      %v5493 = vrot.slane %v5479, %v5492
      %v5494 = vcombine.low %v5486, %v5493
      %v5495 = vcombine.low %v2913, %v2941
      %v5496 = vcombine.low %v2948, %v2955
      %v5498 = vunpack.c.l.s4 1966171168
      %v5499 = vunpack.c.0.s8 %v5498
      %v5500 = vlaneseq
      %v5501 = vshrl.u32 %v5500, 7
      %v5502 = vsub.s32 %v5499, %v5501
      %v5503 = vrot.slane %v5495, %v5502
      %v5505 = vunpack.c.l.s4 1966171168
      %v5506 = vunpack.c.0.s8 %v5505
      %v5507 = vlaneseq
      %v5508 = vshrl.u32 %v5507, 7
      %v5509 = vsub.s32 %v5506, %v5508
      %v5510 = vrot.slane %v5496, %v5509
      %v5511 = vcombine.low %v5503, %v5510
      %v5512 = vcombine.low %v2962, %v2990
      %v5513 = vcombine.low %v2997, %v3004
      %v5515 = vunpack.c.l.s4 1966171168
      %v5516 = vunpack.c.0.s8 %v5515
      %v5517 = vlaneseq
      %v5518 = vshrl.u32 %v5517, 7
      %v5519 = vsub.s32 %v5516, %v5518
      %v5520 = vrot.slane %v5512, %v5519
      %v5522 = vunpack.c.l.s4 1966171168
      %v5523 = vunpack.c.0.s8 %v5522
      %v5524 = vlaneseq
      %v5525 = vshrl.u32 %v5524, 7
      %v5526 = vsub.s32 %v5523, %v5525
      %v5527 = vrot.slane %v5513, %v5526
      %v5528 = vcombine.low %v5520, %v5527
      %v5529 = vcombine.low %v3011, %v3039
      %v5530 = vcombine.low %v3046, %v3053
      %v5532 = vunpack.c.l.s4 1966171168
      %v5533 = vunpack.c.0.s8 %v5532
      %v5534 = vlaneseq
      %v5535 = vshrl.u32 %v5534, 7
      %v5536 = vsub.s32 %v5533, %v5535
      %v5537 = vrot.slane %v5529, %v5536
      %v5539 = vunpack.c.l.s4 1966171168
      %v5540 = vunpack.c.0.s8 %v5539
      %v5541 = vlaneseq
      %v5542 = vshrl.u32 %v5541, 7
      %v5543 = vsub.s32 %v5540, %v5542
      %v5544 = vrot.slane %v5530, %v5543
      %v5545 = vcombine.low %v5537, %v5544
      %v5546 = vcombine.low %v3060, %v3088
      %v5547 = vcombine.low %v3095, %v3102
      %v5549 = vunpack.c.l.s4 1966171168
      %v5550 = vunpack.c.0.s8 %v5549
      %v5551 = vlaneseq
      %v5552 = vshrl.u32 %v5551, 7
      %v5553 = vsub.s32 %v5550, %v5552
      %v5554 = vrot.slane %v5546, %v5553
      %v5556 = vunpack.c.l.s4 1966171168
      %v5557 = vunpack.c.0.s8 %v5556
      %v5558 = vlaneseq
      %v5559 = vshrl.u32 %v5558, 7
      %v5560 = vsub.s32 %v5557, %v5559
      %v5561 = vrot.slane %v5547, %v5560
      %v5562 = vcombine.low %v5554, %v5561
      %v5563 = vcombine.low %v3109, %v3137
      %v5564 = vcombine.low %v3144, %v3151
      %v5566 = vunpack.c.l.s4 1966171168
      %v5567 = vunpack.c.0.s8 %v5566
      %v5568 = vlaneseq
      %v5569 = vshrl.u32 %v5568, 7
      %v5570 = vsub.s32 %v5567, %v5569
      %v5571 = vrot.slane %v5563, %v5570
      %v5573 = vunpack.c.l.s4 1966171168
      %v5574 = vunpack.c.0.s8 %v5573
      %v5575 = vlaneseq
      %v5576 = vshrl.u32 %v5575, 7
      %v5577 = vsub.s32 %v5574, %v5576
      %v5578 = vrot.slane %v5564, %v5577
      %v5579 = vcombine.low %v5571, %v5578
      %v5580 = vcombine.low %v1829, %v1837
      %v5581 = vcombine.low %v1845, %v1853
      %v5583 = vunpack.c.l.s4 1966171168
      %v5584 = vunpack.c.0.s8 %v5583
      %v5585 = vlaneseq
      %v5586 = vshrl.u32 %v5585, 7
      %v5587 = vsub.s32 %v5584, %v5586
      %v5588 = vrot.slane %v5580, %v5587
      %v5590 = vunpack.c.l.s4 1966171168
      %v5591 = vunpack.c.0.s8 %v5590
      %v5592 = vlaneseq
      %v5593 = vshrl.u32 %v5592, 7
      %v5594 = vsub.s32 %v5591, %v5593
      %v5595 = vrot.slane %v5581, %v5594
      %v5596 = vcombine.low %v3158, %v3183
      %v5597 = vcombine.low %v5588, %v5595
      %v5599 = vunpack.c.l.s4 1966171168
      %v5600 = vunpack.c.0.s8 %v5599
      %v5601 = vlaneseq
      %v5602 = vshrl.u32 %v5601, 7
      %v5603 = vsub.s32 %v5600, %v5602
      %v5604 = vrot.slane %v5596, %v5603
      %v5606 = vunpack.c.l.s4 1966171168
      %v5607 = vunpack.c.0.s8 %v5606
      %v5608 = vlaneseq
      %v5609 = vshrl.u32 %v5608, 7
      %v5610 = vsub.s32 %v5607, %v5609
      %v5611 = vrot.slane %v5597, %v5610
      %v5612 = vcombine.low %v5604, %v5611
      %v5613 = vcombine.low %v1861, %v1869
      %v5614 = vcombine.low %v1877, %v1936
      %v5615 = vcombine.low %v1944, %v1952
      %v5616 = vcombine.low %v1960, %v1968
      %v5618 = vunpack.c.l.s4 1966171168
      %v5619 = vunpack.c.0.s8 %v5618
      %v5620 = vlaneseq
      %v5621 = vshrl.u32 %v5620, 7
      %v5622 = vsub.s32 %v5619, %v5621
      %v5623 = vrot.slane %v5613, %v5622
      %v5625 = vunpack.c.l.s4 1966171168
      %v5626 = vunpack.c.0.s8 %v5625
      %v5627 = vlaneseq
      %v5628 = vshrl.u32 %v5627, 7
      %v5629 = vsub.s32 %v5626, %v5628
      %v5630 = vrot.slane %v5614, %v5629
      %v5632 = vunpack.c.l.s4 1966171168
      %v5633 = vunpack.c.0.s8 %v5632
      %v5634 = vlaneseq
      %v5635 = vshrl.u32 %v5634, 7
      %v5636 = vsub.s32 %v5633, %v5635
      %v5637 = vrot.slane %v5615, %v5636
      %v5639 = vunpack.c.l.s4 1966171168
      %v5640 = vunpack.c.0.s8 %v5639
      %v5641 = vlaneseq
      %v5642 = vshrl.u32 %v5641, 7
      %v5643 = vsub.s32 %v5640, %v5642
      %v5644 = vrot.slane %v5616, %v5643
      %v5645 = vcombine.low %v5623, %v5630
      %v5646 = vcombine.low %v5637, %v5644
      %v5648 = vunpack.c.l.s4 1966171168
      %v5649 = vunpack.c.0.s8 %v5648
      %v5650 = vlaneseq
      %v5651 = vshrl.u32 %v5650, 7
      %v5652 = vsub.s32 %v5649, %v5651
      %v5653 = vrot.slane %v5645, %v5652
      %v5655 = vunpack.c.l.s4 1966171168
      %v5656 = vunpack.c.0.s8 %v5655
      %v5657 = vlaneseq
      %v5658 = vshrl.u32 %v5657, 7
      %v5659 = vsub.s32 %v5656, %v5658
      %v5660 = vrot.slane %v5646, %v5659
      %v5661 = vcombine.low %v5653, %v5660
      %v5662 = vcombine.low %v1976, %v1984
      %v5664 = vunpack.c.l.s4 1966171168
      %v5665 = vunpack.c.0.s8 %v5664
      %v5666 = vlaneseq
      %v5667 = vshrl.u32 %v5666, 7
      %v5668 = vsub.s32 %v5665, %v5667
      %v5669 = vrot.slane %v5662, %v5668
      %v5671 = vunpack.c.l.s4 1966171168
      %v5672 = vunpack.c.0.s8 %v5671
      %v5673 = vlaneseq
      %v5674 = vshrl.u32 %v5673, 7
      %v5675 = vsub.s32 %v5672, %v5674
      %v5676 = vrot.slane %v5669, %v5675
      %5677 = vrot.lane.b32.xlu0 %v5426, 28
      %v5678 = vpop.permute.xlu0 %5677
      %5679 = vrot.lane.b32.xlu0 %v5443, 28
      %v5680 = vpop.permute.xlu0 %5679
      %5681 = vrot.lane.b32.xlu0 %v5460, 28
      %v5682 = vpop.permute.xlu0 %5681
      %5683 = vrot.lane.b32.xlu0 %v5477, 28
      %v5684 = vpop.permute.xlu0 %5683
      %5685 = vrot.lane.b32.xlu0 %v5494, 28
      %v5686 = vpop.permute.xlu0 %5685
      %5687 = vrot.lane.b32.xlu0 %v5511, 28
      %v5688 = vpop.permute.xlu0 %5687
      %5689 = vrot.lane.b32.xlu0 %v5528, 28
      %v5690 = vpop.permute.xlu0 %5689
      %5691 = vrot.lane.b32.xlu0 %v5545, 28
      %v5692 = vpop.permute.xlu0 %5691
      %5693 = vrot.lane.b32.xlu0 %v5562, 28
      %v5694 = vpop.permute.xlu0 %5693
      %5695 = vrot.lane.b32.xlu0 %v5579, 28
      %v5696 = vpop.permute.xlu0 %5695
      %5697 = vrot.lane.b32.xlu0 %v5612, 28
      %v5698 = vpop.permute.xlu0 %5697
      %5699 = vrot.lane.b32.xlu0 %v5661, 28
      %v5700 = vpop.permute.xlu0 %5699
      %5701 = vrot.lane.b32.xlu0 %v5676, 28
      %v5702 = vpop.permute.xlu0 %5701
      %v5703 = vcombine.low %v3332, %v3339
      %v5705 = vunpack.c.l.s4 1966171168
      %v5706 = vunpack.c.0.s8 %v5705
      %v5707 = vlaneseq
      %v5708 = vshrl.u32 %v5707, 7
      %v5709 = vsub.s32 %v5706, %v5708
      %v5710 = vrot.slane %v5703, %v5709
      %v5711 = vcombine.low %v3895, %v5710
      %v5712 = vcombine.low %v3381, %v3388
      %v5714 = vunpack.c.l.s4 1966171168
      %v5715 = vunpack.c.0.s8 %v5714
      %v5716 = vlaneseq
      %v5717 = vshrl.u32 %v5716, 7
      %v5718 = vsub.s32 %v5715, %v5717
      %v5719 = vrot.slane %v5712, %v5718
      %v5720 = vcombine.low %v3920, %v5719
      %v5721 = vcombine.low %v3430, %v3437
      %v5723 = vunpack.c.l.s4 1966171168
      %v5724 = vunpack.c.0.s8 %v5723
      %v5725 = vlaneseq
      %v5726 = vshrl.u32 %v5725, 7
      %v5727 = vsub.s32 %v5724, %v5726
      %v5728 = vrot.slane %v5721, %v5727
      %v5729 = vcombine.low %v3945, %v5728
      %v5730 = vcombine.low %v3444, %v3472
      %v5732 = vunpack.c.l.s4 1966171168
      %v5733 = vunpack.c.0.s8 %v5732
      %v5734 = vlaneseq
      %v5735 = vshrl.u32 %v5734, 7
      %v5736 = vsub.s32 %v5733, %v5735
      %v5737 = vrot.slane %v5730, %v5736
      %v5738 = vcombine.low %v5737, %v3977
      %v5739 = vcombine.low %v3493, %v3521
      %v5741 = vunpack.c.l.s4 1966171168
      %v5742 = vunpack.c.0.s8 %v5741
      %v5743 = vlaneseq
      %v5744 = vshrl.u32 %v5743, 7
      %v5745 = vsub.s32 %v5742, %v5744
      %v5746 = vrot.slane %v5739, %v5745
      %v5747 = vcombine.low %v5746, %v4002
      %v5748 = vcombine.low %v3542, %v3570
      %v5750 = vunpack.c.l.s4 1966171168
      %v5751 = vunpack.c.0.s8 %v5750
      %v5752 = vlaneseq
      %v5753 = vshrl.u32 %v5752, 7
      %v5754 = vsub.s32 %v5751, %v5753
      %v5755 = vrot.slane %v5748, %v5754
      %v5756 = vcombine.low %v5755, %v4027
      %v5757 = vcombine.low %v3591, %v3619
      %v5758 = vcombine.low %v3626, %v3633
      %v5760 = vunpack.c.l.s4 1966171168
      %v5761 = vunpack.c.0.s8 %v5760
      %v5762 = vlaneseq
      %v5763 = vshrl.u32 %v5762, 7
      %v5764 = vsub.s32 %v5761, %v5763
      %v5765 = vrot.slane %v5757, %v5764
      %v5767 = vunpack.c.l.s4 1966171168
      %v5768 = vunpack.c.0.s8 %v5767
      %v5769 = vlaneseq
      %v5770 = vshrl.u32 %v5769, 7
      %v5771 = vsub.s32 %v5768, %v5770
      %v5772 = vrot.slane %v5758, %v5771
      %v5773 = vcombine.low %v5765, %v5772
      %v5774 = vcombine.low %v3675, %v3682
      %v5776 = vunpack.c.l.s4 1966171168
      %v5777 = vunpack.c.0.s8 %v5776
      %v5778 = vlaneseq
      %v5779 = vshrl.u32 %v5778, 7
      %v5780 = vsub.s32 %v5777, %v5779
      %v5781 = vrot.slane %v5774, %v5780
      %v5782 = vcombine.low %v4078, %v5781
      %v5783 = vcombine.low %v3724, %v3731
      %v5785 = vunpack.c.l.s4 1966171168
      %v5786 = vunpack.c.0.s8 %v5785
      %v5787 = vlaneseq
      %v5788 = vshrl.u32 %v5787, 7
      %v5789 = vsub.s32 %v5786, %v5788
      %v5790 = vrot.slane %v5783, %v5789
      %v5791 = vcombine.low %v4103, %v5790
      %v5792 = vcombine.low %v3773, %v3780
      %v5794 = vunpack.c.l.s4 1966171168
      %v5795 = vunpack.c.0.s8 %v5794
      %v5796 = vlaneseq
      %v5797 = vshrl.u32 %v5796, 7
      %v5798 = vsub.s32 %v5795, %v5797
      %v5799 = vrot.slane %v5792, %v5798
      %v5800 = vcombine.low %v4128, %v5799
      %v5801 = vcombine.low %v3787, %v3812
      %v5803 = vunpack.c.l.s4 1966171168
      %v5804 = vunpack.c.0.s8 %v5803
      %v5805 = vlaneseq
      %v5806 = vshrl.u32 %v5805, 7
      %v5807 = vsub.s32 %v5804, %v5806
      %v5808 = vrot.slane %v5801, %v5807
      %v5809 = vcombine.low %v5808, %v4176
      %v5810 = vcombine.low %v1820, %v1916
      %v5811 = vcombine.low %v1924, %v1926
      %v5812 = vcombine.low %v1909, %v1923
      %v5814 = vunpack.c.l.s4 1966171168
      %v5815 = vunpack.c.0.s8 %v5814
      %v5816 = vlaneseq
      %v5817 = vshrl.u32 %v5816, 7
      %v5818 = vsub.s32 %v5815, %v5817
      %v5819 = vrot.slane %v5810, %v5818
      %v5821 = vunpack.c.l.s4 1966171168
      %v5822 = vunpack.c.0.s8 %v5821
      %v5823 = vlaneseq
      %v5824 = vshrl.u32 %v5823, 7
      %v5825 = vsub.s32 %v5822, %v5824
      %v5826 = vrot.slane %v5811, %v5825
      %v5828 = vunpack.c.l.s4 1966171168
      %v5829 = vunpack.c.0.s8 %v5828
      %v5830 = vlaneseq
      %v5831 = vshrl.u32 %v5830, 7
      %v5832 = vsub.s32 %v5829, %v5831
      %v5833 = vrot.slane %v5812, %v5832
      %v5834 = vcombine.low %v4185, %v5819
      %v5835 = vcombine.low %v5826, %v5833
      %v5837 = vunpack.c.l.s4 1966171168
      %v5838 = vunpack.c.0.s8 %v5837
      %v5839 = vlaneseq
      %v5840 = vshrl.u32 %v5839, 7
      %v5841 = vsub.s32 %v5838, %v5840
      %v5842 = vrot.slane %v5834, %v5841
      %v5844 = vunpack.c.l.s4 1966171168
      %v5845 = vunpack.c.0.s8 %v5844
      %v5846 = vlaneseq
      %v5847 = vshrl.u32 %v5846, 7
      %v5848 = vsub.s32 %v5845, %v5847
      %v5849 = vrot.slane %v5835, %v5848
      %v5850 = vcombine.low %v5842, %v5849
      %v5851 = vcombine.low %v1925, %v1927
      %v5853 = vunpack.c.l.s4 1966171168
      %v5854 = vunpack.c.0.s8 %v5853
      %v5855 = vlaneseq
      %v5856 = vshrl.u32 %v5855, 7
      %v5857 = vsub.s32 %v5854, %v5856
      %v5858 = vrot.slane %v5851, %v5857
      %v5860 = vunpack.c.l.s4 1966171168
      %v5861 = vunpack.c.0.s8 %v5860
      %v5862 = vlaneseq
      %v5863 = vshrl.u32 %v5862, 7
      %v5864 = vsub.s32 %v5861, %v5863
      %v5865 = vrot.slane %v5858, %v5864
      %5866 = vrot.lane.b32.xlu0 %v5711, 32
      %v5867 = vpop.permute.xlu0 %5866
      %5868 = vrot.lane.b32.xlu0 %v5720, 32
      %v5869 = vpop.permute.xlu0 %5868
      %5870 = vrot.lane.b32.xlu0 %v5729, 32
      %v5871 = vpop.permute.xlu0 %5870
      %5872 = vrot.lane.b32.xlu0 %v5738, 32
      %v5873 = vpop.permute.xlu0 %5872
      %5874 = vrot.lane.b32.xlu0 %v5747, 32
      %v5875 = vpop.permute.xlu0 %5874
      %5876 = vrot.lane.b32.xlu0 %v5756, 32
      %v5877 = vpop.permute.xlu0 %5876
      %5878 = vrot.lane.b32.xlu0 %v5773, 32
      %v5879 = vpop.permute.xlu0 %5878
      %5880 = vrot.lane.b32.xlu0 %v5782, 32
      %v5881 = vpop.permute.xlu0 %5880
      %5882 = vrot.lane.b32.xlu0 %v5791, 32
      %v5883 = vpop.permute.xlu0 %5882
      %5884 = vrot.lane.b32.xlu0 %v5800, 32
      %v5885 = vpop.permute.xlu0 %5884
      %5886 = vrot.lane.b32.xlu0 %v5809, 32
      %v5887 = vpop.permute.xlu0 %5886
      %5888 = vrot.lane.b32.xlu0 %v5850, 32
      %v5889 = vpop.permute.xlu0 %5888
      %5890 = vrot.lane.b32.xlu0 %v5865, 32
      %v5891 = vpop.permute.xlu0 %5890
      %vm5892 = vcmask 31744
      %v5895 = vsel %vm5892, %v2033, %v3192
      %v5898 = vsel %vm5892, %v2082, %v3194
      %v5901 = vsel %vm5892, %v2131, %v3196
      %v5904 = vsel %vm5892, %v2180, %v3198
      %v5907 = vsel %vm5892, %v2229, %v3200
      %v5910 = vsel %vm5892, %v2278, %v3202
      %v5913 = vsel %vm5892, %v2327, %v3204
      %v5916 = vsel %vm5892, %v2376, %v3206
      %v5919 = vsel %vm5892, %v2425, %v3208
      %v5922 = vsel %vm5892, %v2474, %v3210
      %v5925 = vsel %vm5892, %v2523, %v3212
      %v5928 = vsel %vm5892, %v2572, %v3214
      %v5931 = vsel %vm5892, %v2587, %v3216
      %vm5932 = vcmask 64512
      %v5934 = vsel %vm5932, %v5895, %v3821
      %v5936 = vsel %vm5932, %v5898, %v3823
      %v5938 = vsel %vm5932, %v5901, %v3825
      %v5940 = vsel %vm5932, %v5904, %v3827
      %v5942 = vsel %vm5932, %v5907, %v3829
      %v5944 = vsel %vm5932, %v5910, %v3831
      %v5946 = vsel %vm5932, %v5913, %v3833
      %v5948 = vsel %vm5932, %v5916, %v3835
      %v5950 = vsel %vm5932, %v5919, %v3837
      %v5952 = vsel %vm5932, %v5922, %v3839
      %v5954 = vsel %vm5932, %v5925, %v3841
      %v5956 = vsel %vm5932, %v5928, %v3843
      %v5958 = vsel %vm5932, %v5931, %v3845
      %vm5959 = vcmask 97280
      %v5961 = vsel %vm5959, %v5934, %v4194
      %v5963 = vsel %vm5959, %v5936, %v4196
      %v5965 = vsel %vm5959, %v5938, %v4198
      %v5967 = vsel %vm5959, %v5940, %v4200
      %v5969 = vsel %vm5959, %v5942, %v4202
      %v5971 = vsel %vm5959, %v5944, %v4204
      %v5973 = vsel %vm5959, %v5946, %v4206
      %v5975 = vsel %vm5959, %v5948, %v4208
      %v5977 = vsel %vm5959, %v5950, %v4210
      %v5979 = vsel %vm5959, %v5952, %v4212
      %v5981 = vsel %vm5959, %v5954, %v4214
      %v5983 = vsel %vm5959, %v5956, %v4216
      %v5985 = vsel %vm5959, %v5958, %v4218
      %vm5986 = vcmask 130048
      %v5988 = vsel %vm5986, %v5961, %v4823
      %v5990 = vsel %vm5986, %v5963, %v4825
      %v5992 = vsel %vm5986, %v5965, %v4827
      %v5994 = vsel %vm5986, %v5967, %v4829
      %v5996 = vsel %vm5986, %v5969, %v4831
      %v5998 = vsel %vm5986, %v5971, %v4833
      %v6000 = vsel %vm5986, %v5973, %v4835
      %v6002 = vsel %vm5986, %v5975, %v4837
      %v6004 = vsel %vm5986, %v5977, %v4839
      %v6006 = vsel %vm5986, %v5979, %v4841
      %v6008 = vsel %vm5986, %v5981, %v4843
      %v6010 = vsel %vm5986, %v5983, %v4845
      %v6012 = vsel %vm5986, %v5985, %v4847
      %vm6013 = vcmask 162816
      %v6015 = vsel %vm6013, %v5988, %v5108
      %v6017 = vsel %vm6013, %v5990, %v5110
      %v6019 = vsel %vm6013, %v5992, %v5112
      %v6021 = vsel %vm6013, %v5994, %v5114
      %v6023 = vsel %vm6013, %v5996, %v5116
      %v6025 = vsel %vm6013, %v5998, %v5118
      %v6027 = vsel %vm6013, %v6000, %v5120
      %v6029 = vsel %vm6013, %v6002, %v5122
      %v6031 = vsel %vm6013, %v6004, %v5124
      %v6033 = vsel %vm6013, %v6006, %v5126
      %v6035 = vsel %vm6013, %v6008, %v5128
      %v6037 = vsel %vm6013, %v6010, %v5130
      %v6039 = vsel %vm6013, %v6012, %v5132
      %vm6040 = vcmask 195584
      %v6042 = vsel %vm6040, %v6015, %v5385
      %v6044 = vsel %vm6040, %v6017, %v5387
      %v6046 = vsel %vm6040, %v6019, %v5389
      %v6048 = vsel %vm6040, %v6021, %v5391
      %v6050 = vsel %vm6040, %v6023, %v5393
      %v6052 = vsel %vm6040, %v6025, %v5395
      %v6054 = vsel %vm6040, %v6027, %v5397
      %v6056 = vsel %vm6040, %v6029, %v5399
      %v6058 = vsel %vm6040, %v6031, %v5401
      %v6060 = vsel %vm6040, %v6033, %v5403
      %v6062 = vsel %vm6040, %v6035, %v5405
      %v6064 = vsel %vm6040, %v6037, %v5407
      %v6066 = vsel %vm6040, %v6039, %v5409
      %vm6067 = vcmask 228352
      %v6069 = vsel %vm6067, %v6042, %v5678
      %v6071 = vsel %vm6067, %v6044, %v5680
      %v6073 = vsel %vm6067, %v6046, %v5682
      %v6075 = vsel %vm6067, %v6048, %v5684
      %v6077 = vsel %vm6067, %v6050, %v5686
      %v6079 = vsel %vm6067, %v6052, %v5688
      %v6081 = vsel %vm6067, %v6054, %v5690
      %v6083 = vsel %vm6067, %v6056, %v5692
      %v6085 = vsel %vm6067, %v6058, %v5694
      %v6087 = vsel %vm6067, %v6060, %v5696
      %v6089 = vsel %vm6067, %v6062, %v5698
      %v6091 = vsel %vm6067, %v6064, %v5700
      %v6093 = vsel %vm6067, %v6066, %v5702
      %vm6094 = vcmask 261120
      %v6096 = vsel %vm6094, %v6069, %v5867
      %v6098 = vsel %vm6094, %v6071, %v5869
      %v6100 = vsel %vm6094, %v6073, %v5871
      %v6102 = vsel %vm6094, %v6075, %v5873
      %v6104 = vsel %vm6094, %v6077, %v5875
      %v6106 = vsel %vm6094, %v6079, %v5877
      %v6108 = vsel %vm6094, %v6081, %v5879
      %v6110 = vsel %vm6094, %v6083, %v5881
      %v6112 = vsel %vm6094, %v6085, %v5883
      %v6114 = vsel %vm6094, %v6087, %v5885
      %v6116 = vsel %vm6094, %v6089, %v5887
      %v6118 = vsel %vm6094, %v6091, %v5889
      %v6120 = vsel %vm6094, %v6093, %v5891
      %v6121 = vld [vmem:[%s1] sm:$0xf]
      %v6122 = vld [vmem:[%s1 + $0x4] sm:$0xf]
      %v6123 = vld [vmem:[%s1 + $0x8] sm:$0xf]
      %v6124 = vld [vmem:[%s1 + $0xc] sm:$0xf]
      %v6125 = vld [vmem:[%s1 + $0x10] sm:$0x3]
      %v6126 = vld [vmem:[%s2] sm:$0x1]
      %v6128 = vlaneseq
      %v6129 = vshrl.u32 %v6128, 7
      %v6130 = vsub.s32 0, %v6129
      %v6131 = vrot.slane %v6126, %v6130
      %v6138 = vunpack.c.l.b16 %v6121
      %v6139 = vunpack.c.l.b16 %v6122
      %v6140 = vunpack.c.l.b16 %v6123
      %v6141 = vunpack.c.l.b16 %v6124
      %v6142 = vunpack.c.l.b16 %v6125
      %v6143 = vpack.c.b16 %v6139, %v6138
      %v6144 = vpack.c.b16 %v6141, %v6140
      %v6145 = vpack.c.b16 %v6142, %v6142
      %vm6148 = vcmask 293888
      %v6149 = vsel %vm6148, %v6096, 0
      %v6151 = vsel %vm6148, %v6098, 0
      %v6153 = vsel %vm6148, %v6100, 0
      %v6155 = vsel %vm6148, %v6102, 0
      %v6157 = vsel %vm6148, %v6104, 0
      %v6159 = vsel %vm6148, %v6106, 0
      %v6161 = vsel %vm6148, %v6108, 0
      %v6163 = vsel %vm6148, %v6110, 0
      %v6165 = vsel %vm6148, %v6112, 0
      %v6167 = vsel %vm6148, %v6114, 0
      %v6169 = vsel %vm6148, %v6116, 0
      %v6171 = vsel %vm6148, %v6118, 0
      %v6173 = vsel %vm6148, %v6120, 0
      %vm6175 = vcmask 1041408
      %v6177 = vsel %vm6175, %v6145, 0
      %6179 = vmatprep.subr.bf16.mxu0 0
      %6180 = vmatpush1.bf16.msra.mxu0 0
      %6181 = vmatprep.subr.bf16.mxu0 0
      %6182 = vmatpush1.bf16.msra.mxu0 0
      %6183 = vmatprep.subr.bf16.mxu0 0
      %6184 = vmatpush1.bf16.msra.mxu0 0
      %6185 = vmatprep.subr.bf16.mxu0 0
      %6186 = vmatpush1.bf16.msra.mxu0 0
      %6187 = vmatprep.subr.bf16.mxu0 0
      %6188 = vmatpush1.bf16.msra.mxu0 0
      %6189 = vmatprep.subr.bf16.mxu0 0
      %6190 = vmatpush1.bf16.msra.mxu0 %v6177
      %6191 = vmatprep.subr.bf16.mxu0 0
      %6192 = vmatpush1.bf16.msra.mxu0 %v6144
      %6193 = vmatprep.subr.bf16.mxu0 0
      %6194 = vmatpush1.bf16.msra.mxu0 %v6143
      %6195 = vmatprep.subr.bf16.mxu0 0
      %6196 = vmatpush2.bf16.msra.mxu0 0
      %6197 = vmatprep.subr.bf16.mxu0 0
      %6198 = vmatpush2.bf16.msra.mxu0 0
      %6199 = vmatprep.subr.bf16.mxu0 0
      %6200 = vmatpush2.bf16.msra.mxu0 0
      %6201 = vmatprep.subr.bf16.mxu0 0
      %6202 = vmatpush2.bf16.msra.mxu0 0
      %6203 = vmatprep.subr.bf16.mxu0 0
      %6204 = vmatpush2.bf16.msra.mxu0 0
      %6205 = vmatprep.subr.bf16.mxu0 0
      %6206 = vmatpush2.bf16.msra.mxu0 0
      %6207 = vmatprep.subr.bf16.mxu0 0
      %6208 = vmatpush2.bf16.msra.mxu0 0
      %6209 = vmatprep.subr.bf16.mxu0 0
      %6210 = vmatpush2.bf16.msra.mxu0 0
      %6211 = vmatprep.mubr.bf16.mxu0 0
      %6212 = vmatmul.mubr.bf16.gmra.mxu0 %v6149
      %v6213 = vpop.f32.mrf.mxu0
      %v6214 = vadd.f32 %v6131, %v6213
      %v6215 = vpop.f32.mrf.mxu0
      %v6216 = vpop.f32.mrf.mxu0
      %v6217 = vadd.f32 %v6131, %v6216
      %v6218 = vpop.f32.mrf.mxu0
      %6219 = vmatprep.mubr.bf16.mxu0 0
      %6220 = vmatmul.mubr.bf16.gmra.mxu0 %v6151
      %v6221 = vpop.f32.mrf.mxu0
      %v6222 = vadd.f32 %v6131, %v6221
      %v6223 = vpop.f32.mrf.mxu0
      %v6224 = vpop.f32.mrf.mxu0
      %v6225 = vadd.f32 %v6131, %v6224
      %v6226 = vpop.f32.mrf.mxu0
      %6227 = vmatprep.mubr.bf16.mxu0 0
      %6228 = vmatmul.mubr.bf16.gmra.mxu0 %v6153
      %v6229 = vpop.f32.mrf.mxu0
      %v6230 = vadd.f32 %v6131, %v6229
      %v6231 = vpop.f32.mrf.mxu0
      %v6232 = vpop.f32.mrf.mxu0
      %v6233 = vadd.f32 %v6131, %v6232
      %v6234 = vpop.f32.mrf.mxu0
      %6235 = vmatprep.mubr.bf16.mxu0 0
      %6236 = vmatmul.mubr.bf16.gmra.mxu0 %v6155
      %v6237 = vpop.f32.mrf.mxu0
      %v6238 = vadd.f32 %v6131, %v6237
      %v6239 = vpop.f32.mrf.mxu0
      %v6240 = vpop.f32.mrf.mxu0
      %v6241 = vadd.f32 %v6131, %v6240
      %v6242 = vpop.f32.mrf.mxu0
      %6243 = vmatprep.mubr.bf16.mxu0 0
      %6244 = vmatmul.mubr.bf16.gmra.mxu0 %v6157
      %v6245 = vpop.f32.mrf.mxu0
      %v6246 = vadd.f32 %v6131, %v6245
      %v6247 = vpop.f32.mrf.mxu0
      %v6248 = vpop.f32.mrf.mxu0
      %v6249 = vadd.f32 %v6131, %v6248
      %v6250 = vpop.f32.mrf.mxu0
      %6251 = vmatprep.mubr.bf16.mxu0 0
      %6252 = vmatmul.mubr.bf16.gmra.mxu0 %v6159
      %v6253 = vpop.f32.mrf.mxu0
      %v6254 = vadd.f32 %v6131, %v6253
      %v6255 = vpop.f32.mrf.mxu0
      %v6256 = vpop.f32.mrf.mxu0
      %v6257 = vadd.f32 %v6131, %v6256
      %v6258 = vpop.f32.mrf.mxu0
      %6259 = vmatprep.mubr.bf16.mxu0 0
      %6260 = vmatmul.mubr.bf16.gmra.mxu0 %v6161
      %v6261 = vpop.f32.mrf.mxu0
      %v6262 = vadd.f32 %v6131, %v6261
      %v6263 = vpop.f32.mrf.mxu0
      %v6264 = vpop.f32.mrf.mxu0
      %v6265 = vadd.f32 %v6131, %v6264
      %v6266 = vpop.f32.mrf.mxu0
      %6267 = vmatprep.mubr.bf16.mxu0 0
      %6268 = vmatmul.mubr.bf16.gmra.mxu0 %v6163
      %v6269 = vpop.f32.mrf.mxu0
      %v6270 = vadd.f32 %v6131, %v6269
      %v6271 = vpop.f32.mrf.mxu0
      %v6272 = vpop.f32.mrf.mxu0
      %v6273 = vadd.f32 %v6131, %v6272
      %v6274 = vpop.f32.mrf.mxu0
      %6275 = vmatprep.mubr.bf16.mxu0 0
      %6276 = vmatmul.mubr.bf16.gmra.mxu0 %v6165
      %v6277 = vpop.f32.mrf.mxu0
      %v6278 = vadd.f32 %v6131, %v6277
      %v6279 = vpop.f32.mrf.mxu0
      %v6280 = vpop.f32.mrf.mxu0
      %v6281 = vadd.f32 %v6131, %v6280
      %v6282 = vpop.f32.mrf.mxu0
      %6283 = vmatprep.mubr.bf16.mxu0 0
      %6284 = vmatmul.mubr.bf16.gmra.mxu0 %v6167
      %v6285 = vpop.f32.mrf.mxu0
      %v6286 = vadd.f32 %v6131, %v6285
      %v6287 = vpop.f32.mrf.mxu0
      %v6288 = vpop.f32.mrf.mxu0
      %v6289 = vadd.f32 %v6131, %v6288
      %v6290 = vpop.f32.mrf.mxu0
      %6291 = vmatprep.mubr.bf16.mxu0 0
      %6292 = vmatmul.mubr.bf16.gmra.mxu0 %v6169
      %v6293 = vpop.f32.mrf.mxu0
      %v6294 = vadd.f32 %v6131, %v6293
      %v6295 = vpop.f32.mrf.mxu0
      %v6296 = vpop.f32.mrf.mxu0
      %v6297 = vadd.f32 %v6131, %v6296
      %v6298 = vpop.f32.mrf.mxu0
      %6299 = vmatprep.mubr.bf16.mxu0 0
      %6300 = vmatmul.mubr.bf16.gmra.mxu0 %v6171
      %v6301 = vpop.f32.mrf.mxu0
      %v6302 = vadd.f32 %v6131, %v6301
      %v6303 = vpop.f32.mrf.mxu0
      %v6304 = vpop.f32.mrf.mxu0
      %v6305 = vadd.f32 %v6131, %v6304
      %v6306 = vpop.f32.mrf.mxu0
      %6307 = vmatprep.mubr.bf16.mxu0 0
      %6308 = vmatmul.mubr.bf16.gmra.mxu0 %v6173
      %v6309 = vpop.f32.mrf.mxu0
      %v6310 = vadd.f32 %v6131, %v6309
      %v6311 = vpop.f32.mrf.mxu0
      %v6312 = vpop.f32.mrf.mxu0
      %v6313 = vpop.f32.mrf.mxu0
      %6314 = vdwg.mxu0
      %v6315 = vsel %vm5932, %v6214, 0.0
      %v6316 = vsel %vm5932, %v6217, 0.0
      %v6317 = vadd.f32 %v6315, %v6316
      %v6318 = vsel %vm5932, %v6222, 0.0
      %v6319 = vadd.f32 %v6317, %v6318
      %v6320 = vsel %vm5932, %v6225, 0.0
      %v6321 = vadd.f32 %v6319, %v6320
      %v6322 = vsel %vm5932, %v6230, 0.0
      %v6323 = vadd.f32 %v6321, %v6322
      %v6324 = vsel %vm5932, %v6233, 0.0
      %v6325 = vadd.f32 %v6323, %v6324
      %v6326 = vsel %vm5932, %v6238, 0.0
      %v6327 = vadd.f32 %v6325, %v6326
      %v6328 = vsel %vm5932, %v6241, 0.0
      %v6329 = vadd.f32 %v6327, %v6328
      %v6330 = vsel %vm5932, %v6246, 0.0
      %v6331 = vadd.f32 %v6329, %v6330
      %v6332 = vsel %vm5932, %v6249, 0.0
      %v6333 = vadd.f32 %v6331, %v6332
      %v6334 = vsel %vm5932, %v6254, 0.0
      %v6335 = vadd.f32 %v6333, %v6334
      %v6336 = vsel %vm5932, %v6257, 0.0
      %v6337 = vadd.f32 %v6335, %v6336
      %v6338 = vsel %vm5932, %v6262, 0.0
      %v6339 = vadd.f32 %v6337, %v6338
      %v6340 = vsel %vm5932, %v6265, 0.0
      %v6341 = vadd.f32 %v6339, %v6340
      %v6342 = vsel %vm5932, %v6270, 0.0
      %v6343 = vadd.f32 %v6341, %v6342
      %v6344 = vsel %vm5932, %v6273, 0.0
      %v6345 = vadd.f32 %v6343, %v6344
      %v6346 = vsel %vm5932, %v6278, 0.0
      %v6347 = vadd.f32 %v6345, %v6346
      %v6348 = vsel %vm5932, %v6281, 0.0
      %v6349 = vadd.f32 %v6347, %v6348
      %v6350 = vsel %vm5932, %v6286, 0.0
      %v6351 = vadd.f32 %v6349, %v6350
      %v6352 = vsel %vm5932, %v6289, 0.0
      %v6353 = vadd.f32 %v6351, %v6352
      %v6354 = vsel %vm5932, %v6294, 0.0
      %v6355 = vadd.f32 %v6353, %v6354
      %v6356 = vsel %vm5932, %v6297, 0.0
      %v6357 = vadd.f32 %v6355, %v6356
      %v6358 = vsel %vm5932, %v6302, 0.0
      %v6359 = vadd.f32 %v6357, %v6358
      %v6360 = vsel %vm5932, %v6305, 0.0
      %v6361 = vadd.f32 %v6359, %v6360
      %vm6362 = vcmask 60416
      %v6363 = vsel %vm6362, %v6310, 0.0
      %v6364 = vadd.f32 %v6361, %v6363
      %v6365 = vrot.slane %v6364, 4
      %v6366 = vadd.f32 %v6364, %v6365
      %v6367 = vrot.slane %v6366, 2
      %v6368 = vadd.f32 %v6366, %v6367
      %v6369 = vrot.slane %v6368, 1
      %v6370 = vadd.f32 %v6368, %v6369
      %v6371 = vmul.f32 %v6214, %v6214
      %v6372 = vmul.f32 %v6217, %v6217
      %v6373 = vmul.f32 %v6222, %v6222
      %v6374 = vmul.f32 %v6225, %v6225
      %v6375 = vmul.f32 %v6230, %v6230
      %v6376 = vmul.f32 %v6233, %v6233
      %v6377 = vmul.f32 %v6238, %v6238
      %v6378 = vmul.f32 %v6241, %v6241
      %v6379 = vmul.f32 %v6246, %v6246
      %v6380 = vmul.f32 %v6249, %v6249
      %v6381 = vmul.f32 %v6254, %v6254
      %v6382 = vmul.f32 %v6257, %v6257
      %v6383 = vmul.f32 %v6262, %v6262
      %v6384 = vmul.f32 %v6265, %v6265
      %v6385 = vmul.f32 %v6270, %v6270
      %v6386 = vmul.f32 %v6273, %v6273
      %v6387 = vmul.f32 %v6278, %v6278
      %v6388 = vmul.f32 %v6281, %v6281
      %v6389 = vmul.f32 %v6286, %v6286
      %v6390 = vmul.f32 %v6289, %v6289
      %v6391 = vmul.f32 %v6294, %v6294
      %v6392 = vmul.f32 %v6297, %v6297
      %v6393 = vmul.f32 %v6302, %v6302
      %v6394 = vmul.f32 %v6305, %v6305
      %v6395 = vmul.f32 %v6310, %v6310
      %v6396 = vsel %vm5932, %v6371, 0.0
      %v6397 = vsel %vm5932, %v6372, 0.0
      %v6398 = vadd.f32 %v6396, %v6397
      %v6399 = vsel %vm5932, %v6373, 0.0
      %v6400 = vadd.f32 %v6398, %v6399
      %v6401 = vsel %vm5932, %v6374, 0.0
      %v6402 = vadd.f32 %v6400, %v6401
      %v6403 = vsel %vm5932, %v6375, 0.0
      %v6404 = vadd.f32 %v6402, %v6403
      %v6405 = vsel %vm5932, %v6376, 0.0
      %v6406 = vadd.f32 %v6404, %v6405
      %v6407 = vsel %vm5932, %v6377, 0.0
      %v6408 = vadd.f32 %v6406, %v6407
      %v6409 = vsel %vm5932, %v6378, 0.0
      %v6410 = vadd.f32 %v6408, %v6409
      %v6411 = vsel %vm5932, %v6379, 0.0
      %v6412 = vadd.f32 %v6410, %v6411
      %v6413 = vsel %vm5932, %v6380, 0.0
      %v6414 = vadd.f32 %v6412, %v6413
      %v6415 = vsel %vm5932, %v6381, 0.0
      %v6416 = vadd.f32 %v6414, %v6415
      %v6417 = vsel %vm5932, %v6382, 0.0
      %v6418 = vadd.f32 %v6416, %v6417
      %v6419 = vsel %vm5932, %v6383, 0.0
      %v6420 = vadd.f32 %v6418, %v6419
      %v6421 = vsel %vm5932, %v6384, 0.0
      %v6422 = vadd.f32 %v6420, %v6421
      %v6423 = vsel %vm5932, %v6385, 0.0
      %v6424 = vadd.f32 %v6422, %v6423
      %v6425 = vsel %vm5932, %v6386, 0.0
      %v6426 = vadd.f32 %v6424, %v6425
      %v6427 = vsel %vm5932, %v6387, 0.0
      %v6428 = vadd.f32 %v6426, %v6427
      %v6429 = vsel %vm5932, %v6388, 0.0
      %v6430 = vadd.f32 %v6428, %v6429
      %v6431 = vsel %vm5932, %v6389, 0.0
      %v6432 = vadd.f32 %v6430, %v6431
      %v6433 = vsel %vm5932, %v6390, 0.0
      %v6434 = vadd.f32 %v6432, %v6433
      %v6435 = vsel %vm5932, %v6391, 0.0
      %v6436 = vadd.f32 %v6434, %v6435
      %v6437 = vsel %vm5932, %v6392, 0.0
      %v6438 = vadd.f32 %v6436, %v6437
      %v6439 = vsel %vm5932, %v6393, 0.0
      %v6440 = vadd.f32 %v6438, %v6439
      %v6441 = vsel %vm5932, %v6394, 0.0
      %v6442 = vadd.f32 %v6440, %v6441
      %v6443 = vsel %vm6362, %v6395, 0.0
      %v6444 = vadd.f32 %v6442, %v6443
      %v6445 = vrot.slane %v6444, 4
      %v6446 = vadd.f32 %v6444, %v6445
      %v6447 = vrot.slane %v6446, 2
      %v6448 = vadd.f32 %v6446, %v6447
      %v6449 = vrot.slane %v6448, 1
      %v6450 = vadd.f32 %v6448, %v6449
      %vm6451 = vcmask 1040384
      %v6452 = vsel %vm6451, %v6370, %v6450
      %vm6453 = vcmask 58368
      %6454 = vst.msk [vmem:[%s208] sm:$0x3] %vm6453, %v6452
      %v6480 = vcombine.high %v6214, %v6214
      %v6482 = vunpack.c.l.s4 1983009808
      %v6483 = vunpack.c.0.s8 %v6482
      %v6484 = vlaneseq
      %v6485 = vshrl.u32 %v6484, 7
      %v6486 = vsub.s32 %v6483, %v6485
      %v6487 = vrot.slane %v6214, %v6486
      %v6489 = vunpack.c.l.s4 1983009808
      %v6490 = vunpack.c.0.s8 %v6489
      %v6491 = vlaneseq
      %v6492 = vshrl.u32 %v6491, 7
      %v6493 = vsub.s32 %v6490, %v6492
      %v6494 = vrot.slane %v6480, %v6493
      %v6495 = vcombine.high %v6487, %v6487
      %v6496 = vcombine.high %v6494, %v6494
      %v6497 = vcombine.high %v6217, %v6217
      %v6499 = vunpack.c.l.s4 1983009808
      %v6500 = vunpack.c.0.s8 %v6499
      %v6501 = vlaneseq
      %v6502 = vshrl.u32 %v6501, 7
      %v6503 = vsub.s32 %v6500, %v6502
      %v6504 = vrot.slane %v6217, %v6503
      %v6506 = vunpack.c.l.s4 1983009808
      %v6507 = vunpack.c.0.s8 %v6506
      %v6508 = vlaneseq
      %v6509 = vshrl.u32 %v6508, 7
      %v6510 = vsub.s32 %v6507, %v6509
      %v6511 = vrot.slane %v6497, %v6510
      %v6512 = vcombine.high %v6504, %v6504
      %v6513 = vcombine.high %v6511, %v6511
      %v6514 = vcombine.high %v6222, %v6222
      %v6516 = vunpack.c.l.s4 1983009808
      %v6517 = vunpack.c.0.s8 %v6516
      %v6518 = vlaneseq
      %v6519 = vshrl.u32 %v6518, 7
      %v6520 = vsub.s32 %v6517, %v6519
      %v6521 = vrot.slane %v6222, %v6520
      %v6523 = vunpack.c.l.s4 1983009808
      %v6524 = vunpack.c.0.s8 %v6523
      %v6525 = vlaneseq
      %v6526 = vshrl.u32 %v6525, 7
      %v6527 = vsub.s32 %v6524, %v6526
      %v6528 = vrot.slane %v6514, %v6527
      %v6529 = vcombine.high %v6521, %v6521
      %v6530 = vcombine.high %v6528, %v6528
      %v6531 = vcombine.high %v6225, %v6225
      %v6533 = vunpack.c.l.s4 1983009808
      %v6534 = vunpack.c.0.s8 %v6533
      %v6535 = vlaneseq
      %v6536 = vshrl.u32 %v6535, 7
      %v6537 = vsub.s32 %v6534, %v6536
      %v6538 = vrot.slane %v6225, %v6537
      %v6540 = vunpack.c.l.s4 1983009808
      %v6541 = vunpack.c.0.s8 %v6540
      %v6542 = vlaneseq
      %v6543 = vshrl.u32 %v6542, 7
      %v6544 = vsub.s32 %v6541, %v6543
      %v6545 = vrot.slane %v6531, %v6544
      %v6546 = vcombine.high %v6538, %v6538
      %v6547 = vcombine.high %v6545, %v6545
      %v6548 = vcombine.high %v6230, %v6230
      %v6550 = vunpack.c.l.s4 1983009808
      %v6551 = vunpack.c.0.s8 %v6550
      %v6552 = vlaneseq
      %v6553 = vshrl.u32 %v6552, 7
      %v6554 = vsub.s32 %v6551, %v6553
      %v6555 = vrot.slane %v6230, %v6554
      %v6557 = vunpack.c.l.s4 1983009808
      %v6558 = vunpack.c.0.s8 %v6557
      %v6559 = vlaneseq
      %v6560 = vshrl.u32 %v6559, 7
      %v6561 = vsub.s32 %v6558, %v6560
      %v6562 = vrot.slane %v6548, %v6561
      %v6563 = vcombine.high %v6555, %v6555
      %v6564 = vcombine.high %v6562, %v6562
      %v6565 = vcombine.high %v6233, %v6233
      %v6567 = vunpack.c.l.s4 1983009808
      %v6568 = vunpack.c.0.s8 %v6567
      %v6569 = vlaneseq
      %v6570 = vshrl.u32 %v6569, 7
      %v6571 = vsub.s32 %v6568, %v6570
      %v6572 = vrot.slane %v6233, %v6571
      %v6574 = vunpack.c.l.s4 1983009808
      %v6575 = vunpack.c.0.s8 %v6574
      %v6576 = vlaneseq
      %v6577 = vshrl.u32 %v6576, 7
      %v6578 = vsub.s32 %v6575, %v6577
      %v6579 = vrot.slane %v6565, %v6578
      %v6580 = vcombine.high %v6572, %v6572
      %v6581 = vcombine.high %v6579, %v6579
      %v6582 = vcombine.high %v6238, %v6238
      %v6584 = vunpack.c.l.s4 1983009808
      %v6585 = vunpack.c.0.s8 %v6584
      %v6586 = vlaneseq
      %v6587 = vshrl.u32 %v6586, 7
      %v6588 = vsub.s32 %v6585, %v6587
      %v6589 = vrot.slane %v6238, %v6588
      %v6591 = vunpack.c.l.s4 1983009808
      %v6592 = vunpack.c.0.s8 %v6591
      %v6593 = vlaneseq
      %v6594 = vshrl.u32 %v6593, 7
      %v6595 = vsub.s32 %v6592, %v6594
      %v6596 = vrot.slane %v6582, %v6595
      %v6597 = vcombine.high %v6589, %v6589
      %v6598 = vcombine.high %v6596, %v6596
      %v6599 = vcombine.high %v6241, %v6241
      %v6601 = vunpack.c.l.s4 1983009808
      %v6602 = vunpack.c.0.s8 %v6601
      %v6603 = vlaneseq
      %v6604 = vshrl.u32 %v6603, 7
      %v6605 = vsub.s32 %v6602, %v6604
      %v6606 = vrot.slane %v6241, %v6605
      %v6608 = vunpack.c.l.s4 1983009808
      %v6609 = vunpack.c.0.s8 %v6608
      %v6610 = vlaneseq
      %v6611 = vshrl.u32 %v6610, 7
      %v6612 = vsub.s32 %v6609, %v6611
      %v6613 = vrot.slane %v6599, %v6612
      %v6614 = vcombine.high %v6606, %v6606
      %v6615 = vcombine.high %v6613, %v6613
      %v6616 = vcombine.high %v6246, %v6246
      %v6618 = vunpack.c.l.s4 1983009808
      %v6619 = vunpack.c.0.s8 %v6618
      %v6620 = vlaneseq
      %v6621 = vshrl.u32 %v6620, 7
      %v6622 = vsub.s32 %v6619, %v6621
      %v6623 = vrot.slane %v6246, %v6622
      %v6625 = vunpack.c.l.s4 1983009808
      %v6626 = vunpack.c.0.s8 %v6625
      %v6627 = vlaneseq
      %v6628 = vshrl.u32 %v6627, 7
      %v6629 = vsub.s32 %v6626, %v6628
      %v6630 = vrot.slane %v6616, %v6629
      %v6631 = vcombine.high %v6623, %v6623
      %v6632 = vcombine.high %v6630, %v6630
      %v6633 = vcombine.high %v6249, %v6249
      %v6635 = vunpack.c.l.s4 1983009808
      %v6636 = vunpack.c.0.s8 %v6635
      %v6637 = vlaneseq
      %v6638 = vshrl.u32 %v6637, 7
      %v6639 = vsub.s32 %v6636, %v6638
      %v6640 = vrot.slane %v6249, %v6639
      %v6642 = vunpack.c.l.s4 1983009808
      %v6643 = vunpack.c.0.s8 %v6642
      %v6644 = vlaneseq
      %v6645 = vshrl.u32 %v6644, 7
      %v6646 = vsub.s32 %v6643, %v6645
      %v6647 = vrot.slane %v6633, %v6646
      %v6648 = vcombine.high %v6640, %v6640
      %v6649 = vcombine.high %v6647, %v6647
      %v6650 = vcombine.high %v6254, %v6254
      %v6652 = vunpack.c.l.s4 1983009808
      %v6653 = vunpack.c.0.s8 %v6652
      %v6654 = vlaneseq
      %v6655 = vshrl.u32 %v6654, 7
      %v6656 = vsub.s32 %v6653, %v6655
      %v6657 = vrot.slane %v6254, %v6656
      %v6659 = vunpack.c.l.s4 1983009808
      %v6660 = vunpack.c.0.s8 %v6659
      %v6661 = vlaneseq
      %v6662 = vshrl.u32 %v6661, 7
      %v6663 = vsub.s32 %v6660, %v6662
      %v6664 = vrot.slane %v6650, %v6663
      %v6665 = vcombine.high %v6657, %v6657
      %v6666 = vcombine.high %v6664, %v6664
      %v6667 = vcombine.high %v6257, %v6257
      %v6669 = vunpack.c.l.s4 1983009808
      %v6670 = vunpack.c.0.s8 %v6669
      %v6671 = vlaneseq
      %v6672 = vshrl.u32 %v6671, 7
      %v6673 = vsub.s32 %v6670, %v6672
      %v6674 = vrot.slane %v6257, %v6673
      %v6676 = vunpack.c.l.s4 1983009808
      %v6677 = vunpack.c.0.s8 %v6676
      %v6678 = vlaneseq
      %v6679 = vshrl.u32 %v6678, 7
      %v6680 = vsub.s32 %v6677, %v6679
      %v6681 = vrot.slane %v6667, %v6680
      %v6682 = vcombine.high %v6674, %v6674
      %v6683 = vcombine.high %v6681, %v6681
      %v6684 = vcombine.high %v6262, %v6262
      %v6686 = vunpack.c.l.s4 1983009808
      %v6687 = vunpack.c.0.s8 %v6686
      %v6688 = vlaneseq
      %v6689 = vshrl.u32 %v6688, 7
      %v6690 = vsub.s32 %v6687, %v6689
      %v6691 = vrot.slane %v6262, %v6690
      %v6693 = vunpack.c.l.s4 1983009808
      %v6694 = vunpack.c.0.s8 %v6693
      %v6695 = vlaneseq
      %v6696 = vshrl.u32 %v6695, 7
      %v6697 = vsub.s32 %v6694, %v6696
      %v6698 = vrot.slane %v6684, %v6697
      %v6699 = vcombine.high %v6691, %v6691
      %v6700 = vcombine.high %v6698, %v6698
      %v6701 = vcombine.high %v6265, %v6265
      %v6703 = vunpack.c.l.s4 1983009808
      %v6704 = vunpack.c.0.s8 %v6703
      %v6705 = vlaneseq
      %v6706 = vshrl.u32 %v6705, 7
      %v6707 = vsub.s32 %v6704, %v6706
      %v6708 = vrot.slane %v6265, %v6707
      %v6710 = vunpack.c.l.s4 1983009808
      %v6711 = vunpack.c.0.s8 %v6710
      %v6712 = vlaneseq
      %v6713 = vshrl.u32 %v6712, 7
      %v6714 = vsub.s32 %v6711, %v6713
      %v6715 = vrot.slane %v6701, %v6714
      %v6716 = vcombine.high %v6708, %v6708
      %v6717 = vcombine.high %v6715, %v6715
      %v6718 = vcombine.high %v6270, %v6270
      %v6720 = vunpack.c.l.s4 1983009808
      %v6721 = vunpack.c.0.s8 %v6720
      %v6722 = vlaneseq
      %v6723 = vshrl.u32 %v6722, 7
      %v6724 = vsub.s32 %v6721, %v6723
      %v6725 = vrot.slane %v6270, %v6724
      %v6727 = vunpack.c.l.s4 1983009808
      %v6728 = vunpack.c.0.s8 %v6727
      %v6729 = vlaneseq
      %v6730 = vshrl.u32 %v6729, 7
      %v6731 = vsub.s32 %v6728, %v6730
      %v6732 = vrot.slane %v6718, %v6731
      %v6733 = vcombine.high %v6725, %v6725
      %v6734 = vcombine.high %v6732, %v6732
      %v6735 = vcombine.high %v6273, %v6273
      %v6737 = vunpack.c.l.s4 1983009808
      %v6738 = vunpack.c.0.s8 %v6737
      %v6739 = vlaneseq
      %v6740 = vshrl.u32 %v6739, 7
      %v6741 = vsub.s32 %v6738, %v6740
      %v6742 = vrot.slane %v6273, %v6741
      %v6744 = vunpack.c.l.s4 1983009808
      %v6745 = vunpack.c.0.s8 %v6744
      %v6746 = vlaneseq
      %v6747 = vshrl.u32 %v6746, 7
      %v6748 = vsub.s32 %v6745, %v6747
      %v6749 = vrot.slane %v6735, %v6748
      %v6750 = vcombine.high %v6742, %v6742
      %v6751 = vcombine.high %v6749, %v6749
      %v6752 = vcombine.high %v6278, %v6278
      %v6754 = vunpack.c.l.s4 1983009808
      %v6755 = vunpack.c.0.s8 %v6754
      %v6756 = vlaneseq
      %v6757 = vshrl.u32 %v6756, 7
      %v6758 = vsub.s32 %v6755, %v6757
      %v6759 = vrot.slane %v6278, %v6758
      %v6761 = vunpack.c.l.s4 1983009808
      %v6762 = vunpack.c.0.s8 %v6761
      %v6763 = vlaneseq
      %v6764 = vshrl.u32 %v6763, 7
      %v6765 = vsub.s32 %v6762, %v6764
      %v6766 = vrot.slane %v6752, %v6765
      %v6767 = vcombine.high %v6759, %v6759
      %v6768 = vcombine.high %v6766, %v6766
      %v6769 = vcombine.high %v6281, %v6281
      %v6771 = vunpack.c.l.s4 1983009808
      %v6772 = vunpack.c.0.s8 %v6771
      %v6773 = vlaneseq
      %v6774 = vshrl.u32 %v6773, 7
      %v6775 = vsub.s32 %v6772, %v6774
      %v6776 = vrot.slane %v6281, %v6775
      %v6778 = vunpack.c.l.s4 1983009808
      %v6779 = vunpack.c.0.s8 %v6778
      %v6780 = vlaneseq
      %v6781 = vshrl.u32 %v6780, 7
      %v6782 = vsub.s32 %v6779, %v6781
      %v6783 = vrot.slane %v6769, %v6782
      %v6784 = vcombine.high %v6776, %v6776
      %v6785 = vcombine.high %v6783, %v6783
      %v6786 = vcombine.high %v6286, %v6286
      %v6788 = vunpack.c.l.s4 1983009808
      %v6789 = vunpack.c.0.s8 %v6788
      %v6790 = vlaneseq
      %v6791 = vshrl.u32 %v6790, 7
      %v6792 = vsub.s32 %v6789, %v6791
      %v6793 = vrot.slane %v6286, %v6792
      %v6795 = vunpack.c.l.s4 1983009808
      %v6796 = vunpack.c.0.s8 %v6795
      %v6797 = vlaneseq
      %v6798 = vshrl.u32 %v6797, 7
      %v6799 = vsub.s32 %v6796, %v6798
      %v6800 = vrot.slane %v6786, %v6799
      %v6801 = vcombine.high %v6793, %v6793
      %v6802 = vcombine.high %v6800, %v6800
      %v6803 = vcombine.high %v6289, %v6289
      %v6805 = vunpack.c.l.s4 1983009808
      %v6806 = vunpack.c.0.s8 %v6805
      %v6807 = vlaneseq
      %v6808 = vshrl.u32 %v6807, 7
      %v6809 = vsub.s32 %v6806, %v6808
      %v6810 = vrot.slane %v6289, %v6809
      %v6812 = vunpack.c.l.s4 1983009808
      %v6813 = vunpack.c.0.s8 %v6812
      %v6814 = vlaneseq
      %v6815 = vshrl.u32 %v6814, 7
      %v6816 = vsub.s32 %v6813, %v6815
      %v6817 = vrot.slane %v6803, %v6816
      %v6818 = vcombine.high %v6810, %v6810
      %v6819 = vcombine.high %v6817, %v6817
      %v6820 = vcombine.high %v6294, %v6294
      %v6822 = vunpack.c.l.s4 1983009808
      %v6823 = vunpack.c.0.s8 %v6822
      %v6824 = vlaneseq
      %v6825 = vshrl.u32 %v6824, 7
      %v6826 = vsub.s32 %v6823, %v6825
      %v6827 = vrot.slane %v6294, %v6826
      %v6829 = vunpack.c.l.s4 1983009808
      %v6830 = vunpack.c.0.s8 %v6829
      %v6831 = vlaneseq
      %v6832 = vshrl.u32 %v6831, 7
      %v6833 = vsub.s32 %v6830, %v6832
      %v6834 = vrot.slane %v6820, %v6833
      %v6835 = vcombine.high %v6827, %v6827
      %v6836 = vcombine.high %v6834, %v6834
      %v6837 = vcombine.high %v6297, %v6297
      %v6839 = vunpack.c.l.s4 1983009808
      %v6840 = vunpack.c.0.s8 %v6839
      %v6841 = vlaneseq
      %v6842 = vshrl.u32 %v6841, 7
      %v6843 = vsub.s32 %v6840, %v6842
      %v6844 = vrot.slane %v6297, %v6843
      %v6846 = vunpack.c.l.s4 1983009808
      %v6847 = vunpack.c.0.s8 %v6846
      %v6848 = vlaneseq
      %v6849 = vshrl.u32 %v6848, 7
      %v6850 = vsub.s32 %v6847, %v6849
      %v6851 = vrot.slane %v6837, %v6850
      %v6852 = vcombine.high %v6844, %v6844
      %v6853 = vcombine.high %v6851, %v6851
      %v6854 = vcombine.high %v6302, %v6302
      %v6856 = vunpack.c.l.s4 1983009808
      %v6857 = vunpack.c.0.s8 %v6856
      %v6858 = vlaneseq
      %v6859 = vshrl.u32 %v6858, 7
      %v6860 = vsub.s32 %v6857, %v6859
      %v6861 = vrot.slane %v6302, %v6860
      %v6863 = vunpack.c.l.s4 1983009808
      %v6864 = vunpack.c.0.s8 %v6863
      %v6865 = vlaneseq
      %v6866 = vshrl.u32 %v6865, 7
      %v6867 = vsub.s32 %v6864, %v6866
      %v6868 = vrot.slane %v6854, %v6867
      %v6869 = vcombine.high %v6861, %v6861
      %v6870 = vcombine.high %v6868, %v6868
      %v6871 = vcombine.high %v6305, %v6305
      %v6873 = vunpack.c.l.s4 1983009808
      %v6874 = vunpack.c.0.s8 %v6873
      %v6875 = vlaneseq
      %v6876 = vshrl.u32 %v6875, 7
      %v6877 = vsub.s32 %v6874, %v6876
      %v6878 = vrot.slane %v6305, %v6877
      %v6880 = vunpack.c.l.s4 1983009808
      %v6881 = vunpack.c.0.s8 %v6880
      %v6882 = vlaneseq
      %v6883 = vshrl.u32 %v6882, 7
      %v6884 = vsub.s32 %v6881, %v6883
      %v6885 = vrot.slane %v6871, %v6884
      %v6886 = vcombine.high %v6878, %v6878
      %v6887 = vcombine.high %v6885, %v6885
      %v6889 = vunpack.c.l.s4 1983009808
      %v6890 = vunpack.c.0.s8 %v6889
      %v6891 = vlaneseq
      %v6892 = vshrl.u32 %v6891, 7
      %v6893 = vsub.s32 %v6890, %v6892
      %v6894 = vrot.slane %v6310, %v6893
      %v6895 = vcombine.high %v6894, %v6894
      %v6896 = vcombine.low %v6487, %v6495
      %v6897 = vcombine.low %v6494, %v6496
      %v6899 = vunpack.c.l.s4 1983009808
      %v6900 = vunpack.c.0.s8 %v6899
      %v6901 = vlaneseq
      %v6902 = vshrl.u32 %v6901, 7
      %v6903 = vsub.s32 %v6900, %v6902
      %v6904 = vrot.slane %v6896, %v6903
      %v6906 = vunpack.c.l.s4 1983009808
      %v6907 = vunpack.c.0.s8 %v6906
      %v6908 = vlaneseq
      %v6909 = vshrl.u32 %v6908, 7
      %v6910 = vsub.s32 %v6907, %v6909
      %v6911 = vrot.slane %v6897, %v6910
      %v6912 = vcombine.low %v6904, %v6911
      %v6913 = vcombine.low %v6504, %v6512
      %v6915 = vunpack.c.l.s4 1983009808
      %v6916 = vunpack.c.0.s8 %v6915
      %v6917 = vlaneseq
      %v6918 = vshrl.u32 %v6917, 7
      %v6919 = vsub.s32 %v6916, %v6918
      %v6920 = vrot.slane %v6913, %v6919
      %v6922 = vunpack.c.l.s4 1983009808
      %v6923 = vunpack.c.0.s8 %v6922
      %v6924 = vlaneseq
      %v6925 = vshrl.u32 %v6924, 7
      %v6926 = vsub.s32 %v6923, %v6925
      %v6927 = vrot.slane %v6511, %v6926
      %v6928 = vcombine.low %v6920, %v6927
      %v6929 = vcombine.low %v6513, %v6521
      %v6930 = vcombine.low %v6529, %v6528
      %v6932 = vunpack.c.l.s4 1983009808
      %v6933 = vunpack.c.0.s8 %v6932
      %v6934 = vlaneseq
      %v6935 = vshrl.u32 %v6934, 7
      %v6936 = vsub.s32 %v6933, %v6935
      %v6937 = vrot.slane %v6929, %v6936
      %v6939 = vunpack.c.l.s4 1983009808
      %v6940 = vunpack.c.0.s8 %v6939
      %v6941 = vlaneseq
      %v6942 = vshrl.u32 %v6941, 7
      %v6943 = vsub.s32 %v6940, %v6942
      %v6944 = vrot.slane %v6930, %v6943
      %v6945 = vcombine.low %v6937, %v6944
      %v6946 = vcombine.low %v6530, %v6538
      %v6948 = vunpack.c.l.s4 1983009808
      %v6949 = vunpack.c.0.s8 %v6948
      %v6950 = vlaneseq
      %v6951 = vshrl.u32 %v6950, 7
      %v6952 = vsub.s32 %v6949, %v6951
      %v6953 = vrot.slane %v6946, %v6952
      %v6955 = vunpack.c.l.s4 1983009808
      %v6956 = vunpack.c.0.s8 %v6955
      %v6957 = vlaneseq
      %v6958 = vshrl.u32 %v6957, 7
      %v6959 = vsub.s32 %v6956, %v6958
      %v6960 = vrot.slane %v6546, %v6959
      %v6961 = vcombine.low %v6953, %v6960
      %v6962 = vcombine.low %v6545, %v6547
      %v6963 = vcombine.low %v6555, %v6563
      %v6965 = vunpack.c.l.s4 1983009808
      %v6966 = vunpack.c.0.s8 %v6965
      %v6967 = vlaneseq
      %v6968 = vshrl.u32 %v6967, 7
      %v6969 = vsub.s32 %v6966, %v6968
      %v6970 = vrot.slane %v6962, %v6969
      %v6972 = vunpack.c.l.s4 1983009808
      %v6973 = vunpack.c.0.s8 %v6972
      %v6974 = vlaneseq
      %v6975 = vshrl.u32 %v6974, 7
      %v6976 = vsub.s32 %v6973, %v6975
      %v6977 = vrot.slane %v6963, %v6976
      %v6978 = vcombine.low %v6970, %v6977
      %v6979 = vcombine.low %v6562, %v6564
      %v6981 = vunpack.c.l.s4 1983009808
      %v6982 = vunpack.c.0.s8 %v6981
      %v6983 = vlaneseq
      %v6984 = vshrl.u32 %v6983, 7
      %v6985 = vsub.s32 %v6982, %v6984
      %v6986 = vrot.slane %v6979, %v6985
      %v6988 = vunpack.c.l.s4 1983009808
      %v6989 = vunpack.c.0.s8 %v6988
      %v6990 = vlaneseq
      %v6991 = vshrl.u32 %v6990, 7
      %v6992 = vsub.s32 %v6989, %v6991
      %v6993 = vrot.slane %v6572, %v6992
      %v6994 = vcombine.low %v6986, %v6993
      %v6995 = vcombine.low %v6580, %v6579
      %v6996 = vcombine.low %v6581, %v6589
      %v6998 = vunpack.c.l.s4 1983009808
      %v6999 = vunpack.c.0.s8 %v6998
      %v7000 = vlaneseq
      %v7001 = vshrl.u32 %v7000, 7
      %v7002 = vsub.s32 %v6999, %v7001
      %v7003 = vrot.slane %v6995, %v7002
      %v7005 = vunpack.c.l.s4 1983009808
      %v7006 = vunpack.c.0.s8 %v7005
      %v7007 = vlaneseq
      %v7008 = vshrl.u32 %v7007, 7
      %v7009 = vsub.s32 %v7006, %v7008
      %v7010 = vrot.slane %v6996, %v7009
      %v7011 = vcombine.low %v7003, %v7010
      %v7012 = vcombine.low %v6597, %v6596
      %v7014 = vunpack.c.l.s4 1983009808
      %v7015 = vunpack.c.0.s8 %v7014
      %v7016 = vlaneseq
      %v7017 = vshrl.u32 %v7016, 7
      %v7018 = vsub.s32 %v7015, %v7017
      %v7019 = vrot.slane %v7012, %v7018
      %v7021 = vunpack.c.l.s4 1983009808
      %v7022 = vunpack.c.0.s8 %v7021
      %v7023 = vlaneseq
      %v7024 = vshrl.u32 %v7023, 7
      %v7025 = vsub.s32 %v7022, %v7024
      %v7026 = vrot.slane %v6598, %v7025
      %v7027 = vcombine.low %v7019, %v7026
      %v7028 = vcombine.low %v6606, %v6614
      %v7029 = vcombine.low %v6613, %v6615
      %v7031 = vunpack.c.l.s4 1983009808
      %v7032 = vunpack.c.0.s8 %v7031
      %v7033 = vlaneseq
      %v7034 = vshrl.u32 %v7033, 7
      %v7035 = vsub.s32 %v7032, %v7034
      %v7036 = vrot.slane %v7028, %v7035
      %v7038 = vunpack.c.l.s4 1983009808
      %v7039 = vunpack.c.0.s8 %v7038
      %v7040 = vlaneseq
      %v7041 = vshrl.u32 %v7040, 7
      %v7042 = vsub.s32 %v7039, %v7041
      %v7043 = vrot.slane %v7029, %v7042
      %v7044 = vcombine.low %v7036, %v7043
      %v7045 = vcombine.low %v6623, %v6631
      %v7047 = vunpack.c.l.s4 1983009808
      %v7048 = vunpack.c.0.s8 %v7047
      %v7049 = vlaneseq
      %v7050 = vshrl.u32 %v7049, 7
      %v7051 = vsub.s32 %v7048, %v7050
      %v7052 = vrot.slane %v7045, %v7051
      %v7054 = vunpack.c.l.s4 1983009808
      %v7055 = vunpack.c.0.s8 %v7054
      %v7056 = vlaneseq
      %v7057 = vshrl.u32 %v7056, 7
      %v7058 = vsub.s32 %v7055, %v7057
      %v7059 = vrot.slane %v6630, %v7058
      %v7060 = vcombine.low %v7052, %v7059
      %v7061 = vcombine.low %v6632, %v6640
      %v7062 = vcombine.low %v6648, %v6647
      %v7064 = vunpack.c.l.s4 1983009808
      %v7065 = vunpack.c.0.s8 %v7064
      %v7066 = vlaneseq
      %v7067 = vshrl.u32 %v7066, 7
      %v7068 = vsub.s32 %v7065, %v7067
      %v7069 = vrot.slane %v7061, %v7068
      %v7071 = vunpack.c.l.s4 1983009808
      %v7072 = vunpack.c.0.s8 %v7071
      %v7073 = vlaneseq
      %v7074 = vshrl.u32 %v7073, 7
      %v7075 = vsub.s32 %v7072, %v7074
      %v7076 = vrot.slane %v7062, %v7075
      %v7077 = vcombine.low %v7069, %v7076
      %v7078 = vcombine.low %v6649, %v6657
      %v7080 = vunpack.c.l.s4 1983009808
      %v7081 = vunpack.c.0.s8 %v7080
      %v7082 = vlaneseq
      %v7083 = vshrl.u32 %v7082, 7
      %v7084 = vsub.s32 %v7081, %v7083
      %v7085 = vrot.slane %v7078, %v7084
      %v7087 = vunpack.c.l.s4 1983009808
      %v7088 = vunpack.c.0.s8 %v7087
      %v7089 = vlaneseq
      %v7090 = vshrl.u32 %v7089, 7
      %v7091 = vsub.s32 %v7088, %v7090
      %v7092 = vrot.slane %v6665, %v7091
      %v7093 = vcombine.low %v7085, %v7092
      %v7094 = vcombine.low %v6664, %v6666
      %v7095 = vcombine.low %v6674, %v6682
      %v7097 = vunpack.c.l.s4 1983009808
      %v7098 = vunpack.c.0.s8 %v7097
      %v7099 = vlaneseq
      %v7100 = vshrl.u32 %v7099, 7
      %v7101 = vsub.s32 %v7098, %v7100
      %v7102 = vrot.slane %v7094, %v7101
      %v7104 = vunpack.c.l.s4 1983009808
      %v7105 = vunpack.c.0.s8 %v7104
      %v7106 = vlaneseq
      %v7107 = vshrl.u32 %v7106, 7
      %v7108 = vsub.s32 %v7105, %v7107
      %v7109 = vrot.slane %v7095, %v7108
      %v7110 = vcombine.low %v7102, %v7109
      %v7111 = vcombine.low %v6681, %v6683
      %v7113 = vunpack.c.l.s4 1983009808
      %v7114 = vunpack.c.0.s8 %v7113
      %v7115 = vlaneseq
      %v7116 = vshrl.u32 %v7115, 7
      %v7117 = vsub.s32 %v7114, %v7116
      %v7118 = vrot.slane %v7111, %v7117
      %v7120 = vunpack.c.l.s4 1983009808
      %v7121 = vunpack.c.0.s8 %v7120
      %v7122 = vlaneseq
      %v7123 = vshrl.u32 %v7122, 7
      %v7124 = vsub.s32 %v7121, %v7123
      %v7125 = vrot.slane %v6691, %v7124
      %v7126 = vcombine.low %v7118, %v7125
      %v7127 = vcombine.low %v6699, %v6698
      %v7128 = vcombine.low %v6700, %v6708
      %v7130 = vunpack.c.l.s4 1983009808
      %v7131 = vunpack.c.0.s8 %v7130
      %v7132 = vlaneseq
      %v7133 = vshrl.u32 %v7132, 7
      %v7134 = vsub.s32 %v7131, %v7133
      %v7135 = vrot.slane %v7127, %v7134
      %v7137 = vunpack.c.l.s4 1983009808
      %v7138 = vunpack.c.0.s8 %v7137
      %v7139 = vlaneseq
      %v7140 = vshrl.u32 %v7139, 7
      %v7141 = vsub.s32 %v7138, %v7140
      %v7142 = vrot.slane %v7128, %v7141
      %v7143 = vcombine.low %v7135, %v7142
      %v7144 = vcombine.low %v6716, %v6715
      %v7146 = vunpack.c.l.s4 1983009808
      %v7147 = vunpack.c.0.s8 %v7146
      %v7148 = vlaneseq
      %v7149 = vshrl.u32 %v7148, 7
      %v7150 = vsub.s32 %v7147, %v7149
      %v7151 = vrot.slane %v7144, %v7150
      %v7153 = vunpack.c.l.s4 1983009808
      %v7154 = vunpack.c.0.s8 %v7153
      %v7155 = vlaneseq
      %v7156 = vshrl.u32 %v7155, 7
      %v7157 = vsub.s32 %v7154, %v7156
      %v7158 = vrot.slane %v6717, %v7157
      %v7159 = vcombine.low %v7151, %v7158
      %v7160 = vcombine.low %v6725, %v6733
      %v7161 = vcombine.low %v6732, %v6734
      %v7163 = vunpack.c.l.s4 1983009808
      %v7164 = vunpack.c.0.s8 %v7163
      %v7165 = vlaneseq
      %v7166 = vshrl.u32 %v7165, 7
      %v7167 = vsub.s32 %v7164, %v7166
      %v7168 = vrot.slane %v7160, %v7167
      %v7170 = vunpack.c.l.s4 1983009808
      %v7171 = vunpack.c.0.s8 %v7170
      %v7172 = vlaneseq
      %v7173 = vshrl.u32 %v7172, 7
      %v7174 = vsub.s32 %v7171, %v7173
      %v7175 = vrot.slane %v7161, %v7174
      %v7176 = vcombine.low %v7168, %v7175
      %v7177 = vcombine.low %v6742, %v6750
      %v7179 = vunpack.c.l.s4 1983009808
      %v7180 = vunpack.c.0.s8 %v7179
      %v7181 = vlaneseq
      %v7182 = vshrl.u32 %v7181, 7
      %v7183 = vsub.s32 %v7180, %v7182
      %v7184 = vrot.slane %v7177, %v7183
      %v7186 = vunpack.c.l.s4 1983009808
      %v7187 = vunpack.c.0.s8 %v7186
      %v7188 = vlaneseq
      %v7189 = vshrl.u32 %v7188, 7
      %v7190 = vsub.s32 %v7187, %v7189
      %v7191 = vrot.slane %v6749, %v7190
      %v7192 = vcombine.low %v7184, %v7191
      %v7193 = vcombine.low %v6751, %v6759
      %v7194 = vcombine.low %v6767, %v6766
      %v7196 = vunpack.c.l.s4 1983009808
      %v7197 = vunpack.c.0.s8 %v7196
      %v7198 = vlaneseq
      %v7199 = vshrl.u32 %v7198, 7
      %v7200 = vsub.s32 %v7197, %v7199
      %v7201 = vrot.slane %v7193, %v7200
      %v7203 = vunpack.c.l.s4 1983009808
      %v7204 = vunpack.c.0.s8 %v7203
      %v7205 = vlaneseq
      %v7206 = vshrl.u32 %v7205, 7
      %v7207 = vsub.s32 %v7204, %v7206
      %v7208 = vrot.slane %v7194, %v7207
      %v7209 = vcombine.low %v7201, %v7208
      %v7210 = vcombine.low %v6768, %v6776
      %v7212 = vunpack.c.l.s4 1983009808
      %v7213 = vunpack.c.0.s8 %v7212
      %v7214 = vlaneseq
      %v7215 = vshrl.u32 %v7214, 7
      %v7216 = vsub.s32 %v7213, %v7215
      %v7217 = vrot.slane %v7210, %v7216
      %v7219 = vunpack.c.l.s4 1983009808
      %v7220 = vunpack.c.0.s8 %v7219
      %v7221 = vlaneseq
      %v7222 = vshrl.u32 %v7221, 7
      %v7223 = vsub.s32 %v7220, %v7222
      %v7224 = vrot.slane %v6784, %v7223
      %v7225 = vcombine.low %v7217, %v7224
      %v7226 = vcombine.low %v6783, %v6785
      %v7227 = vcombine.low %v6793, %v6801
      %v7229 = vunpack.c.l.s4 1983009808
      %v7230 = vunpack.c.0.s8 %v7229
      %v7231 = vlaneseq
      %v7232 = vshrl.u32 %v7231, 7
      %v7233 = vsub.s32 %v7230, %v7232
      %v7234 = vrot.slane %v7226, %v7233
      %v7236 = vunpack.c.l.s4 1983009808
      %v7237 = vunpack.c.0.s8 %v7236
      %v7238 = vlaneseq
      %v7239 = vshrl.u32 %v7238, 7
      %v7240 = vsub.s32 %v7237, %v7239
      %v7241 = vrot.slane %v7227, %v7240
      %v7242 = vcombine.low %v7234, %v7241
      %v7243 = vcombine.low %v6800, %v6802
      %v7245 = vunpack.c.l.s4 1983009808
      %v7246 = vunpack.c.0.s8 %v7245
      %v7247 = vlaneseq
      %v7248 = vshrl.u32 %v7247, 7
      %v7249 = vsub.s32 %v7246, %v7248
      %v7250 = vrot.slane %v7243, %v7249
      %v7252 = vunpack.c.l.s4 1983009808
      %v7253 = vunpack.c.0.s8 %v7252
      %v7254 = vlaneseq
      %v7255 = vshrl.u32 %v7254, 7
      %v7256 = vsub.s32 %v7253, %v7255
      %v7257 = vrot.slane %v6810, %v7256
      %v7258 = vcombine.low %v7250, %v7257
      %v7259 = vcombine.low %v6818, %v6817
      %v7260 = vcombine.low %v6819, %v6827
      %v7262 = vunpack.c.l.s4 1983009808
      %v7263 = vunpack.c.0.s8 %v7262
      %v7264 = vlaneseq
      %v7265 = vshrl.u32 %v7264, 7
      %v7266 = vsub.s32 %v7263, %v7265
      %v7267 = vrot.slane %v7259, %v7266
      %v7269 = vunpack.c.l.s4 1983009808
      %v7270 = vunpack.c.0.s8 %v7269
      %v7271 = vlaneseq
      %v7272 = vshrl.u32 %v7271, 7
      %v7273 = vsub.s32 %v7270, %v7272
      %v7274 = vrot.slane %v7260, %v7273
      %v7275 = vcombine.low %v7267, %v7274
      %v7276 = vcombine.low %v6835, %v6834
      %v7278 = vunpack.c.l.s4 1983009808
      %v7279 = vunpack.c.0.s8 %v7278
      %v7280 = vlaneseq
      %v7281 = vshrl.u32 %v7280, 7
      %v7282 = vsub.s32 %v7279, %v7281
      %v7283 = vrot.slane %v7276, %v7282
      %v7285 = vunpack.c.l.s4 1983009808
      %v7286 = vunpack.c.0.s8 %v7285
      %v7287 = vlaneseq
      %v7288 = vshrl.u32 %v7287, 7
      %v7289 = vsub.s32 %v7286, %v7288
      %v7290 = vrot.slane %v6836, %v7289
      %v7291 = vcombine.low %v7283, %v7290
      %v7292 = vcombine.low %v6844, %v6852
      %v7293 = vcombine.low %v6851, %v6853
      %v7295 = vunpack.c.l.s4 1983009808
      %v7296 = vunpack.c.0.s8 %v7295
      %v7297 = vlaneseq
      %v7298 = vshrl.u32 %v7297, 7
      %v7299 = vsub.s32 %v7296, %v7298
      %v7300 = vrot.slane %v7292, %v7299
      %v7302 = vunpack.c.l.s4 1983009808
      %v7303 = vunpack.c.0.s8 %v7302
      %v7304 = vlaneseq
      %v7305 = vshrl.u32 %v7304, 7
      %v7306 = vsub.s32 %v7303, %v7305
      %v7307 = vrot.slane %v7293, %v7306
      %v7308 = vcombine.low %v7300, %v7307
      %v7309 = vcombine.low %v6861, %v6869
      %v7311 = vunpack.c.l.s4 1983009808
      %v7312 = vunpack.c.0.s8 %v7311
      %v7313 = vlaneseq
      %v7314 = vshrl.u32 %v7313, 7
      %v7315 = vsub.s32 %v7312, %v7314
      %v7316 = vrot.slane %v7309, %v7315
      %v7318 = vunpack.c.l.s4 1983009808
      %v7319 = vunpack.c.0.s8 %v7318
      %v7320 = vlaneseq
      %v7321 = vshrl.u32 %v7320, 7
      %v7322 = vsub.s32 %v7319, %v7321
      %v7323 = vrot.slane %v6868, %v7322
      %v7324 = vcombine.low %v7316, %v7323
      %v7325 = vcombine.low %v6870, %v6878
      %v7326 = vcombine.low %v6886, %v6885
      %v7328 = vunpack.c.l.s4 1983009808
      %v7329 = vunpack.c.0.s8 %v7328
      %v7330 = vlaneseq
      %v7331 = vshrl.u32 %v7330, 7
      %v7332 = vsub.s32 %v7329, %v7331
      %v7333 = vrot.slane %v7325, %v7332
      %v7335 = vunpack.c.l.s4 1983009808
      %v7336 = vunpack.c.0.s8 %v7335
      %v7337 = vlaneseq
      %v7338 = vshrl.u32 %v7337, 7
      %v7339 = vsub.s32 %v7336, %v7338
      %v7340 = vrot.slane %v7326, %v7339
      %v7341 = vcombine.low %v7333, %v7340
      %v7342 = vcombine.low %v6887, %v6894
      %v7344 = vunpack.c.l.s4 1983009808
      %v7345 = vunpack.c.0.s8 %v7344
      %v7346 = vlaneseq
      %v7347 = vshrl.u32 %v7346, 7
      %v7348 = vsub.s32 %v7345, %v7347
      %v7349 = vrot.slane %v7342, %v7348
      %v7351 = vunpack.c.l.s4 1983009808
      %v7352 = vunpack.c.0.s8 %v7351
      %v7353 = vlaneseq
      %v7354 = vshrl.u32 %v7353, 7
      %v7355 = vsub.s32 %v7352, %v7354
      %v7356 = vrot.slane %v6895, %v7355
      %v7357 = vcombine.low %v7349, %v7356
      %7386 = vst.msk [vmem:[%s204] sm:$0xff] %vm5932, %v6912
      %vm7387 = vcmask 62464
      %7388 = vst.msk [vmem:[%s204 + $0x8] sm:$0x3f] %vm7387, %v6928
      %7389 = vst.msk [vmem:[%s204 + $0x10] sm:$0xff] %vm5932, %v6945
      %7390 = vst.msk [vmem:[%s204 + $0x18] sm:$0x3f] %vm7387, %v6961
      %7391 = vst.msk [vmem:[%s204 + $0x20] sm:$0xff] %vm5932, %v6978
      %7392 = vst.msk [vmem:[%s204 + $0x28] sm:$0x3f] %vm7387, %v6994
      %7393 = vst.msk [vmem:[%s204 + $0x30] sm:$0xff] %vm5932, %v7011
      %7394 = vst.msk [vmem:[%s204 + $0x38] sm:$0x3f] %vm7387, %v7027
      %7395 = vst.msk [vmem:[%s204 + $0x40] sm:$0xff] %vm5932, %v7044
      %7396 = vst.msk [vmem:[%s204 + $0x48] sm:$0x3f] %vm7387, %v7060
      %7397 = vst.msk [vmem:[%s204 + $0x50] sm:$0xff] %vm5932, %v7077
      %7398 = vst.msk [vmem:[%s204 + $0x58] sm:$0x3f] %vm7387, %v7093
      %7399 = vst.msk [vmem:[%s204 + $0x60] sm:$0xff] %vm5932, %v7110
      %7400 = vst.msk [vmem:[%s204 + $0x68] sm:$0x3f] %vm7387, %v7126
      %7401 = vst.msk [vmem:[%s204 + $0x70] sm:$0xff] %vm5932, %v7143
      %7402 = vst.msk [vmem:[%s204 + $0x78] sm:$0x3f] %vm7387, %v7159
      %7403 = vst.msk [vmem:[%s204 + $0x80] sm:$0xff] %vm5932, %v7176
      %7404 = vst.msk [vmem:[%s204 + $0x88] sm:$0x3f] %vm7387, %v7192
      %7405 = vst.msk [vmem:[%s204 + $0x90] sm:$0xff] %vm5932, %v7209
      %7406 = vst.msk [vmem:[%s204 + $0x98] sm:$0x3f] %vm7387, %v7225
      %7407 = vst.msk [vmem:[%s204 + $0xa0] sm:$0xff] %vm5932, %v7242
      %7408 = vst.msk [vmem:[%s204 + $0xa8] sm:$0x3f] %vm7387, %v7258
      %7409 = vst.msk [vmem:[%s204 + $0xb0] sm:$0xff] %vm5932, %v7275
      %7410 = vst.msk [vmem:[%s204 + $0xb8] sm:$0x3f] %vm7387, %v7291
      %7411 = vst.msk [vmem:[%s204 + $0xc0] sm:$0xff] %vm5932, %v7308
      %7412 = vst.msk [vmem:[%s204 + $0xc8] sm:$0x3f] %vm7387, %v7324
      %7413 = vst.msk [vmem:[%s204 + $0xd0] sm:$0xff] %vm5932, %v7341
      %7414 = vst.msk [vmem:[%s204 + $0xd8] sm:$0x3f] %vm7387, %v7357
      %p7415 = scmp.lt.s32.totalorder %s16, 1
      %s7416 = scalar_select %p7415, %s16, 1
      %s7417 = smul.addr %s7416, 28
      %s7418 = smul.addr %s7417, 8
      %s7419 = scalar_lea.vmem %s3, %s7418
      %p7420 = scmp.lt.s32.totalorder %s16, 1
      %s7421 = scalar_select %p7420, %s16, 1
      %s7422 = smul.addr %s7421, 2
      %s7423 = scalar_lea.vmem %s4, %s7422
      // Predicated region
      $region33: #{encoder_block.3} parent=31 // pred_check
        %p7424 = pneg %p102
      $region34: #{encoder_block.3} parent=31 // pred_check_branch
        %7426 = sbr.rel (%p7424) target = $region36
      $region35: #{encoder_block.3} parent=31 // pred_region
        _
      $region36: #{encoder_block.3} parent=31 // pred_fallthru
        _
      // Predicated region
      $region37: #{encoder_block.3} parent=31 // pred_check
        %p7427 = pneg %p128
      $region38: #{encoder_block.3} parent=31 // pred_check_branch
        %7429 = sbr.rel (%p7427) target = $region40
      $region39: #{encoder_block.3} parent=31 // pred_region
        _
      $region40: #{encoder_block.3} parent=31 // pred_fallthru
        _
    $region32: #{encoder_block.3} parent=5 // pred_fallthru
      _
    %p7430 = scmp.le.s32.totalorder 2, %s11
    // Predicated region
    $region41: #{encoder_block.3} parent=5 // pred_check
      %p7431 = pneg %p7430
    $region42: #{encoder_block.3} parent=5 // pred_check_branch
      %7433 = sbr.rel (%p7431) target = $region44
    $region43: #{encoder_block.3} parent=5 // pred_region
      %s7434 = ssub.s32 %s11, 2
      // Predicated region
      $region45: #{encoder_block.3} parent=43 // pred_check
        %p7435 = pneg %p108
      $region46: #{encoder_block.3} parent=43 // pred_check_branch
        %7437 = sbr.rel (%p7435) target = $region48
      $region47: #{encoder_block.3} parent=43 // pred_region
        %p7438 = scmp.lt.s32.totalorder %s17, 1
        %s7439 = scalar_select %p7438, %s17, 1
        %s7440 = smul.addr %s7439, 28
        %s7441 = smul.addr %s7440, 8
        %s7442 = scalar_lea.vmem %s3, %s7441
      $region48: #{encoder_block.3} parent=43 // pred_fallthru
        _
      // Predicated region
      $region49: #{encoder_block.3} parent=43 // pred_check
        %p7443 = pneg %p134
      $region50: #{encoder_block.3} parent=43 // pred_check_branch
        %7445 = sbr.rel (%p7443) target = $region52
      $region51: #{encoder_block.3} parent=43 // pred_region
        %p7446 = scmp.lt.s32.totalorder %s17, 1
        %s7447 = scalar_select %p7446, %s17, 1
        %s7448 = smul.addr %s7447, 2
        %s7449 = scalar_lea.vmem %s4, %s7448
      $region52: #{encoder_block.3} parent=43 // pred_fallthru
        _
    $region44: #{encoder_block.3} parent=5 // pred_fallthru
      _
  $region6: #{encoder_block.3} parent=0 // loop_footer
    %s15 = sadd.s32 1, %s11
  $region7: #{encoder_block.3} parent=0 // loop_footer_branch
    %10 = sbr.rel target = $region3
  $region8: #{encoder_block.3} parent=0 // loop_exit
    _

</llo_original>
